<compile_context>
chip_gen: v7x
topology: tpu7x:2x2x1
jax: 0.10.0
libtpu: 0.0.40
codegen_flags: <defaults>
</compile_context>

<pallas_src>
import functools

import jax
import jax.numpy as jnp
from jax.experimental import pallas as pl
from jax.experimental.pallas import tpu as pltpu

K = 7            # TCN kernel size
NUM_LEVELS = 8   # [128] * 8
HID = 128        # TCN channel width
IN_FEAT = 512    # fc input features
FC_OUT = 32      # fc output features == TCN input channels


# ----------------------------- fused Pallas kernel ---------------------------

def fused_restcn_kernel(x_ref, fcw_ref, fcb_ref, wd_ref, bd_ref, ball_ref,
                        smat_ref, linw_ref, linb_ref, wall_ref,
                        out_ref, wbuf, sems,
                        *, B, T, level_offsets, level_rows, off_index):
    M = B * T

    # ---- 1) issue ALL level-weight DMAs (HBM -> VMEM) up front ----
    # Total slab is ~1.5 MiB bf16, trivially VMEM-resident; issuing everything now
    # keeps the DMA engine streaming while the fc / early-level matmuls run, and each
    # level only waits on its own slab (copies[i].wait()) right before it needs it.
    copies = []
    for i, (off, rows) in enumerate(level_rows):
        cp = pltpu.make_async_copy(wall_ref.at[pl.ds(off, rows)],
                                   wbuf.at[pl.ds(off, rows)],
                                   sems.at[i])
        cp.start()
        copies.append(cp)

    # shifted column for offset o: S_o @ h  (causal shift + batch-boundary mask baked
    # into the 0/1 matrix; exact, runs on the otherwise-idle MXU)
    def col(h_bf16, o):
        if o == 0:
            return h_bf16
        return jnp.dot(smat_ref[off_index[o]], h_bf16,
                       preferred_element_type=jnp.float32).astype(jnp.bfloat16)

    def conv(h_bf16, offsets, w_rows, bias):
        cols = [col(h_bf16, o) for o in offsets]
        xcol = cols[0] if len(cols) == 1 else jnp.concatenate(cols, axis=1)  # bf16
        return jnp.dot(xcol, w_rows, preferred_element_type=jnp.float32) + bias

    # ---- fc: (M,512) @ (512,128) + b  (output channels zero-padded 32 -> 128) ----
    h = jnp.dot(x_ref[...], fcw_ref[...],
                preferred_element_type=jnp.float32) + fcb_ref[...]

    # ---- level-0 1x1 downsample residual (Cin zero-padded 32 -> 128) ----
    res0 = jnp.dot(h.astype(jnp.bfloat16), wd_ref[...],
                   preferred_element_type=jnp.float32) + bd_ref[...]

    # ---- 8 TemporalBlocks ----
    for i, offsets in enumerate(level_offsets):
        off, rows = level_rows[i]
        n = rows // 2                                   # rows per conv = Klive*128
        copies[i].wait()                                # this level's weights landed
        res = res0 if i == 0 else h
        hb = h.astype(jnp.bfloat16)
        b1 = ball_ref[2 * i:2 * i + 1, :]
        b2 = ball_ref[2 * i + 1:2 * i + 2, :]
        h1 = jnp.maximum(conv(hb, offsets, wbuf[off:off + n, :], b1), 0.0)
        h2 = jnp.maximum(conv(h1.astype(jnp.bfloat16), offsets,
                              wbuf[off + n:off + rows, :], b2), 0.0)
        # Dropout is identity (inference).
        h = jnp.maximum(h2 + res, 0.0)                  # f32 epilogue (v5e-friendly)

    # ---- sum over time + Linear(128,1): VPU multiply + lane reduce ----
    s = jnp.sum(h.reshape(B, T, HID), axis=1)           # (B, 128)
    out_ref[...] = jnp.sum(s * linw_ref[...], axis=1, keepdims=True) + linb_ref[...]


# ------------------------------ host-side packing -----------------------------

def pack_inputs(params, B, T):
    """Pad the 32-wide channel to 128 lanes, drop dead conv taps, concatenate live
    taps (and conv1/conv2) per level into one bf16 slab, and build the constant
    causal-shift matrices.  Runs once in build_forward (not per call)."""
    bf16 = lambda a: a.astype(jnp.bfloat16)
    M = B * T

    fc_w = jnp.zeros((IN_FEAT, HID), jnp.float32).at[:, :FC_OUT].set(params["fc_w"])
    fc_b = jnp.zeros((1, HID), jnp.float32).at[0, :FC_OUT].set(params["fc_b"])
    lvl0 = params["levels"][0]
    wd = jnp.zeros((HID, HID), jnp.float32).at[:FC_OUT, :].set(lvl0["wd"])
    bd = lvl0["bd"].reshape(1, HID)

    level_offsets, level_rows, w_blocks, b_rows = [], [], [], []
    row_off = 0
    for i, lvl in enumerate(params["levels"]):
        d = 2 ** i
        live_ks = [k for k in range(K) if (K - 1 - k) * d < T]       # dead taps read 0
        offsets = tuple((K - 1 - k) * d for k in live_ks)
        level_offsets.append(offsets)
        cin = FC_OUT if i == 0 else HID
        w1_taps = []
        for k in live_ks:
            wk = lvl["w1"][k]
            if cin != HID:                                            # pad Cin 32 -> 128
                wk = jnp.zeros((HID, HID), jnp.float32).at[:cin, :].set(wk)
            w1_taps.append(wk)
        w1 = jnp.concatenate(w1_taps, axis=0)                         # (Kl*128, 128)
        w2 = jnp.concatenate([lvl["w2"][k] for k in live_ks], axis=0) # (Kl*128, 128)
        blk = bf16(jnp.concatenate([w1, w2], axis=0))                 # (2*Kl*128, 128)
        w_blocks.append(blk)
        level_rows.append((row_off, blk.shape[0]))
        row_off += blk.shape[0]
        b_rows += [lvl["b1"].reshape(1, HID), lvl["b2"].reshape(1, HID)]

    w_all = jnp.concatenate(w_blocks, axis=0)                         # (total_rows, 128) bf16
    b_all = jnp.concatenate(b_rows, axis=0)                           # (16, 128) f32

    # constant causal-shift matrices (shift by o rows within each T-block, zero elsewhere)
    distinct = sorted({o for offs in level_offsets for o in offs if o != 0})
    off_index = {o: j for j, o in enumerate(distinct)}
    r = jnp.arange(M)
    if distinct:
        smats = jnp.stack(
            [((r[:, None] - o == r[None, :]) & ((r[:, None] % T) >= o)).astype(jnp.float32)
             for o in distinct], axis=0)
    else:
        smats = jnp.zeros((1, M, M), jnp.float32)
    smats = bf16(smats)

    flat = [bf16(fc_w), fc_b, bf16(wd), bd, b_all, smats,
            params["lin_w"].reshape(1, HID), params["lin_b"].reshape(1, 1),
            w_all]
    return flat, tuple(level_offsets), tuple(level_rows), off_index


def build_forward(params, B, T):
    flat, level_offsets, level_rows, off_index = pack_inputs(params, B, T)
    total_rows = level_rows[-1][0] + level_rows[-1][1]
    M = B * T

    def const_map(nd):
        return lambda i: (0,) * nd

    kernel = functools.partial(fused_restcn_kernel, B=B, T=T,
                               level_offsets=level_offsets,
                               level_rows=level_rows, off_index=off_index)

    call = pl.pallas_call(
        kernel,
        out_shape=jax.ShapeDtypeStruct((B, 1), jnp.float32),
        grid=(1,),
        in_specs=([pl.BlockSpec((M, IN_FEAT), const_map(2))]
                  + [pl.BlockSpec(a.shape, const_map(a.ndim)) for a in flat[:-1]]
                  + [pl.BlockSpec(memory_space=pl.ANY)]),   # w_all stays in HBM
        out_specs=pl.BlockSpec((B, 1), lambda i: (0, 0)),
        scratch_shapes=[pltpu.VMEM((total_rows, HID), jnp.bfloat16),
                        pltpu.SemaphoreType.DMA((len(level_rows),))],
        compiler_params=pltpu.CompilerParams(
            dimension_semantics=("arbitrary",),
            vmem_limit_bytes=32 * 1024 * 1024,
        ),
    )

    @jax.jit
    def forward(x, *flat_args):
        x2d = x.reshape(B * T, IN_FEAT).astype(jnp.bfloat16)  # halve the x DMA
        return call(x2d, *flat_args)[:, 0]                    # squeeze(1)

    return lambda x: forward(x, *flat)


# ------------------------------ parameters -----------------------------------

def init_params(key):
    keys = iter(jax.random.split(key, 4 * NUM_LEVELS + 8))

    def nrm(shape, fan_in):
        return jax.random.normal(next(keys), shape, jnp.float32) / jnp.sqrt(
            jnp.float32(fan_in))

    params = {
        # fc: nn.Linear(512, 32); stored transposed as (Din, Dout)
        "fc_w": nrm((IN_FEAT, FC_OUT), IN_FEAT),
        "fc_b": nrm((FC_OUT,), IN_FEAT),
        # final nn.Linear(128, 1); stored as (128, 1)
        "lin_w": nrm((HID, 1), HID),
        "lin_b": nrm((1,), HID),
        "levels": [],
    }
    for i in range(NUM_LEVELS):
        cin = FC_OUT if i == 0 else HID
        lvl = {
            # conv weights stored as (K, Cin, Cout) (PyTorch (Cout, Cin, K) transposed)
            "w1": nrm((K, cin, HID), cin * K),
            "b1": nrm((HID,), cin * K),
            "w2": nrm((K, HID, HID), HID * K),
            "b2": nrm((HID,), HID * K),
        }
        if cin != HID:
            # 1x1 downsample conv, stored as (Cin, Cout)
            lvl["wd"] = nrm((cin, HID), cin)
            lvl["bd"] = nrm((HID,), cin)
        params["levels"].append(lvl)
    return params


# ------------------------------ pure-JAX reference ----------------------------

def ref_forward(params, x):
    # Mirrors the kernel math (bf16 matmul inputs, f32 accumulation/epilogue) with the
    # straightforward full-K zero-padded conv formulation on the unpadded channels.
    B, T, F = x.shape

    def mm(a, w):
        return jnp.dot(a.astype(jnp.bfloat16), w.astype(jnp.bfloat16),
                       preferred_element_type=jnp.float32)

    h = (mm(x.reshape(B * T, F), params["fc_w"])
         + params["fc_b"]).reshape(B, T, FC_OUT)
    for i, lvl in enumerate(params["levels"]):
        d = 2 ** i
        P = (K - 1) * d

        def conv(inp, w, b):
            xp = jnp.pad(inp, ((0, 0), (P, 0), (0, 0)))
            acc = jnp.zeros((B, T, w.shape[-1]), jnp.float32)
            for k in range(K):
                sl = xp[:, k * d:k * d + T, :].reshape(B * T, -1)
                acc = acc + mm(sl, w[k]).reshape(B, T, -1)
            return acc + b

        h1 = jax.nn.relu(conv(h, lvl["w1"], lvl["b1"]))
        h2 = jax.nn.relu(conv(h1, lvl["w2"], lvl["b2"]))
        if "wd" in lvl:
            res = (mm(h.reshape(B * T, -1), lvl["wd"]) + lvl["bd"]).reshape(B, T, HID)
        else:
            res = h
        h = jax.nn.relu(h2 + res)
    s = jnp.sum(h, axis=1)                               # (B, 128)
    return (s @ params["lin_w"] + params["lin_b"])[:, 0]


# ---------------------------------- main --------------------------------------

if __name__ == "__main__":
    key = jax.random.PRNGKey(0)
    pkey, xkey = jax.random.split(key)
    params = init_params(pkey)

    B, T = 2, 16
    x = jax.random.normal(xkey, (B, T, IN_FEAT), jnp.float32)

    forward = build_forward(params, B, T)      # packs weights once (outside hot path)
    out = jax.block_until_ready(forward(x))
    assert out.shape == (B,), out.shape

    ref = ref_forward(params, x)
    err = float(jnp.max(jnp.abs(out - ref)))
    if not jnp.allclose(out, ref, rtol=1e-2, atol=1e-2):
        raise AssertionError(f"Pallas vs reference mismatch, max abs err = {err}")

    print("KERNEL_OK")
</pallas_src>

<mosaic_0001>
module attributes {stable_mosaic.version = 11 : i64} {
  func.func @fused_restcn_kernel(%arg0: i32, %arg1: memref<32x512xbf16, #tpu.memory_space<vmem>>, %arg2: memref<512x128xbf16, #tpu.memory_space<vmem>>, %arg3: memref<1x128xf32, #tpu.memory_space<vmem>>, %arg4: memref<128x128xbf16, #tpu.memory_space<vmem>>, %arg5: memref<1x128xf32, #tpu.memory_space<vmem>>, %arg6: memref<16x128xf32, #tpu.memory_space<vmem>>, %arg7: memref<9x32x32xbf16, #tpu.memory_space<vmem>>, %arg8: memref<1x128xf32, #tpu.memory_space<vmem>>, %arg9: memref<1x1xf32, #tpu.memory_space<vmem>>, %arg10: memref<6144x128xbf16, #tpu.memory_space<any>>, %arg11: memref<2x1xf32, #tpu.memory_space<vmem>>, %arg12: memref<6144x128xbf16, #tpu.memory_space<vmem>>, %arg13: memref<8x!tpu.dma_semaphore, #tpu.memory_space<semaphore_mem>>) attributes {dimension_semantics = [#tpu.dimension_semantics<arbitrary>], iteration_bounds = array<i64: 1>, scalar_prefetch = 0 : i64, scratch_operands = 2 : i64, tpu.core_type = #tpu.core_type<tc>, window_params = [{pipeline_mode = #tpu.pipeline_mode<synchronous>, transform_indices = @transform_0, window_bounds = array<i64: 32, 512>}, {pipeline_mode = #tpu.pipeline_mode<synchronous>, transform_indices = @transform_1, window_bounds = array<i64: 512, 128>}, {pipeline_mode = #tpu.pipeline_mode<synchronous>, transform_indices = @transform_2, window_bounds = array<i64: 1, 128>}, {pipeline_mode = #tpu.pipeline_mode<synchronous>, transform_indices = @transform_3, window_bounds = array<i64: 128, 128>}, {pipeline_mode = #tpu.pipeline_mode<synchronous>, transform_indices = @transform_4, window_bounds = array<i64: 1, 128>}, {pipeline_mode = #tpu.pipeline_mode<synchronous>, transform_indices = @transform_5, window_bounds = array<i64: 16, 128>}, {pipeline_mode = #tpu.pipeline_mode<synchronous>, transform_indices = @transform_6, window_bounds = array<i64: 9, 32, 32>}, {pipeline_mode = #tpu.pipeline_mode<synchronous>, transform_indices = @transform_7, window_bounds = array<i64: 1, 128>}, {pipeline_mode = #tpu.pipeline_mode<synchronous>, transform_indices = @transform_8, window_bounds = array<i64: 1, 1>}, {}, {pipeline_mode = #tpu.pipeline_mode<synchronous>, transform_indices = @transform_10, window_bounds = array<i64: 2, 1>}]} {
    %c0_i32 = arith.constant 0 : i32
    %c0_i32_0 = arith.constant 0 : i32
    %c0_i32_1 = arith.constant 0 : i32
    %0 = tpu.memref_slice %arg10[%c0_i32_0, %c0_i32_1] : memref<6144x128xbf16, #tpu.memory_space<any>> -> memref<1792x128xbf16, #tpu.memory_space<any>>
    %c0_i32_2 = arith.constant 0 : i32
    %c0_i32_3 = arith.constant 0 : i32
    %1 = tpu.memref_slice %arg12[%c0_i32_2, %c0_i32_3] : memref<6144x128xbf16, #tpu.memory_space<vmem>> -> memref<1792x128xbf16, #tpu.memory_space<vmem>>
    %2 = tpu.memref_slice %arg13[%c0_i32] : memref<8x!tpu.dma_semaphore, #tpu.memory_space<semaphore_mem>> -> memref<1x!tpu.dma_semaphore, #tpu.memory_space<semaphore_mem>>
    %3 = tpu.memref_squeeze %2 : memref<1x!tpu.dma_semaphore, #tpu.memory_space<semaphore_mem>> -> memref<!tpu.dma_semaphore, #tpu.memory_space<semaphore_mem>>
    tpu.enqueue_dma source(%0 : memref<1792x128xbf16, #tpu.memory_space<any>>) target(%1 : memref<1792x128xbf16, #tpu.memory_space<vmem>>) target_semaphore(%3 : memref<!tpu.dma_semaphore, #tpu.memory_space<semaphore_mem>>)
    %c1_i32 = arith.constant 1 : i32
    %c1792_i32 = arith.constant 1792 : i32
    %c0_i32_4 = arith.constant 0 : i32
    %4 = tpu.memref_slice %arg10[%c1792_i32, %c0_i32_4] : memref<6144x128xbf16, #tpu.memory_space<any>> -> memref<1792x128xbf16, #tpu.memory_space<any>>
    %c1792_i32_5 = arith.constant 1792 : i32
    %c0_i32_6 = arith.constant 0 : i32
    %5 = tpu.memref_slice %arg12[%c1792_i32_5, %c0_i32_6] : memref<6144x128xbf16, #tpu.memory_space<vmem>> -> memref<1792x128xbf16, #tpu.memory_space<vmem>>
    %6 = tpu.memref_slice %arg13[%c1_i32] : memref<8x!tpu.dma_semaphore, #tpu.memory_space<semaphore_mem>> -> memref<1x!tpu.dma_semaphore, #tpu.memory_space<semaphore_mem>>
    %7 = tpu.memref_squeeze %6 : memref<1x!tpu.dma_semaphore, #tpu.memory_space<semaphore_mem>> -> memref<!tpu.dma_semaphore, #tpu.memory_space<semaphore_mem>>
    tpu.enqueue_dma source(%4 : memref<1792x128xbf16, #tpu.memory_space<any>>) target(%5 : memref<1792x128xbf16, #tpu.memory_space<vmem>>) target_semaphore(%7 : memref<!tpu.dma_semaphore, #tpu.memory_space<semaphore_mem>>)
    %c2_i32 = arith.constant 2 : i32
    %c3584_i32 = arith.constant 3584 : i32
    %c0_i32_7 = arith.constant 0 : i32
    %8 = tpu.memref_slice %arg10[%c3584_i32, %c0_i32_7] : memref<6144x128xbf16, #tpu.memory_space<any>> -> memref<1024x128xbf16, #tpu.memory_space<any>>
    %c3584_i32_8 = arith.constant 3584 : i32
    %c0_i32_9 = arith.constant 0 : i32
    %9 = tpu.memref_slice %arg12[%c3584_i32_8, %c0_i32_9] : memref<6144x128xbf16, #tpu.memory_space<vmem>> -> memref<1024x128xbf16, #tpu.memory_space<vmem>>
    %10 = tpu.memref_slice %arg13[%c2_i32] : memref<8x!tpu.dma_semaphore, #tpu.memory_space<semaphore_mem>> -> memref<1x!tpu.dma_semaphore, #tpu.memory_space<semaphore_mem>>
    %11 = tpu.memref_squeeze %10 : memref<1x!tpu.dma_semaphore, #tpu.memory_space<semaphore_mem>> -> memref<!tpu.dma_semaphore, #tpu.memory_space<semaphore_mem>>
    tpu.enqueue_dma source(%8 : memref<1024x128xbf16, #tpu.memory_space<any>>) target(%9 : memref<1024x128xbf16, #tpu.memory_space<vmem>>) target_semaphore(%11 : memref<!tpu.dma_semaphore, #tpu.memory_space<semaphore_mem>>)
    %c3_i32 = arith.constant 3 : i32
    %c4608_i32 = arith.constant 4608 : i32
    %c0_i32_10 = arith.constant 0 : i32
    %12 = tpu.memref_slice %arg10[%c4608_i32, %c0_i32_10] : memref<6144x128xbf16, #tpu.memory_space<any>> -> memref<512x128xbf16, #tpu.memory_space<any>>
    %c4608_i32_11 = arith.constant 4608 : i32
    %c0_i32_12 = arith.constant 0 : i32
    %13 = tpu.memref_slice %arg12[%c4608_i32_11, %c0_i32_12] : memref<6144x128xbf16, #tpu.memory_space<vmem>> -> memref<512x128xbf16, #tpu.memory_space<vmem>>
    %14 = tpu.memref_slice %arg13[%c3_i32] : memref<8x!tpu.dma_semaphore, #tpu.memory_space<semaphore_mem>> -> memref<1x!tpu.dma_semaphore, #tpu.memory_space<semaphore_mem>>
    %15 = tpu.memref_squeeze %14 : memref<1x!tpu.dma_semaphore, #tpu.memory_space<semaphore_mem>> -> memref<!tpu.dma_semaphore, #tpu.memory_space<semaphore_mem>>
    tpu.enqueue_dma source(%12 : memref<512x128xbf16, #tpu.memory_space<any>>) target(%13 : memref<512x128xbf16, #tpu.memory_space<vmem>>) target_semaphore(%15 : memref<!tpu.dma_semaphore, #tpu.memory_space<semaphore_mem>>)
    %c4_i32 = arith.constant 4 : i32
    %c5120_i32 = arith.constant 5120 : i32
    %c0_i32_13 = arith.constant 0 : i32
    %16 = tpu.memref_slice %arg10[%c5120_i32, %c0_i32_13] : memref<6144x128xbf16, #tpu.memory_space<any>> -> memref<256x128xbf16, #tpu.memory_space<any>>
    %c5120_i32_14 = arith.constant 5120 : i32
    %c0_i32_15 = arith.constant 0 : i32
    %17 = tpu.memref_slice %arg12[%c5120_i32_14, %c0_i32_15] : memref<6144x128xbf16, #tpu.memory_space<vmem>> -> memref<256x128xbf16, #tpu.memory_space<vmem>>
    %18 = tpu.memref_slice %arg13[%c4_i32] : memref<8x!tpu.dma_semaphore, #tpu.memory_space<semaphore_mem>> -> memref<1x!tpu.dma_semaphore, #tpu.memory_space<semaphore_mem>>
    %19 = tpu.memref_squeeze %18 : memref<1x!tpu.dma_semaphore, #tpu.memory_space<semaphore_mem>> -> memref<!tpu.dma_semaphore, #tpu.memory_space<semaphore_mem>>
    tpu.enqueue_dma source(%16 : memref<256x128xbf16, #tpu.memory_space<any>>) target(%17 : memref<256x128xbf16, #tpu.memory_space<vmem>>) target_semaphore(%19 : memref<!tpu.dma_semaphore, #tpu.memory_space<semaphore_mem>>)
    %c5_i32 = arith.constant 5 : i32
    %c5376_i32 = arith.constant 5376 : i32
    %c0_i32_16 = arith.constant 0 : i32
    %20 = tpu.memref_slice %arg10[%c5376_i32, %c0_i32_16] : memref<6144x128xbf16, #tpu.memory_space<any>> -> memref<256x128xbf16, #tpu.memory_space<any>>
    %c5376_i32_17 = arith.constant 5376 : i32
    %c0_i32_18 = arith.constant 0 : i32
    %21 = tpu.memref_slice %arg12[%c5376_i32_17, %c0_i32_18] : memref<6144x128xbf16, #tpu.memory_space<vmem>> -> memref<256x128xbf16, #tpu.memory_space<vmem>>
    %22 = tpu.memref_slice %arg13[%c5_i32] : memref<8x!tpu.dma_semaphore, #tpu.memory_space<semaphore_mem>> -> memref<1x!tpu.dma_semaphore, #tpu.memory_space<semaphore_mem>>
    %23 = tpu.memref_squeeze %22 : memref<1x!tpu.dma_semaphore, #tpu.memory_space<semaphore_mem>> -> memref<!tpu.dma_semaphore, #tpu.memory_space<semaphore_mem>>
    tpu.enqueue_dma source(%20 : memref<256x128xbf16, #tpu.memory_space<any>>) target(%21 : memref<256x128xbf16, #tpu.memory_space<vmem>>) target_semaphore(%23 : memref<!tpu.dma_semaphore, #tpu.memory_space<semaphore_mem>>)
    %c6_i32 = arith.constant 6 : i32
    %c5632_i32 = arith.constant 5632 : i32
    %c0_i32_19 = arith.constant 0 : i32
    %24 = tpu.memref_slice %arg10[%c5632_i32, %c0_i32_19] : memref<6144x128xbf16, #tpu.memory_space<any>> -> memref<256x128xbf16, #tpu.memory_space<any>>
    %c5632_i32_20 = arith.constant 5632 : i32
    %c0_i32_21 = arith.constant 0 : i32
    %25 = tpu.memref_slice %arg12[%c5632_i32_20, %c0_i32_21] : memref<6144x128xbf16, #tpu.memory_space<vmem>> -> memref<256x128xbf16, #tpu.memory_space<vmem>>
    %26 = tpu.memref_slice %arg13[%c6_i32] : memref<8x!tpu.dma_semaphore, #tpu.memory_space<semaphore_mem>> -> memref<1x!tpu.dma_semaphore, #tpu.memory_space<semaphore_mem>>
    %27 = tpu.memref_squeeze %26 : memref<1x!tpu.dma_semaphore, #tpu.memory_space<semaphore_mem>> -> memref<!tpu.dma_semaphore, #tpu.memory_space<semaphore_mem>>
    tpu.enqueue_dma source(%24 : memref<256x128xbf16, #tpu.memory_space<any>>) target(%25 : memref<256x128xbf16, #tpu.memory_space<vmem>>) target_semaphore(%27 : memref<!tpu.dma_semaphore, #tpu.memory_space<semaphore_mem>>)
    %c7_i32 = arith.constant 7 : i32
    %c5888_i32 = arith.constant 5888 : i32
    %c0_i32_22 = arith.constant 0 : i32
    %28 = tpu.memref_slice %arg10[%c5888_i32, %c0_i32_22] : memref<6144x128xbf16, #tpu.memory_space<any>> -> memref<256x128xbf16, #tpu.memory_space<any>>
    %c5888_i32_23 = arith.constant 5888 : i32
    %c0_i32_24 = arith.constant 0 : i32
    %29 = tpu.memref_slice %arg12[%c5888_i32_23, %c0_i32_24] : memref<6144x128xbf16, #tpu.memory_space<vmem>> -> memref<256x128xbf16, #tpu.memory_space<vmem>>
    %30 = tpu.memref_slice %arg13[%c7_i32] : memref<8x!tpu.dma_semaphore, #tpu.memory_space<semaphore_mem>> -> memref<1x!tpu.dma_semaphore, #tpu.memory_space<semaphore_mem>>
    %31 = tpu.memref_squeeze %30 : memref<1x!tpu.dma_semaphore, #tpu.memory_space<semaphore_mem>> -> memref<!tpu.dma_semaphore, #tpu.memory_space<semaphore_mem>>
    tpu.enqueue_dma source(%28 : memref<256x128xbf16, #tpu.memory_space<any>>) target(%29 : memref<256x128xbf16, #tpu.memory_space<vmem>>) target_semaphore(%31 : memref<!tpu.dma_semaphore, #tpu.memory_space<semaphore_mem>>)
    %c0 = arith.constant 0 : index
    %c0_25 = arith.constant 0 : index
    %32 = vector.load %arg1[%c0, %c0_25] : memref<32x512xbf16, #tpu.memory_space<vmem>>, vector<32x512xbf16>
    %c0_26 = arith.constant 0 : index
    %c0_27 = arith.constant 0 : index
    %33 = vector.load %arg2[%c0_26, %c0_27] : memref<512x128xbf16, #tpu.memory_space<vmem>>, vector<512x128xbf16>
    %cst = arith.constant dense<0.000000e+00> : vector<32x128xf32>
    %34 = tpu.matmul %32, %33, %cst {dimension_numbers = #tpu.dot_dimension_numbers<[1], [0], [0], [1], [0, 0, 1, 1], [], []>} : vector<32x512xbf16>, vector<512x128xbf16>, vector<32x128xf32> -> vector<32x128xf32>
    %c0_28 = arith.constant 0 : index
    %c0_29 = arith.constant 0 : index
    %35 = vector.load %arg3[%c0_28, %c0_29] : memref<1x128xf32, #tpu.memory_space<vmem>>, vector<1x128xf32>
    %36 = vector.broadcast %35 : vector<1x128xf32> to vector<32x128xf32>
    %37 = arith.addf %34, %36 : vector<32x128xf32>
    %38 = arith.truncf %37 : vector<32x128xf32> to vector<32x128xbf16>
    %c0_30 = arith.constant 0 : index
    %c0_31 = arith.constant 0 : index
    %39 = vector.load %arg4[%c0_30, %c0_31] : memref<128x128xbf16, #tpu.memory_space<vmem>>, vector<128x128xbf16>
    %cst_32 = arith.constant dense<0.000000e+00> : vector<32x128xf32>
    %40 = tpu.matmul %38, %39, %cst_32 {dimension_numbers = #tpu.dot_dimension_numbers<[1], [0], [0], [1], [0, 0, 1, 1], [], []>} : vector<32x128xbf16>, vector<128x128xbf16>, vector<32x128xf32> -> vector<32x128xf32>
    %c0_33 = arith.constant 0 : index
    %c0_34 = arith.constant 0 : index
    %41 = vector.load %arg5[%c0_33, %c0_34] : memref<1x128xf32, #tpu.memory_space<vmem>>, vector<1x128xf32>
    %42 = vector.broadcast %41 : vector<1x128xf32> to vector<32x128xf32>
    %43 = arith.addf %40, %42 : vector<32x128xf32>
    %c0_i32_35 = arith.constant 0 : i32
    %c0_i32_36 = arith.constant 0 : i32
    %c0_i32_37 = arith.constant 0 : i32
    %44 = tpu.memref_slice %arg10[%c0_i32_36, %c0_i32_37] : memref<6144x128xbf16, #tpu.memory_space<any>> -> memref<1792x128xbf16, #tpu.memory_space<any>>
    %c0_i32_38 = arith.constant 0 : i32
    %c0_i32_39 = arith.constant 0 : i32
    %45 = tpu.memref_slice %arg12[%c0_i32_38, %c0_i32_39] : memref<6144x128xbf16, #tpu.memory_space<vmem>> -> memref<1792x128xbf16, #tpu.memory_space<vmem>>
    %46 = tpu.memref_slice %arg13[%c0_i32_35] : memref<8x!tpu.dma_semaphore, #tpu.memory_space<semaphore_mem>> -> memref<1x!tpu.dma_semaphore, #tpu.memory_space<semaphore_mem>>
    %47 = tpu.memref_squeeze %46 : memref<1x!tpu.dma_semaphore, #tpu.memory_space<semaphore_mem>> -> memref<!tpu.dma_semaphore, #tpu.memory_space<semaphore_mem>>
    tpu.wait_dma2 semaphore(%47 : memref<!tpu.dma_semaphore, #tpu.memory_space<semaphore_mem>>) src(%44 : memref<1792x128xbf16, #tpu.memory_space<any>>) dst(%45 : memref<1792x128xbf16, #tpu.memory_space<vmem>>)
    %48 = arith.truncf %37 : vector<32x128xf32> to vector<32x128xbf16>
    %c0_40 = arith.constant 0 : index
    %c0_41 = arith.constant 0 : index
    %49 = vector.load %arg6[%c0_40, %c0_41] : memref<16x128xf32, #tpu.memory_space<vmem>>, vector<1x128xf32>
    %c1 = arith.constant 1 : index
    %c0_42 = arith.constant 0 : index
    %50 = vector.load %arg6[%c1, %c0_42] : memref<16x128xf32, #tpu.memory_space<vmem>>, vector<1x128xf32>
    %c0_43 = arith.constant 0 : index
    %c0_44 = arith.constant 0 : index
    %51 = vector.load %arg12[%c0_43, %c0_44] : memref<6144x128xbf16, #tpu.memory_space<vmem>>, vector<896x128xbf16>
    %c5 = arith.constant 5 : index
    %c0_45 = arith.constant 0 : index
    %c0_46 = arith.constant 0 : index
    %52 = vector.load %arg7[%c5, %c0_45, %c0_46] : memref<9x32x32xbf16, #tpu.memory_space<vmem>>, vector<1x32x32xbf16>
    %53 = vector.shape_cast %52 : vector<1x32x32xbf16> to vector<32x32xbf16>
    %cst_47 = arith.constant dense<0.000000e+00> : vector<32x128xf32>
    %54 = tpu.matmul %53, %48, %cst_47 {dimension_numbers = #tpu.dot_dimension_numbers<[1], [0], [0], [1], [0, 0, 1, 1], [], []>} : vector<32x32xbf16>, vector<32x128xbf16>, vector<32x128xf32> -> vector<32x128xf32>
    %55 = arith.truncf %54 : vector<32x128xf32> to vector<32x128xbf16>
    %c4 = arith.constant 4 : index
    %c0_48 = arith.constant 0 : index
    %c0_49 = arith.constant 0 : index
    %56 = vector.load %arg7[%c4, %c0_48, %c0_49] : memref<9x32x32xbf16, #tpu.memory_space<vmem>>, vector<1x32x32xbf16>
    %57 = vector.shape_cast %56 : vector<1x32x32xbf16> to vector<32x32xbf16>
    %cst_50 = arith.constant dense<0.000000e+00> : vector<32x128xf32>
    %58 = tpu.matmul %57, %48, %cst_50 {dimension_numbers = #tpu.dot_dimension_numbers<[1], [0], [0], [1], [0, 0, 1, 1], [], []>} : vector<32x32xbf16>, vector<32x128xbf16>, vector<32x128xf32> -> vector<32x128xf32>
    %59 = arith.truncf %58 : vector<32x128xf32> to vector<32x128xbf16>
    %c3 = arith.constant 3 : index
    %c0_51 = arith.constant 0 : index
    %c0_52 = arith.constant 0 : index
    %60 = vector.load %arg7[%c3, %c0_51, %c0_52] : memref<9x32x32xbf16, #tpu.memory_space<vmem>>, vector<1x32x32xbf16>
    %61 = vector.shape_cast %60 : vector<1x32x32xbf16> to vector<32x32xbf16>
    %cst_53 = arith.constant dense<0.000000e+00> : vector<32x128xf32>
    %62 = tpu.matmul %61, %48, %cst_53 {dimension_numbers = #tpu.dot_dimension_numbers<[1], [0], [0], [1], [0, 0, 1, 1], [], []>} : vector<32x32xbf16>, vector<32x128xbf16>, vector<32x128xf32> -> vector<32x128xf32>
    %63 = arith.truncf %62 : vector<32x128xf32> to vector<32x128xbf16>
    %c2 = arith.constant 2 : index
    %c0_54 = arith.constant 0 : index
    %c0_55 = arith.constant 0 : index
    %64 = vector.load %arg7[%c2, %c0_54, %c0_55] : memref<9x32x32xbf16, #tpu.memory_space<vmem>>, vector<1x32x32xbf16>
    %65 = vector.shape_cast %64 : vector<1x32x32xbf16> to vector<32x32xbf16>
    %cst_56 = arith.constant dense<0.000000e+00> : vector<32x128xf32>
    %66 = tpu.matmul %65, %48, %cst_56 {dimension_numbers = #tpu.dot_dimension_numbers<[1], [0], [0], [1], [0, 0, 1, 1], [], []>} : vector<32x32xbf16>, vector<32x128xbf16>, vector<32x128xf32> -> vector<32x128xf32>
    %67 = arith.truncf %66 : vector<32x128xf32> to vector<32x128xbf16>
    %c1_57 = arith.constant 1 : index
    %c0_58 = arith.constant 0 : index
    %c0_59 = arith.constant 0 : index
    %68 = vector.load %arg7[%c1_57, %c0_58, %c0_59] : memref<9x32x32xbf16, #tpu.memory_space<vmem>>, vector<1x32x32xbf16>
    %69 = vector.shape_cast %68 : vector<1x32x32xbf16> to vector<32x32xbf16>
    %cst_60 = arith.constant dense<0.000000e+00> : vector<32x128xf32>
    %70 = tpu.matmul %69, %48, %cst_60 {dimension_numbers = #tpu.dot_dimension_numbers<[1], [0], [0], [1], [0, 0, 1, 1], [], []>} : vector<32x32xbf16>, vector<32x128xbf16>, vector<32x128xf32> -> vector<32x128xf32>
    %71 = arith.truncf %70 : vector<32x128xf32> to vector<32x128xbf16>
    %c0_61 = arith.constant 0 : index
    %c0_62 = arith.constant 0 : index
    %c0_63 = arith.constant 0 : index
    %72 = vector.load %arg7[%c0_61, %c0_62, %c0_63] : memref<9x32x32xbf16, #tpu.memory_space<vmem>>, vector<1x32x32xbf16>
    %73 = vector.shape_cast %72 : vector<1x32x32xbf16> to vector<32x32xbf16>
    %cst_64 = arith.constant dense<0.000000e+00> : vector<32x128xf32>
    %74 = tpu.matmul %73, %48, %cst_64 {dimension_numbers = #tpu.dot_dimension_numbers<[1], [0], [0], [1], [0, 0, 1, 1], [], []>} : vector<32x32xbf16>, vector<32x128xbf16>, vector<32x128xf32> -> vector<32x128xf32>
    %75 = arith.truncf %74 : vector<32x128xf32> to vector<32x128xbf16>
    %76 = tpu.concatenate %55, %59, %63, %67, %71, %75, %48 in 1 : vector<32x128xbf16>, vector<32x128xbf16>, vector<32x128xbf16>, vector<32x128xbf16>, vector<32x128xbf16>, vector<32x128xbf16>, vector<32x128xbf16> -> vector<32x896xbf16>
    %cst_65 = arith.constant dense<0.000000e+00> : vector<32x128xf32>
    %77 = tpu.matmul %76, %51, %cst_65 {dimension_numbers = #tpu.dot_dimension_numbers<[1], [0], [0], [1], [0, 0, 1, 1], [], []>} : vector<32x896xbf16>, vector<896x128xbf16>, vector<32x128xf32> -> vector<32x128xf32>
    %78 = vector.broadcast %49 : vector<1x128xf32> to vector<32x128xf32>
    %79 = arith.addf %77, %78 : vector<32x128xf32>
    %cst_66 = arith.constant 0.000000e+00 : f32
    %80 = vector.broadcast %cst_66 : f32 to vector<32x128xf32>
    %81 = arith.maximumf %79, %80 : vector<32x128xf32>
    %82 = arith.truncf %81 : vector<32x128xf32> to vector<32x128xbf16>
    %c896 = arith.constant 896 : index
    %c0_67 = arith.constant 0 : index
    %83 = vector.load %arg12[%c896, %c0_67] : memref<6144x128xbf16, #tpu.memory_space<vmem>>, vector<896x128xbf16>
    %c5_68 = arith.constant 5 : index
    %c0_69 = arith.constant 0 : index
    %c0_70 = arith.constant 0 : index
    %84 = vector.load %arg7[%c5_68, %c0_69, %c0_70] : memref<9x32x32xbf16, #tpu.memory_space<vmem>>, vector<1x32x32xbf16>
    %85 = vector.shape_cast %84 : vector<1x32x32xbf16> to vector<32x32xbf16>
    %cst_71 = arith.constant dense<0.000000e+00> : vector<32x128xf32>
    %86 = tpu.matmul %85, %82, %cst_71 {dimension_numbers = #tpu.dot_dimension_numbers<[1], [0], [0], [1], [0, 0, 1, 1], [], []>} : vector<32x32xbf16>, vector<32x128xbf16>, vector<32x128xf32> -> vector<32x128xf32>
    %87 = arith.truncf %86 : vector<32x128xf32> to vector<32x128xbf16>
    %c4_72 = arith.constant 4 : index
    %c0_73 = arith.constant 0 : index
    %c0_74 = arith.constant 0 : index
    %88 = vector.load %arg7[%c4_72, %c0_73, %c0_74] : memref<9x32x32xbf16, #tpu.memory_space<vmem>>, vector<1x32x32xbf16>
    %89 = vector.shape_cast %88 : vector<1x32x32xbf16> to vector<32x32xbf16>
    %cst_75 = arith.constant dense<0.000000e+00> : vector<32x128xf32>
    %90 = tpu.matmul %89, %82, %cst_75 {dimension_numbers = #tpu.dot_dimension_numbers<[1], [0], [0], [1], [0, 0, 1, 1], [], []>} : vector<32x32xbf16>, vector<32x128xbf16>, vector<32x128xf32> -> vector<32x128xf32>
    %91 = arith.truncf %90 : vector<32x128xf32> to vector<32x128xbf16>
    %c3_76 = arith.constant 3 : index
    %c0_77 = arith.constant 0 : index
    %c0_78 = arith.constant 0 : index
    %92 = vector.load %arg7[%c3_76, %c0_77, %c0_78] : memref<9x32x32xbf16, #tpu.memory_space<vmem>>, vector<1x32x32xbf16>
    %93 = vector.shape_cast %92 : vector<1x32x32xbf16> to vector<32x32xbf16>
    %cst_79 = arith.constant dense<0.000000e+00> : vector<32x128xf32>
    %94 = tpu.matmul %93, %82, %cst_79 {dimension_numbers = #tpu.dot_dimension_numbers<[1], [0], [0], [1], [0, 0, 1, 1], [], []>} : vector<32x32xbf16>, vector<32x128xbf16>, vector<32x128xf32> -> vector<32x128xf32>
    %95 = arith.truncf %94 : vector<32x128xf32> to vector<32x128xbf16>
    %c2_80 = arith.constant 2 : index
    %c0_81 = arith.constant 0 : index
    %c0_82 = arith.constant 0 : index
    %96 = vector.load %arg7[%c2_80, %c0_81, %c0_82] : memref<9x32x32xbf16, #tpu.memory_space<vmem>>, vector<1x32x32xbf16>
    %97 = vector.shape_cast %96 : vector<1x32x32xbf16> to vector<32x32xbf16>
    %cst_83 = arith.constant dense<0.000000e+00> : vector<32x128xf32>
    %98 = tpu.matmul %97, %82, %cst_83 {dimension_numbers = #tpu.dot_dimension_numbers<[1], [0], [0], [1], [0, 0, 1, 1], [], []>} : vector<32x32xbf16>, vector<32x128xbf16>, vector<32x128xf32> -> vector<32x128xf32>
    %99 = arith.truncf %98 : vector<32x128xf32> to vector<32x128xbf16>
    %c1_84 = arith.constant 1 : index
    %c0_85 = arith.constant 0 : index
    %c0_86 = arith.constant 0 : index
    %100 = vector.load %arg7[%c1_84, %c0_85, %c0_86] : memref<9x32x32xbf16, #tpu.memory_space<vmem>>, vector<1x32x32xbf16>
    %101 = vector.shape_cast %100 : vector<1x32x32xbf16> to vector<32x32xbf16>
    %cst_87 = arith.constant dense<0.000000e+00> : vector<32x128xf32>
    %102 = tpu.matmul %101, %82, %cst_87 {dimension_numbers = #tpu.dot_dimension_numbers<[1], [0], [0], [1], [0, 0, 1, 1], [], []>} : vector<32x32xbf16>, vector<32x128xbf16>, vector<32x128xf32> -> vector<32x128xf32>
    %103 = arith.truncf %102 : vector<32x128xf32> to vector<32x128xbf16>
    %c0_88 = arith.constant 0 : index
    %c0_89 = arith.constant 0 : index
    %c0_90 = arith.constant 0 : index
    %104 = vector.load %arg7[%c0_88, %c0_89, %c0_90] : memref<9x32x32xbf16, #tpu.memory_space<vmem>>, vector<1x32x32xbf16>
    %105 = vector.shape_cast %104 : vector<1x32x32xbf16> to vector<32x32xbf16>
    %cst_91 = arith.constant dense<0.000000e+00> : vector<32x128xf32>
    %106 = tpu.matmul %105, %82, %cst_91 {dimension_numbers = #tpu.dot_dimension_numbers<[1], [0], [0], [1], [0, 0, 1, 1], [], []>} : vector<32x32xbf16>, vector<32x128xbf16>, vector<32x128xf32> -> vector<32x128xf32>
    %107 = arith.truncf %106 : vector<32x128xf32> to vector<32x128xbf16>
    %108 = tpu.concatenate %87, %91, %95, %99, %103, %107, %82 in 1 : vector<32x128xbf16>, vector<32x128xbf16>, vector<32x128xbf16>, vector<32x128xbf16>, vector<32x128xbf16>, vector<32x128xbf16>, vector<32x128xbf16> -> vector<32x896xbf16>
    %cst_92 = arith.constant dense<0.000000e+00> : vector<32x128xf32>
    %109 = tpu.matmul %108, %83, %cst_92 {dimension_numbers = #tpu.dot_dimension_numbers<[1], [0], [0], [1], [0, 0, 1, 1], [], []>} : vector<32x896xbf16>, vector<896x128xbf16>, vector<32x128xf32> -> vector<32x128xf32>
    %110 = vector.broadcast %50 : vector<1x128xf32> to vector<32x128xf32>
    %111 = arith.addf %109, %110 : vector<32x128xf32>
    %cst_93 = arith.constant 0.000000e+00 : f32
    %112 = vector.broadcast %cst_93 : f32 to vector<32x128xf32>
    %113 = arith.maximumf %111, %112 : vector<32x128xf32>
    %114 = arith.addf %113, %43 : vector<32x128xf32>
    %cst_94 = arith.constant 0.000000e+00 : f32
    %115 = vector.broadcast %cst_94 : f32 to vector<32x128xf32>
    %116 = arith.maximumf %114, %115 : vector<32x128xf32>
    %c1_i32_95 = arith.constant 1 : i32
    %c1792_i32_96 = arith.constant 1792 : i32
    %c0_i32_97 = arith.constant 0 : i32
    %117 = tpu.memref_slice %arg10[%c1792_i32_96, %c0_i32_97] : memref<6144x128xbf16, #tpu.memory_space<any>> -> memref<1792x128xbf16, #tpu.memory_space<any>>
    %c1792_i32_98 = arith.constant 1792 : i32
    %c0_i32_99 = arith.constant 0 : i32
    %118 = tpu.memref_slice %arg12[%c1792_i32_98, %c0_i32_99] : memref<6144x128xbf16, #tpu.memory_space<vmem>> -> memref<1792x128xbf16, #tpu.memory_space<vmem>>
    %119 = tpu.memref_slice %arg13[%c1_i32_95] : memref<8x!tpu.dma_semaphore, #tpu.memory_space<semaphore_mem>> -> memref<1x!tpu.dma_semaphore, #tpu.memory_space<semaphore_mem>>
    %120 = tpu.memref_squeeze %119 : memref<1x!tpu.dma_semaphore, #tpu.memory_space<semaphore_mem>> -> memref<!tpu.dma_semaphore, #tpu.memory_space<semaphore_mem>>
    tpu.wait_dma2 semaphore(%120 : memref<!tpu.dma_semaphore, #tpu.memory_space<semaphore_mem>>) src(%117 : memref<1792x128xbf16, #tpu.memory_space<any>>) dst(%118 : memref<1792x128xbf16, #tpu.memory_space<vmem>>)
    %121 = arith.truncf %116 : vector<32x128xf32> to vector<32x128xbf16>
    %c2_100 = arith.constant 2 : index
    %c0_101 = arith.constant 0 : index
    %122 = vector.load %arg6[%c2_100, %c0_101] : memref<16x128xf32, #tpu.memory_space<vmem>>, vector<1x128xf32>
    %c3_102 = arith.constant 3 : index
    %c0_103 = arith.constant 0 : index
    %123 = vector.load %arg6[%c3_102, %c0_103] : memref<16x128xf32, #tpu.memory_space<vmem>>, vector<1x128xf32>
    %c1792 = arith.constant 1792 : index
    %c0_104 = arith.constant 0 : index
    %124 = vector.load %arg12[%c1792, %c0_104] : memref<6144x128xbf16, #tpu.memory_space<vmem>>, vector<896x128xbf16>
    %c8 = arith.constant 8 : index
    %c0_105 = arith.constant 0 : index
    %c0_106 = arith.constant 0 : index
    %125 = vector.load %arg7[%c8, %c0_105, %c0_106] : memref<9x32x32xbf16, #tpu.memory_space<vmem>>, vector<1x32x32xbf16>
    %126 = vector.shape_cast %125 : vector<1x32x32xbf16> to vector<32x32xbf16>
    %cst_107 = arith.constant dense<0.000000e+00> : vector<32x128xf32>
    %127 = tpu.matmul %126, %121, %cst_107 {dimension_numbers = #tpu.dot_dimension_numbers<[1], [0], [0], [1], [0, 0, 1, 1], [], []>} : vector<32x32xbf16>, vector<32x128xbf16>, vector<32x128xf32> -> vector<32x128xf32>
    %128 = arith.truncf %127 : vector<32x128xf32> to vector<32x128xbf16>
    %c7 = arith.constant 7 : index
    %c0_108 = arith.constant 0 : index
    %c0_109 = arith.constant 0 : index
    %129 = vector.load %arg7[%c7, %c0_108, %c0_109] : memref<9x32x32xbf16, #tpu.memory_space<vmem>>, vector<1x32x32xbf16>
    %130 = vector.shape_cast %129 : vector<1x32x32xbf16> to vector<32x32xbf16>
    %cst_110 = arith.constant dense<0.000000e+00> : vector<32x128xf32>
    %131 = tpu.matmul %130, %121, %cst_110 {dimension_numbers = #tpu.dot_dimension_numbers<[1], [0], [0], [1], [0, 0, 1, 1], [], []>} : vector<32x32xbf16>, vector<32x128xbf16>, vector<32x128xf32> -> vector<32x128xf32>
    %132 = arith.truncf %131 : vector<32x128xf32> to vector<32x128xbf16>
    %c6 = arith.constant 6 : index
    %c0_111 = arith.constant 0 : index
    %c0_112 = arith.constant 0 : index
    %133 = vector.load %arg7[%c6, %c0_111, %c0_112] : memref<9x32x32xbf16, #tpu.memory_space<vmem>>, vector<1x32x32xbf16>
    %134 = vector.shape_cast %133 : vector<1x32x32xbf16> to vector<32x32xbf16>
    %cst_113 = arith.constant dense<0.000000e+00> : vector<32x128xf32>
    %135 = tpu.matmul %134, %121, %cst_113 {dimension_numbers = #tpu.dot_dimension_numbers<[1], [0], [0], [1], [0, 0, 1, 1], [], []>} : vector<32x32xbf16>, vector<32x128xbf16>, vector<32x128xf32> -> vector<32x128xf32>
    %136 = arith.truncf %135 : vector<32x128xf32> to vector<32x128xbf16>
    %c5_114 = arith.constant 5 : index
    %c0_115 = arith.constant 0 : index
    %c0_116 = arith.constant 0 : index
    %137 = vector.load %arg7[%c5_114, %c0_115, %c0_116] : memref<9x32x32xbf16, #tpu.memory_space<vmem>>, vector<1x32x32xbf16>
    %138 = vector.shape_cast %137 : vector<1x32x32xbf16> to vector<32x32xbf16>
    %cst_117 = arith.constant dense<0.000000e+00> : vector<32x128xf32>
    %139 = tpu.matmul %138, %121, %cst_117 {dimension_numbers = #tpu.dot_dimension_numbers<[1], [0], [0], [1], [0, 0, 1, 1], [], []>} : vector<32x32xbf16>, vector<32x128xbf16>, vector<32x128xf32> -> vector<32x128xf32>
    %140 = arith.truncf %139 : vector<32x128xf32> to vector<32x128xbf16>
    %c3_118 = arith.constant 3 : index
    %c0_119 = arith.constant 0 : index
    %c0_120 = arith.constant 0 : index
    %141 = vector.load %arg7[%c3_118, %c0_119, %c0_120] : memref<9x32x32xbf16, #tpu.memory_space<vmem>>, vector<1x32x32xbf16>
    %142 = vector.shape_cast %141 : vector<1x32x32xbf16> to vector<32x32xbf16>
    %cst_121 = arith.constant dense<0.000000e+00> : vector<32x128xf32>
    %143 = tpu.matmul %142, %121, %cst_121 {dimension_numbers = #tpu.dot_dimension_numbers<[1], [0], [0], [1], [0, 0, 1, 1], [], []>} : vector<32x32xbf16>, vector<32x128xbf16>, vector<32x128xf32> -> vector<32x128xf32>
    %144 = arith.truncf %143 : vector<32x128xf32> to vector<32x128xbf16>
    %c1_122 = arith.constant 1 : index
    %c0_123 = arith.constant 0 : index
    %c0_124 = arith.constant 0 : index
    %145 = vector.load %arg7[%c1_122, %c0_123, %c0_124] : memref<9x32x32xbf16, #tpu.memory_space<vmem>>, vector<1x32x32xbf16>
    %146 = vector.shape_cast %145 : vector<1x32x32xbf16> to vector<32x32xbf16>
    %cst_125 = arith.constant dense<0.000000e+00> : vector<32x128xf32>
    %147 = tpu.matmul %146, %121, %cst_125 {dimension_numbers = #tpu.dot_dimension_numbers<[1], [0], [0], [1], [0, 0, 1, 1], [], []>} : vector<32x32xbf16>, vector<32x128xbf16>, vector<32x128xf32> -> vector<32x128xf32>
    %148 = arith.truncf %147 : vector<32x128xf32> to vector<32x128xbf16>
    %149 = tpu.concatenate %128, %132, %136, %140, %144, %148, %121 in 1 : vector<32x128xbf16>, vector<32x128xbf16>, vector<32x128xbf16>, vector<32x128xbf16>, vector<32x128xbf16>, vector<32x128xbf16>, vector<32x128xbf16> -> vector<32x896xbf16>
    %cst_126 = arith.constant dense<0.000000e+00> : vector<32x128xf32>
    %150 = tpu.matmul %149, %124, %cst_126 {dimension_numbers = #tpu.dot_dimension_numbers<[1], [0], [0], [1], [0, 0, 1, 1], [], []>} : vector<32x896xbf16>, vector<896x128xbf16>, vector<32x128xf32> -> vector<32x128xf32>
    %151 = vector.broadcast %122 : vector<1x128xf32> to vector<32x128xf32>
    %152 = arith.addf %150, %151 : vector<32x128xf32>
    %cst_127 = arith.constant 0.000000e+00 : f32
    %153 = vector.broadcast %cst_127 : f32 to vector<32x128xf32>
    %154 = arith.maximumf %152, %153 : vector<32x128xf32>
    %155 = arith.truncf %154 : vector<32x128xf32> to vector<32x128xbf16>
    %c2688 = arith.constant 2688 : index
    %c0_128 = arith.constant 0 : index
    %156 = vector.load %arg12[%c2688, %c0_128] : memref<6144x128xbf16, #tpu.memory_space<vmem>>, vector<896x128xbf16>
    %c8_129 = arith.constant 8 : index
    %c0_130 = arith.constant 0 : index
    %c0_131 = arith.constant 0 : index
    %157 = vector.load %arg7[%c8_129, %c0_130, %c0_131] : memref<9x32x32xbf16, #tpu.memory_space<vmem>>, vector<1x32x32xbf16>
    %158 = vector.shape_cast %157 : vector<1x32x32xbf16> to vector<32x32xbf16>
    %cst_132 = arith.constant dense<0.000000e+00> : vector<32x128xf32>
    %159 = tpu.matmul %158, %155, %cst_132 {dimension_numbers = #tpu.dot_dimension_numbers<[1], [0], [0], [1], [0, 0, 1, 1], [], []>} : vector<32x32xbf16>, vector<32x128xbf16>, vector<32x128xf32> -> vector<32x128xf32>
    %160 = arith.truncf %159 : vector<32x128xf32> to vector<32x128xbf16>
    %c7_133 = arith.constant 7 : index
    %c0_134 = arith.constant 0 : index
    %c0_135 = arith.constant 0 : index
    %161 = vector.load %arg7[%c7_133, %c0_134, %c0_135] : memref<9x32x32xbf16, #tpu.memory_space<vmem>>, vector<1x32x32xbf16>
    %162 = vector.shape_cast %161 : vector<1x32x32xbf16> to vector<32x32xbf16>
    %cst_136 = arith.constant dense<0.000000e+00> : vector<32x128xf32>
    %163 = tpu.matmul %162, %155, %cst_136 {dimension_numbers = #tpu.dot_dimension_numbers<[1], [0], [0], [1], [0, 0, 1, 1], [], []>} : vector<32x32xbf16>, vector<32x128xbf16>, vector<32x128xf32> -> vector<32x128xf32>
    %164 = arith.truncf %163 : vector<32x128xf32> to vector<32x128xbf16>
    %c6_137 = arith.constant 6 : index
    %c0_138 = arith.constant 0 : index
    %c0_139 = arith.constant 0 : index
    %165 = vector.load %arg7[%c6_137, %c0_138, %c0_139] : memref<9x32x32xbf16, #tpu.memory_space<vmem>>, vector<1x32x32xbf16>
    %166 = vector.shape_cast %165 : vector<1x32x32xbf16> to vector<32x32xbf16>
    %cst_140 = arith.constant dense<0.000000e+00> : vector<32x128xf32>
    %167 = tpu.matmul %166, %155, %cst_140 {dimension_numbers = #tpu.dot_dimension_numbers<[1], [0], [0], [1], [0, 0, 1, 1], [], []>} : vector<32x32xbf16>, vector<32x128xbf16>, vector<32x128xf32> -> vector<32x128xf32>
    %168 = arith.truncf %167 : vector<32x128xf32> to vector<32x128xbf16>
    %c5_141 = arith.constant 5 : index
    %c0_142 = arith.constant 0 : index
    %c0_143 = arith.constant 0 : index
    %169 = vector.load %arg7[%c5_141, %c0_142, %c0_143] : memref<9x32x32xbf16, #tpu.memory_space<vmem>>, vector<1x32x32xbf16>
    %170 = vector.shape_cast %169 : vector<1x32x32xbf16> to vector<32x32xbf16>
    %cst_144 = arith.constant dense<0.000000e+00> : vector<32x128xf32>
    %171 = tpu.matmul %170, %155, %cst_144 {dimension_numbers = #tpu.dot_dimension_numbers<[1], [0], [0], [1], [0, 0, 1, 1], [], []>} : vector<32x32xbf16>, vector<32x128xbf16>, vector<32x128xf32> -> vector<32x128xf32>
    %172 = arith.truncf %171 : vector<32x128xf32> to vector<32x128xbf16>
    %c3_145 = arith.constant 3 : index
    %c0_146 = arith.constant 0 : index
    %c0_147 = arith.constant 0 : index
    %173 = vector.load %arg7[%c3_145, %c0_146, %c0_147] : memref<9x32x32xbf16, #tpu.memory_space<vmem>>, vector<1x32x32xbf16>
    %174 = vector.shape_cast %173 : vector<1x32x32xbf16> to vector<32x32xbf16>
    %cst_148 = arith.constant dense<0.000000e+00> : vector<32x128xf32>
    %175 = tpu.matmul %174, %155, %cst_148 {dimension_numbers = #tpu.dot_dimension_numbers<[1], [0], [0], [1], [0, 0, 1, 1], [], []>} : vector<32x32xbf16>, vector<32x128xbf16>, vector<32x128xf32> -> vector<32x128xf32>
    %176 = arith.truncf %175 : vector<32x128xf32> to vector<32x128xbf16>
    %c1_149 = arith.constant 1 : index
    %c0_150 = arith.constant 0 : index
    %c0_151 = arith.constant 0 : index
    %177 = vector.load %arg7[%c1_149, %c0_150, %c0_151] : memref<9x32x32xbf16, #tpu.memory_space<vmem>>, vector<1x32x32xbf16>
    %178 = vector.shape_cast %177 : vector<1x32x32xbf16> to vector<32x32xbf16>
    %cst_152 = arith.constant dense<0.000000e+00> : vector<32x128xf32>
    %179 = tpu.matmul %178, %155, %cst_152 {dimension_numbers = #tpu.dot_dimension_numbers<[1], [0], [0], [1], [0, 0, 1, 1], [], []>} : vector<32x32xbf16>, vector<32x128xbf16>, vector<32x128xf32> -> vector<32x128xf32>
    %180 = arith.truncf %179 : vector<32x128xf32> to vector<32x128xbf16>
    %181 = tpu.concatenate %160, %164, %168, %172, %176, %180, %155 in 1 : vector<32x128xbf16>, vector<32x128xbf16>, vector<32x128xbf16>, vector<32x128xbf16>, vector<32x128xbf16>, vector<32x128xbf16>, vector<32x128xbf16> -> vector<32x896xbf16>
    %cst_153 = arith.constant dense<0.000000e+00> : vector<32x128xf32>
    %182 = tpu.matmul %181, %156, %cst_153 {dimension_numbers = #tpu.dot_dimension_numbers<[1], [0], [0], [1], [0, 0, 1, 1], [], []>} : vector<32x896xbf16>, vector<896x128xbf16>, vector<32x128xf32> -> vector<32x128xf32>
    %183 = vector.broadcast %123 : vector<1x128xf32> to vector<32x128xf32>
    %184 = arith.addf %182, %183 : vector<32x128xf32>
    %cst_154 = arith.constant 0.000000e+00 : f32
    %185 = vector.broadcast %cst_154 : f32 to vector<32x128xf32>
    %186 = arith.maximumf %184, %185 : vector<32x128xf32>
    %187 = arith.addf %186, %116 : vector<32x128xf32>
    %cst_155 = arith.constant 0.000000e+00 : f32
    %188 = vector.broadcast %cst_155 : f32 to vector<32x128xf32>
    %189 = arith.maximumf %187, %188 : vector<32x128xf32>
    %c2_i32_156 = arith.constant 2 : i32
    %c3584_i32_157 = arith.constant 3584 : i32
    %c0_i32_158 = arith.constant 0 : i32
    %190 = tpu.memref_slice %arg10[%c3584_i32_157, %c0_i32_158] : memref<6144x128xbf16, #tpu.memory_space<any>> -> memref<1024x128xbf16, #tpu.memory_space<any>>
    %c3584_i32_159 = arith.constant 3584 : i32
    %c0_i32_160 = arith.constant 0 : i32
    %191 = tpu.memref_slice %arg12[%c3584_i32_159, %c0_i32_160] : memref<6144x128xbf16, #tpu.memory_space<vmem>> -> memref<1024x128xbf16, #tpu.memory_space<vmem>>
    %192 = tpu.memref_slice %arg13[%c2_i32_156] : memref<8x!tpu.dma_semaphore, #tpu.memory_space<semaphore_mem>> -> memref<1x!tpu.dma_semaphore, #tpu.memory_space<semaphore_mem>>
    %193 = tpu.memref_squeeze %192 : memref<1x!tpu.dma_semaphore, #tpu.memory_space<semaphore_mem>> -> memref<!tpu.dma_semaphore, #tpu.memory_space<semaphore_mem>>
    tpu.wait_dma2 semaphore(%193 : memref<!tpu.dma_semaphore, #tpu.memory_space<semaphore_mem>>) src(%190 : memref<1024x128xbf16, #tpu.memory_space<any>>) dst(%191 : memref<1024x128xbf16, #tpu.memory_space<vmem>>)
    %194 = arith.truncf %189 : vector<32x128xf32> to vector<32x128xbf16>
    %c4_161 = arith.constant 4 : index
    %c0_162 = arith.constant 0 : index
    %195 = vector.load %arg6[%c4_161, %c0_162] : memref<16x128xf32, #tpu.memory_space<vmem>>, vector<1x128xf32>
    %c5_163 = arith.constant 5 : index
    %c0_164 = arith.constant 0 : index
    %196 = vector.load %arg6[%c5_163, %c0_164] : memref<16x128xf32, #tpu.memory_space<vmem>>, vector<1x128xf32>
    %c3584 = arith.constant 3584 : index
    %c0_165 = arith.constant 0 : index
    %197 = vector.load %arg12[%c3584, %c0_165] : memref<6144x128xbf16, #tpu.memory_space<vmem>>, vector<512x128xbf16>
    %c8_166 = arith.constant 8 : index
    %c0_167 = arith.constant 0 : index
    %c0_168 = arith.constant 0 : index
    %198 = vector.load %arg7[%c8_166, %c0_167, %c0_168] : memref<9x32x32xbf16, #tpu.memory_space<vmem>>, vector<1x32x32xbf16>
    %199 = vector.shape_cast %198 : vector<1x32x32xbf16> to vector<32x32xbf16>
    %cst_169 = arith.constant dense<0.000000e+00> : vector<32x128xf32>
    %200 = tpu.matmul %199, %194, %cst_169 {dimension_numbers = #tpu.dot_dimension_numbers<[1], [0], [0], [1], [0, 0, 1, 1], [], []>} : vector<32x32xbf16>, vector<32x128xbf16>, vector<32x128xf32> -> vector<32x128xf32>
    %201 = arith.truncf %200 : vector<32x128xf32> to vector<32x128xbf16>
    %c6_170 = arith.constant 6 : index
    %c0_171 = arith.constant 0 : index
    %c0_172 = arith.constant 0 : index
    %202 = vector.load %arg7[%c6_170, %c0_171, %c0_172] : memref<9x32x32xbf16, #tpu.memory_space<vmem>>, vector<1x32x32xbf16>
    %203 = vector.shape_cast %202 : vector<1x32x32xbf16> to vector<32x32xbf16>
    %cst_173 = arith.constant dense<0.000000e+00> : vector<32x128xf32>
    %204 = tpu.matmul %203, %194, %cst_173 {dimension_numbers = #tpu.dot_dimension_numbers<[1], [0], [0], [1], [0, 0, 1, 1], [], []>} : vector<32x32xbf16>, vector<32x128xbf16>, vector<32x128xf32> -> vector<32x128xf32>
    %205 = arith.truncf %204 : vector<32x128xf32> to vector<32x128xbf16>
    %c3_174 = arith.constant 3 : index
    %c0_175 = arith.constant 0 : index
    %c0_176 = arith.constant 0 : index
    %206 = vector.load %arg7[%c3_174, %c0_175, %c0_176] : memref<9x32x32xbf16, #tpu.memory_space<vmem>>, vector<1x32x32xbf16>
    %207 = vector.shape_cast %206 : vector<1x32x32xbf16> to vector<32x32xbf16>
    %cst_177 = arith.constant dense<0.000000e+00> : vector<32x128xf32>
    %208 = tpu.matmul %207, %194, %cst_177 {dimension_numbers = #tpu.dot_dimension_numbers<[1], [0], [0], [1], [0, 0, 1, 1], [], []>} : vector<32x32xbf16>, vector<32x128xbf16>, vector<32x128xf32> -> vector<32x128xf32>
    %209 = arith.truncf %208 : vector<32x128xf32> to vector<32x128xbf16>
    %210 = tpu.concatenate %201, %205, %209, %194 in 1 : vector<32x128xbf16>, vector<32x128xbf16>, vector<32x128xbf16>, vector<32x128xbf16> -> vector<32x512xbf16>
    %cst_178 = arith.constant dense<0.000000e+00> : vector<32x128xf32>
    %211 = tpu.matmul %210, %197, %cst_178 {dimension_numbers = #tpu.dot_dimension_numbers<[1], [0], [0], [1], [0, 0, 1, 1], [], []>} : vector<32x512xbf16>, vector<512x128xbf16>, vector<32x128xf32> -> vector<32x128xf32>
    %212 = vector.broadcast %195 : vector<1x128xf32> to vector<32x128xf32>
    %213 = arith.addf %211, %212 : vector<32x128xf32>
    %cst_179 = arith.constant 0.000000e+00 : f32
    %214 = vector.broadcast %cst_179 : f32 to vector<32x128xf32>
    %215 = arith.maximumf %213, %214 : vector<32x128xf32>
    %216 = arith.truncf %215 : vector<32x128xf32> to vector<32x128xbf16>
    %c4096 = arith.constant 4096 : index
    %c0_180 = arith.constant 0 : index
    %217 = vector.load %arg12[%c4096, %c0_180] : memref<6144x128xbf16, #tpu.memory_space<vmem>>, vector<512x128xbf16>
    %c8_181 = arith.constant 8 : index
    %c0_182 = arith.constant 0 : index
    %c0_183 = arith.constant 0 : index
    %218 = vector.load %arg7[%c8_181, %c0_182, %c0_183] : memref<9x32x32xbf16, #tpu.memory_space<vmem>>, vector<1x32x32xbf16>
    %219 = vector.shape_cast %218 : vector<1x32x32xbf16> to vector<32x32xbf16>
    %cst_184 = arith.constant dense<0.000000e+00> : vector<32x128xf32>
    %220 = tpu.matmul %219, %216, %cst_184 {dimension_numbers = #tpu.dot_dimension_numbers<[1], [0], [0], [1], [0, 0, 1, 1], [], []>} : vector<32x32xbf16>, vector<32x128xbf16>, vector<32x128xf32> -> vector<32x128xf32>
    %221 = arith.truncf %220 : vector<32x128xf32> to vector<32x128xbf16>
    %c6_185 = arith.constant 6 : index
    %c0_186 = arith.constant 0 : index
    %c0_187 = arith.constant 0 : index
    %222 = vector.load %arg7[%c6_185, %c0_186, %c0_187] : memref<9x32x32xbf16, #tpu.memory_space<vmem>>, vector<1x32x32xbf16>
    %223 = vector.shape_cast %222 : vector<1x32x32xbf16> to vector<32x32xbf16>
    %cst_188 = arith.constant dense<0.000000e+00> : vector<32x128xf32>
    %224 = tpu.matmul %223, %216, %cst_188 {dimension_numbers = #tpu.dot_dimension_numbers<[1], [0], [0], [1], [0, 0, 1, 1], [], []>} : vector<32x32xbf16>, vector<32x128xbf16>, vector<32x128xf32> -> vector<32x128xf32>
    %225 = arith.truncf %224 : vector<32x128xf32> to vector<32x128xbf16>
    %c3_189 = arith.constant 3 : index
    %c0_190 = arith.constant 0 : index
    %c0_191 = arith.constant 0 : index
    %226 = vector.load %arg7[%c3_189, %c0_190, %c0_191] : memref<9x32x32xbf16, #tpu.memory_space<vmem>>, vector<1x32x32xbf16>
    %227 = vector.shape_cast %226 : vector<1x32x32xbf16> to vector<32x32xbf16>
    %cst_192 = arith.constant dense<0.000000e+00> : vector<32x128xf32>
    %228 = tpu.matmul %227, %216, %cst_192 {dimension_numbers = #tpu.dot_dimension_numbers<[1], [0], [0], [1], [0, 0, 1, 1], [], []>} : vector<32x32xbf16>, vector<32x128xbf16>, vector<32x128xf32> -> vector<32x128xf32>
    %229 = arith.truncf %228 : vector<32x128xf32> to vector<32x128xbf16>
    %230 = tpu.concatenate %221, %225, %229, %216 in 1 : vector<32x128xbf16>, vector<32x128xbf16>, vector<32x128xbf16>, vector<32x128xbf16> -> vector<32x512xbf16>
    %cst_193 = arith.constant dense<0.000000e+00> : vector<32x128xf32>
    %231 = tpu.matmul %230, %217, %cst_193 {dimension_numbers = #tpu.dot_dimension_numbers<[1], [0], [0], [1], [0, 0, 1, 1], [], []>} : vector<32x512xbf16>, vector<512x128xbf16>, vector<32x128xf32> -> vector<32x128xf32>
    %232 = vector.broadcast %196 : vector<1x128xf32> to vector<32x128xf32>
    %233 = arith.addf %231, %232 : vector<32x128xf32>
    %cst_194 = arith.constant 0.000000e+00 : f32
    %234 = vector.broadcast %cst_194 : f32 to vector<32x128xf32>
    %235 = arith.maximumf %233, %234 : vector<32x128xf32>
    %236 = arith.addf %235, %189 : vector<32x128xf32>
    %cst_195 = arith.constant 0.000000e+00 : f32
    %237 = vector.broadcast %cst_195 : f32 to vector<32x128xf32>
    %238 = arith.maximumf %236, %237 : vector<32x128xf32>
    %c3_i32_196 = arith.constant 3 : i32
    %c4608_i32_197 = arith.constant 4608 : i32
    %c0_i32_198 = arith.constant 0 : i32
    %239 = tpu.memref_slice %arg10[%c4608_i32_197, %c0_i32_198] : memref<6144x128xbf16, #tpu.memory_space<any>> -> memref<512x128xbf16, #tpu.memory_space<any>>
    %c4608_i32_199 = arith.constant 4608 : i32
    %c0_i32_200 = arith.constant 0 : i32
    %240 = tpu.memref_slice %arg12[%c4608_i32_199, %c0_i32_200] : memref<6144x128xbf16, #tpu.memory_space<vmem>> -> memref<512x128xbf16, #tpu.memory_space<vmem>>
    %241 = tpu.memref_slice %arg13[%c3_i32_196] : memref<8x!tpu.dma_semaphore, #tpu.memory_space<semaphore_mem>> -> memref<1x!tpu.dma_semaphore, #tpu.memory_space<semaphore_mem>>
    %242 = tpu.memref_squeeze %241 : memref<1x!tpu.dma_semaphore, #tpu.memory_space<semaphore_mem>> -> memref<!tpu.dma_semaphore, #tpu.memory_space<semaphore_mem>>
    tpu.wait_dma2 semaphore(%242 : memref<!tpu.dma_semaphore, #tpu.memory_space<semaphore_mem>>) src(%239 : memref<512x128xbf16, #tpu.memory_space<any>>) dst(%240 : memref<512x128xbf16, #tpu.memory_space<vmem>>)
    %243 = arith.truncf %238 : vector<32x128xf32> to vector<32x128xbf16>
    %c6_201 = arith.constant 6 : index
    %c0_202 = arith.constant 0 : index
    %244 = vector.load %arg6[%c6_201, %c0_202] : memref<16x128xf32, #tpu.memory_space<vmem>>, vector<1x128xf32>
    %c7_203 = arith.constant 7 : index
    %c0_204 = arith.constant 0 : index
    %245 = vector.load %arg6[%c7_203, %c0_204] : memref<16x128xf32, #tpu.memory_space<vmem>>, vector<1x128xf32>
    %c4608 = arith.constant 4608 : index
    %c0_205 = arith.constant 0 : index
    %246 = vector.load %arg12[%c4608, %c0_205] : memref<6144x128xbf16, #tpu.memory_space<vmem>>, vector<256x128xbf16>
    %c6_206 = arith.constant 6 : index
    %c0_207 = arith.constant 0 : index
    %c0_208 = arith.constant 0 : index
    %247 = vector.load %arg7[%c6_206, %c0_207, %c0_208] : memref<9x32x32xbf16, #tpu.memory_space<vmem>>, vector<1x32x32xbf16>
    %248 = vector.shape_cast %247 : vector<1x32x32xbf16> to vector<32x32xbf16>
    %cst_209 = arith.constant dense<0.000000e+00> : vector<32x128xf32>
    %249 = tpu.matmul %248, %243, %cst_209 {dimension_numbers = #tpu.dot_dimension_numbers<[1], [0], [0], [1], [0, 0, 1, 1], [], []>} : vector<32x32xbf16>, vector<32x128xbf16>, vector<32x128xf32> -> vector<32x128xf32>
    %250 = arith.truncf %249 : vector<32x128xf32> to vector<32x128xbf16>
    %251 = tpu.concatenate %250, %243 in 1 : vector<32x128xbf16>, vector<32x128xbf16> -> vector<32x256xbf16>
    %cst_210 = arith.constant dense<0.000000e+00> : vector<32x128xf32>
    %252 = tpu.matmul %251, %246, %cst_210 {dimension_numbers = #tpu.dot_dimension_numbers<[1], [0], [0], [1], [0, 0, 1, 1], [], []>} : vector<32x256xbf16>, vector<256x128xbf16>, vector<32x128xf32> -> vector<32x128xf32>
    %253 = vector.broadcast %244 : vector<1x128xf32> to vector<32x128xf32>
    %254 = arith.addf %252, %253 : vector<32x128xf32>
    %cst_211 = arith.constant 0.000000e+00 : f32
    %255 = vector.broadcast %cst_211 : f32 to vector<32x128xf32>
    %256 = arith.maximumf %254, %255 : vector<32x128xf32>
    %257 = arith.truncf %256 : vector<32x128xf32> to vector<32x128xbf16>
    %c4864 = arith.constant 4864 : index
    %c0_212 = arith.constant 0 : index
    %258 = vector.load %arg12[%c4864, %c0_212] : memref<6144x128xbf16, #tpu.memory_space<vmem>>, vector<256x128xbf16>
    %c6_213 = arith.constant 6 : index
    %c0_214 = arith.constant 0 : index
    %c0_215 = arith.constant 0 : index
    %259 = vector.load %arg7[%c6_213, %c0_214, %c0_215] : memref<9x32x32xbf16, #tpu.memory_space<vmem>>, vector<1x32x32xbf16>
    %260 = vector.shape_cast %259 : vector<1x32x32xbf16> to vector<32x32xbf16>
    %cst_216 = arith.constant dense<0.000000e+00> : vector<32x128xf32>
    %261 = tpu.matmul %260, %257, %cst_216 {dimension_numbers = #tpu.dot_dimension_numbers<[1], [0], [0], [1], [0, 0, 1, 1], [], []>} : vector<32x32xbf16>, vector<32x128xbf16>, vector<32x128xf32> -> vector<32x128xf32>
    %262 = arith.truncf %261 : vector<32x128xf32> to vector<32x128xbf16>
    %263 = tpu.concatenate %262, %257 in 1 : vector<32x128xbf16>, vector<32x128xbf16> -> vector<32x256xbf16>
    %cst_217 = arith.constant dense<0.000000e+00> : vector<32x128xf32>
    %264 = tpu.matmul %263, %258, %cst_217 {dimension_numbers = #tpu.dot_dimension_numbers<[1], [0], [0], [1], [0, 0, 1, 1], [], []>} : vector<32x256xbf16>, vector<256x128xbf16>, vector<32x128xf32> -> vector<32x128xf32>
    %265 = vector.broadcast %245 : vector<1x128xf32> to vector<32x128xf32>
    %266 = arith.addf %264, %265 : vector<32x128xf32>
    %cst_218 = arith.constant 0.000000e+00 : f32
    %267 = vector.broadcast %cst_218 : f32 to vector<32x128xf32>
    %268 = arith.maximumf %266, %267 : vector<32x128xf32>
    %269 = arith.addf %268, %238 : vector<32x128xf32>
    %cst_219 = arith.constant 0.000000e+00 : f32
    %270 = vector.broadcast %cst_219 : f32 to vector<32x128xf32>
    %271 = arith.maximumf %269, %270 : vector<32x128xf32>
    %c4_i32_220 = arith.constant 4 : i32
    %c5120_i32_221 = arith.constant 5120 : i32
    %c0_i32_222 = arith.constant 0 : i32
    %272 = tpu.memref_slice %arg10[%c5120_i32_221, %c0_i32_222] : memref<6144x128xbf16, #tpu.memory_space<any>> -> memref<256x128xbf16, #tpu.memory_space<any>>
    %c5120_i32_223 = arith.constant 5120 : i32
    %c0_i32_224 = arith.constant 0 : i32
    %273 = tpu.memref_slice %arg12[%c5120_i32_223, %c0_i32_224] : memref<6144x128xbf16, #tpu.memory_space<vmem>> -> memref<256x128xbf16, #tpu.memory_space<vmem>>
    %274 = tpu.memref_slice %arg13[%c4_i32_220] : memref<8x!tpu.dma_semaphore, #tpu.memory_space<semaphore_mem>> -> memref<1x!tpu.dma_semaphore, #tpu.memory_space<semaphore_mem>>
    %275 = tpu.memref_squeeze %274 : memref<1x!tpu.dma_semaphore, #tpu.memory_space<semaphore_mem>> -> memref<!tpu.dma_semaphore, #tpu.memory_space<semaphore_mem>>
    tpu.wait_dma2 semaphore(%275 : memref<!tpu.dma_semaphore, #tpu.memory_space<semaphore_mem>>) src(%272 : memref<256x128xbf16, #tpu.memory_space<any>>) dst(%273 : memref<256x128xbf16, #tpu.memory_space<vmem>>)
    %276 = arith.truncf %271 : vector<32x128xf32> to vector<32x128xbf16>
    %c8_225 = arith.constant 8 : index
    %c0_226 = arith.constant 0 : index
    %277 = vector.load %arg6[%c8_225, %c0_226] : memref<16x128xf32, #tpu.memory_space<vmem>>, vector<1x128xf32>
    %c9 = arith.constant 9 : index
    %c0_227 = arith.constant 0 : index
    %278 = vector.load %arg6[%c9, %c0_227] : memref<16x128xf32, #tpu.memory_space<vmem>>, vector<1x128xf32>
    %c5120 = arith.constant 5120 : index
    %c0_228 = arith.constant 0 : index
    %279 = vector.load %arg12[%c5120, %c0_228] : memref<6144x128xbf16, #tpu.memory_space<vmem>>, vector<128x128xbf16>
    %cst_229 = arith.constant dense<0.000000e+00> : vector<32x128xf32>
    %280 = tpu.matmul %276, %279, %cst_229 {dimension_numbers = #tpu.dot_dimension_numbers<[1], [0], [0], [1], [0, 0, 1, 1], [], []>} : vector<32x128xbf16>, vector<128x128xbf16>, vector<32x128xf32> -> vector<32x128xf32>
    %281 = vector.broadcast %277 : vector<1x128xf32> to vector<32x128xf32>
    %282 = arith.addf %280, %281 : vector<32x128xf32>
    %cst_230 = arith.constant 0.000000e+00 : f32
    %283 = vector.broadcast %cst_230 : f32 to vector<32x128xf32>
    %284 = arith.maximumf %282, %283 : vector<32x128xf32>
    %285 = arith.truncf %284 : vector<32x128xf32> to vector<32x128xbf16>
    %c5248 = arith.constant 5248 : index
    %c0_231 = arith.constant 0 : index
    %286 = vector.load %arg12[%c5248, %c0_231] : memref<6144x128xbf16, #tpu.memory_space<vmem>>, vector<128x128xbf16>
    %cst_232 = arith.constant dense<0.000000e+00> : vector<32x128xf32>
    %287 = tpu.matmul %285, %286, %cst_232 {dimension_numbers = #tpu.dot_dimension_numbers<[1], [0], [0], [1], [0, 0, 1, 1], [], []>} : vector<32x128xbf16>, vector<128x128xbf16>, vector<32x128xf32> -> vector<32x128xf32>
    %288 = vector.broadcast %278 : vector<1x128xf32> to vector<32x128xf32>
    %289 = arith.addf %287, %288 : vector<32x128xf32>
    %cst_233 = arith.constant 0.000000e+00 : f32
    %290 = vector.broadcast %cst_233 : f32 to vector<32x128xf32>
    %291 = arith.maximumf %289, %290 : vector<32x128xf32>
    %292 = arith.addf %291, %271 : vector<32x128xf32>
    %cst_234 = arith.constant 0.000000e+00 : f32
    %293 = vector.broadcast %cst_234 : f32 to vector<32x128xf32>
    %294 = arith.maximumf %292, %293 : vector<32x128xf32>
    %c5_i32_235 = arith.constant 5 : i32
    %c5376_i32_236 = arith.constant 5376 : i32
    %c0_i32_237 = arith.constant 0 : i32
    %295 = tpu.memref_slice %arg10[%c5376_i32_236, %c0_i32_237] : memref<6144x128xbf16, #tpu.memory_space<any>> -> memref<256x128xbf16, #tpu.memory_space<any>>
    %c5376_i32_238 = arith.constant 5376 : i32
    %c0_i32_239 = arith.constant 0 : i32
    %296 = tpu.memref_slice %arg12[%c5376_i32_238, %c0_i32_239] : memref<6144x128xbf16, #tpu.memory_space<vmem>> -> memref<256x128xbf16, #tpu.memory_space<vmem>>
    %297 = tpu.memref_slice %arg13[%c5_i32_235] : memref<8x!tpu.dma_semaphore, #tpu.memory_space<semaphore_mem>> -> memref<1x!tpu.dma_semaphore, #tpu.memory_space<semaphore_mem>>
    %298 = tpu.memref_squeeze %297 : memref<1x!tpu.dma_semaphore, #tpu.memory_space<semaphore_mem>> -> memref<!tpu.dma_semaphore, #tpu.memory_space<semaphore_mem>>
    tpu.wait_dma2 semaphore(%298 : memref<!tpu.dma_semaphore, #tpu.memory_space<semaphore_mem>>) src(%295 : memref<256x128xbf16, #tpu.memory_space<any>>) dst(%296 : memref<256x128xbf16, #tpu.memory_space<vmem>>)
    %299 = arith.truncf %294 : vector<32x128xf32> to vector<32x128xbf16>
    %c10 = arith.constant 10 : index
    %c0_240 = arith.constant 0 : index
    %300 = vector.load %arg6[%c10, %c0_240] : memref<16x128xf32, #tpu.memory_space<vmem>>, vector<1x128xf32>
    %c11 = arith.constant 11 : index
    %c0_241 = arith.constant 0 : index
    %301 = vector.load %arg6[%c11, %c0_241] : memref<16x128xf32, #tpu.memory_space<vmem>>, vector<1x128xf32>
    %c5376 = arith.constant 5376 : index
    %c0_242 = arith.constant 0 : index
    %302 = vector.load %arg12[%c5376, %c0_242] : memref<6144x128xbf16, #tpu.memory_space<vmem>>, vector<128x128xbf16>
    %cst_243 = arith.constant dense<0.000000e+00> : vector<32x128xf32>
    %303 = tpu.matmul %299, %302, %cst_243 {dimension_numbers = #tpu.dot_dimension_numbers<[1], [0], [0], [1], [0, 0, 1, 1], [], []>} : vector<32x128xbf16>, vector<128x128xbf16>, vector<32x128xf32> -> vector<32x128xf32>
    %304 = vector.broadcast %300 : vector<1x128xf32> to vector<32x128xf32>
    %305 = arith.addf %303, %304 : vector<32x128xf32>
    %cst_244 = arith.constant 0.000000e+00 : f32
    %306 = vector.broadcast %cst_244 : f32 to vector<32x128xf32>
    %307 = arith.maximumf %305, %306 : vector<32x128xf32>
    %308 = arith.truncf %307 : vector<32x128xf32> to vector<32x128xbf16>
    %c5504 = arith.constant 5504 : index
    %c0_245 = arith.constant 0 : index
    %309 = vector.load %arg12[%c5504, %c0_245] : memref<6144x128xbf16, #tpu.memory_space<vmem>>, vector<128x128xbf16>
    %cst_246 = arith.constant dense<0.000000e+00> : vector<32x128xf32>
    %310 = tpu.matmul %308, %309, %cst_246 {dimension_numbers = #tpu.dot_dimension_numbers<[1], [0], [0], [1], [0, 0, 1, 1], [], []>} : vector<32x128xbf16>, vector<128x128xbf16>, vector<32x128xf32> -> vector<32x128xf32>
    %311 = vector.broadcast %301 : vector<1x128xf32> to vector<32x128xf32>
    %312 = arith.addf %310, %311 : vector<32x128xf32>
    %cst_247 = arith.constant 0.000000e+00 : f32
    %313 = vector.broadcast %cst_247 : f32 to vector<32x128xf32>
    %314 = arith.maximumf %312, %313 : vector<32x128xf32>
    %315 = arith.addf %314, %294 : vector<32x128xf32>
    %cst_248 = arith.constant 0.000000e+00 : f32
    %316 = vector.broadcast %cst_248 : f32 to vector<32x128xf32>
    %317 = arith.maximumf %315, %316 : vector<32x128xf32>
    %c6_i32_249 = arith.constant 6 : i32
    %c5632_i32_250 = arith.constant 5632 : i32
    %c0_i32_251 = arith.constant 0 : i32
    %318 = tpu.memref_slice %arg10[%c5632_i32_250, %c0_i32_251] : memref<6144x128xbf16, #tpu.memory_space<any>> -> memref<256x128xbf16, #tpu.memory_space<any>>
    %c5632_i32_252 = arith.constant 5632 : i32
    %c0_i32_253 = arith.constant 0 : i32
    %319 = tpu.memref_slice %arg12[%c5632_i32_252, %c0_i32_253] : memref<6144x128xbf16, #tpu.memory_space<vmem>> -> memref<256x128xbf16, #tpu.memory_space<vmem>>
    %320 = tpu.memref_slice %arg13[%c6_i32_249] : memref<8x!tpu.dma_semaphore, #tpu.memory_space<semaphore_mem>> -> memref<1x!tpu.dma_semaphore, #tpu.memory_space<semaphore_mem>>
    %321 = tpu.memref_squeeze %320 : memref<1x!tpu.dma_semaphore, #tpu.memory_space<semaphore_mem>> -> memref<!tpu.dma_semaphore, #tpu.memory_space<semaphore_mem>>
    tpu.wait_dma2 semaphore(%321 : memref<!tpu.dma_semaphore, #tpu.memory_space<semaphore_mem>>) src(%318 : memref<256x128xbf16, #tpu.memory_space<any>>) dst(%319 : memref<256x128xbf16, #tpu.memory_space<vmem>>)
    %322 = arith.truncf %317 : vector<32x128xf32> to vector<32x128xbf16>
    %c12 = arith.constant 12 : index
    %c0_254 = arith.constant 0 : index
    %323 = vector.load %arg6[%c12, %c0_254] : memref<16x128xf32, #tpu.memory_space<vmem>>, vector<1x128xf32>
    %c13 = arith.constant 13 : index
    %c0_255 = arith.constant 0 : index
    %324 = vector.load %arg6[%c13, %c0_255] : memref<16x128xf32, #tpu.memory_space<vmem>>, vector<1x128xf32>
    %c5632 = arith.constant 5632 : index
    %c0_256 = arith.constant 0 : index
    %325 = vector.load %arg12[%c5632, %c0_256] : memref<6144x128xbf16, #tpu.memory_space<vmem>>, vector<128x128xbf16>
    %cst_257 = arith.constant dense<0.000000e+00> : vector<32x128xf32>
    %326 = tpu.matmul %322, %325, %cst_257 {dimension_numbers = #tpu.dot_dimension_numbers<[1], [0], [0], [1], [0, 0, 1, 1], [], []>} : vector<32x128xbf16>, vector<128x128xbf16>, vector<32x128xf32> -> vector<32x128xf32>
    %327 = vector.broadcast %323 : vector<1x128xf32> to vector<32x128xf32>
    %328 = arith.addf %326, %327 : vector<32x128xf32>
    %cst_258 = arith.constant 0.000000e+00 : f32
    %329 = vector.broadcast %cst_258 : f32 to vector<32x128xf32>
    %330 = arith.maximumf %328, %329 : vector<32x128xf32>
    %331 = arith.truncf %330 : vector<32x128xf32> to vector<32x128xbf16>
    %c5760 = arith.constant 5760 : index
    %c0_259 = arith.constant 0 : index
    %332 = vector.load %arg12[%c5760, %c0_259] : memref<6144x128xbf16, #tpu.memory_space<vmem>>, vector<128x128xbf16>
    %cst_260 = arith.constant dense<0.000000e+00> : vector<32x128xf32>
    %333 = tpu.matmul %331, %332, %cst_260 {dimension_numbers = #tpu.dot_dimension_numbers<[1], [0], [0], [1], [0, 0, 1, 1], [], []>} : vector<32x128xbf16>, vector<128x128xbf16>, vector<32x128xf32> -> vector<32x128xf32>
    %334 = vector.broadcast %324 : vector<1x128xf32> to vector<32x128xf32>
    %335 = arith.addf %333, %334 : vector<32x128xf32>
    %cst_261 = arith.constant 0.000000e+00 : f32
    %336 = vector.broadcast %cst_261 : f32 to vector<32x128xf32>
    %337 = arith.maximumf %335, %336 : vector<32x128xf32>
    %338 = arith.addf %337, %317 : vector<32x128xf32>
    %cst_262 = arith.constant 0.000000e+00 : f32
    %339 = vector.broadcast %cst_262 : f32 to vector<32x128xf32>
    %340 = arith.maximumf %338, %339 : vector<32x128xf32>
    %c7_i32_263 = arith.constant 7 : i32
    %c5888_i32_264 = arith.constant 5888 : i32
    %c0_i32_265 = arith.constant 0 : i32
    %341 = tpu.memref_slice %arg10[%c5888_i32_264, %c0_i32_265] : memref<6144x128xbf16, #tpu.memory_space<any>> -> memref<256x128xbf16, #tpu.memory_space<any>>
    %c5888_i32_266 = arith.constant 5888 : i32
    %c0_i32_267 = arith.constant 0 : i32
    %342 = tpu.memref_slice %arg12[%c5888_i32_266, %c0_i32_267] : memref<6144x128xbf16, #tpu.memory_space<vmem>> -> memref<256x128xbf16, #tpu.memory_space<vmem>>
    %343 = tpu.memref_slice %arg13[%c7_i32_263] : memref<8x!tpu.dma_semaphore, #tpu.memory_space<semaphore_mem>> -> memref<1x!tpu.dma_semaphore, #tpu.memory_space<semaphore_mem>>
    %344 = tpu.memref_squeeze %343 : memref<1x!tpu.dma_semaphore, #tpu.memory_space<semaphore_mem>> -> memref<!tpu.dma_semaphore, #tpu.memory_space<semaphore_mem>>
    tpu.wait_dma2 semaphore(%344 : memref<!tpu.dma_semaphore, #tpu.memory_space<semaphore_mem>>) src(%341 : memref<256x128xbf16, #tpu.memory_space<any>>) dst(%342 : memref<256x128xbf16, #tpu.memory_space<vmem>>)
    %345 = arith.truncf %340 : vector<32x128xf32> to vector<32x128xbf16>
    %c14 = arith.constant 14 : index
    %c0_268 = arith.constant 0 : index
    %346 = vector.load %arg6[%c14, %c0_268] : memref<16x128xf32, #tpu.memory_space<vmem>>, vector<1x128xf32>
    %c15 = arith.constant 15 : index
    %c0_269 = arith.constant 0 : index
    %347 = vector.load %arg6[%c15, %c0_269] : memref<16x128xf32, #tpu.memory_space<vmem>>, vector<1x128xf32>
    %c5888 = arith.constant 5888 : index
    %c0_270 = arith.constant 0 : index
    %348 = vector.load %arg12[%c5888, %c0_270] : memref<6144x128xbf16, #tpu.memory_space<vmem>>, vector<128x128xbf16>
    %cst_271 = arith.constant dense<0.000000e+00> : vector<32x128xf32>
    %349 = tpu.matmul %345, %348, %cst_271 {dimension_numbers = #tpu.dot_dimension_numbers<[1], [0], [0], [1], [0, 0, 1, 1], [], []>} : vector<32x128xbf16>, vector<128x128xbf16>, vector<32x128xf32> -> vector<32x128xf32>
    %350 = vector.broadcast %346 : vector<1x128xf32> to vector<32x128xf32>
    %351 = arith.addf %349, %350 : vector<32x128xf32>
    %cst_272 = arith.constant 0.000000e+00 : f32
    %352 = vector.broadcast %cst_272 : f32 to vector<32x128xf32>
    %353 = arith.maximumf %351, %352 : vector<32x128xf32>
    %354 = arith.truncf %353 : vector<32x128xf32> to vector<32x128xbf16>
    %c6016 = arith.constant 6016 : index
    %c0_273 = arith.constant 0 : index
    %355 = vector.load %arg12[%c6016, %c0_273] : memref<6144x128xbf16, #tpu.memory_space<vmem>>, vector<128x128xbf16>
    %cst_274 = arith.constant dense<0.000000e+00> : vector<32x128xf32>
    %356 = tpu.matmul %354, %355, %cst_274 {dimension_numbers = #tpu.dot_dimension_numbers<[1], [0], [0], [1], [0, 0, 1, 1], [], []>} : vector<32x128xbf16>, vector<128x128xbf16>, vector<32x128xf32> -> vector<32x128xf32>
    %357 = vector.broadcast %347 : vector<1x128xf32> to vector<32x128xf32>
    %358 = arith.addf %356, %357 : vector<32x128xf32>
    %cst_275 = arith.constant 0.000000e+00 : f32
    %359 = vector.broadcast %cst_275 : f32 to vector<32x128xf32>
    %360 = arith.maximumf %358, %359 : vector<32x128xf32>
    %361 = arith.addf %360, %340 : vector<32x128xf32>
    %cst_276 = arith.constant 0.000000e+00 : f32
    %362 = vector.broadcast %cst_276 : f32 to vector<32x128xf32>
    %363 = arith.maximumf %361, %362 : vector<32x128xf32>
    %364 = vector.shape_cast %363 : vector<32x128xf32> to vector<2x16x128xf32>
    %cst_277 = arith.constant dense<0.000000e+00> : vector<2x128xf32>
    %365 = vector.multi_reduction <add>, %364, %cst_277 [1] : vector<2x16x128xf32> to vector<2x128xf32>
    %c0_278 = arith.constant 0 : index
    %c0_279 = arith.constant 0 : index
    %366 = vector.load %arg8[%c0_278, %c0_279] : memref<1x128xf32, #tpu.memory_space<vmem>>, vector<1x128xf32>
    %367 = vector.broadcast %366 : vector<1x128xf32> to vector<2x128xf32>
    %368 = arith.mulf %365, %367 : vector<2x128xf32>
    %cst_280 = arith.constant dense<0.000000e+00> : vector<2xf32>
    %369 = vector.multi_reduction <add>, %368, %cst_280 [1] : vector<2x128xf32> to vector<2xf32>
    %370 = vector.shape_cast %369 : vector<2xf32> to vector<2x1xf32>
    %c0_281 = arith.constant 0 : index
    %c0_282 = arith.constant 0 : index
    %371 = vector.load %arg9[%c0_281, %c0_282] : memref<1x1xf32, #tpu.memory_space<vmem>>, vector<1x1xf32>
    %372 = vector.broadcast %371 : vector<1x1xf32> to vector<2x1xf32>
    %373 = arith.addf %370, %372 : vector<2x1xf32>
    %c0_283 = arith.constant 0 : index
    %c0_284 = arith.constant 0 : index
    %374 = vector.load %arg11[%c0_283, %c0_284] : memref<2x1xf32, #tpu.memory_space<vmem>>, vector<2x1xf32>
    tpu.vector_store %arg11[%c0_283, %c0_284], %373 {strides = array<i32>} : memref<2x1xf32, #tpu.memory_space<vmem>>, vector<2x1xf32>,
    return
  }
  func.func @transform_0(%arg0: i32) -> (i32, i32) {
    %c0_i32 = arith.constant 0 : i32
    %c0_i32_0 = arith.constant 0 : i32
    %c0_i32_1 = arith.constant 0 : i32
    return %c0_i32, %c0_i32_0 : i32, i32
  }
  func.func @transform_1(%arg0: i32) -> (i32, i32) {
    %c0_i32 = arith.constant 0 : i32
    %c0_i32_0 = arith.constant 0 : i32
    %c0_i32_1 = arith.constant 0 : i32
    return %c0_i32, %c0_i32_0 : i32, i32
  }
  func.func @transform_2(%arg0: i32) -> (i32, i32) {
    %c0_i32 = arith.constant 0 : i32
    %c0_i32_0 = arith.constant 0 : i32
    %c0_i32_1 = arith.constant 0 : i32
    return %c0_i32, %c0_i32_0 : i32, i32
  }
  func.func @transform_3(%arg0: i32) -> (i32, i32) {
    %c0_i32 = arith.constant 0 : i32
    %c0_i32_0 = arith.constant 0 : i32
    %c0_i32_1 = arith.constant 0 : i32
    return %c0_i32, %c0_i32_0 : i32, i32
  }
  func.func @transform_4(%arg0: i32) -> (i32, i32) {
    %c0_i32 = arith.constant 0 : i32
    %c0_i32_0 = arith.constant 0 : i32
    %c0_i32_1 = arith.constant 0 : i32
    return %c0_i32, %c0_i32_0 : i32, i32
  }
  func.func @transform_5(%arg0: i32) -> (i32, i32) {
    %c0_i32 = arith.constant 0 : i32
    %c0_i32_0 = arith.constant 0 : i32
    %c0_i32_1 = arith.constant 0 : i32
    return %c0_i32, %c0_i32_0 : i32, i32
  }
  func.func @transform_6(%arg0: i32) -> (i32, i32, i32) {
    %c0_i32 = arith.constant 0 : i32
    %c0_i32_0 = arith.constant 0 : i32
    %c0_i32_1 = arith.constant 0 : i32
    %c0_i32_2 = arith.constant 0 : i32
    return %c0_i32, %c0_i32_0, %c0_i32_1 : i32, i32, i32
  }
  func.func @transform_7(%arg0: i32) -> (i32, i32) {
    %c0_i32 = arith.constant 0 : i32
    %c0_i32_0 = arith.constant 0 : i32
    %c0_i32_1 = arith.constant 0 : i32
    return %c0_i32, %c0_i32_0 : i32, i32
  }
  func.func @transform_8(%arg0: i32) -> (i32, i32) {
    %c0_i32 = arith.constant 0 : i32
    %c0_i32_0 = arith.constant 0 : i32
    %c0_i32_1 = arith.constant 0 : i32
    return %c0_i32, %c0_i32_0 : i32, i32
  }
  func.func @transform_10(%arg0: i32) -> (i32, i32) {
    %c0_i32 = arith.constant 0 : i32
    %c0_i32_0 = arith.constant 0 : i32
    %c0_i32_1 = arith.constant 0 : i32
    return %c0_i32, %c0_i32_0 : i32, i32
  }
}

</mosaic_0001>

<llo_original>
// kernel: forward.1
$region0: #{forward.1}
  #allocation0 [shape = 'u32[]', space=smem, size = 0x4, offset = 0x4, fixed_abs, tag = 'smem constant byte address 0x4 - core index']
  #allocation1 [shape = 'u32[144,128]{1,0:T(1,128)}', space=vmem, size = 0x12000, scoped, tag = 'internal scratch']
  #allocation2 [shape = 'bf16[6144,128]{1,0:T(16,128)(2,1)}', space=vmem, size = 0x180000, scoped, tag = 'scratch operand']
  #allocation3 [shape = 's32[8]{0}', space=sflag, size = 0x20, scoped, tag = 'scratch operand']
  #allocation4 [shape = 'f32[1,1]{1,0:T(1,128)S(1)}', space=vmem, size = 0x200, scoped, tag = 'scoped memory for forward.1']
  #allocation16 [shape = 's32[]', space=sflag, size = 0x4, offset = 0, fixed_abs, tag = 'sflag constant byte address 0x0 - dummy sync flag']
  #allocation17 [shape = 's32[]', space=sflag, size = 0x4, offset = 0, fixed_abs, tag = 'sflag constant byte address 0x0 - dummy sync flag']
  #allocation18 [shape = 'u32[]', space=smem, size = 0x4, offset = 0x44, fixed_abs, tag = 'smem constant byte address 0x44 - assertion arg 0']
  #allocation19 [shape = 'u32[]', space=smem, size = 0x4, offset = 0x48, fixed_abs, tag = 'smem constant byte address 0x48 - assertion arg 1']
  #allocation20 [shape = 's32[]', space=sflag, size = 0x4, offset = 0, fixed_abs, tag = 'sflag constant byte address 0x0 - dummy sync flag']
  #allocation21 [shape = 's32[]', space=sflag, size = 0x4, offset = 0, fixed_abs, tag = 'sflag constant byte address 0x0 - dummy sync flag']
  #allocation22 [shape = 's32[]', space=sflag, size = 0x4, offset = 0, fixed_abs, tag = 'sflag constant byte address 0x0 - dummy sync flag']
  #allocation23 [shape = 's32[]', space=sflag, size = 0x4, offset = 0, fixed_abs, tag = 'sflag constant byte address 0x0 - dummy sync flag']
  #allocation24 [shape = 's32[]', space=sflag, size = 0x4, offset = 0, fixed_abs, tag = 'sflag constant byte address 0x0 - dummy sync flag']
  #allocation25 [shape = 's32[]', space=sflag, size = 0x4, offset = 0, fixed_abs, tag = 'sflag constant byte address 0x0 - dummy sync flag']
  #allocation26 [shape = 's32[]', space=sflag, size = 0x4, offset = 0, fixed_abs, tag = 'sflag constant byte address 0x0 - dummy sync flag']
  #allocation27 [shape = 's32[]', space=sflag, size = 0x4, offset = 0, fixed_abs, tag = 'sflag constant byte address 0x0 - dummy sync flag']
  #allocation28 [shape = 's32[]', space=sflag, size = 0x4, offset = 0, fixed_abs, tag = 'sflag constant byte address 0x0 - dummy sync flag']
  #allocation29 [shape = 's32[]', space=sflag, size = 0x4, offset = 0, fixed_abs, tag = 'sflag constant byte address 0x0 - dummy sync flag']
  #allocation30 [shape = 's32[]', space=sflag, size = 0x4, offset = 0, fixed_abs, tag = 'sflag constant byte address 0x0 - dummy sync flag']
  #allocation31 [shape = 's32[]', space=sflag, size = 0x4, offset = 0, fixed_abs, tag = 'sflag constant byte address 0x0 - dummy sync flag']
  #allocation32 [shape = 's32[]', space=sflag, size = 0x4, offset = 0, fixed_abs, tag = 'sflag constant byte address 0x0 - dummy sync flag']
  #allocation33 [shape = 's32[]', space=sflag, size = 0x4, offset = 0, fixed_abs, tag = 'sflag constant byte address 0x0 - dummy sync flag']
  %s0 = inlined_call_operand.vmem [shape: bf16[32,512], index: 0, kind: input, shape index: {}]
  %s1 = inlined_call_operand.hbm [shape: bf16[512,128], index: 1, kind: input, shape index: {}]
  %s2 = inlined_call_operand.hbm [shape: f32[1,128], index: 2, kind: input, shape index: {}]
  %s3 = inlined_call_operand.hbm [shape: bf16[128,128], index: 3, kind: input, shape index: {}]
  %s4 = inlined_call_operand.hbm [shape: f32[1,128], index: 4, kind: input, shape index: {}]
  %s5 = inlined_call_operand.hbm [shape: f32[16,128], index: 5, kind: input, shape index: {}]
  %s6 = inlined_call_operand.hbm [shape: bf16[9,32,32], index: 6, kind: input, shape index: {}]
  %s7 = inlined_call_operand.hbm [shape: f32[1,128], index: 7, kind: input, shape index: {}]
  %s8 = inlined_call_operand.<no memory space> [shape: f32[1,1], index: 8, kind: input, shape index: {}]
  %s9 = inlined_call_operand.hbm [shape: bf16[6144,128], index: 9, kind: input, shape index: {}]
  %s10 = inlined_call_operand.vmem [shape: f32[2,1], index: 10, kind: output, shape index: {}]
  %s11 = sld [smem:[#allocation0]]
  $region106: #{forward.1} parent=0
    _
  %s13 = ssub.s32 1, %s11
  %s14 = scalar_select 0, %s13, %s11
  %v15 = vstv %s8
  %16 = vst [vmem:[#allocation4] sm:$0x1] %v15
  $region1: #{forward.1} parent=0
    #allocation5 [shape = 'u8[131072]{0}', space=vmem, size = 0x20000, scoped, tag = 'input window, operand 1, single buffered']
    #allocation6 [shape = 's32[1]{0}', space=sflag, size = 0x4, scoped, tag = 'scoped memory for forward.1']
    #allocation7 [shape = 'u8[512]{0}', space=vmem, size = 0x400, scoped, tag = 'input window, operand 2, single buffered']
    #allocation8 [shape = 's32[1]{0}', space=sflag, size = 0x4, scoped, tag = 'scoped memory for forward.1']
    #allocation9 [shape = 'u8[32768]{0}', space=vmem, size = 0x8000, scoped, tag = 'input window, operand 3, single buffered']
    #allocation10 [shape = 'u8[512]{0}', space=vmem, size = 0x400, scoped, tag = 'input window, operand 4, single buffered']
    #allocation11 [shape = 's32[1]{0}', space=sflag, size = 0x4, scoped, tag = 'scoped memory for forward.1']
    #allocation12 [shape = 'u8[8192]{0}', space=vmem, size = 0x2000, scoped, tag = 'input window, operand 5, single buffered']
    #allocation13 [shape = 'u8[73728]{0}', space=vmem, size = 0x12000, scoped, tag = 'input window, operand 6, single buffered']
    #allocation14 [shape = 's32[1]{0}', space=sflag, size = 0x4, scoped, tag = 'scoped memory for forward.1']
    #allocation15 [shape = 'u8[512]{0}', space=vmem, size = 0x400, scoped, tag = 'input window, operand 7, single buffered']
    %17 = vsyncpa [#allocation6], 0
    %18 = vsyncpa [#allocation8], 0
    %19 = vsyncpa [#allocation11], 0
    %20 = vsyncpa [#allocation14], 0
    // Predicated region
    $region2: #{forward.1} parent=1 // pred_check
      _
    $region3: #{forward.1} parent=1 // pred_check_branch
      %22 = sbr.rel (0) target = $region5
    $region4: #{forward.1} parent=1 // pred_region
      _
    $region5: #{forward.1} parent=1 // pred_fallthru
      _
    // Predicated region
    $region6: #{forward.1} parent=1 // pred_check
      _
    $region7: #{forward.1} parent=1 // pred_check_branch
      %24 = sbr.rel (0) target = $region9
    $region8: #{forward.1} parent=1 // pred_region
      %s26 = ssub.s32 4096, 4096
      %27 = vsyncadd [#allocation6], %s26
      %s28 = sshll.u32 [#allocation5], 4
      %s29 = int_to_ptr.vmem [resolvable:$true] %s28
      %34 = dma.hbm_to_vmem [thread:$0]  %s1, 4096, %s29, [#allocation6], 64, 64, 4
    $region9: #{forward.1} parent=1 // pred_fallthru
      _
    // Predicated region
    $region10: #{forward.1} parent=1 // pred_check
      _
    $region11: #{forward.1} parent=1 // pred_check_branch
      %36 = sbr.rel (0) target = $region13
    $region12: #{forward.1} parent=1 // pred_region
      %s38 = ssub.s32 16, 16
      %39 = vsyncadd [#allocation8], %s38
      %s41 = sshll.u32 [#allocation7], 4
      %s42 = int_to_ptr.vmem [resolvable:$true] %s41
      %44 = dma.hbm_to_vmem [thread:$0]  %s2, 16, %s42, [#allocation8]
    $region13: #{forward.1} parent=1 // pred_fallthru
      _
    // Predicated region
    $region14: #{forward.1} parent=1 // pred_check
      _
    $region15: #{forward.1} parent=1 // pred_check_branch
      %46 = sbr.rel (0) target = $region17
    $region16: #{forward.1} parent=1 // pred_region
      %s48 = ssub.s32 1024, 1024
      %49 = vsyncadd [#allocation8], %s48
      %s50 = sshll.u32 [#allocation9], 4
      %s51 = int_to_ptr.vmem [resolvable:$true] %s50
      %56 = dma.hbm_to_vmem [thread:$0]  %s3, 1024, %s51, [#allocation8], 64, 64, 4
    $region17: #{forward.1} parent=1 // pred_fallthru
      _
    // Predicated region
    $region18: #{forward.1} parent=1 // pred_check
      _
    $region19: #{forward.1} parent=1 // pred_check_branch
      %58 = sbr.rel (0) target = $region21
    $region20: #{forward.1} parent=1 // pred_region
      %s60 = ssub.s32 16, 16
      %61 = vsyncadd [#allocation11], %s60
      %s63 = sshll.u32 [#allocation10], 4
      %s64 = int_to_ptr.vmem [resolvable:$true] %s63
      %66 = dma.hbm_to_vmem [thread:$0]  %s4, 16, %s64, [#allocation11]
    $region21: #{forward.1} parent=1 // pred_fallthru
      _
    // Predicated region
    $region22: #{forward.1} parent=1 // pred_check
      _
    $region23: #{forward.1} parent=1 // pred_check_branch
      %68 = sbr.rel (0) target = $region25
    $region24: #{forward.1} parent=1 // pred_region
      %s70 = ssub.s32 256, 256
      %71 = vsyncadd [#allocation11], %s70
      %s72 = sshll.u32 [#allocation12], 4
      %s73 = int_to_ptr.vmem [resolvable:$true] %s72
      %78 = dma.hbm_to_vmem [thread:$0]  %s5, 256, %s73, [#allocation11], 128, 128, 8
    $region25: #{forward.1} parent=1 // pred_fallthru
      _
    // Predicated region
    $region26: #{forward.1} parent=1 // pred_check
      _
    $region27: #{forward.1} parent=1 // pred_check_branch
      %80 = sbr.rel (0) target = $region29
    $region28: #{forward.1} parent=1 // pred_region
      %s82 = ssub.s32 2304, 2304
      %83 = vsyncadd [#allocation14], %s82
      %s84 = sshll.u32 [#allocation13], 4
      %s85 = int_to_ptr.vmem [resolvable:$true] %s84
      %90 = dma.hbm_to_vmem [thread:$0]  %s6, 2304, %s85, [#allocation14], 64, 64, 4
    $region29: #{forward.1} parent=1 // pred_fallthru
      _
    // Predicated region
    $region30: #{forward.1} parent=1 // pred_check
      _
    $region31: #{forward.1} parent=1 // pred_check_branch
      %92 = sbr.rel (0) target = $region33
    $region32: #{forward.1} parent=1 // pred_region
      %s94 = ssub.s32 16, 16
      %95 = vsyncadd [#allocation14], %s94
      %s97 = sshll.u32 [#allocation15], 4
      %s98 = int_to_ptr.vmem [resolvable:$true] %s97
      %100 = dma.hbm_to_vmem [thread:$0]  %s7, 16, %s98, [#allocation14]
    $region33: #{forward.1} parent=1 // pred_fallthru
      _
    // Predicated region
    $region34: #{forward.1} parent=1 // pred_check
      _
    $region35: #{forward.1} parent=1 // pred_check_branch
      %102 = sbr.rel (0) target = $region37
    $region36: #{forward.1} parent=1 // pred_region
      _
    $region37: #{forward.1} parent=1 // pred_fallthru
      _
    // Predicated region
    $region38: #{forward.1} parent=1 // pred_check
      _
    $region39: #{forward.1} parent=1 // pred_check_branch
      %104 = sbr.rel (0) target = $region41
    $region40: #{forward.1} parent=1 // pred_region
      %105 = dma.done [#allocation6], 4096
    $region41: #{forward.1} parent=1 // pred_fallthru
      _
    // Predicated region
    $region42: #{forward.1} parent=1 // pred_check
      _
    $region43: #{forward.1} parent=1 // pred_check_branch
      %107 = sbr.rel (0) target = $region45
    $region44: #{forward.1} parent=1 // pred_region
      %108 = dma.done [#allocation8], 16
    $region45: #{forward.1} parent=1 // pred_fallthru
      _
    // Predicated region
    $region46: #{forward.1} parent=1 // pred_check
      _
    $region47: #{forward.1} parent=1 // pred_check_branch
      %110 = sbr.rel (0) target = $region49
    $region48: #{forward.1} parent=1 // pred_region
      %111 = dma.done [#allocation8], 1024
    $region49: #{forward.1} parent=1 // pred_fallthru
      _
    // Predicated region
    $region50: #{forward.1} parent=1 // pred_check
      _
    $region51: #{forward.1} parent=1 // pred_check_branch
      %113 = sbr.rel (0) target = $region53
    $region52: #{forward.1} parent=1 // pred_region
      %114 = dma.done [#allocation11], 16
    $region53: #{forward.1} parent=1 // pred_fallthru
      _
    // Predicated region
    $region54: #{forward.1} parent=1 // pred_check
      _
    $region55: #{forward.1} parent=1 // pred_check_branch
      %116 = sbr.rel (0) target = $region57
    $region56: #{forward.1} parent=1 // pred_region
      %117 = dma.done [#allocation11], 256
    $region57: #{forward.1} parent=1 // pred_fallthru
      _
    // Predicated region
    $region58: #{forward.1} parent=1 // pred_check
      _
    $region59: #{forward.1} parent=1 // pred_check_branch
      %119 = sbr.rel (0) target = $region61
    $region60: #{forward.1} parent=1 // pred_region
      %120 = dma.done [#allocation14], 2304
    $region61: #{forward.1} parent=1 // pred_fallthru
      _
    // Predicated region
    $region62: #{forward.1} parent=1 // pred_check
      _
    $region63: #{forward.1} parent=1 // pred_check_branch
      %122 = sbr.rel (0) target = $region65
    $region64: #{forward.1} parent=1 // pred_region
      %123 = dma.done [#allocation14], 16
    $region65: #{forward.1} parent=1 // pred_fallthru
      _
    // Predicated region
    $region66: #{forward.1} parent=1 // pred_check
      _
    $region67: #{forward.1} parent=1 // pred_check_branch
      %126 = sbr.rel target = $region69
    $region68: #{forward.1} parent=1 // pred_region
      %127 = sst [smem:[#allocation18]] [#allocation17]
      %128 = sst [smem:[#allocation19]] [#allocation16]
    $region69: #{forward.1} parent=1 // pred_fallthru
      _
    %130 = shalt.err (0)
    %s132 = sshll.u32 [#allocation2], 4
    %s133 = int_to_ptr.vmem [resolvable:$true] %s132
    %135 = dma.hbm_to_vmem [thread:$0]  %s9, 14336, %s133, [#allocation3]
    %s136 = scalar_lea.hbm %s9, 14336
    %s137 = scalar_lea.vmem [#allocation2], 896
    %s138 = scalar_lea.sflag [#allocation3], 1
    // Predicated region
    $region70: #{forward.1} parent=1 // pred_check
      _
    $region71: #{forward.1} parent=1 // pred_check_branch
      %140 = sbr.rel target = $region73
    $region72: #{forward.1} parent=1 // pred_region
      %141 = sst [smem:[#allocation18]] [#allocation21]
      %142 = sst [smem:[#allocation19]] [#allocation20]
    $region73: #{forward.1} parent=1 // pred_fallthru
      _
    %144 = shalt.err (0)
    %s146 = sshll.u32 %s137, 4
    %s147 = int_to_ptr.vmem [resolvable:$true] %s146
    %149 = dma.hbm_to_vmem [thread:$0]  %s136, 14336, %s147, %s138
    %s150 = scalar_lea.hbm %s9, 28672
    %s151 = scalar_lea.vmem [#allocation2], 1792
    %s152 = scalar_lea.sflag [#allocation3], 2
    // Predicated region
    $region74: #{forward.1} parent=1 // pred_check
      _
    $region75: #{forward.1} parent=1 // pred_check_branch
      %154 = sbr.rel target = $region77
    $region76: #{forward.1} parent=1 // pred_region
      %155 = sst [smem:[#allocation18]] [#allocation23]
      %156 = sst [smem:[#allocation19]] [#allocation22]
    $region77: #{forward.1} parent=1 // pred_fallthru
      _
    %158 = shalt.err (0)
    %s160 = sshll.u32 %s151, 4
    %s161 = int_to_ptr.vmem [resolvable:$true] %s160
    %163 = dma.hbm_to_vmem [thread:$0]  %s150, 8192, %s161, %s152
    %s164 = scalar_lea.hbm %s9, 36864
    %s165 = scalar_lea.vmem [#allocation2], 2304
    %s166 = scalar_lea.sflag [#allocation3], 3
    // Predicated region
    $region78: #{forward.1} parent=1 // pred_check
      _
    $region79: #{forward.1} parent=1 // pred_check_branch
      %168 = sbr.rel target = $region81
    $region80: #{forward.1} parent=1 // pred_region
      %169 = sst [smem:[#allocation18]] [#allocation25]
      %170 = sst [smem:[#allocation19]] [#allocation24]
    $region81: #{forward.1} parent=1 // pred_fallthru
      _
    %172 = shalt.err (0)
    %s174 = sshll.u32 %s165, 4
    %s175 = int_to_ptr.vmem [resolvable:$true] %s174
    %177 = dma.hbm_to_vmem [thread:$0]  %s164, 4096, %s175, %s166
    %s178 = scalar_lea.hbm %s9, 40960
    %s179 = scalar_lea.vmem [#allocation2], 2560
    %s180 = scalar_lea.sflag [#allocation3], 4
    // Predicated region
    $region82: #{forward.1} parent=1 // pred_check
      _
    $region83: #{forward.1} parent=1 // pred_check_branch
      %182 = sbr.rel target = $region85
    $region84: #{forward.1} parent=1 // pred_region
      %183 = sst [smem:[#allocation18]] [#allocation27]
      %184 = sst [smem:[#allocation19]] [#allocation26]
    $region85: #{forward.1} parent=1 // pred_fallthru
      _
    %186 = shalt.err (0)
    %s188 = sshll.u32 %s179, 4
    %s189 = int_to_ptr.vmem [resolvable:$true] %s188
    %191 = dma.hbm_to_vmem [thread:$0]  %s178, 2048, %s189, %s180
    %s192 = scalar_lea.hbm %s9, 43008
    %s193 = scalar_lea.vmem [#allocation2], 2688
    %s194 = scalar_lea.sflag [#allocation3], 5
    // Predicated region
    $region86: #{forward.1} parent=1 // pred_check
      _
    $region87: #{forward.1} parent=1 // pred_check_branch
      %196 = sbr.rel target = $region89
    $region88: #{forward.1} parent=1 // pred_region
      %197 = sst [smem:[#allocation18]] [#allocation29]
      %198 = sst [smem:[#allocation19]] [#allocation28]
    $region89: #{forward.1} parent=1 // pred_fallthru
      _
    %200 = shalt.err (0)
    %s202 = sshll.u32 %s193, 4
    %s203 = int_to_ptr.vmem [resolvable:$true] %s202
    %205 = dma.hbm_to_vmem [thread:$0]  %s192, 2048, %s203, %s194
    %s206 = scalar_lea.hbm %s9, 45056
    %s207 = scalar_lea.vmem [#allocation2], 2816
    %s208 = scalar_lea.sflag [#allocation3], 6
    // Predicated region
    $region90: #{forward.1} parent=1 // pred_check
      _
    $region91: #{forward.1} parent=1 // pred_check_branch
      %210 = sbr.rel target = $region93
    $region92: #{forward.1} parent=1 // pred_region
      %211 = sst [smem:[#allocation18]] [#allocation31]
      %212 = sst [smem:[#allocation19]] [#allocation30]
    $region93: #{forward.1} parent=1 // pred_fallthru
      _
    %214 = shalt.err (0)
    %s216 = sshll.u32 %s207, 4
    %s217 = int_to_ptr.vmem [resolvable:$true] %s216
    %219 = dma.hbm_to_vmem [thread:$0]  %s206, 2048, %s217, %s208
    %s220 = scalar_lea.hbm %s9, 47104
    %s221 = scalar_lea.vmem [#allocation2], 2944
    %s222 = scalar_lea.sflag [#allocation3], 7
    // Predicated region
    $region94: #{forward.1} parent=1 // pred_check
      _
    $region95: #{forward.1} parent=1 // pred_check_branch
      %224 = sbr.rel target = $region97
    $region96: #{forward.1} parent=1 // pred_region
      %225 = sst [smem:[#allocation18]] [#allocation33]
      %226 = sst [smem:[#allocation19]] [#allocation32]
    $region97: #{forward.1} parent=1 // pred_fallthru
      _
    %228 = shalt.err (0)
    %s230 = sshll.u32 %s221, 4
    %s231 = int_to_ptr.vmem [resolvable:$true] %s230
    %233 = dma.hbm_to_vmem [thread:$0]  %s220, 2048, %s231, %s222
    %v234 = vld [vmem:[%s0] sm:$0xff]
    %v235 = vld [vmem:[%s0 + $0x8] sm:$0xff]
    %v236 = vld [vmem:[%s0 + $0x10] sm:$0xff]
    %v237 = vld [vmem:[%s0 + $0x18] sm:$0xff]
    %v238 = vld [vmem:[%s0 + $0x20] sm:$0xff]
    %v239 = vld [vmem:[%s0 + $0x28] sm:$0xff]
    %v240 = vld [vmem:[%s0 + $0x30] sm:$0xff]
    %v241 = vld [vmem:[%s0 + $0x38] sm:$0xff]
    %v242 = vld [vmem:[#allocation5] sm:$0xf]
    %v243 = vld [vmem:[#allocation5 + $0x4] sm:$0xf]
    %v244 = vld [vmem:[#allocation5 + $0x8] sm:$0xf]
    %v245 = vld [vmem:[#allocation5 + $0xc] sm:$0xf]
    %v246 = vld [vmem:[#allocation5 + $0x10] sm:$0xf]
    %v247 = vld [vmem:[#allocation5 + $0x14] sm:$0xf]
    %v248 = vld [vmem:[#allocation5 + $0x18] sm:$0xf]
    %v249 = vld [vmem:[#allocation5 + $0x1c] sm:$0xf]
    %v250 = vld [vmem:[#allocation5 + $0x20] sm:$0xf]
    %v251 = vld [vmem:[#allocation5 + $0x24] sm:$0xf]
    %v252 = vld [vmem:[#allocation5 + $0x28] sm:$0xf]
    %v253 = vld [vmem:[#allocation5 + $0x2c] sm:$0xf]
    %v254 = vld [vmem:[#allocation5 + $0x30] sm:$0xf]
    %v255 = vld [vmem:[#allocation5 + $0x34] sm:$0xf]
    %v256 = vld [vmem:[#allocation5 + $0x38] sm:$0xf]
    %v257 = vld [vmem:[#allocation5 + $0x3c] sm:$0xf]
    %v258 = vld [vmem:[#allocation5 + $0x40] sm:$0xf]
    %v259 = vld [vmem:[#allocation5 + $0x44] sm:$0xf]
    %v260 = vld [vmem:[#allocation5 + $0x48] sm:$0xf]
    %v261 = vld [vmem:[#allocation5 + $0x4c] sm:$0xf]
    %v262 = vld [vmem:[#allocation5 + $0x50] sm:$0xf]
    %v263 = vld [vmem:[#allocation5 + $0x54] sm:$0xf]
    %v264 = vld [vmem:[#allocation5 + $0x58] sm:$0xf]
    %v265 = vld [vmem:[#allocation5 + $0x5c] sm:$0xf]
    %v266 = vld [vmem:[#allocation5 + $0x60] sm:$0xf]
    %v267 = vld [vmem:[#allocation5 + $0x64] sm:$0xf]
    %v268 = vld [vmem:[#allocation5 + $0x68] sm:$0xf]
    %v269 = vld [vmem:[#allocation5 + $0x6c] sm:$0xf]
    %v270 = vld [vmem:[#allocation5 + $0x70] sm:$0xf]
    %v271 = vld [vmem:[#allocation5 + $0x74] sm:$0xf]
    %v272 = vld [vmem:[#allocation5 + $0x78] sm:$0xf]
    %v273 = vld [vmem:[#allocation5 + $0x7c] sm:$0xf]
    %v274 = vld [vmem:[#allocation5 + $0x80] sm:$0xf]
    %v275 = vld [vmem:[#allocation5 + $0x84] sm:$0xf]
    %v276 = vld [vmem:[#allocation5 + $0x88] sm:$0xf]
    %v277 = vld [vmem:[#allocation5 + $0x8c] sm:$0xf]
    %v278 = vld [vmem:[#allocation5 + $0x90] sm:$0xf]
    %v279 = vld [vmem:[#allocation5 + $0x94] sm:$0xf]
    %v280 = vld [vmem:[#allocation5 + $0x98] sm:$0xf]
    %v281 = vld [vmem:[#allocation5 + $0x9c] sm:$0xf]
    %v282 = vld [vmem:[#allocation5 + $0xa0] sm:$0xf]
    %v283 = vld [vmem:[#allocation5 + $0xa4] sm:$0xf]
    %v284 = vld [vmem:[#allocation5 + $0xa8] sm:$0xf]
    %v285 = vld [vmem:[#allocation5 + $0xac] sm:$0xf]
    %v286 = vld [vmem:[#allocation5 + $0xb0] sm:$0xf]
    %v287 = vld [vmem:[#allocation5 + $0xb4] sm:$0xf]
    %v288 = vld [vmem:[#allocation5 + $0xb8] sm:$0xf]
    %v289 = vld [vmem:[#allocation5 + $0xbc] sm:$0xf]
    %v290 = vld [vmem:[#allocation5 + $0xc0] sm:$0xf]
    %v291 = vld [vmem:[#allocation5 + $0xc4] sm:$0xf]
    %v292 = vld [vmem:[#allocation5 + $0xc8] sm:$0xf]
    %v293 = vld [vmem:[#allocation5 + $0xcc] sm:$0xf]
    %v294 = vld [vmem:[#allocation5 + $0xd0] sm:$0xf]
    %v295 = vld [vmem:[#allocation5 + $0xd4] sm:$0xf]
    %v296 = vld [vmem:[#allocation5 + $0xd8] sm:$0xf]
    %v297 = vld [vmem:[#allocation5 + $0xdc] sm:$0xf]
    %v298 = vld [vmem:[#allocation5 + $0xe0] sm:$0xf]
    %v299 = vld [vmem:[#allocation5 + $0xe4] sm:$0xf]
    %v300 = vld [vmem:[#allocation5 + $0xe8] sm:$0xf]
    %v301 = vld [vmem:[#allocation5 + $0xec] sm:$0xf]
    %v302 = vld [vmem:[#allocation5 + $0xf0] sm:$0xf]
    %v303 = vld [vmem:[#allocation5 + $0xf4] sm:$0xf]
    %v304 = vld [vmem:[#allocation5 + $0xf8] sm:$0xf]
    %v305 = vld [vmem:[#allocation5 + $0xfc] sm:$0xf]
    %v306 = vld [vmem:[#allocation7] sm:$0x1]
    %v308 = vlaneseq
    %v309 = vshrl.u32 %v308, 7
    %v310 = vsub.s32 0, %v309
    %v311 = vrot.slane %v306, %v310
    %v321 = vunpack.c.l.b16 %v234
    %v322 = vunpack.c.h.b16 %v234
    %v323 = vunpack.c.l.b16 %v235
    %v324 = vunpack.c.h.b16 %v235
    %v325 = vunpack.c.l.b16 %v236
    %v326 = vunpack.c.h.b16 %v236
    %v327 = vunpack.c.l.b16 %v237
    %v328 = vunpack.c.h.b16 %v237
    %v329 = vunpack.c.l.b16 %v238
    %v330 = vunpack.c.h.b16 %v238
    %v331 = vunpack.c.l.b16 %v239
    %v332 = vunpack.c.h.b16 %v239
    %v333 = vunpack.c.l.b16 %v240
    %v334 = vunpack.c.h.b16 %v240
    %v335 = vunpack.c.l.b16 %v241
    %v336 = vunpack.c.h.b16 %v241
    %v337 = vpack.c.b16 %v325, %v321
    %v338 = vpack.c.b16 %v326, %v322
    %v339 = vpack.c.b16 %v327, %v323
    %v340 = vpack.c.b16 %v328, %v324
    %v341 = vpack.c.b16 %v333, %v329
    %v342 = vpack.c.b16 %v334, %v330
    %v343 = vpack.c.b16 %v335, %v331
    %v344 = vpack.c.b16 %v336, %v332
    %v417 = vunpack.c.l.b16 %v242
    %v418 = vunpack.c.l.b16 %v243
    %v419 = vunpack.c.l.b16 %v244
    %v420 = vunpack.c.l.b16 %v245
    %v421 = vunpack.c.l.b16 %v246
    %v422 = vunpack.c.l.b16 %v247
    %v423 = vunpack.c.l.b16 %v248
    %v424 = vunpack.c.l.b16 %v249
    %v425 = vunpack.c.l.b16 %v250
    %v426 = vunpack.c.l.b16 %v251
    %v427 = vunpack.c.l.b16 %v252
    %v428 = vunpack.c.l.b16 %v253
    %v429 = vunpack.c.l.b16 %v254
    %v430 = vunpack.c.l.b16 %v255
    %v431 = vunpack.c.l.b16 %v256
    %v432 = vunpack.c.l.b16 %v257
    %v433 = vunpack.c.l.b16 %v258
    %v434 = vunpack.c.l.b16 %v259
    %v435 = vunpack.c.l.b16 %v260
    %v436 = vunpack.c.l.b16 %v261
    %v437 = vunpack.c.l.b16 %v262
    %v438 = vunpack.c.l.b16 %v263
    %v439 = vunpack.c.l.b16 %v264
    %v440 = vunpack.c.l.b16 %v265
    %v441 = vunpack.c.l.b16 %v266
    %v442 = vunpack.c.l.b16 %v267
    %v443 = vunpack.c.l.b16 %v268
    %v444 = vunpack.c.l.b16 %v269
    %v445 = vunpack.c.l.b16 %v270
    %v446 = vunpack.c.l.b16 %v271
    %v447 = vunpack.c.l.b16 %v272
    %v448 = vunpack.c.l.b16 %v273
    %v449 = vunpack.c.l.b16 %v274
    %v450 = vunpack.c.l.b16 %v275
    %v451 = vunpack.c.l.b16 %v276
    %v452 = vunpack.c.l.b16 %v277
    %v453 = vunpack.c.l.b16 %v278
    %v454 = vunpack.c.l.b16 %v279
    %v455 = vunpack.c.l.b16 %v280
    %v456 = vunpack.c.l.b16 %v281
    %v457 = vunpack.c.l.b16 %v282
    %v458 = vunpack.c.l.b16 %v283
    %v459 = vunpack.c.l.b16 %v284
    %v460 = vunpack.c.l.b16 %v285
    %v461 = vunpack.c.l.b16 %v286
    %v462 = vunpack.c.l.b16 %v287
    %v463 = vunpack.c.l.b16 %v288
    %v464 = vunpack.c.l.b16 %v289
    %v465 = vunpack.c.l.b16 %v290
    %v466 = vunpack.c.l.b16 %v291
    %v467 = vunpack.c.l.b16 %v292
    %v468 = vunpack.c.l.b16 %v293
    %v469 = vunpack.c.l.b16 %v294
    %v470 = vunpack.c.l.b16 %v295
    %v471 = vunpack.c.l.b16 %v296
    %v472 = vunpack.c.l.b16 %v297
    %v473 = vunpack.c.l.b16 %v298
    %v474 = vunpack.c.l.b16 %v299
    %v475 = vunpack.c.l.b16 %v300
    %v476 = vunpack.c.l.b16 %v301
    %v477 = vunpack.c.l.b16 %v302
    %v478 = vunpack.c.l.b16 %v303
    %v479 = vunpack.c.l.b16 %v304
    %v480 = vunpack.c.l.b16 %v305
    %v481 = vpack.c.b16 %v418, %v417
    %v482 = vpack.c.b16 %v420, %v419
    %v483 = vpack.c.b16 %v422, %v421
    %v484 = vpack.c.b16 %v424, %v423
    %v485 = vpack.c.b16 %v426, %v425
    %v486 = vpack.c.b16 %v428, %v427
    %v487 = vpack.c.b16 %v430, %v429
    %v488 = vpack.c.b16 %v432, %v431
    %v489 = vpack.c.b16 %v434, %v433
    %v490 = vpack.c.b16 %v436, %v435
    %v491 = vpack.c.b16 %v438, %v437
    %v492 = vpack.c.b16 %v440, %v439
    %v493 = vpack.c.b16 %v442, %v441
    %v494 = vpack.c.b16 %v444, %v443
    %v495 = vpack.c.b16 %v446, %v445
    %v496 = vpack.c.b16 %v448, %v447
    %v497 = vpack.c.b16 %v450, %v449
    %v498 = vpack.c.b16 %v452, %v451
    %v499 = vpack.c.b16 %v454, %v453
    %v500 = vpack.c.b16 %v456, %v455
    %v501 = vpack.c.b16 %v458, %v457
    %v502 = vpack.c.b16 %v460, %v459
    %v503 = vpack.c.b16 %v462, %v461
    %v504 = vpack.c.b16 %v464, %v463
    %v505 = vpack.c.b16 %v466, %v465
    %v506 = vpack.c.b16 %v468, %v467
    %v507 = vpack.c.b16 %v470, %v469
    %v508 = vpack.c.b16 %v472, %v471
    %v509 = vpack.c.b16 %v474, %v473
    %v510 = vpack.c.b16 %v476, %v475
    %v511 = vpack.c.b16 %v478, %v477
    %v512 = vpack.c.b16 %v480, %v479
    %545 = vmatprep.subr.bf16.mxu0 0
    %546 = vmatpush1.bf16.msra.mxu0 %v481
    %547 = vmatprep.subr.bf16.mxu0 0
    %548 = vmatpush1.bf16.msra.mxu0 %v482
    %549 = vmatprep.subr.bf16.mxu0 0
    %550 = vmatpush1.bf16.msra.mxu0 %v483
    %551 = vmatprep.subr.bf16.mxu0 0
    %552 = vmatpush1.bf16.msra.mxu0 %v484
    %553 = vmatprep.subr.bf16.mxu0 0
    %554 = vmatpush1.bf16.msra.mxu0 %v485
    %555 = vmatprep.subr.bf16.mxu0 0
    %556 = vmatpush1.bf16.msra.mxu0 %v486
    %557 = vmatprep.subr.bf16.mxu0 0
    %558 = vmatpush1.bf16.msra.mxu0 %v487
    %559 = vmatprep.subr.bf16.mxu0 0
    %560 = vmatpush1.bf16.msra.mxu0 %v488
    %561 = vmatprep.subr.bf16.mxu0 0
    %562 = vmatpush1.bf16.msra.mxu0 %v489
    %563 = vmatprep.subr.bf16.mxu0 0
    %564 = vmatpush1.bf16.msra.mxu0 %v490
    %565 = vmatprep.subr.bf16.mxu0 0
    %566 = vmatpush1.bf16.msra.mxu0 %v491
    %567 = vmatprep.subr.bf16.mxu0 0
    %568 = vmatpush1.bf16.msra.mxu0 %v492
    %569 = vmatprep.subr.bf16.mxu0 0
    %570 = vmatpush1.bf16.msra.mxu0 %v493
    %571 = vmatprep.subr.bf16.mxu0 0
    %572 = vmatpush1.bf16.msra.mxu0 %v494
    %573 = vmatprep.subr.bf16.mxu0 0
    %574 = vmatpush1.bf16.msra.mxu0 %v495
    %575 = vmatprep.subr.bf16.mxu0 0
    %576 = vmatpush1.bf16.msra.mxu0 %v496
    %577 = vmatprep.mubr.bf16.mxu0 %v338
    %578 = vmatmul.mubr.bf16.gmra.mrb[0].mxu0 %v337
    %v579 = vpop.f32.mrb[0].mxu0
    %v580 = vadd.f32 %v311, %v579
    %v581 = vpop.f32.mrb[0].mxu0
    %v582 = vpop.f32.mrb[0].mxu0
    %v583 = vadd.f32 %v311, %v582
    %v584 = vpop.f32.mrb[0].mxu0
    %585 = vmatprep.mubr.bf16.mxu0 %v342
    %586 = vmatmul.mubr.bf16.gmra.mrb[0].mxu0 %v341
    %v587 = vpop.f32.mrb[0].mxu0
    %v588 = vadd.f32 %v311, %v587
    %v589 = vpop.f32.mrb[0].mxu0
    %v590 = vpop.f32.mrb[0].mxu0
    %v591 = vadd.f32 %v311, %v590
    %v592 = vpop.f32.mrb[0].mxu0
    %593 = vdwg.mxu0
    %594 = vmatprep.subr.bf16.mxu0 0
    %595 = vmatpush1.bf16.msra.mxu0 %v497
    %596 = vmatprep.subr.bf16.mxu0 0
    %597 = vmatpush1.bf16.msra.mxu0 %v498
    %598 = vmatprep.subr.bf16.mxu0 0
    %599 = vmatpush1.bf16.msra.mxu0 %v499
    %600 = vmatprep.subr.bf16.mxu0 0
    %601 = vmatpush1.bf16.msra.mxu0 %v500
    %602 = vmatprep.subr.bf16.mxu0 0
    %603 = vmatpush1.bf16.msra.mxu0 %v501
    %604 = vmatprep.subr.bf16.mxu0 0
    %605 = vmatpush1.bf16.msra.mxu0 %v502
    %606 = vmatprep.subr.bf16.mxu0 0
    %607 = vmatpush1.bf16.msra.mxu0 %v503
    %608 = vmatprep.subr.bf16.mxu0 0
    %609 = vmatpush1.bf16.msra.mxu0 %v504
    %610 = vmatprep.subr.bf16.mxu0 0
    %611 = vmatpush1.bf16.msra.mxu0 %v505
    %612 = vmatprep.subr.bf16.mxu0 0
    %613 = vmatpush1.bf16.msra.mxu0 %v506
    %614 = vmatprep.subr.bf16.mxu0 0
    %615 = vmatpush1.bf16.msra.mxu0 %v507
    %616 = vmatprep.subr.bf16.mxu0 0
    %617 = vmatpush1.bf16.msra.mxu0 %v508
    %618 = vmatprep.subr.bf16.mxu0 0
    %619 = vmatpush1.bf16.msra.mxu0 %v509
    %620 = vmatprep.subr.bf16.mxu0 0
    %621 = vmatpush1.bf16.msra.mxu0 %v510
    %622 = vmatprep.subr.bf16.mxu0 0
    %623 = vmatpush1.bf16.msra.mxu0 %v511
    %624 = vmatprep.subr.bf16.mxu0 0
    %625 = vmatpush1.bf16.msra.mxu0 %v512
    %626 = vmatprep.mubr.bf16.mxu0 %v340
    %627 = vmatmul.mubr.bf16.gmra.mrb[0].mxu0 %v339
    %v628 = vpop.f32.mrb[0].mxu0
    %v629 = vadd.f32 %v580, %v628
    %v630 = vpop.f32.mrb[0].mxu0
    %v631 = vpop.f32.mrb[0].mxu0
    %v632 = vadd.f32 %v583, %v631
    %v633 = vpop.f32.mrb[0].mxu0
    %634 = vmatprep.mubr.bf16.mxu0 %v344
    %635 = vmatmul.mubr.bf16.gmra.mrb[0].mxu0 %v343
    %v636 = vpop.f32.mrb[0].mxu0
    %v637 = vadd.f32 %v588, %v636
    %v638 = vpop.f32.mrb[0].mxu0
    %v639 = vpop.f32.mrb[0].mxu0
    %v640 = vadd.f32 %v591, %v639
    %v641 = vpop.f32.mrb[0].mxu0
    %642 = vdwg.mxu0
    %v643 = vpack.c.bf16 %v632, %v629
    %v644 = vpack.c.bf16 %v640, %v637
    %v645 = vld [vmem:[#allocation9] sm:$0xf]
    %v646 = vld [vmem:[#allocation9 + $0x4] sm:$0xf]
    %v647 = vld [vmem:[#allocation9 + $0x8] sm:$0xf]
    %v648 = vld [vmem:[#allocation9 + $0xc] sm:$0xf]
    %v649 = vld [vmem:[#allocation9 + $0x10] sm:$0xf]
    %v650 = vld [vmem:[#allocation9 + $0x14] sm:$0xf]
    %v651 = vld [vmem:[#allocation9 + $0x18] sm:$0xf]
    %v652 = vld [vmem:[#allocation9 + $0x1c] sm:$0xf]
    %v653 = vld [vmem:[#allocation9 + $0x20] sm:$0xf]
    %v654 = vld [vmem:[#allocation9 + $0x24] sm:$0xf]
    %v655 = vld [vmem:[#allocation9 + $0x28] sm:$0xf]
    %v656 = vld [vmem:[#allocation9 + $0x2c] sm:$0xf]
    %v657 = vld [vmem:[#allocation9 + $0x30] sm:$0xf]
    %v658 = vld [vmem:[#allocation9 + $0x34] sm:$0xf]
    %v659 = vld [vmem:[#allocation9 + $0x38] sm:$0xf]
    %v660 = vld [vmem:[#allocation9 + $0x3c] sm:$0xf]
    %v661 = vld [vmem:[#allocation10] sm:$0x1]
    %v663 = vlaneseq
    %v664 = vshrl.u32 %v663, 7
    %v665 = vsub.s32 0, %v664
    %v666 = vrot.slane %v661, %v665
    %v684 = vunpack.c.l.b16 %v645
    %v685 = vunpack.c.l.b16 %v646
    %v686 = vunpack.c.l.b16 %v647
    %v687 = vunpack.c.l.b16 %v648
    %v688 = vunpack.c.l.b16 %v649
    %v689 = vunpack.c.l.b16 %v650
    %v690 = vunpack.c.l.b16 %v651
    %v691 = vunpack.c.l.b16 %v652
    %v692 = vunpack.c.l.b16 %v653
    %v693 = vunpack.c.l.b16 %v654
    %v694 = vunpack.c.l.b16 %v655
    %v695 = vunpack.c.l.b16 %v656
    %v696 = vunpack.c.l.b16 %v657
    %v697 = vunpack.c.l.b16 %v658
    %v698 = vunpack.c.l.b16 %v659
    %v699 = vunpack.c.l.b16 %v660
    %v700 = vpack.c.b16 %v685, %v684
    %v701 = vpack.c.b16 %v687, %v686
    %v702 = vpack.c.b16 %v689, %v688
    %v703 = vpack.c.b16 %v691, %v690
    %v704 = vpack.c.b16 %v693, %v692
    %v705 = vpack.c.b16 %v695, %v694
    %v706 = vpack.c.b16 %v697, %v696
    %v707 = vpack.c.b16 %v699, %v698
    %716 = vmatprep.subr.bf16.mxu0 0
    %717 = vmatpush1.bf16.msra.mxu0 %v700
    %718 = vmatprep.subr.bf16.mxu0 0
    %719 = vmatpush1.bf16.msra.mxu0 %v701
    %720 = vmatprep.subr.bf16.mxu0 0
    %721 = vmatpush1.bf16.msra.mxu0 %v702
    %722 = vmatprep.subr.bf16.mxu0 0
    %723 = vmatpush1.bf16.msra.mxu0 %v703
    %724 = vmatprep.subr.bf16.mxu0 0
    %725 = vmatpush1.bf16.msra.mxu0 %v704
    %726 = vmatprep.subr.bf16.mxu0 0
    %727 = vmatpush1.bf16.msra.mxu0 %v705
    %728 = vmatprep.subr.bf16.mxu0 0
    %729 = vmatpush1.bf16.msra.mxu0 %v706
    %730 = vmatprep.subr.bf16.mxu0 0
    %731 = vmatpush1.bf16.msra.mxu0 %v707
    %732 = vmatprep.subr.bf16.mxu0 0
    %733 = vmatpush1.bf16.msra.mxu0 0
    %734 = vmatprep.subr.bf16.mxu0 0
    %735 = vmatpush1.bf16.msra.mxu0 0
    %736 = vmatprep.subr.bf16.mxu0 0
    %737 = vmatpush1.bf16.msra.mxu0 0
    %738 = vmatprep.subr.bf16.mxu0 0
    %739 = vmatpush1.bf16.msra.mxu0 0
    %740 = vmatprep.subr.bf16.mxu0 0
    %741 = vmatpush1.bf16.msra.mxu0 0
    %742 = vmatprep.subr.bf16.mxu0 0
    %743 = vmatpush1.bf16.msra.mxu0 0
    %744 = vmatprep.subr.bf16.mxu0 0
    %745 = vmatpush1.bf16.msra.mxu0 0
    %746 = vmatprep.subr.bf16.mxu0 0
    %747 = vmatpush1.bf16.msra.mxu0 0
    %748 = vmatprep.mubr.bf16.mxu0 0
    %749 = vmatmul.mubr.bf16.gmra.mrb[0].mxu0 %v643
    %v750 = vpop.f32.mrb[0].mxu0
    %v751 = vadd.f32 %v666, %v750
    %v752 = vpop.f32.mrb[0].mxu0
    %v753 = vpop.f32.mrb[0].mxu0
    %v754 = vadd.f32 %v666, %v753
    %v755 = vpop.f32.mrb[0].mxu0
    %756 = vmatprep.mubr.bf16.mxu0 0
    %757 = vmatmul.mubr.bf16.gmra.mrb[0].mxu0 %v644
    %v758 = vpop.f32.mrb[0].mxu0
    %v759 = vadd.f32 %v666, %v758
    %v760 = vpop.f32.mrb[0].mxu0
    %v761 = vpop.f32.mrb[0].mxu0
    %v762 = vadd.f32 %v666, %v761
    %v763 = vpop.f32.mrb[0].mxu0
    %764 = vdwg.mxu0
    %s765 = smul.u32 4, 224
    %s766 = smul.u32 %s765, 1
    %s767 = sshll.u32 %s766, 4
    %768 = dma.done [#allocation3], %s767
    %v769 = vld [vmem:[#allocation12] sm:$0x1]
    %v770 = vld [vmem:[#allocation12 + $0x1] sm:$0x1]
    %v771 = vld [vmem:[#allocation2] sm:$0xff]
    %v772 = vld [vmem:[#allocation2 + $0x8] sm:$0xff]
    %v773 = vld [vmem:[#allocation2 + $0x10] sm:$0xff]
    %v774 = vld [vmem:[#allocation2 + $0x18] sm:$0xff]
    %v775 = vld [vmem:[#allocation2 + $0x20] sm:$0xff]
    %v776 = vld [vmem:[#allocation2 + $0x28] sm:$0xff]
    %v777 = vld [vmem:[#allocation2 + $0x30] sm:$0xff]
    %v778 = vld [vmem:[#allocation2 + $0x38] sm:$0xff]
    %v779 = vld [vmem:[#allocation2 + $0x40] sm:$0xff]
    %v780 = vld [vmem:[#allocation2 + $0x48] sm:$0xff]
    %v781 = vld [vmem:[#allocation2 + $0x50] sm:$0xff]
    %v782 = vld [vmem:[#allocation2 + $0x58] sm:$0xff]
    %v783 = vld [vmem:[#allocation2 + $0x60] sm:$0xff]
    %v784 = vld [vmem:[#allocation2 + $0x68] sm:$0xff]
    %v785 = vld [vmem:[#allocation2 + $0x70] sm:$0xff]
    %v786 = vld [vmem:[#allocation2 + $0x78] sm:$0xff]
    %v787 = vld [vmem:[#allocation2 + $0x80] sm:$0xff]
    %v788 = vld [vmem:[#allocation2 + $0x88] sm:$0xff]
    %v789 = vld [vmem:[#allocation2 + $0x90] sm:$0xff]
    %v790 = vld [vmem:[#allocation2 + $0x98] sm:$0xff]
    %v791 = vld [vmem:[#allocation2 + $0xa0] sm:$0xff]
    %v792 = vld [vmem:[#allocation2 + $0xa8] sm:$0xff]
    %v793 = vld [vmem:[#allocation2 + $0xb0] sm:$0xff]
    %v794 = vld [vmem:[#allocation2 + $0xb8] sm:$0xff]
    %v795 = vld [vmem:[#allocation2 + $0xc0] sm:$0xff]
    %v796 = vld [vmem:[#allocation2 + $0xc8] sm:$0xff]
    %v797 = vld [vmem:[#allocation2 + $0xd0] sm:$0xff]
    %v798 = vld [vmem:[#allocation2 + $0xd8] sm:$0xff]
    %v799 = vld [vmem:[#allocation2 + $0xe0] sm:$0xff]
    %v800 = vld [vmem:[#allocation2 + $0xe8] sm:$0xff]
    %v801 = vld [vmem:[#allocation2 + $0xf0] sm:$0xff]
    %v802 = vld [vmem:[#allocation2 + $0xf8] sm:$0xff]
    %v803 = vld [vmem:[#allocation2 + $0x100] sm:$0xff]
    %v804 = vld [vmem:[#allocation2 + $0x108] sm:$0xff]
    %v805 = vld [vmem:[#allocation2 + $0x110] sm:$0xff]
    %v806 = vld [vmem:[#allocation2 + $0x118] sm:$0xff]
    %v807 = vld [vmem:[#allocation2 + $0x120] sm:$0xff]
    %v808 = vld [vmem:[#allocation2 + $0x128] sm:$0xff]
    %v809 = vld [vmem:[#allocation2 + $0x130] sm:$0xff]
    %v810 = vld [vmem:[#allocation2 + $0x138] sm:$0xff]
    %v811 = vld [vmem:[#allocation2 + $0x140] sm:$0xff]
    %v812 = vld [vmem:[#allocation2 + $0x148] sm:$0xff]
    %v813 = vld [vmem:[#allocation2 + $0x150] sm:$0xff]
    %v814 = vld [vmem:[#allocation2 + $0x158] sm:$0xff]
    %v815 = vld [vmem:[#allocation2 + $0x160] sm:$0xff]
    %v816 = vld [vmem:[#allocation2 + $0x168] sm:$0xff]
    %v817 = vld [vmem:[#allocation2 + $0x170] sm:$0xff]
    %v818 = vld [vmem:[#allocation2 + $0x178] sm:$0xff]
    %v819 = vld [vmem:[#allocation2 + $0x180] sm:$0xff]
    %v820 = vld [vmem:[#allocation2 + $0x188] sm:$0xff]
    %v821 = vld [vmem:[#allocation2 + $0x190] sm:$0xff]
    %v822 = vld [vmem:[#allocation2 + $0x198] sm:$0xff]
    %v823 = vld [vmem:[#allocation2 + $0x1a0] sm:$0xff]
    %v824 = vld [vmem:[#allocation2 + $0x1a8] sm:$0xff]
    %v825 = vld [vmem:[#allocation2 + $0x1b0] sm:$0xff]
    %v826 = vld [vmem:[#allocation2 + $0x1b8] sm:$0xff]
    %s827 = scalar_lea.vmem [#allocation13], 80
    %v828 = vld [vmem:[%s827] sm:$0xf]
    %v829 = vld [vmem:[%s827 + $0x4] sm:$0xf]
    %v830 = vld [vmem:[%s827 + $0x8] sm:$0xf]
    %v831 = vld [vmem:[%s827 + $0xc] sm:$0xf]
    %v836 = vunpack.c.l.b16 %v828
    %v837 = vunpack.c.l.b16 %v829
    %v838 = vunpack.c.l.b16 %v830
    %v839 = vunpack.c.l.b16 %v831
    %v840 = vpack.c.b16 %v837, %v836
    %v841 = vpack.c.b16 %v839, %v838
    %vm842 = vcmask 261120
    %v844 = vsel %vm842, %v840, 0
    %v847 = vsel %vm842, %v841, 0
    %849 = vmatprep.subr.bf16.mxu0 0
    %850 = vmatpush1.bf16.msra.mxu0 %v643
    %851 = vmatprep.subr.bf16.mxu0 0
    %852 = vmatpush1.bf16.msra.mxu0 %v644
    %853 = vmatprep.subr.bf16.mxu0 0
    %854 = vmatpush1.bf16.msra.mxu0 0
    %855 = vmatprep.subr.bf16.mxu0 0
    %856 = vmatpush1.bf16.msra.mxu0 0
    %857 = vmatprep.subr.bf16.mxu0 0
    %858 = vmatpush1.bf16.msra.mxu0 0
    %859 = vmatprep.subr.bf16.mxu0 0
    %860 = vmatpush1.bf16.msra.mxu0 0
    %861 = vmatprep.subr.bf16.mxu0 0
    %862 = vmatpush1.bf16.msra.mxu0 0
    %863 = vmatprep.subr.bf16.mxu0 0
    %864 = vmatpush1.bf16.msra.mxu0 0
    %865 = vmatprep.subr.bf16.mxu0 0
    %866 = vmatpush1.bf16.msra.mxu0 0
    %867 = vmatprep.subr.bf16.mxu0 0
    %868 = vmatpush1.bf16.msra.mxu0 0
    %869 = vmatprep.subr.bf16.mxu0 0
    %870 = vmatpush1.bf16.msra.mxu0 0
    %871 = vmatprep.subr.bf16.mxu0 0
    %872 = vmatpush1.bf16.msra.mxu0 0
    %873 = vmatprep.subr.bf16.mxu0 0
    %874 = vmatpush1.bf16.msra.mxu0 0
    %875 = vmatprep.subr.bf16.mxu0 0
    %876 = vmatpush1.bf16.msra.mxu0 0
    %877 = vmatprep.subr.bf16.mxu0 0
    %878 = vmatpush1.bf16.msra.mxu0 0
    %879 = vmatprep.subr.bf16.mxu0 0
    %880 = vmatpush1.bf16.msra.mxu0 0
    %881 = vmatprep.mubr.bf16.mxu0 0
    %882 = vmatmul.mubr.bf16.gmra.mrb[0].mxu0 %v844
    %v883 = vpop.f32.mrb[0].mxu0
    %v884 = vadd.f32 0.0, %v883
    %v885 = vpop.f32.mrb[0].mxu0
    %v886 = vpop.f32.mrb[0].mxu0
    %v887 = vadd.f32 0.0, %v886
    %v888 = vpop.f32.mrb[0].mxu0
    %889 = vmatprep.mubr.bf16.mxu0 0
    %890 = vmatmul.mubr.bf16.gmra.mrb[0].mxu0 %v847
    %v891 = vpop.f32.mrb[0].mxu0
    %v892 = vadd.f32 0.0, %v891
    %v893 = vpop.f32.mrb[0].mxu0
    %v894 = vpop.f32.mrb[0].mxu0
    %v895 = vadd.f32 0.0, %v894
    %v896 = vpop.f32.mrb[0].mxu0
    %897 = vdwg.mxu0
    %v898 = vpack.c.bf16 %v887, %v884
    %v899 = vpack.c.bf16 %v895, %v892
    %s900 = scalar_lea.vmem [#allocation13], 64
    %v901 = vld [vmem:[%s900] sm:$0xf]
    %v902 = vld [vmem:[%s900 + $0x4] sm:$0xf]
    %v903 = vld [vmem:[%s900 + $0x8] sm:$0xf]
    %v904 = vld [vmem:[%s900 + $0xc] sm:$0xf]
    %v909 = vunpack.c.l.b16 %v901
    %v910 = vunpack.c.l.b16 %v902
    %v911 = vunpack.c.l.b16 %v903
    %v912 = vunpack.c.l.b16 %v904
    %v913 = vpack.c.b16 %v910, %v909
    %v914 = vpack.c.b16 %v912, %v911
    %v916 = vsel %vm842, %v913, 0
    %v919 = vsel %vm842, %v914, 0
    %921 = vmatprep.subr.bf16.mxu0 0
    %922 = vmatpush1.bf16.msra.mxu0 %v643
    %923 = vmatprep.subr.bf16.mxu0 0
    %924 = vmatpush1.bf16.msra.mxu0 %v644
    %925 = vmatprep.subr.bf16.mxu0 0
    %926 = vmatpush1.bf16.msra.mxu0 0
    %927 = vmatprep.subr.bf16.mxu0 0
    %928 = vmatpush1.bf16.msra.mxu0 0
    %929 = vmatprep.subr.bf16.mxu0 0
    %930 = vmatpush1.bf16.msra.mxu0 0
    %931 = vmatprep.subr.bf16.mxu0 0
    %932 = vmatpush1.bf16.msra.mxu0 0
    %933 = vmatprep.subr.bf16.mxu0 0
    %934 = vmatpush1.bf16.msra.mxu0 0
    %935 = vmatprep.subr.bf16.mxu0 0
    %936 = vmatpush1.bf16.msra.mxu0 0
    %937 = vmatprep.subr.bf16.mxu0 0
    %938 = vmatpush1.bf16.msra.mxu0 0
    %939 = vmatprep.subr.bf16.mxu0 0
    %940 = vmatpush1.bf16.msra.mxu0 0
    %941 = vmatprep.subr.bf16.mxu0 0
    %942 = vmatpush1.bf16.msra.mxu0 0
    %943 = vmatprep.subr.bf16.mxu0 0
    %944 = vmatpush1.bf16.msra.mxu0 0
    %945 = vmatprep.subr.bf16.mxu0 0
    %946 = vmatpush1.bf16.msra.mxu0 0
    %947 = vmatprep.subr.bf16.mxu0 0
    %948 = vmatpush1.bf16.msra.mxu0 0
    %949 = vmatprep.subr.bf16.mxu0 0
    %950 = vmatpush1.bf16.msra.mxu0 0
    %951 = vmatprep.subr.bf16.mxu0 0
    %952 = vmatpush1.bf16.msra.mxu0 0
    %953 = vmatprep.mubr.bf16.mxu0 0
    %954 = vmatmul.mubr.bf16.gmra.mrb[0].mxu0 %v916
    %v955 = vpop.f32.mrb[0].mxu0
    %v956 = vadd.f32 0.0, %v955
    %v957 = vpop.f32.mrb[0].mxu0
    %v958 = vpop.f32.mrb[0].mxu0
    %v959 = vadd.f32 0.0, %v958
    %v960 = vpop.f32.mrb[0].mxu0
    %961 = vmatprep.mubr.bf16.mxu0 0
    %962 = vmatmul.mubr.bf16.gmra.mrb[0].mxu0 %v919
    %v963 = vpop.f32.mrb[0].mxu0
    %v964 = vadd.f32 0.0, %v963
    %v965 = vpop.f32.mrb[0].mxu0
    %v966 = vpop.f32.mrb[0].mxu0
    %v967 = vadd.f32 0.0, %v966
    %v968 = vpop.f32.mrb[0].mxu0
    %969 = vdwg.mxu0
    %v970 = vpack.c.bf16 %v959, %v956
    %v971 = vpack.c.bf16 %v967, %v964
    %s972 = scalar_lea.vmem [#allocation13], 48
    %v973 = vld [vmem:[%s972] sm:$0xf]
    %v974 = vld [vmem:[%s972 + $0x4] sm:$0xf]
    %v975 = vld [vmem:[%s972 + $0x8] sm:$0xf]
    %v976 = vld [vmem:[%s972 + $0xc] sm:$0xf]
    %v981 = vunpack.c.l.b16 %v973
    %v982 = vunpack.c.l.b16 %v974
    %v983 = vunpack.c.l.b16 %v975
    %v984 = vunpack.c.l.b16 %v976
    %v985 = vpack.c.b16 %v982, %v981
    %v986 = vpack.c.b16 %v984, %v983
    %v988 = vsel %vm842, %v985, 0
    %v991 = vsel %vm842, %v986, 0
    %993 = vmatprep.subr.bf16.mxu0 0
    %994 = vmatpush1.bf16.msra.mxu0 %v643
    %995 = vmatprep.subr.bf16.mxu0 0
    %996 = vmatpush1.bf16.msra.mxu0 %v644
    %997 = vmatprep.subr.bf16.mxu0 0
    %998 = vmatpush1.bf16.msra.mxu0 0
    %999 = vmatprep.subr.bf16.mxu0 0
    %1000 = vmatpush1.bf16.msra.mxu0 0
    %1001 = vmatprep.subr.bf16.mxu0 0
    %1002 = vmatpush1.bf16.msra.mxu0 0
    %1003 = vmatprep.subr.bf16.mxu0 0
    %1004 = vmatpush1.bf16.msra.mxu0 0
    %1005 = vmatprep.subr.bf16.mxu0 0
    %1006 = vmatpush1.bf16.msra.mxu0 0
    %1007 = vmatprep.subr.bf16.mxu0 0
    %1008 = vmatpush1.bf16.msra.mxu0 0
    %1009 = vmatprep.subr.bf16.mxu0 0
    %1010 = vmatpush1.bf16.msra.mxu0 0
    %1011 = vmatprep.subr.bf16.mxu0 0
    %1012 = vmatpush1.bf16.msra.mxu0 0
    %1013 = vmatprep.subr.bf16.mxu0 0
    %1014 = vmatpush1.bf16.msra.mxu0 0
    %1015 = vmatprep.subr.bf16.mxu0 0
    %1016 = vmatpush1.bf16.msra.mxu0 0
    %1017 = vmatprep.subr.bf16.mxu0 0
    %1018 = vmatpush1.bf16.msra.mxu0 0
    %1019 = vmatprep.subr.bf16.mxu0 0
    %1020 = vmatpush1.bf16.msra.mxu0 0
    %1021 = vmatprep.subr.bf16.mxu0 0
    %1022 = vmatpush1.bf16.msra.mxu0 0
    %1023 = vmatprep.subr.bf16.mxu0 0
    %1024 = vmatpush1.bf16.msra.mxu0 0
    %1025 = vmatprep.mubr.bf16.mxu0 0
    %1026 = vmatmul.mubr.bf16.gmra.mrb[0].mxu0 %v988
    %v1027 = vpop.f32.mrb[0].mxu0
    %v1028 = vadd.f32 0.0, %v1027
    %v1029 = vpop.f32.mrb[0].mxu0
    %v1030 = vpop.f32.mrb[0].mxu0
    %v1031 = vadd.f32 0.0, %v1030
    %v1032 = vpop.f32.mrb[0].mxu0
    %1033 = vmatprep.mubr.bf16.mxu0 0
    %1034 = vmatmul.mubr.bf16.gmra.mrb[0].mxu0 %v991
    %v1035 = vpop.f32.mrb[0].mxu0
    %v1036 = vadd.f32 0.0, %v1035
    %v1037 = vpop.f32.mrb[0].mxu0
    %v1038 = vpop.f32.mrb[0].mxu0
    %v1039 = vadd.f32 0.0, %v1038
    %v1040 = vpop.f32.mrb[0].mxu0
    %1041 = vdwg.mxu0
    %v1042 = vpack.c.bf16 %v1031, %v1028
    %v1043 = vpack.c.bf16 %v1039, %v1036
    %s1044 = scalar_lea.vmem [#allocation13], 32
    %v1045 = vld [vmem:[%s1044] sm:$0xf]
    %v1046 = vld [vmem:[%s1044 + $0x4] sm:$0xf]
    %v1047 = vld [vmem:[%s1044 + $0x8] sm:$0xf]
    %v1048 = vld [vmem:[%s1044 + $0xc] sm:$0xf]
    %v1053 = vunpack.c.l.b16 %v1045
    %v1054 = vunpack.c.l.b16 %v1046
    %v1055 = vunpack.c.l.b16 %v1047
    %v1056 = vunpack.c.l.b16 %v1048
    %v1057 = vpack.c.b16 %v1054, %v1053
    %v1058 = vpack.c.b16 %v1056, %v1055
    %v1060 = vsel %vm842, %v1057, 0
    %v1063 = vsel %vm842, %v1058, 0
    %1065 = vmatprep.subr.bf16.mxu0 0
    %1066 = vmatpush1.bf16.msra.mxu0 %v643
    %1067 = vmatprep.subr.bf16.mxu0 0
    %1068 = vmatpush1.bf16.msra.mxu0 %v644
    %1069 = vmatprep.subr.bf16.mxu0 0
    %1070 = vmatpush1.bf16.msra.mxu0 0
    %1071 = vmatprep.subr.bf16.mxu0 0
    %1072 = vmatpush1.bf16.msra.mxu0 0
    %1073 = vmatprep.subr.bf16.mxu0 0
    %1074 = vmatpush1.bf16.msra.mxu0 0
    %1075 = vmatprep.subr.bf16.mxu0 0
    %1076 = vmatpush1.bf16.msra.mxu0 0
    %1077 = vmatprep.subr.bf16.mxu0 0
    %1078 = vmatpush1.bf16.msra.mxu0 0
    %1079 = vmatprep.subr.bf16.mxu0 0
    %1080 = vmatpush1.bf16.msra.mxu0 0
    %1081 = vmatprep.subr.bf16.mxu0 0
    %1082 = vmatpush1.bf16.msra.mxu0 0
    %1083 = vmatprep.subr.bf16.mxu0 0
    %1084 = vmatpush1.bf16.msra.mxu0 0
    %1085 = vmatprep.subr.bf16.mxu0 0
    %1086 = vmatpush1.bf16.msra.mxu0 0
    %1087 = vmatprep.subr.bf16.mxu0 0
    %1088 = vmatpush1.bf16.msra.mxu0 0
    %1089 = vmatprep.subr.bf16.mxu0 0
    %1090 = vmatpush1.bf16.msra.mxu0 0
    %1091 = vmatprep.subr.bf16.mxu0 0
    %1092 = vmatpush1.bf16.msra.mxu0 0
    %1093 = vmatprep.subr.bf16.mxu0 0
    %1094 = vmatpush1.bf16.msra.mxu0 0
    %1095 = vmatprep.subr.bf16.mxu0 0
    %1096 = vmatpush1.bf16.msra.mxu0 0
    %1097 = vmatprep.mubr.bf16.mxu0 0
    %1098 = vmatmul.mubr.bf16.gmra.mrb[0].mxu0 %v1060
    %v1099 = vpop.f32.mrb[0].mxu0
    %v1100 = vadd.f32 0.0, %v1099
    %v1101 = vpop.f32.mrb[0].mxu0
    %v1102 = vpop.f32.mrb[0].mxu0
    %v1103 = vadd.f32 0.0, %v1102
    %v1104 = vpop.f32.mrb[0].mxu0
    %1105 = vmatprep.mubr.bf16.mxu0 0
    %1106 = vmatmul.mubr.bf16.gmra.mrb[0].mxu0 %v1063
    %v1107 = vpop.f32.mrb[0].mxu0
    %v1108 = vadd.f32 0.0, %v1107
    %v1109 = vpop.f32.mrb[0].mxu0
    %v1110 = vpop.f32.mrb[0].mxu0
    %v1111 = vadd.f32 0.0, %v1110
    %v1112 = vpop.f32.mrb[0].mxu0
    %1113 = vdwg.mxu0
    %v1114 = vpack.c.bf16 %v1103, %v1100
    %v1115 = vpack.c.bf16 %v1111, %v1108
    %s1116 = scalar_lea.vmem [#allocation13], 16
    %v1117 = vld [vmem:[%s1116] sm:$0xf]
    %v1118 = vld [vmem:[%s1116 + $0x4] sm:$0xf]
    %v1119 = vld [vmem:[%s1116 + $0x8] sm:$0xf]
    %v1120 = vld [vmem:[%s1116 + $0xc] sm:$0xf]
    %v1125 = vunpack.c.l.b16 %v1117
    %v1126 = vunpack.c.l.b16 %v1118
    %v1127 = vunpack.c.l.b16 %v1119
    %v1128 = vunpack.c.l.b16 %v1120
    %v1129 = vpack.c.b16 %v1126, %v1125
    %v1130 = vpack.c.b16 %v1128, %v1127
    %v1132 = vsel %vm842, %v1129, 0
    %v1135 = vsel %vm842, %v1130, 0
    %1137 = vmatprep.subr.bf16.mxu0 0
    %1138 = vmatpush1.bf16.msra.mxu0 %v643
    %1139 = vmatprep.subr.bf16.mxu0 0
    %1140 = vmatpush1.bf16.msra.mxu0 %v644
    %1141 = vmatprep.subr.bf16.mxu0 0
    %1142 = vmatpush1.bf16.msra.mxu0 0
    %1143 = vmatprep.subr.bf16.mxu0 0
    %1144 = vmatpush1.bf16.msra.mxu0 0
    %1145 = vmatprep.subr.bf16.mxu0 0
    %1146 = vmatpush1.bf16.msra.mxu0 0
    %1147 = vmatprep.subr.bf16.mxu0 0
    %1148 = vmatpush1.bf16.msra.mxu0 0
    %1149 = vmatprep.subr.bf16.mxu0 0
    %1150 = vmatpush1.bf16.msra.mxu0 0
    %1151 = vmatprep.subr.bf16.mxu0 0
    %1152 = vmatpush1.bf16.msra.mxu0 0
    %1153 = vmatprep.subr.bf16.mxu0 0
    %1154 = vmatpush1.bf16.msra.mxu0 0
    %1155 = vmatprep.subr.bf16.mxu0 0
    %1156 = vmatpush1.bf16.msra.mxu0 0
    %1157 = vmatprep.subr.bf16.mxu0 0
    %1158 = vmatpush1.bf16.msra.mxu0 0
    %1159 = vmatprep.subr.bf16.mxu0 0
    %1160 = vmatpush1.bf16.msra.mxu0 0
    %1161 = vmatprep.subr.bf16.mxu0 0
    %1162 = vmatpush1.bf16.msra.mxu0 0
    %1163 = vmatprep.subr.bf16.mxu0 0
    %1164 = vmatpush1.bf16.msra.mxu0 0
    %1165 = vmatprep.subr.bf16.mxu0 0
    %1166 = vmatpush1.bf16.msra.mxu0 0
    %1167 = vmatprep.subr.bf16.mxu0 0
    %1168 = vmatpush1.bf16.msra.mxu0 0
    %1169 = vmatprep.mubr.bf16.mxu0 0
    %1170 = vmatmul.mubr.bf16.gmra.mrb[0].mxu0 %v1132
    %v1171 = vpop.f32.mrb[0].mxu0
    %v1172 = vadd.f32 0.0, %v1171
    %v1173 = vpop.f32.mrb[0].mxu0
    %v1174 = vpop.f32.mrb[0].mxu0
    %v1175 = vadd.f32 0.0, %v1174
    %v1176 = vpop.f32.mrb[0].mxu0
    %1177 = vmatprep.mubr.bf16.mxu0 0
    %1178 = vmatmul.mubr.bf16.gmra.mrb[0].mxu0 %v1135
    %v1179 = vpop.f32.mrb[0].mxu0
    %v1180 = vadd.f32 0.0, %v1179
    %v1181 = vpop.f32.mrb[0].mxu0
    %v1182 = vpop.f32.mrb[0].mxu0
    %v1183 = vadd.f32 0.0, %v1182
    %v1184 = vpop.f32.mrb[0].mxu0
    %1185 = vdwg.mxu0
    %v1186 = vpack.c.bf16 %v1175, %v1172
    %v1187 = vpack.c.bf16 %v1183, %v1180
    %v1188 = vld [vmem:[#allocation13] sm:$0xf]
    %v1189 = vld [vmem:[#allocation13 + $0x4] sm:$0xf]
    %v1190 = vld [vmem:[#allocation13 + $0x8] sm:$0xf]
    %v1191 = vld [vmem:[#allocation13 + $0xc] sm:$0xf]
    %v1196 = vunpack.c.l.b16 %v1188
    %v1197 = vunpack.c.l.b16 %v1189
    %v1198 = vunpack.c.l.b16 %v1190
    %v1199 = vunpack.c.l.b16 %v1191
    %v1200 = vpack.c.b16 %v1197, %v1196
    %v1201 = vpack.c.b16 %v1199, %v1198
    %v1203 = vsel %vm842, %v1200, 0
    %v1206 = vsel %vm842, %v1201, 0
    %1208 = vmatprep.subr.bf16.mxu0 0
    %1209 = vmatpush1.bf16.msra.mxu0 %v643
    %1210 = vmatprep.subr.bf16.mxu0 0
    %1211 = vmatpush1.bf16.msra.mxu0 %v644
    %1212 = vmatprep.subr.bf16.mxu0 0
    %1213 = vmatpush1.bf16.msra.mxu0 0
    %1214 = vmatprep.subr.bf16.mxu0 0
    %1215 = vmatpush1.bf16.msra.mxu0 0
    %1216 = vmatprep.subr.bf16.mxu0 0
    %1217 = vmatpush1.bf16.msra.mxu0 0
    %1218 = vmatprep.subr.bf16.mxu0 0
    %1219 = vmatpush1.bf16.msra.mxu0 0
    %1220 = vmatprep.subr.bf16.mxu0 0
    %1221 = vmatpush1.bf16.msra.mxu0 0
    %1222 = vmatprep.subr.bf16.mxu0 0
    %1223 = vmatpush1.bf16.msra.mxu0 0
    %1224 = vmatprep.subr.bf16.mxu0 0
    %1225 = vmatpush1.bf16.msra.mxu0 0
    %1226 = vmatprep.subr.bf16.mxu0 0
    %1227 = vmatpush1.bf16.msra.mxu0 0
    %1228 = vmatprep.subr.bf16.mxu0 0
    %1229 = vmatpush1.bf16.msra.mxu0 0
    %1230 = vmatprep.subr.bf16.mxu0 0
    %1231 = vmatpush1.bf16.msra.mxu0 0
    %1232 = vmatprep.subr.bf16.mxu0 0
    %1233 = vmatpush1.bf16.msra.mxu0 0
    %1234 = vmatprep.subr.bf16.mxu0 0
    %1235 = vmatpush1.bf16.msra.mxu0 0
    %1236 = vmatprep.subr.bf16.mxu0 0
    %1237 = vmatpush1.bf16.msra.mxu0 0
    %1238 = vmatprep.subr.bf16.mxu0 0
    %1239 = vmatpush1.bf16.msra.mxu0 0
    %1240 = vmatprep.mubr.bf16.mxu0 0
    %1241 = vmatmul.mubr.bf16.gmra.mrb[0].mxu0 %v1203
    %v1242 = vpop.f32.mrb[0].mxu0
    %v1243 = vadd.f32 0.0, %v1242
    %v1244 = vpop.f32.mrb[0].mxu0
    %v1245 = vpop.f32.mrb[0].mxu0
    %v1246 = vadd.f32 0.0, %v1245
    %v1247 = vpop.f32.mrb[0].mxu0
    %1248 = vmatprep.mubr.bf16.mxu0 0
    %1249 = vmatmul.mubr.bf16.gmra.mrb[0].mxu0 %v1206
    %v1250 = vpop.f32.mrb[0].mxu0
    %v1251 = vadd.f32 0.0, %v1250
    %v1252 = vpop.f32.mrb[0].mxu0
    %v1253 = vpop.f32.mrb[0].mxu0
    %v1254 = vadd.f32 0.0, %v1253
    %v1255 = vpop.f32.mrb[0].mxu0
    %1256 = vdwg.mxu0
    %v1257 = vpack.c.bf16 %v1246, %v1243
    %v1258 = vpack.c.bf16 %v1254, %v1251
    %v1259 = vlaneseq
    %v1260 = vshrl.u32 %v1259, 7
    %v1261 = vsub.s32 0, %v1260
    %v1262 = vrot.slane %v769, %v1261
    %1263 = vmatprep.subr.bf16.mxu0 0
    %1264 = vmatpush1.bf16.msra.mxu0 %v771
    %1265 = vmatprep.subr.bf16.mxu0 0
    %1266 = vmatpush1.bf16.msra.mxu0 %v772
    %1267 = vmatprep.subr.bf16.mxu0 0
    %1268 = vmatpush1.bf16.msra.mxu0 %v773
    %1269 = vmatprep.subr.bf16.mxu0 0
    %1270 = vmatpush1.bf16.msra.mxu0 %v774
    %1271 = vmatprep.subr.bf16.mxu0 0
    %1272 = vmatpush1.bf16.msra.mxu0 %v775
    %1273 = vmatprep.subr.bf16.mxu0 0
    %1274 = vmatpush1.bf16.msra.mxu0 %v776
    %1275 = vmatprep.subr.bf16.mxu0 0
    %1276 = vmatpush1.bf16.msra.mxu0 %v777
    %1277 = vmatprep.subr.bf16.mxu0 0
    %1278 = vmatpush1.bf16.msra.mxu0 %v778
    %1279 = vmatprep.subr.bf16.mxu0 0
    %1280 = vmatpush1.bf16.msra.mxu0 %v779
    %1281 = vmatprep.subr.bf16.mxu0 0
    %1282 = vmatpush1.bf16.msra.mxu0 %v780
    %1283 = vmatprep.subr.bf16.mxu0 0
    %1284 = vmatpush1.bf16.msra.mxu0 %v781
    %1285 = vmatprep.subr.bf16.mxu0 0
    %1286 = vmatpush1.bf16.msra.mxu0 %v782
    %1287 = vmatprep.subr.bf16.mxu0 0
    %1288 = vmatpush1.bf16.msra.mxu0 %v783
    %1289 = vmatprep.subr.bf16.mxu0 0
    %1290 = vmatpush1.bf16.msra.mxu0 %v784
    %1291 = vmatprep.subr.bf16.mxu0 0
    %1292 = vmatpush1.bf16.msra.mxu0 %v785
    %1293 = vmatprep.subr.bf16.mxu0 0
    %1294 = vmatpush1.bf16.msra.mxu0 %v786
    %1295 = vmatprep.mubr.bf16.mxu0 %v970
    %1296 = vmatmul.mubr.bf16.gmra.mrb[0].mxu0 %v898
    %v1297 = vpop.f32.mrb[0].mxu0
    %v1298 = vadd.f32 %v1262, %v1297
    %v1299 = vpop.f32.mrb[0].mxu0
    %v1300 = vpop.f32.mrb[0].mxu0
    %v1301 = vadd.f32 %v1262, %v1300
    %v1302 = vpop.f32.mrb[0].mxu0
    %1303 = vmatprep.mubr.bf16.mxu0 %v971
    %1304 = vmatmul.mubr.bf16.gmra.mrb[0].mxu0 %v899
    %v1305 = vpop.f32.mrb[0].mxu0
    %v1306 = vadd.f32 %v1262, %v1305
    %v1307 = vpop.f32.mrb[0].mxu0
    %v1308 = vpop.f32.mrb[0].mxu0
    %v1309 = vadd.f32 %v1262, %v1308
    %v1310 = vpop.f32.mrb[0].mxu0
    %1311 = vdwg.mxu0
    %1312 = vmatprep.subr.bf16.mxu0 0
    %1313 = vmatpush1.bf16.msra.mxu0 %v787
    %1314 = vmatprep.subr.bf16.mxu0 0
    %1315 = vmatpush1.bf16.msra.mxu0 %v788
    %1316 = vmatprep.subr.bf16.mxu0 0
    %1317 = vmatpush1.bf16.msra.mxu0 %v789
    %1318 = vmatprep.subr.bf16.mxu0 0
    %1319 = vmatpush1.bf16.msra.mxu0 %v790
    %1320 = vmatprep.subr.bf16.mxu0 0
    %1321 = vmatpush1.bf16.msra.mxu0 %v791
    %1322 = vmatprep.subr.bf16.mxu0 0
    %1323 = vmatpush1.bf16.msra.mxu0 %v792
    %1324 = vmatprep.subr.bf16.mxu0 0
    %1325 = vmatpush1.bf16.msra.mxu0 %v793
    %1326 = vmatprep.subr.bf16.mxu0 0
    %1327 = vmatpush1.bf16.msra.mxu0 %v794
    %1328 = vmatprep.subr.bf16.mxu0 0
    %1329 = vmatpush1.bf16.msra.mxu0 %v795
    %1330 = vmatprep.subr.bf16.mxu0 0
    %1331 = vmatpush1.bf16.msra.mxu0 %v796
    %1332 = vmatprep.subr.bf16.mxu0 0
    %1333 = vmatpush1.bf16.msra.mxu0 %v797
    %1334 = vmatprep.subr.bf16.mxu0 0
    %1335 = vmatpush1.bf16.msra.mxu0 %v798
    %1336 = vmatprep.subr.bf16.mxu0 0
    %1337 = vmatpush1.bf16.msra.mxu0 %v799
    %1338 = vmatprep.subr.bf16.mxu0 0
    %1339 = vmatpush1.bf16.msra.mxu0 %v800
    %1340 = vmatprep.subr.bf16.mxu0 0
    %1341 = vmatpush1.bf16.msra.mxu0 %v801
    %1342 = vmatprep.subr.bf16.mxu0 0
    %1343 = vmatpush1.bf16.msra.mxu0 %v802
    %1344 = vmatprep.mubr.bf16.mxu0 %v1114
    %1345 = vmatmul.mubr.bf16.gmra.mrb[0].mxu0 %v1042
    %v1346 = vpop.f32.mrb[0].mxu0
    %v1347 = vadd.f32 %v1298, %v1346
    %v1348 = vpop.f32.mrb[0].mxu0
    %v1349 = vpop.f32.mrb[0].mxu0
    %v1350 = vadd.f32 %v1301, %v1349
    %v1351 = vpop.f32.mrb[0].mxu0
    %1352 = vmatprep.mubr.bf16.mxu0 %v1115
    %1353 = vmatmul.mubr.bf16.gmra.mrb[0].mxu0 %v1043
    %v1354 = vpop.f32.mrb[0].mxu0
    %v1355 = vadd.f32 %v1306, %v1354
    %v1356 = vpop.f32.mrb[0].mxu0
    %v1357 = vpop.f32.mrb[0].mxu0
    %v1358 = vadd.f32 %v1309, %v1357
    %v1359 = vpop.f32.mrb[0].mxu0
    %1360 = vdwg.mxu0
    %1361 = vmatprep.subr.bf16.mxu0 0
    %1362 = vmatpush1.bf16.msra.mxu0 %v803
    %1363 = vmatprep.subr.bf16.mxu0 0
    %1364 = vmatpush1.bf16.msra.mxu0 %v804
    %1365 = vmatprep.subr.bf16.mxu0 0
    %1366 = vmatpush1.bf16.msra.mxu0 %v805
    %1367 = vmatprep.subr.bf16.mxu0 0
    %1368 = vmatpush1.bf16.msra.mxu0 %v806
    %1369 = vmatprep.subr.bf16.mxu0 0
    %1370 = vmatpush1.bf16.msra.mxu0 %v807
    %1371 = vmatprep.subr.bf16.mxu0 0
    %1372 = vmatpush1.bf16.msra.mxu0 %v808
    %1373 = vmatprep.subr.bf16.mxu0 0
    %1374 = vmatpush1.bf16.msra.mxu0 %v809
    %1375 = vmatprep.subr.bf16.mxu0 0
    %1376 = vmatpush1.bf16.msra.mxu0 %v810
    %1377 = vmatprep.subr.bf16.mxu0 0
    %1378 = vmatpush1.bf16.msra.mxu0 %v811
    %1379 = vmatprep.subr.bf16.mxu0 0
    %1380 = vmatpush1.bf16.msra.mxu0 %v812
    %1381 = vmatprep.subr.bf16.mxu0 0
    %1382 = vmatpush1.bf16.msra.mxu0 %v813
    %1383 = vmatprep.subr.bf16.mxu0 0
    %1384 = vmatpush1.bf16.msra.mxu0 %v814
    %1385 = vmatprep.subr.bf16.mxu0 0
    %1386 = vmatpush1.bf16.msra.mxu0 %v815
    %1387 = vmatprep.subr.bf16.mxu0 0
    %1388 = vmatpush1.bf16.msra.mxu0 %v816
    %1389 = vmatprep.subr.bf16.mxu0 0
    %1390 = vmatpush1.bf16.msra.mxu0 %v817
    %1391 = vmatprep.subr.bf16.mxu0 0
    %1392 = vmatpush1.bf16.msra.mxu0 %v818
    %1393 = vmatprep.mubr.bf16.mxu0 %v1257
    %1394 = vmatmul.mubr.bf16.gmra.mrb[0].mxu0 %v1186
    %v1395 = vpop.f32.mrb[0].mxu0
    %v1396 = vadd.f32 %v1347, %v1395
    %v1397 = vpop.f32.mrb[0].mxu0
    %v1398 = vpop.f32.mrb[0].mxu0
    %v1399 = vadd.f32 %v1350, %v1398
    %v1400 = vpop.f32.mrb[0].mxu0
    %1401 = vmatprep.mubr.bf16.mxu0 %v1258
    %1402 = vmatmul.mubr.bf16.gmra.mrb[0].mxu0 %v1187
    %v1403 = vpop.f32.mrb[0].mxu0
    %v1404 = vadd.f32 %v1355, %v1403
    %v1405 = vpop.f32.mrb[0].mxu0
    %v1406 = vpop.f32.mrb[0].mxu0
    %v1407 = vadd.f32 %v1358, %v1406
    %v1408 = vpop.f32.mrb[0].mxu0
    %1409 = vdwg.mxu0
    %1410 = vmatprep.subr.bf16.mxu0 0
    %1411 = vmatpush1.bf16.msra.mxu0 %v819
    %1412 = vmatprep.subr.bf16.mxu0 0
    %1413 = vmatpush1.bf16.msra.mxu0 %v820
    %1414 = vmatprep.subr.bf16.mxu0 0
    %1415 = vmatpush1.bf16.msra.mxu0 %v821
    %1416 = vmatprep.subr.bf16.mxu0 0
    %1417 = vmatpush1.bf16.msra.mxu0 %v822
    %1418 = vmatprep.subr.bf16.mxu0 0
    %1419 = vmatpush1.bf16.msra.mxu0 %v823
    %1420 = vmatprep.subr.bf16.mxu0 0
    %1421 = vmatpush1.bf16.msra.mxu0 %v824
    %1422 = vmatprep.subr.bf16.mxu0 0
    %1423 = vmatpush1.bf16.msra.mxu0 %v825
    %1424 = vmatprep.subr.bf16.mxu0 0
    %1425 = vmatpush1.bf16.msra.mxu0 %v826
    %1426 = vmatprep.subr.bf16.mxu0 0
    %1427 = vmatpush1.bf16.msra.mxu0 0
    %1428 = vmatprep.subr.bf16.mxu0 0
    %1429 = vmatpush1.bf16.msra.mxu0 0
    %1430 = vmatprep.subr.bf16.mxu0 0
    %1431 = vmatpush1.bf16.msra.mxu0 0
    %1432 = vmatprep.subr.bf16.mxu0 0
    %1433 = vmatpush1.bf16.msra.mxu0 0
    %1434 = vmatprep.subr.bf16.mxu0 0
    %1435 = vmatpush1.bf16.msra.mxu0 0
    %1436 = vmatprep.subr.bf16.mxu0 0
    %1437 = vmatpush1.bf16.msra.mxu0 0
    %1438 = vmatprep.subr.bf16.mxu0 0
    %1439 = vmatpush1.bf16.msra.mxu0 0
    %1440 = vmatprep.subr.bf16.mxu0 0
    %1441 = vmatpush1.bf16.msra.mxu0 0
    %1442 = vmatprep.mubr.bf16.mxu0 0
    %1443 = vmatmul.mubr.bf16.gmra.mrb[0].mxu0 %v643
    %v1444 = vpop.f32.mrb[0].mxu0
    %v1445 = vadd.f32 %v1396, %v1444
    %v1446 = vpop.f32.mrb[0].mxu0
    %v1447 = vpop.f32.mrb[0].mxu0
    %v1448 = vadd.f32 %v1399, %v1447
    %v1449 = vpop.f32.mrb[0].mxu0
    %1450 = vmatprep.mubr.bf16.mxu0 0
    %1451 = vmatmul.mubr.bf16.gmra.mrb[0].mxu0 %v644
    %v1452 = vpop.f32.mrb[0].mxu0
    %v1453 = vadd.f32 %v1404, %v1452
    %v1454 = vpop.f32.mrb[0].mxu0
    %v1455 = vpop.f32.mrb[0].mxu0
    %v1456 = vadd.f32 %v1407, %v1455
    %v1457 = vpop.f32.mrb[0].mxu0
    %1458 = vdwg.mxu0
    %v1459 = vmax.f32 %v1445, 0.0
    %v1460 = vmax.f32 %v1448, 0.0
    %v1461 = vmax.f32 %v1453, 0.0
    %v1462 = vmax.f32 %v1456, 0.0
    %v1463 = vpack.c.bf16 %v1460, %v1459
    %v1464 = vpack.c.bf16 %v1462, %v1461
    %v1465 = vld [vmem:[#allocation2 + $0x1c0] sm:$0xff]
    %v1466 = vld [vmem:[#allocation2 + $0x1c8] sm:$0xff]
    %v1467 = vld [vmem:[#allocation2 + $0x1d0] sm:$0xff]
    %v1468 = vld [vmem:[#allocation2 + $0x1d8] sm:$0xff]
    %v1469 = vld [vmem:[#allocation2 + $0x1e0] sm:$0xff]
    %v1470 = vld [vmem:[#allocation2 + $0x1e8] sm:$0xff]
    %v1471 = vld [vmem:[#allocation2 + $0x1f0] sm:$0xff]
    %v1472 = vld [vmem:[#allocation2 + $0x1f8] sm:$0xff]
    %v1473 = vld [vmem:[#allocation2 + $0x200] sm:$0xff]
    %v1474 = vld [vmem:[#allocation2 + $0x208] sm:$0xff]
    %v1475 = vld [vmem:[#allocation2 + $0x210] sm:$0xff]
    %v1476 = vld [vmem:[#allocation2 + $0x218] sm:$0xff]
    %v1477 = vld [vmem:[#allocation2 + $0x220] sm:$0xff]
    %v1478 = vld [vmem:[#allocation2 + $0x228] sm:$0xff]
    %v1479 = vld [vmem:[#allocation2 + $0x230] sm:$0xff]
    %v1480 = vld [vmem:[#allocation2 + $0x238] sm:$0xff]
    %v1481 = vld [vmem:[#allocation2 + $0x240] sm:$0xff]
    %v1482 = vld [vmem:[#allocation2 + $0x248] sm:$0xff]
    %v1483 = vld [vmem:[#allocation2 + $0x250] sm:$0xff]
    %v1484 = vld [vmem:[#allocation2 + $0x258] sm:$0xff]
    %v1485 = vld [vmem:[#allocation2 + $0x260] sm:$0xff]
    %v1486 = vld [vmem:[#allocation2 + $0x268] sm:$0xff]
    %v1487 = vld [vmem:[#allocation2 + $0x270] sm:$0xff]
    %v1488 = vld [vmem:[#allocation2 + $0x278] sm:$0xff]
    %v1489 = vld [vmem:[#allocation2 + $0x280] sm:$0xff]
    %v1490 = vld [vmem:[#allocation2 + $0x288] sm:$0xff]
    %v1491 = vld [vmem:[#allocation2 + $0x290] sm:$0xff]
    %v1492 = vld [vmem:[#allocation2 + $0x298] sm:$0xff]
    %v1493 = vld [vmem:[#allocation2 + $0x2a0] sm:$0xff]
    %v1494 = vld [vmem:[#allocation2 + $0x2a8] sm:$0xff]
    %v1495 = vld [vmem:[#allocation2 + $0x2b0] sm:$0xff]
    %v1496 = vld [vmem:[#allocation2 + $0x2b8] sm:$0xff]
    %v1497 = vld [vmem:[#allocation2 + $0x2c0] sm:$0xff]
    %v1498 = vld [vmem:[#allocation2 + $0x2c8] sm:$0xff]
    %v1499 = vld [vmem:[#allocation2 + $0x2d0] sm:$0xff]
    %v1500 = vld [vmem:[#allocation2 + $0x2d8] sm:$0xff]
    %v1501 = vld [vmem:[#allocation2 + $0x2e0] sm:$0xff]
    %v1502 = vld [vmem:[#allocation2 + $0x2e8] sm:$0xff]
    %v1503 = vld [vmem:[#allocation2 + $0x2f0] sm:$0xff]
    %v1504 = vld [vmem:[#allocation2 + $0x2f8] sm:$0xff]
    %v1505 = vld [vmem:[#allocation2 + $0x300] sm:$0xff]
    %v1506 = vld [vmem:[#allocation2 + $0x308] sm:$0xff]
    %v1507 = vld [vmem:[#allocation2 + $0x310] sm:$0xff]
    %v1508 = vld [vmem:[#allocation2 + $0x318] sm:$0xff]
    %v1509 = vld [vmem:[#allocation2 + $0x320] sm:$0xff]
    %v1510 = vld [vmem:[#allocation2 + $0x328] sm:$0xff]
    %v1511 = vld [vmem:[#allocation2 + $0x330] sm:$0xff]
    %v1512 = vld [vmem:[#allocation2 + $0x338] sm:$0xff]
    %v1513 = vld [vmem:[#allocation2 + $0x340] sm:$0xff]
    %v1514 = vld [vmem:[#allocation2 + $0x348] sm:$0xff]
    %v1515 = vld [vmem:[#allocation2 + $0x350] sm:$0xff]
    %v1516 = vld [vmem:[#allocation2 + $0x358] sm:$0xff]
    %v1517 = vld [vmem:[#allocation2 + $0x360] sm:$0xff]
    %v1518 = vld [vmem:[#allocation2 + $0x368] sm:$0xff]
    %v1519 = vld [vmem:[#allocation2 + $0x370] sm:$0xff]
    %v1520 = vld [vmem:[#allocation2 + $0x378] sm:$0xff]
    %1521 = vmatprep.subr.bf16.mxu0 0
    %1522 = vmatpush1.bf16.msra.mxu0 %v1463
    %1523 = vmatprep.subr.bf16.mxu0 0
    %1524 = vmatpush1.bf16.msra.mxu0 %v1464
    %1525 = vmatprep.subr.bf16.mxu0 0
    %1526 = vmatpush1.bf16.msra.mxu0 0
    %1527 = vmatprep.subr.bf16.mxu0 0
    %1528 = vmatpush1.bf16.msra.mxu0 0
    %1529 = vmatprep.subr.bf16.mxu0 0
    %1530 = vmatpush1.bf16.msra.mxu0 0
    %1531 = vmatprep.subr.bf16.mxu0 0
    %1532 = vmatpush1.bf16.msra.mxu0 0
    %1533 = vmatprep.subr.bf16.mxu0 0
    %1534 = vmatpush1.bf16.msra.mxu0 0
    %1535 = vmatprep.subr.bf16.mxu0 0
    %1536 = vmatpush1.bf16.msra.mxu0 0
    %1537 = vmatprep.subr.bf16.mxu0 0
    %1538 = vmatpush1.bf16.msra.mxu0 0
    %1539 = vmatprep.subr.bf16.mxu0 0
    %1540 = vmatpush1.bf16.msra.mxu0 0
    %1541 = vmatprep.subr.bf16.mxu0 0
    %1542 = vmatpush1.bf16.msra.mxu0 0
    %1543 = vmatprep.subr.bf16.mxu0 0
    %1544 = vmatpush1.bf16.msra.mxu0 0
    %1545 = vmatprep.subr.bf16.mxu0 0
    %1546 = vmatpush1.bf16.msra.mxu0 0
    %1547 = vmatprep.subr.bf16.mxu0 0
    %1548 = vmatpush1.bf16.msra.mxu0 0
    %1549 = vmatprep.subr.bf16.mxu0 0
    %1550 = vmatpush1.bf16.msra.mxu0 0
    %1551 = vmatprep.subr.bf16.mxu0 0
    %1552 = vmatpush1.bf16.msra.mxu0 0
    %1553 = vmatprep.mubr.bf16.mxu0 0
    %1554 = vmatmul.mubr.bf16.gmra.mrb[0].mxu0 %v844
    %v1555 = vpop.f32.mrb[0].mxu0
    %v1556 = vadd.f32 0.0, %v1555
    %v1557 = vpop.f32.mrb[0].mxu0
    %v1558 = vpop.f32.mrb[0].mxu0
    %v1559 = vadd.f32 0.0, %v1558
    %v1560 = vpop.f32.mrb[0].mxu0
    %1561 = vmatprep.mubr.bf16.mxu0 0
    %1562 = vmatmul.mubr.bf16.gmra.mrb[0].mxu0 %v847
    %v1563 = vpop.f32.mrb[0].mxu0
    %v1564 = vadd.f32 0.0, %v1563
    %v1565 = vpop.f32.mrb[0].mxu0
    %v1566 = vpop.f32.mrb[0].mxu0
    %v1567 = vadd.f32 0.0, %v1566
    %v1568 = vpop.f32.mrb[0].mxu0
    %1569 = vdwg.mxu0
    %v1570 = vpack.c.bf16 %v1559, %v1556
    %v1571 = vpack.c.bf16 %v1567, %v1564
    %1572 = vmatprep.subr.bf16.mxu0 0
    %1573 = vmatpush1.bf16.msra.mxu0 %v1463
    %1574 = vmatprep.subr.bf16.mxu0 0
    %1575 = vmatpush1.bf16.msra.mxu0 %v1464
    %1576 = vmatprep.subr.bf16.mxu0 0
    %1577 = vmatpush1.bf16.msra.mxu0 0
    %1578 = vmatprep.subr.bf16.mxu0 0
    %1579 = vmatpush1.bf16.msra.mxu0 0
    %1580 = vmatprep.subr.bf16.mxu0 0
    %1581 = vmatpush1.bf16.msra.mxu0 0
    %1582 = vmatprep.subr.bf16.mxu0 0
    %1583 = vmatpush1.bf16.msra.mxu0 0
    %1584 = vmatprep.subr.bf16.mxu0 0
    %1585 = vmatpush1.bf16.msra.mxu0 0
    %1586 = vmatprep.subr.bf16.mxu0 0
    %1587 = vmatpush1.bf16.msra.mxu0 0
    %1588 = vmatprep.subr.bf16.mxu0 0
    %1589 = vmatpush1.bf16.msra.mxu0 0
    %1590 = vmatprep.subr.bf16.mxu0 0
    %1591 = vmatpush1.bf16.msra.mxu0 0
    %1592 = vmatprep.subr.bf16.mxu0 0
    %1593 = vmatpush1.bf16.msra.mxu0 0
    %1594 = vmatprep.subr.bf16.mxu0 0
    %1595 = vmatpush1.bf16.msra.mxu0 0
    %1596 = vmatprep.subr.bf16.mxu0 0
    %1597 = vmatpush1.bf16.msra.mxu0 0
    %1598 = vmatprep.subr.bf16.mxu0 0
    %1599 = vmatpush1.bf16.msra.mxu0 0
    %1600 = vmatprep.subr.bf16.mxu0 0
    %1601 = vmatpush1.bf16.msra.mxu0 0
    %1602 = vmatprep.subr.bf16.mxu0 0
    %1603 = vmatpush1.bf16.msra.mxu0 0
    %1604 = vmatprep.mubr.bf16.mxu0 0
    %1605 = vmatmul.mubr.bf16.gmra.mrb[0].mxu0 %v916
    %v1606 = vpop.f32.mrb[0].mxu0
    %v1607 = vadd.f32 0.0, %v1606
    %v1608 = vpop.f32.mrb[0].mxu0
    %v1609 = vpop.f32.mrb[0].mxu0
    %v1610 = vadd.f32 0.0, %v1609
    %v1611 = vpop.f32.mrb[0].mxu0
    %1612 = vmatprep.mubr.bf16.mxu0 0
    %1613 = vmatmul.mubr.bf16.gmra.mrb[0].mxu0 %v919
    %v1614 = vpop.f32.mrb[0].mxu0
    %v1615 = vadd.f32 0.0, %v1614
    %v1616 = vpop.f32.mrb[0].mxu0
    %v1617 = vpop.f32.mrb[0].mxu0
    %v1618 = vadd.f32 0.0, %v1617
    %v1619 = vpop.f32.mrb[0].mxu0
    %1620 = vdwg.mxu0
    %v1621 = vpack.c.bf16 %v1610, %v1607
    %v1622 = vpack.c.bf16 %v1618, %v1615
    %1623 = vmatprep.subr.bf16.mxu0 0
    %1624 = vmatpush1.bf16.msra.mxu0 %v1463
    %1625 = vmatprep.subr.bf16.mxu0 0
    %1626 = vmatpush1.bf16.msra.mxu0 %v1464
    %1627 = vmatprep.subr.bf16.mxu0 0
    %1628 = vmatpush1.bf16.msra.mxu0 0
    %1629 = vmatprep.subr.bf16.mxu0 0
    %1630 = vmatpush1.bf16.msra.mxu0 0
    %1631 = vmatprep.subr.bf16.mxu0 0
    %1632 = vmatpush1.bf16.msra.mxu0 0
    %1633 = vmatprep.subr.bf16.mxu0 0
    %1634 = vmatpush1.bf16.msra.mxu0 0
    %1635 = vmatprep.subr.bf16.mxu0 0
    %1636 = vmatpush1.bf16.msra.mxu0 0
    %1637 = vmatprep.subr.bf16.mxu0 0
    %1638 = vmatpush1.bf16.msra.mxu0 0
    %1639 = vmatprep.subr.bf16.mxu0 0
    %1640 = vmatpush1.bf16.msra.mxu0 0
    %1641 = vmatprep.subr.bf16.mxu0 0
    %1642 = vmatpush1.bf16.msra.mxu0 0
    %1643 = vmatprep.subr.bf16.mxu0 0
    %1644 = vmatpush1.bf16.msra.mxu0 0
    %1645 = vmatprep.subr.bf16.mxu0 0
    %1646 = vmatpush1.bf16.msra.mxu0 0
    %1647 = vmatprep.subr.bf16.mxu0 0
    %1648 = vmatpush1.bf16.msra.mxu0 0
    %1649 = vmatprep.subr.bf16.mxu0 0
    %1650 = vmatpush1.bf16.msra.mxu0 0
    %1651 = vmatprep.subr.bf16.mxu0 0
    %1652 = vmatpush1.bf16.msra.mxu0 0
    %1653 = vmatprep.subr.bf16.mxu0 0
    %1654 = vmatpush1.bf16.msra.mxu0 0
    %1655 = vmatprep.mubr.bf16.mxu0 0
    %1656 = vmatmul.mubr.bf16.gmra.mrb[0].mxu0 %v988
    %v1657 = vpop.f32.mrb[0].mxu0
    %v1658 = vadd.f32 0.0, %v1657
    %v1659 = vpop.f32.mrb[0].mxu0
    %v1660 = vpop.f32.mrb[0].mxu0
    %v1661 = vadd.f32 0.0, %v1660
    %v1662 = vpop.f32.mrb[0].mxu0
    %1663 = vmatprep.mubr.bf16.mxu0 0
    %1664 = vmatmul.mubr.bf16.gmra.mrb[0].mxu0 %v991
    %v1665 = vpop.f32.mrb[0].mxu0
    %v1666 = vadd.f32 0.0, %v1665
    %v1667 = vpop.f32.mrb[0].mxu0
    %v1668 = vpop.f32.mrb[0].mxu0
    %v1669 = vadd.f32 0.0, %v1668
    %v1670 = vpop.f32.mrb[0].mxu0
    %1671 = vdwg.mxu0
    %v1672 = vpack.c.bf16 %v1661, %v1658
    %v1673 = vpack.c.bf16 %v1669, %v1666
    %1674 = vmatprep.subr.bf16.mxu0 0
    %1675 = vmatpush1.bf16.msra.mxu0 %v1463
    %1676 = vmatprep.subr.bf16.mxu0 0
    %1677 = vmatpush1.bf16.msra.mxu0 %v1464
    %1678 = vmatprep.subr.bf16.mxu0 0
    %1679 = vmatpush1.bf16.msra.mxu0 0
    %1680 = vmatprep.subr.bf16.mxu0 0
    %1681 = vmatpush1.bf16.msra.mxu0 0
    %1682 = vmatprep.subr.bf16.mxu0 0
    %1683 = vmatpush1.bf16.msra.mxu0 0
    %1684 = vmatprep.subr.bf16.mxu0 0
    %1685 = vmatpush1.bf16.msra.mxu0 0
    %1686 = vmatprep.subr.bf16.mxu0 0
    %1687 = vmatpush1.bf16.msra.mxu0 0
    %1688 = vmatprep.subr.bf16.mxu0 0
    %1689 = vmatpush1.bf16.msra.mxu0 0
    %1690 = vmatprep.subr.bf16.mxu0 0
    %1691 = vmatpush1.bf16.msra.mxu0 0
    %1692 = vmatprep.subr.bf16.mxu0 0
    %1693 = vmatpush1.bf16.msra.mxu0 0
    %1694 = vmatprep.subr.bf16.mxu0 0
    %1695 = vmatpush1.bf16.msra.mxu0 0
    %1696 = vmatprep.subr.bf16.mxu0 0
    %1697 = vmatpush1.bf16.msra.mxu0 0
    %1698 = vmatprep.subr.bf16.mxu0 0
    %1699 = vmatpush1.bf16.msra.mxu0 0
    %1700 = vmatprep.subr.bf16.mxu0 0
    %1701 = vmatpush1.bf16.msra.mxu0 0
    %1702 = vmatprep.subr.bf16.mxu0 0
    %1703 = vmatpush1.bf16.msra.mxu0 0
    %1704 = vmatprep.subr.bf16.mxu0 0
    %1705 = vmatpush1.bf16.msra.mxu0 0
    %1706 = vmatprep.mubr.bf16.mxu0 0
    %1707 = vmatmul.mubr.bf16.gmra.mrb[0].mxu0 %v1060
    %v1708 = vpop.f32.mrb[0].mxu0
    %v1709 = vadd.f32 0.0, %v1708
    %v1710 = vpop.f32.mrb[0].mxu0
    %v1711 = vpop.f32.mrb[0].mxu0
    %v1712 = vadd.f32 0.0, %v1711
    %v1713 = vpop.f32.mrb[0].mxu0
    %1714 = vmatprep.mubr.bf16.mxu0 0
    %1715 = vmatmul.mubr.bf16.gmra.mrb[0].mxu0 %v1063
    %v1716 = vpop.f32.mrb[0].mxu0
    %v1717 = vadd.f32 0.0, %v1716
    %v1718 = vpop.f32.mrb[0].mxu0
    %v1719 = vpop.f32.mrb[0].mxu0
    %v1720 = vadd.f32 0.0, %v1719
    %v1721 = vpop.f32.mrb[0].mxu0
    %1722 = vdwg.mxu0
    %v1723 = vpack.c.bf16 %v1712, %v1709
    %v1724 = vpack.c.bf16 %v1720, %v1717
    %1725 = vmatprep.subr.bf16.mxu0 0
    %1726 = vmatpush1.bf16.msra.mxu0 %v1463
    %1727 = vmatprep.subr.bf16.mxu0 0
    %1728 = vmatpush1.bf16.msra.mxu0 %v1464
    %1729 = vmatprep.subr.bf16.mxu0 0
    %1730 = vmatpush1.bf16.msra.mxu0 0
    %1731 = vmatprep.subr.bf16.mxu0 0
    %1732 = vmatpush1.bf16.msra.mxu0 0
    %1733 = vmatprep.subr.bf16.mxu0 0
    %1734 = vmatpush1.bf16.msra.mxu0 0
    %1735 = vmatprep.subr.bf16.mxu0 0
    %1736 = vmatpush1.bf16.msra.mxu0 0
    %1737 = vmatprep.subr.bf16.mxu0 0
    %1738 = vmatpush1.bf16.msra.mxu0 0
    %1739 = vmatprep.subr.bf16.mxu0 0
    %1740 = vmatpush1.bf16.msra.mxu0 0
    %1741 = vmatprep.subr.bf16.mxu0 0
    %1742 = vmatpush1.bf16.msra.mxu0 0
    %1743 = vmatprep.subr.bf16.mxu0 0
    %1744 = vmatpush1.bf16.msra.mxu0 0
    %1745 = vmatprep.subr.bf16.mxu0 0
    %1746 = vmatpush1.bf16.msra.mxu0 0
    %1747 = vmatprep.subr.bf16.mxu0 0
    %1748 = vmatpush1.bf16.msra.mxu0 0
    %1749 = vmatprep.subr.bf16.mxu0 0
    %1750 = vmatpush1.bf16.msra.mxu0 0
    %1751 = vmatprep.subr.bf16.mxu0 0
    %1752 = vmatpush1.bf16.msra.mxu0 0
    %1753 = vmatprep.subr.bf16.mxu0 0
    %1754 = vmatpush1.bf16.msra.mxu0 0
    %1755 = vmatprep.subr.bf16.mxu0 0
    %1756 = vmatpush1.bf16.msra.mxu0 0
    %1757 = vmatprep.mubr.bf16.mxu0 0
    %1758 = vmatmul.mubr.bf16.gmra.mrb[0].mxu0 %v1132
    %v1759 = vpop.f32.mrb[0].mxu0
    %v1760 = vadd.f32 0.0, %v1759
    %v1761 = vpop.f32.mrb[0].mxu0
    %v1762 = vpop.f32.mrb[0].mxu0
    %v1763 = vadd.f32 0.0, %v1762
    %v1764 = vpop.f32.mrb[0].mxu0
    %1765 = vmatprep.mubr.bf16.mxu0 0
    %1766 = vmatmul.mubr.bf16.gmra.mrb[0].mxu0 %v1135
    %v1767 = vpop.f32.mrb[0].mxu0
    %v1768 = vadd.f32 0.0, %v1767
    %v1769 = vpop.f32.mrb[0].mxu0
    %v1770 = vpop.f32.mrb[0].mxu0
    %v1771 = vadd.f32 0.0, %v1770
    %v1772 = vpop.f32.mrb[0].mxu0
    %1773 = vdwg.mxu0
    %v1774 = vpack.c.bf16 %v1763, %v1760
    %v1775 = vpack.c.bf16 %v1771, %v1768
    %1776 = vmatprep.subr.bf16.mxu0 0
    %1777 = vmatpush1.bf16.msra.mxu0 %v1463
    %1778 = vmatprep.subr.bf16.mxu0 0
    %1779 = vmatpush1.bf16.msra.mxu0 %v1464
    %1780 = vmatprep.subr.bf16.mxu0 0
    %1781 = vmatpush1.bf16.msra.mxu0 0
    %1782 = vmatprep.subr.bf16.mxu0 0
    %1783 = vmatpush1.bf16.msra.mxu0 0
    %1784 = vmatprep.subr.bf16.mxu0 0
    %1785 = vmatpush1.bf16.msra.mxu0 0
    %1786 = vmatprep.subr.bf16.mxu0 0
    %1787 = vmatpush1.bf16.msra.mxu0 0
    %1788 = vmatprep.subr.bf16.mxu0 0
    %1789 = vmatpush1.bf16.msra.mxu0 0
    %1790 = vmatprep.subr.bf16.mxu0 0
    %1791 = vmatpush1.bf16.msra.mxu0 0
    %1792 = vmatprep.subr.bf16.mxu0 0
    %1793 = vmatpush1.bf16.msra.mxu0 0
    %1794 = vmatprep.subr.bf16.mxu0 0
    %1795 = vmatpush1.bf16.msra.mxu0 0
    %1796 = vmatprep.subr.bf16.mxu0 0
    %1797 = vmatpush1.bf16.msra.mxu0 0
    %1798 = vmatprep.subr.bf16.mxu0 0
    %1799 = vmatpush1.bf16.msra.mxu0 0
    %1800 = vmatprep.subr.bf16.mxu0 0
    %1801 = vmatpush1.bf16.msra.mxu0 0
    %1802 = vmatprep.subr.bf16.mxu0 0
    %1803 = vmatpush1.bf16.msra.mxu0 0
    %1804 = vmatprep.subr.bf16.mxu0 0
    %1805 = vmatpush1.bf16.msra.mxu0 0
    %1806 = vmatprep.subr.bf16.mxu0 0
    %1807 = vmatpush1.bf16.msra.mxu0 0
    %1808 = vmatprep.mubr.bf16.mxu0 0
    %1809 = vmatmul.mubr.bf16.gmra.mrb[0].mxu0 %v1203
    %v1810 = vpop.f32.mrb[0].mxu0
    %v1811 = vadd.f32 0.0, %v1810
    %v1812 = vpop.f32.mrb[0].mxu0
    %v1813 = vpop.f32.mrb[0].mxu0
    %v1814 = vadd.f32 0.0, %v1813
    %v1815 = vpop.f32.mrb[0].mxu0
    %1816 = vmatprep.mubr.bf16.mxu0 0
    %1817 = vmatmul.mubr.bf16.gmra.mrb[0].mxu0 %v1206
    %v1818 = vpop.f32.mrb[0].mxu0
    %v1819 = vadd.f32 0.0, %v1818
    %v1820 = vpop.f32.mrb[0].mxu0
    %v1821 = vpop.f32.mrb[0].mxu0
    %v1822 = vadd.f32 0.0, %v1821
    %v1823 = vpop.f32.mrb[0].mxu0
    %1824 = vdwg.mxu0
    %v1825 = vpack.c.bf16 %v1814, %v1811
    %v1826 = vpack.c.bf16 %v1822, %v1819
    %v1827 = vlaneseq
    %v1828 = vshrl.u32 %v1827, 7
    %v1829 = vsub.s32 0, %v1828
    %v1830 = vrot.slane %v770, %v1829
    %1831 = vmatprep.subr.bf16.mxu0 0
    %1832 = vmatpush1.bf16.msra.mxu0 %v1465
    %1833 = vmatprep.subr.bf16.mxu0 0
    %1834 = vmatpush1.bf16.msra.mxu0 %v1466
    %1835 = vmatprep.subr.bf16.mxu0 0
    %1836 = vmatpush1.bf16.msra.mxu0 %v1467
    %1837 = vmatprep.subr.bf16.mxu0 0
    %1838 = vmatpush1.bf16.msra.mxu0 %v1468
    %1839 = vmatprep.subr.bf16.mxu0 0
    %1840 = vmatpush1.bf16.msra.mxu0 %v1469
    %1841 = vmatprep.subr.bf16.mxu0 0
    %1842 = vmatpush1.bf16.msra.mxu0 %v1470
    %1843 = vmatprep.subr.bf16.mxu0 0
    %1844 = vmatpush1.bf16.msra.mxu0 %v1471
    %1845 = vmatprep.subr.bf16.mxu0 0
    %1846 = vmatpush1.bf16.msra.mxu0 %v1472
    %1847 = vmatprep.subr.bf16.mxu0 0
    %1848 = vmatpush1.bf16.msra.mxu0 %v1473
    %1849 = vmatprep.subr.bf16.mxu0 0
    %1850 = vmatpush1.bf16.msra.mxu0 %v1474
    %1851 = vmatprep.subr.bf16.mxu0 0
    %1852 = vmatpush1.bf16.msra.mxu0 %v1475
    %1853 = vmatprep.subr.bf16.mxu0 0
    %1854 = vmatpush1.bf16.msra.mxu0 %v1476
    %1855 = vmatprep.subr.bf16.mxu0 0
    %1856 = vmatpush1.bf16.msra.mxu0 %v1477
    %1857 = vmatprep.subr.bf16.mxu0 0
    %1858 = vmatpush1.bf16.msra.mxu0 %v1478
    %1859 = vmatprep.subr.bf16.mxu0 0
    %1860 = vmatpush1.bf16.msra.mxu0 %v1479
    %1861 = vmatprep.subr.bf16.mxu0 0
    %1862 = vmatpush1.bf16.msra.mxu0 %v1480
    %1863 = vmatprep.mubr.bf16.mxu0 %v1621
    %1864 = vmatmul.mubr.bf16.gmra.mrb[0].mxu0 %v1570
    %v1865 = vpop.f32.mrb[0].mxu0
    %v1866 = vadd.f32 %v1830, %v1865
    %v1867 = vpop.f32.mrb[0].mxu0
    %v1868 = vpop.f32.mrb[0].mxu0
    %v1869 = vadd.f32 %v1830, %v1868
    %v1870 = vpop.f32.mrb[0].mxu0
    %1871 = vmatprep.mubr.bf16.mxu0 %v1622
    %1872 = vmatmul.mubr.bf16.gmra.mrb[0].mxu0 %v1571
    %v1873 = vpop.f32.mrb[0].mxu0
    %v1874 = vadd.f32 %v1830, %v1873
    %v1875 = vpop.f32.mrb[0].mxu0
    %v1876 = vpop.f32.mrb[0].mxu0
    %v1877 = vadd.f32 %v1830, %v1876
    %v1878 = vpop.f32.mrb[0].mxu0
    %1879 = vdwg.mxu0
    %1880 = vmatprep.subr.bf16.mxu0 0
    %1881 = vmatpush1.bf16.msra.mxu0 %v1481
    %1882 = vmatprep.subr.bf16.mxu0 0
    %1883 = vmatpush1.bf16.msra.mxu0 %v1482
    %1884 = vmatprep.subr.bf16.mxu0 0
    %1885 = vmatpush1.bf16.msra.mxu0 %v1483
    %1886 = vmatprep.subr.bf16.mxu0 0
    %1887 = vmatpush1.bf16.msra.mxu0 %v1484
    %1888 = vmatprep.subr.bf16.mxu0 0
    %1889 = vmatpush1.bf16.msra.mxu0 %v1485
    %1890 = vmatprep.subr.bf16.mxu0 0
    %1891 = vmatpush1.bf16.msra.mxu0 %v1486
    %1892 = vmatprep.subr.bf16.mxu0 0
    %1893 = vmatpush1.bf16.msra.mxu0 %v1487
    %1894 = vmatprep.subr.bf16.mxu0 0
    %1895 = vmatpush1.bf16.msra.mxu0 %v1488
    %1896 = vmatprep.subr.bf16.mxu0 0
    %1897 = vmatpush1.bf16.msra.mxu0 %v1489
    %1898 = vmatprep.subr.bf16.mxu0 0
    %1899 = vmatpush1.bf16.msra.mxu0 %v1490
    %1900 = vmatprep.subr.bf16.mxu0 0
    %1901 = vmatpush1.bf16.msra.mxu0 %v1491
    %1902 = vmatprep.subr.bf16.mxu0 0
    %1903 = vmatpush1.bf16.msra.mxu0 %v1492
    %1904 = vmatprep.subr.bf16.mxu0 0
    %1905 = vmatpush1.bf16.msra.mxu0 %v1493
    %1906 = vmatprep.subr.bf16.mxu0 0
    %1907 = vmatpush1.bf16.msra.mxu0 %v1494
    %1908 = vmatprep.subr.bf16.mxu0 0
    %1909 = vmatpush1.bf16.msra.mxu0 %v1495
    %1910 = vmatprep.subr.bf16.mxu0 0
    %1911 = vmatpush1.bf16.msra.mxu0 %v1496
    %1912 = vmatprep.mubr.bf16.mxu0 %v1723
    %1913 = vmatmul.mubr.bf16.gmra.mrb[0].mxu0 %v1672
    %v1914 = vpop.f32.mrb[0].mxu0
    %v1915 = vadd.f32 %v1866, %v1914
    %v1916 = vpop.f32.mrb[0].mxu0
    %v1917 = vpop.f32.mrb[0].mxu0
    %v1918 = vadd.f32 %v1869, %v1917
    %v1919 = vpop.f32.mrb[0].mxu0
    %1920 = vmatprep.mubr.bf16.mxu0 %v1724
    %1921 = vmatmul.mubr.bf16.gmra.mrb[0].mxu0 %v1673
    %v1922 = vpop.f32.mrb[0].mxu0
    %v1923 = vadd.f32 %v1874, %v1922
    %v1924 = vpop.f32.mrb[0].mxu0
    %v1925 = vpop.f32.mrb[0].mxu0
    %v1926 = vadd.f32 %v1877, %v1925
    %v1927 = vpop.f32.mrb[0].mxu0
    %1928 = vdwg.mxu0
    %1929 = vmatprep.subr.bf16.mxu0 0
    %1930 = vmatpush1.bf16.msra.mxu0 %v1497
    %1931 = vmatprep.subr.bf16.mxu0 0
    %1932 = vmatpush1.bf16.msra.mxu0 %v1498
    %1933 = vmatprep.subr.bf16.mxu0 0
    %1934 = vmatpush1.bf16.msra.mxu0 %v1499
    %1935 = vmatprep.subr.bf16.mxu0 0
    %1936 = vmatpush1.bf16.msra.mxu0 %v1500
    %1937 = vmatprep.subr.bf16.mxu0 0
    %1938 = vmatpush1.bf16.msra.mxu0 %v1501
    %1939 = vmatprep.subr.bf16.mxu0 0
    %1940 = vmatpush1.bf16.msra.mxu0 %v1502
    %1941 = vmatprep.subr.bf16.mxu0 0
    %1942 = vmatpush1.bf16.msra.mxu0 %v1503
    %1943 = vmatprep.subr.bf16.mxu0 0
    %1944 = vmatpush1.bf16.msra.mxu0 %v1504
    %1945 = vmatprep.subr.bf16.mxu0 0
    %1946 = vmatpush1.bf16.msra.mxu0 %v1505
    %1947 = vmatprep.subr.bf16.mxu0 0
    %1948 = vmatpush1.bf16.msra.mxu0 %v1506
    %1949 = vmatprep.subr.bf16.mxu0 0
    %1950 = vmatpush1.bf16.msra.mxu0 %v1507
    %1951 = vmatprep.subr.bf16.mxu0 0
    %1952 = vmatpush1.bf16.msra.mxu0 %v1508
    %1953 = vmatprep.subr.bf16.mxu0 0
    %1954 = vmatpush1.bf16.msra.mxu0 %v1509
    %1955 = vmatprep.subr.bf16.mxu0 0
    %1956 = vmatpush1.bf16.msra.mxu0 %v1510
    %1957 = vmatprep.subr.bf16.mxu0 0
    %1958 = vmatpush1.bf16.msra.mxu0 %v1511
    %1959 = vmatprep.subr.bf16.mxu0 0
    %1960 = vmatpush1.bf16.msra.mxu0 %v1512
    %1961 = vmatprep.mubr.bf16.mxu0 %v1825
    %1962 = vmatmul.mubr.bf16.gmra.mrb[0].mxu0 %v1774
    %v1963 = vpop.f32.mrb[0].mxu0
    %v1964 = vadd.f32 %v1915, %v1963
    %v1965 = vpop.f32.mrb[0].mxu0
    %v1966 = vpop.f32.mrb[0].mxu0
    %v1967 = vadd.f32 %v1918, %v1966
    %v1968 = vpop.f32.mrb[0].mxu0
    %1969 = vmatprep.mubr.bf16.mxu0 %v1826
    %1970 = vmatmul.mubr.bf16.gmra.mrb[0].mxu0 %v1775
    %v1971 = vpop.f32.mrb[0].mxu0
    %v1972 = vadd.f32 %v1923, %v1971
    %v1973 = vpop.f32.mrb[0].mxu0
    %v1974 = vpop.f32.mrb[0].mxu0
    %v1975 = vadd.f32 %v1926, %v1974
    %v1976 = vpop.f32.mrb[0].mxu0
    %1977 = vdwg.mxu0
    %1978 = vmatprep.subr.bf16.mxu0 0
    %1979 = vmatpush1.bf16.msra.mxu0 %v1513
    %1980 = vmatprep.subr.bf16.mxu0 0
    %1981 = vmatpush1.bf16.msra.mxu0 %v1514
    %1982 = vmatprep.subr.bf16.mxu0 0
    %1983 = vmatpush1.bf16.msra.mxu0 %v1515
    %1984 = vmatprep.subr.bf16.mxu0 0
    %1985 = vmatpush1.bf16.msra.mxu0 %v1516
    %1986 = vmatprep.subr.bf16.mxu0 0
    %1987 = vmatpush1.bf16.msra.mxu0 %v1517
    %1988 = vmatprep.subr.bf16.mxu0 0
    %1989 = vmatpush1.bf16.msra.mxu0 %v1518
    %1990 = vmatprep.subr.bf16.mxu0 0
    %1991 = vmatpush1.bf16.msra.mxu0 %v1519
    %1992 = vmatprep.subr.bf16.mxu0 0
    %1993 = vmatpush1.bf16.msra.mxu0 %v1520
    %1994 = vmatprep.subr.bf16.mxu0 0
    %1995 = vmatpush1.bf16.msra.mxu0 0
    %1996 = vmatprep.subr.bf16.mxu0 0
    %1997 = vmatpush1.bf16.msra.mxu0 0
    %1998 = vmatprep.subr.bf16.mxu0 0
    %1999 = vmatpush1.bf16.msra.mxu0 0
    %2000 = vmatprep.subr.bf16.mxu0 0
    %2001 = vmatpush1.bf16.msra.mxu0 0
    %2002 = vmatprep.subr.bf16.mxu0 0
    %2003 = vmatpush1.bf16.msra.mxu0 0
    %2004 = vmatprep.subr.bf16.mxu0 0
    %2005 = vmatpush1.bf16.msra.mxu0 0
    %2006 = vmatprep.subr.bf16.mxu0 0
    %2007 = vmatpush1.bf16.msra.mxu0 0
    %2008 = vmatprep.subr.bf16.mxu0 0
    %2009 = vmatpush1.bf16.msra.mxu0 0
    %2010 = vmatprep.mubr.bf16.mxu0 0
    %2011 = vmatmul.mubr.bf16.gmra.mrb[0].mxu0 %v1463
    %v2012 = vpop.f32.mrb[0].mxu0
    %v2013 = vadd.f32 %v1964, %v2012
    %v2014 = vpop.f32.mrb[0].mxu0
    %v2015 = vpop.f32.mrb[0].mxu0
    %v2016 = vadd.f32 %v1967, %v2015
    %v2017 = vpop.f32.mrb[0].mxu0
    %2018 = vmatprep.mubr.bf16.mxu0 0
    %2019 = vmatmul.mubr.bf16.gmra.mrb[0].mxu0 %v1464
    %v2020 = vpop.f32.mrb[0].mxu0
    %v2021 = vadd.f32 %v1972, %v2020
    %v2022 = vpop.f32.mrb[0].mxu0
    %v2023 = vpop.f32.mrb[0].mxu0
    %v2024 = vadd.f32 %v1975, %v2023
    %v2025 = vpop.f32.mrb[0].mxu0
    %2026 = vdwg.mxu0
    %v2027 = vmax.f32 %v2013, 0.0
    %v2028 = vmax.f32 %v2016, 0.0
    %v2029 = vmax.f32 %v2021, 0.0
    %v2030 = vmax.f32 %v2024, 0.0
    %v2031 = vadd.f32 %v2027, %v751
    %v2032 = vadd.f32 %v2028, %v754
    %v2033 = vadd.f32 %v2029, %v759
    %v2034 = vadd.f32 %v2030, %v762
    %v2035 = vmax.f32 %v2031, 0.0
    %v2036 = vmax.f32 %v2032, 0.0
    %v2037 = vmax.f32 %v2033, 0.0
    %v2038 = vmax.f32 %v2034, 0.0
    %s2039 = sshll.u32 %s766, 4
    %2040 = dma.done %s138, %s2039
    %v2041 = vpack.c.bf16 %v2036, %v2035
    %v2042 = vpack.c.bf16 %v2038, %v2037
    %v2043 = vld [vmem:[#allocation12 + $0x2] sm:$0x1]
    %v2044 = vld [vmem:[#allocation12 + $0x3] sm:$0x1]
    %v2045 = vld [vmem:[#allocation2 + $0x380] sm:$0xff]
    %v2046 = vld [vmem:[#allocation2 + $0x388] sm:$0xff]
    %v2047 = vld [vmem:[#allocation2 + $0x390] sm:$0xff]
    %v2048 = vld [vmem:[#allocation2 + $0x398] sm:$0xff]
    %v2049 = vld [vmem:[#allocation2 + $0x3a0] sm:$0xff]
    %v2050 = vld [vmem:[#allocation2 + $0x3a8] sm:$0xff]
    %v2051 = vld [vmem:[#allocation2 + $0x3b0] sm:$0xff]
    %v2052 = vld [vmem:[#allocation2 + $0x3b8] sm:$0xff]
    %v2053 = vld [vmem:[#allocation2 + $0x3c0] sm:$0xff]
    %v2054 = vld [vmem:[#allocation2 + $0x3c8] sm:$0xff]
    %v2055 = vld [vmem:[#allocation2 + $0x3d0] sm:$0xff]
    %v2056 = vld [vmem:[#allocation2 + $0x3d8] sm:$0xff]
    %v2057 = vld [vmem:[#allocation2 + $0x3e0] sm:$0xff]
    %v2058 = vld [vmem:[#allocation2 + $0x3e8] sm:$0xff]
    %v2059 = vld [vmem:[#allocation2 + $0x3f0] sm:$0xff]
    %v2060 = vld [vmem:[#allocation2 + $0x3f8] sm:$0xff]
    %v2061 = vld [vmem:[#allocation2 + $0x400] sm:$0xff]
    %v2062 = vld [vmem:[#allocation2 + $0x408] sm:$0xff]
    %v2063 = vld [vmem:[#allocation2 + $0x410] sm:$0xff]
    %v2064 = vld [vmem:[#allocation2 + $0x418] sm:$0xff]
    %v2065 = vld [vmem:[#allocation2 + $0x420] sm:$0xff]
    %v2066 = vld [vmem:[#allocation2 + $0x428] sm:$0xff]
    %v2067 = vld [vmem:[#allocation2 + $0x430] sm:$0xff]
    %v2068 = vld [vmem:[#allocation2 + $0x438] sm:$0xff]
    %v2069 = vld [vmem:[#allocation2 + $0x440] sm:$0xff]
    %v2070 = vld [vmem:[#allocation2 + $0x448] sm:$0xff]
    %v2071 = vld [vmem:[#allocation2 + $0x450] sm:$0xff]
    %v2072 = vld [vmem:[#allocation2 + $0x458] sm:$0xff]
    %v2073 = vld [vmem:[#allocation2 + $0x460] sm:$0xff]
    %v2074 = vld [vmem:[#allocation2 + $0x468] sm:$0xff]
    %v2075 = vld [vmem:[#allocation2 + $0x470] sm:$0xff]
    %v2076 = vld [vmem:[#allocation2 + $0x478] sm:$0xff]
    %v2077 = vld [vmem:[#allocation2 + $0x480] sm:$0xff]
    %v2078 = vld [vmem:[#allocation2 + $0x488] sm:$0xff]
    %v2079 = vld [vmem:[#allocation2 + $0x490] sm:$0xff]
    %v2080 = vld [vmem:[#allocation2 + $0x498] sm:$0xff]
    %v2081 = vld [vmem:[#allocation2 + $0x4a0] sm:$0xff]
    %v2082 = vld [vmem:[#allocation2 + $0x4a8] sm:$0xff]
    %v2083 = vld [vmem:[#allocation2 + $0x4b0] sm:$0xff]
    %v2084 = vld [vmem:[#allocation2 + $0x4b8] sm:$0xff]
    %v2085 = vld [vmem:[#allocation2 + $0x4c0] sm:$0xff]
    %v2086 = vld [vmem:[#allocation2 + $0x4c8] sm:$0xff]
    %v2087 = vld [vmem:[#allocation2 + $0x4d0] sm:$0xff]
    %v2088 = vld [vmem:[#allocation2 + $0x4d8] sm:$0xff]
    %v2089 = vld [vmem:[#allocation2 + $0x4e0] sm:$0xff]
    %v2090 = vld [vmem:[#allocation2 + $0x4e8] sm:$0xff]
    %v2091 = vld [vmem:[#allocation2 + $0x4f0] sm:$0xff]
    %v2092 = vld [vmem:[#allocation2 + $0x4f8] sm:$0xff]
    %v2093 = vld [vmem:[#allocation2 + $0x500] sm:$0xff]
    %v2094 = vld [vmem:[#allocation2 + $0x508] sm:$0xff]
    %v2095 = vld [vmem:[#allocation2 + $0x510] sm:$0xff]
    %v2096 = vld [vmem:[#allocation2 + $0x518] sm:$0xff]
    %v2097 = vld [vmem:[#allocation2 + $0x520] sm:$0xff]
    %v2098 = vld [vmem:[#allocation2 + $0x528] sm:$0xff]
    %v2099 = vld [vmem:[#allocation2 + $0x530] sm:$0xff]
    %v2100 = vld [vmem:[#allocation2 + $0x538] sm:$0xff]
    %s2101 = scalar_lea.vmem [#allocation13], 128
    %v2102 = vld [vmem:[%s2101] sm:$0xf]
    %v2103 = vld [vmem:[%s2101 + $0x4] sm:$0xf]
    %v2104 = vld [vmem:[%s2101 + $0x8] sm:$0xf]
    %v2105 = vld [vmem:[%s2101 + $0xc] sm:$0xf]
    %v2110 = vunpack.c.l.b16 %v2102
    %v2111 = vunpack.c.l.b16 %v2103
    %v2112 = vunpack.c.l.b16 %v2104
    %v2113 = vunpack.c.l.b16 %v2105
    %v2114 = vpack.c.b16 %v2111, %v2110
    %v2115 = vpack.c.b16 %v2113, %v2112
    %v2117 = vsel %vm842, %v2114, 0
    %v2120 = vsel %vm842, %v2115, 0
    %2122 = vmatprep.subr.bf16.mxu0 0
    %2123 = vmatpush1.bf16.msra.mxu0 %v2041
    %2124 = vmatprep.subr.bf16.mxu0 0
    %2125 = vmatpush1.bf16.msra.mxu0 %v2042
    %2126 = vmatprep.subr.bf16.mxu0 0
    %2127 = vmatpush1.bf16.msra.mxu0 0
    %2128 = vmatprep.subr.bf16.mxu0 0
    %2129 = vmatpush1.bf16.msra.mxu0 0
    %2130 = vmatprep.subr.bf16.mxu0 0
    %2131 = vmatpush1.bf16.msra.mxu0 0
    %2132 = vmatprep.subr.bf16.mxu0 0
    %2133 = vmatpush1.bf16.msra.mxu0 0
    %2134 = vmatprep.subr.bf16.mxu0 0
    %2135 = vmatpush1.bf16.msra.mxu0 0
    %2136 = vmatprep.subr.bf16.mxu0 0
    %2137 = vmatpush1.bf16.msra.mxu0 0
    %2138 = vmatprep.subr.bf16.mxu0 0
    %2139 = vmatpush1.bf16.msra.mxu0 0
    %2140 = vmatprep.subr.bf16.mxu0 0
    %2141 = vmatpush1.bf16.msra.mxu0 0
    %2142 = vmatprep.subr.bf16.mxu0 0
    %2143 = vmatpush1.bf16.msra.mxu0 0
    %2144 = vmatprep.subr.bf16.mxu0 0
    %2145 = vmatpush1.bf16.msra.mxu0 0
    %2146 = vmatprep.subr.bf16.mxu0 0
    %2147 = vmatpush1.bf16.msra.mxu0 0
    %2148 = vmatprep.subr.bf16.mxu0 0
    %2149 = vmatpush1.bf16.msra.mxu0 0
    %2150 = vmatprep.subr.bf16.mxu0 0
    %2151 = vmatpush1.bf16.msra.mxu0 0
    %2152 = vmatprep.subr.bf16.mxu0 0
    %2153 = vmatpush1.bf16.msra.mxu0 0
    %2154 = vmatprep.mubr.bf16.mxu0 0
    %2155 = vmatmul.mubr.bf16.gmra.mrb[0].mxu0 %v2117
    %v2156 = vpop.f32.mrb[0].mxu0
    %v2157 = vadd.f32 0.0, %v2156
    %v2158 = vpop.f32.mrb[0].mxu0
    %v2159 = vpop.f32.mrb[0].mxu0
    %v2160 = vadd.f32 0.0, %v2159
    %v2161 = vpop.f32.mrb[0].mxu0
    %2162 = vmatprep.mubr.bf16.mxu0 0
    %2163 = vmatmul.mubr.bf16.gmra.mrb[0].mxu0 %v2120
    %v2164 = vpop.f32.mrb[0].mxu0
    %v2165 = vadd.f32 0.0, %v2164
    %v2166 = vpop.f32.mrb[0].mxu0
    %v2167 = vpop.f32.mrb[0].mxu0
    %v2168 = vadd.f32 0.0, %v2167
    %v2169 = vpop.f32.mrb[0].mxu0
    %2170 = vdwg.mxu0
    %v2171 = vpack.c.bf16 %v2160, %v2157
    %v2172 = vpack.c.bf16 %v2168, %v2165
    %s2173 = scalar_lea.vmem [#allocation13], 112
    %v2174 = vld [vmem:[%s2173] sm:$0xf]
    %v2175 = vld [vmem:[%s2173 + $0x4] sm:$0xf]
    %v2176 = vld [vmem:[%s2173 + $0x8] sm:$0xf]
    %v2177 = vld [vmem:[%s2173 + $0xc] sm:$0xf]
    %v2182 = vunpack.c.l.b16 %v2174
    %v2183 = vunpack.c.l.b16 %v2175
    %v2184 = vunpack.c.l.b16 %v2176
    %v2185 = vunpack.c.l.b16 %v2177
    %v2186 = vpack.c.b16 %v2183, %v2182
    %v2187 = vpack.c.b16 %v2185, %v2184
    %v2189 = vsel %vm842, %v2186, 0
    %v2192 = vsel %vm842, %v2187, 0
    %2194 = vmatprep.subr.bf16.mxu0 0
    %2195 = vmatpush1.bf16.msra.mxu0 %v2041
    %2196 = vmatprep.subr.bf16.mxu0 0
    %2197 = vmatpush1.bf16.msra.mxu0 %v2042
    %2198 = vmatprep.subr.bf16.mxu0 0
    %2199 = vmatpush1.bf16.msra.mxu0 0
    %2200 = vmatprep.subr.bf16.mxu0 0
    %2201 = vmatpush1.bf16.msra.mxu0 0
    %2202 = vmatprep.subr.bf16.mxu0 0
    %2203 = vmatpush1.bf16.msra.mxu0 0
    %2204 = vmatprep.subr.bf16.mxu0 0
    %2205 = vmatpush1.bf16.msra.mxu0 0
    %2206 = vmatprep.subr.bf16.mxu0 0
    %2207 = vmatpush1.bf16.msra.mxu0 0
    %2208 = vmatprep.subr.bf16.mxu0 0
    %2209 = vmatpush1.bf16.msra.mxu0 0
    %2210 = vmatprep.subr.bf16.mxu0 0
    %2211 = vmatpush1.bf16.msra.mxu0 0
    %2212 = vmatprep.subr.bf16.mxu0 0
    %2213 = vmatpush1.bf16.msra.mxu0 0
    %2214 = vmatprep.subr.bf16.mxu0 0
    %2215 = vmatpush1.bf16.msra.mxu0 0
    %2216 = vmatprep.subr.bf16.mxu0 0
    %2217 = vmatpush1.bf16.msra.mxu0 0
    %2218 = vmatprep.subr.bf16.mxu0 0
    %2219 = vmatpush1.bf16.msra.mxu0 0
    %2220 = vmatprep.subr.bf16.mxu0 0
    %2221 = vmatpush1.bf16.msra.mxu0 0
    %2222 = vmatprep.subr.bf16.mxu0 0
    %2223 = vmatpush1.bf16.msra.mxu0 0
    %2224 = vmatprep.subr.bf16.mxu0 0
    %2225 = vmatpush1.bf16.msra.mxu0 0
    %2226 = vmatprep.mubr.bf16.mxu0 0
    %2227 = vmatmul.mubr.bf16.gmra.mrb[0].mxu0 %v2189
    %v2228 = vpop.f32.mrb[0].mxu0
    %v2229 = vadd.f32 0.0, %v2228
    %v2230 = vpop.f32.mrb[0].mxu0
    %v2231 = vpop.f32.mrb[0].mxu0
    %v2232 = vadd.f32 0.0, %v2231
    %v2233 = vpop.f32.mrb[0].mxu0
    %2234 = vmatprep.mubr.bf16.mxu0 0
    %2235 = vmatmul.mubr.bf16.gmra.mrb[0].mxu0 %v2192
    %v2236 = vpop.f32.mrb[0].mxu0
    %v2237 = vadd.f32 0.0, %v2236
    %v2238 = vpop.f32.mrb[0].mxu0
    %v2239 = vpop.f32.mrb[0].mxu0
    %v2240 = vadd.f32 0.0, %v2239
    %v2241 = vpop.f32.mrb[0].mxu0
    %2242 = vdwg.mxu0
    %v2243 = vpack.c.bf16 %v2232, %v2229
    %v2244 = vpack.c.bf16 %v2240, %v2237
    %s2245 = scalar_lea.vmem [#allocation13], 96
    %v2246 = vld [vmem:[%s2245] sm:$0xf]
    %v2247 = vld [vmem:[%s2245 + $0x4] sm:$0xf]
    %v2248 = vld [vmem:[%s2245 + $0x8] sm:$0xf]
    %v2249 = vld [vmem:[%s2245 + $0xc] sm:$0xf]
    %v2254 = vunpack.c.l.b16 %v2246
    %v2255 = vunpack.c.l.b16 %v2247
    %v2256 = vunpack.c.l.b16 %v2248
    %v2257 = vunpack.c.l.b16 %v2249
    %v2258 = vpack.c.b16 %v2255, %v2254
    %v2259 = vpack.c.b16 %v2257, %v2256
    %v2261 = vsel %vm842, %v2258, 0
    %v2264 = vsel %vm842, %v2259, 0
    %2266 = vmatprep.subr.bf16.mxu0 0
    %2267 = vmatpush1.bf16.msra.mxu0 %v2041
    %2268 = vmatprep.subr.bf16.mxu0 0
    %2269 = vmatpush1.bf16.msra.mxu0 %v2042
    %2270 = vmatprep.subr.bf16.mxu0 0
    %2271 = vmatpush1.bf16.msra.mxu0 0
    %2272 = vmatprep.subr.bf16.mxu0 0
    %2273 = vmatpush1.bf16.msra.mxu0 0
    %2274 = vmatprep.subr.bf16.mxu0 0
    %2275 = vmatpush1.bf16.msra.mxu0 0
    %2276 = vmatprep.subr.bf16.mxu0 0
    %2277 = vmatpush1.bf16.msra.mxu0 0
    %2278 = vmatprep.subr.bf16.mxu0 0
    %2279 = vmatpush1.bf16.msra.mxu0 0
    %2280 = vmatprep.subr.bf16.mxu0 0
    %2281 = vmatpush1.bf16.msra.mxu0 0
    %2282 = vmatprep.subr.bf16.mxu0 0
    %2283 = vmatpush1.bf16.msra.mxu0 0
    %2284 = vmatprep.subr.bf16.mxu0 0
    %2285 = vmatpush1.bf16.msra.mxu0 0
    %2286 = vmatprep.subr.bf16.mxu0 0
    %2287 = vmatpush1.bf16.msra.mxu0 0
    %2288 = vmatprep.subr.bf16.mxu0 0
    %2289 = vmatpush1.bf16.msra.mxu0 0
    %2290 = vmatprep.subr.bf16.mxu0 0
    %2291 = vmatpush1.bf16.msra.mxu0 0
    %2292 = vmatprep.subr.bf16.mxu0 0
    %2293 = vmatpush1.bf16.msra.mxu0 0
    %2294 = vmatprep.subr.bf16.mxu0 0
    %2295 = vmatpush1.bf16.msra.mxu0 0
    %2296 = vmatprep.subr.bf16.mxu0 0
    %2297 = vmatpush1.bf16.msra.mxu0 0
    %2298 = vmatprep.mubr.bf16.mxu0 0
    %2299 = vmatmul.mubr.bf16.gmra.mrb[0].mxu0 %v2261
    %v2300 = vpop.f32.mrb[0].mxu0
    %v2301 = vadd.f32 0.0, %v2300
    %v2302 = vpop.f32.mrb[0].mxu0
    %v2303 = vpop.f32.mrb[0].mxu0
    %v2304 = vadd.f32 0.0, %v2303
    %v2305 = vpop.f32.mrb[0].mxu0
    %2306 = vmatprep.mubr.bf16.mxu0 0
    %2307 = vmatmul.mubr.bf16.gmra.mrb[0].mxu0 %v2264
    %v2308 = vpop.f32.mrb[0].mxu0
    %v2309 = vadd.f32 0.0, %v2308
    %v2310 = vpop.f32.mrb[0].mxu0
    %v2311 = vpop.f32.mrb[0].mxu0
    %v2312 = vadd.f32 0.0, %v2311
    %v2313 = vpop.f32.mrb[0].mxu0
    %2314 = vdwg.mxu0
    %v2315 = vpack.c.bf16 %v2304, %v2301
    %v2316 = vpack.c.bf16 %v2312, %v2309
    %v2317 = vld [vmem:[%s827] sm:$0xf]
    %v2318 = vld [vmem:[%s827 + $0x4] sm:$0xf]
    %v2319 = vld [vmem:[%s827 + $0x8] sm:$0xf]
    %v2320 = vld [vmem:[%s827 + $0xc] sm:$0xf]
    %v2325 = vunpack.c.l.b16 %v2317
    %v2326 = vunpack.c.l.b16 %v2318
    %v2327 = vunpack.c.l.b16 %v2319
    %v2328 = vunpack.c.l.b16 %v2320
    %v2329 = vpack.c.b16 %v2326, %v2325
    %v2330 = vpack.c.b16 %v2328, %v2327
    %v2332 = vsel %vm842, %v2329, 0
    %v2335 = vsel %vm842, %v2330, 0
    %2337 = vmatprep.subr.bf16.mxu0 0
    %2338 = vmatpush1.bf16.msra.mxu0 %v2041
    %2339 = vmatprep.subr.bf16.mxu0 0
    %2340 = vmatpush1.bf16.msra.mxu0 %v2042
    %2341 = vmatprep.subr.bf16.mxu0 0
    %2342 = vmatpush1.bf16.msra.mxu0 0
    %2343 = vmatprep.subr.bf16.mxu0 0
    %2344 = vmatpush1.bf16.msra.mxu0 0
    %2345 = vmatprep.subr.bf16.mxu0 0
    %2346 = vmatpush1.bf16.msra.mxu0 0
    %2347 = vmatprep.subr.bf16.mxu0 0
    %2348 = vmatpush1.bf16.msra.mxu0 0
    %2349 = vmatprep.subr.bf16.mxu0 0
    %2350 = vmatpush1.bf16.msra.mxu0 0
    %2351 = vmatprep.subr.bf16.mxu0 0
    %2352 = vmatpush1.bf16.msra.mxu0 0
    %2353 = vmatprep.subr.bf16.mxu0 0
    %2354 = vmatpush1.bf16.msra.mxu0 0
    %2355 = vmatprep.subr.bf16.mxu0 0
    %2356 = vmatpush1.bf16.msra.mxu0 0
    %2357 = vmatprep.subr.bf16.mxu0 0
    %2358 = vmatpush1.bf16.msra.mxu0 0
    %2359 = vmatprep.subr.bf16.mxu0 0
    %2360 = vmatpush1.bf16.msra.mxu0 0
    %2361 = vmatprep.subr.bf16.mxu0 0
    %2362 = vmatpush1.bf16.msra.mxu0 0
    %2363 = vmatprep.subr.bf16.mxu0 0
    %2364 = vmatpush1.bf16.msra.mxu0 0
    %2365 = vmatprep.subr.bf16.mxu0 0
    %2366 = vmatpush1.bf16.msra.mxu0 0
    %2367 = vmatprep.subr.bf16.mxu0 0
    %2368 = vmatpush1.bf16.msra.mxu0 0
    %2369 = vmatprep.mubr.bf16.mxu0 0
    %2370 = vmatmul.mubr.bf16.gmra.mrb[0].mxu0 %v2332
    %v2371 = vpop.f32.mrb[0].mxu0
    %v2372 = vadd.f32 0.0, %v2371
    %v2373 = vpop.f32.mrb[0].mxu0
    %v2374 = vpop.f32.mrb[0].mxu0
    %v2375 = vadd.f32 0.0, %v2374
    %v2376 = vpop.f32.mrb[0].mxu0
    %2377 = vmatprep.mubr.bf16.mxu0 0
    %2378 = vmatmul.mubr.bf16.gmra.mrb[0].mxu0 %v2335
    %v2379 = vpop.f32.mrb[0].mxu0
    %v2380 = vadd.f32 0.0, %v2379
    %v2381 = vpop.f32.mrb[0].mxu0
    %v2382 = vpop.f32.mrb[0].mxu0
    %v2383 = vadd.f32 0.0, %v2382
    %v2384 = vpop.f32.mrb[0].mxu0
    %2385 = vdwg.mxu0
    %v2386 = vpack.c.bf16 %v2375, %v2372
    %v2387 = vpack.c.bf16 %v2383, %v2380
    %v2388 = vld [vmem:[%s972] sm:$0xf]
    %v2389 = vld [vmem:[%s972 + $0x4] sm:$0xf]
    %v2390 = vld [vmem:[%s972 + $0x8] sm:$0xf]
    %v2391 = vld [vmem:[%s972 + $0xc] sm:$0xf]
    %v2396 = vunpack.c.l.b16 %v2388
    %v2397 = vunpack.c.l.b16 %v2389
    %v2398 = vunpack.c.l.b16 %v2390
    %v2399 = vunpack.c.l.b16 %v2391
    %v2400 = vpack.c.b16 %v2397, %v2396
    %v2401 = vpack.c.b16 %v2399, %v2398
    %v2403 = vsel %vm842, %v2400, 0
    %v2406 = vsel %vm842, %v2401, 0
    %2408 = vmatprep.subr.bf16.mxu0 0
    %2409 = vmatpush1.bf16.msra.mxu0 %v2041
    %2410 = vmatprep.subr.bf16.mxu0 0
    %2411 = vmatpush1.bf16.msra.mxu0 %v2042
    %2412 = vmatprep.subr.bf16.mxu0 0
    %2413 = vmatpush1.bf16.msra.mxu0 0
    %2414 = vmatprep.subr.bf16.mxu0 0
    %2415 = vmatpush1.bf16.msra.mxu0 0
    %2416 = vmatprep.subr.bf16.mxu0 0
    %2417 = vmatpush1.bf16.msra.mxu0 0
    %2418 = vmatprep.subr.bf16.mxu0 0
    %2419 = vmatpush1.bf16.msra.mxu0 0
    %2420 = vmatprep.subr.bf16.mxu0 0
    %2421 = vmatpush1.bf16.msra.mxu0 0
    %2422 = vmatprep.subr.bf16.mxu0 0
    %2423 = vmatpush1.bf16.msra.mxu0 0
    %2424 = vmatprep.subr.bf16.mxu0 0
    %2425 = vmatpush1.bf16.msra.mxu0 0
    %2426 = vmatprep.subr.bf16.mxu0 0
    %2427 = vmatpush1.bf16.msra.mxu0 0
    %2428 = vmatprep.subr.bf16.mxu0 0
    %2429 = vmatpush1.bf16.msra.mxu0 0
    %2430 = vmatprep.subr.bf16.mxu0 0
    %2431 = vmatpush1.bf16.msra.mxu0 0
    %2432 = vmatprep.subr.bf16.mxu0 0
    %2433 = vmatpush1.bf16.msra.mxu0 0
    %2434 = vmatprep.subr.bf16.mxu0 0
    %2435 = vmatpush1.bf16.msra.mxu0 0
    %2436 = vmatprep.subr.bf16.mxu0 0
    %2437 = vmatpush1.bf16.msra.mxu0 0
    %2438 = vmatprep.subr.bf16.mxu0 0
    %2439 = vmatpush1.bf16.msra.mxu0 0
    %2440 = vmatprep.mubr.bf16.mxu0 0
    %2441 = vmatmul.mubr.bf16.gmra.mrb[0].mxu0 %v2403
    %v2442 = vpop.f32.mrb[0].mxu0
    %v2443 = vadd.f32 0.0, %v2442
    %v2444 = vpop.f32.mrb[0].mxu0
    %v2445 = vpop.f32.mrb[0].mxu0
    %v2446 = vadd.f32 0.0, %v2445
    %v2447 = vpop.f32.mrb[0].mxu0
    %2448 = vmatprep.mubr.bf16.mxu0 0
    %2449 = vmatmul.mubr.bf16.gmra.mrb[0].mxu0 %v2406
    %v2450 = vpop.f32.mrb[0].mxu0
    %v2451 = vadd.f32 0.0, %v2450
    %v2452 = vpop.f32.mrb[0].mxu0
    %v2453 = vpop.f32.mrb[0].mxu0
    %v2454 = vadd.f32 0.0, %v2453
    %v2455 = vpop.f32.mrb[0].mxu0
    %2456 = vdwg.mxu0
    %v2457 = vpack.c.bf16 %v2446, %v2443
    %v2458 = vpack.c.bf16 %v2454, %v2451
    %v2459 = vld [vmem:[%s1116] sm:$0xf]
    %v2460 = vld [vmem:[%s1116 + $0x4] sm:$0xf]
    %v2461 = vld [vmem:[%s1116 + $0x8] sm:$0xf]
    %v2462 = vld [vmem:[%s1116 + $0xc] sm:$0xf]
    %v2467 = vunpack.c.l.b16 %v2459
    %v2468 = vunpack.c.l.b16 %v2460
    %v2469 = vunpack.c.l.b16 %v2461
    %v2470 = vunpack.c.l.b16 %v2462
    %v2471 = vpack.c.b16 %v2468, %v2467
    %v2472 = vpack.c.b16 %v2470, %v2469
    %v2474 = vsel %vm842, %v2471, 0
    %v2477 = vsel %vm842, %v2472, 0
    %2479 = vmatprep.subr.bf16.mxu0 0
    %2480 = vmatpush1.bf16.msra.mxu0 %v2041
    %2481 = vmatprep.subr.bf16.mxu0 0
    %2482 = vmatpush1.bf16.msra.mxu0 %v2042
    %2483 = vmatprep.subr.bf16.mxu0 0
    %2484 = vmatpush1.bf16.msra.mxu0 0
    %2485 = vmatprep.subr.bf16.mxu0 0
    %2486 = vmatpush1.bf16.msra.mxu0 0
    %2487 = vmatprep.subr.bf16.mxu0 0
    %2488 = vmatpush1.bf16.msra.mxu0 0
    %2489 = vmatprep.subr.bf16.mxu0 0
    %2490 = vmatpush1.bf16.msra.mxu0 0
    %2491 = vmatprep.subr.bf16.mxu0 0
    %2492 = vmatpush1.bf16.msra.mxu0 0
    %2493 = vmatprep.subr.bf16.mxu0 0
    %2494 = vmatpush1.bf16.msra.mxu0 0
    %2495 = vmatprep.subr.bf16.mxu0 0
    %2496 = vmatpush1.bf16.msra.mxu0 0
    %2497 = vmatprep.subr.bf16.mxu0 0
    %2498 = vmatpush1.bf16.msra.mxu0 0
    %2499 = vmatprep.subr.bf16.mxu0 0
    %2500 = vmatpush1.bf16.msra.mxu0 0
    %2501 = vmatprep.subr.bf16.mxu0 0
    %2502 = vmatpush1.bf16.msra.mxu0 0
    %2503 = vmatprep.subr.bf16.mxu0 0
    %2504 = vmatpush1.bf16.msra.mxu0 0
    %2505 = vmatprep.subr.bf16.mxu0 0
    %2506 = vmatpush1.bf16.msra.mxu0 0
    %2507 = vmatprep.subr.bf16.mxu0 0
    %2508 = vmatpush1.bf16.msra.mxu0 0
    %2509 = vmatprep.subr.bf16.mxu0 0
    %2510 = vmatpush1.bf16.msra.mxu0 0
    %2511 = vmatprep.mubr.bf16.mxu0 0
    %2512 = vmatmul.mubr.bf16.gmra.mrb[0].mxu0 %v2474
    %v2513 = vpop.f32.mrb[0].mxu0
    %v2514 = vadd.f32 0.0, %v2513
    %v2515 = vpop.f32.mrb[0].mxu0
    %v2516 = vpop.f32.mrb[0].mxu0
    %v2517 = vadd.f32 0.0, %v2516
    %v2518 = vpop.f32.mrb[0].mxu0
    %2519 = vmatprep.mubr.bf16.mxu0 0
    %2520 = vmatmul.mubr.bf16.gmra.mrb[0].mxu0 %v2477
    %v2521 = vpop.f32.mrb[0].mxu0
    %v2522 = vadd.f32 0.0, %v2521
    %v2523 = vpop.f32.mrb[0].mxu0
    %v2524 = vpop.f32.mrb[0].mxu0
    %v2525 = vadd.f32 0.0, %v2524
    %v2526 = vpop.f32.mrb[0].mxu0
    %2527 = vdwg.mxu0
    %v2528 = vpack.c.bf16 %v2517, %v2514
    %v2529 = vpack.c.bf16 %v2525, %v2522
    %v2530 = vlaneseq
    %v2531 = vshrl.u32 %v2530, 7
    %v2532 = vsub.s32 0, %v2531
    %v2533 = vrot.slane %v2043, %v2532
    %2534 = vmatprep.subr.bf16.mxu0 0
    %2535 = vmatpush1.bf16.msra.mxu0 %v2045
    %2536 = vmatprep.subr.bf16.mxu0 0
    %2537 = vmatpush1.bf16.msra.mxu0 %v2046
    %2538 = vmatprep.subr.bf16.mxu0 0
    %2539 = vmatpush1.bf16.msra.mxu0 %v2047
    %2540 = vmatprep.subr.bf16.mxu0 0
    %2541 = vmatpush1.bf16.msra.mxu0 %v2048
    %2542 = vmatprep.subr.bf16.mxu0 0
    %2543 = vmatpush1.bf16.msra.mxu0 %v2049
    %2544 = vmatprep.subr.bf16.mxu0 0
    %2545 = vmatpush1.bf16.msra.mxu0 %v2050
    %2546 = vmatprep.subr.bf16.mxu0 0
    %2547 = vmatpush1.bf16.msra.mxu0 %v2051
    %2548 = vmatprep.subr.bf16.mxu0 0
    %2549 = vmatpush1.bf16.msra.mxu0 %v2052
    %2550 = vmatprep.subr.bf16.mxu0 0
    %2551 = vmatpush1.bf16.msra.mxu0 %v2053
    %2552 = vmatprep.subr.bf16.mxu0 0
    %2553 = vmatpush1.bf16.msra.mxu0 %v2054
    %2554 = vmatprep.subr.bf16.mxu0 0
    %2555 = vmatpush1.bf16.msra.mxu0 %v2055
    %2556 = vmatprep.subr.bf16.mxu0 0
    %2557 = vmatpush1.bf16.msra.mxu0 %v2056
    %2558 = vmatprep.subr.bf16.mxu0 0
    %2559 = vmatpush1.bf16.msra.mxu0 %v2057
    %2560 = vmatprep.subr.bf16.mxu0 0
    %2561 = vmatpush1.bf16.msra.mxu0 %v2058
    %2562 = vmatprep.subr.bf16.mxu0 0
    %2563 = vmatpush1.bf16.msra.mxu0 %v2059
    %2564 = vmatprep.subr.bf16.mxu0 0
    %2565 = vmatpush1.bf16.msra.mxu0 %v2060
    %2566 = vmatprep.mubr.bf16.mxu0 %v2243
    %2567 = vmatmul.mubr.bf16.gmra.mrb[0].mxu0 %v2171
    %v2568 = vpop.f32.mrb[0].mxu0
    %v2569 = vadd.f32 %v2533, %v2568
    %v2570 = vpop.f32.mrb[0].mxu0
    %v2571 = vpop.f32.mrb[0].mxu0
    %v2572 = vadd.f32 %v2533, %v2571
    %v2573 = vpop.f32.mrb[0].mxu0
    %2574 = vmatprep.mubr.bf16.mxu0 %v2244
    %2575 = vmatmul.mubr.bf16.gmra.mrb[0].mxu0 %v2172
    %v2576 = vpop.f32.mrb[0].mxu0
    %v2577 = vadd.f32 %v2533, %v2576
    %v2578 = vpop.f32.mrb[0].mxu0
    %v2579 = vpop.f32.mrb[0].mxu0
    %v2580 = vadd.f32 %v2533, %v2579
    %v2581 = vpop.f32.mrb[0].mxu0
    %2582 = vdwg.mxu0
    %2583 = vmatprep.subr.bf16.mxu0 0
    %2584 = vmatpush1.bf16.msra.mxu0 %v2061
    %2585 = vmatprep.subr.bf16.mxu0 0
    %2586 = vmatpush1.bf16.msra.mxu0 %v2062
    %2587 = vmatprep.subr.bf16.mxu0 0
    %2588 = vmatpush1.bf16.msra.mxu0 %v2063
    %2589 = vmatprep.subr.bf16.mxu0 0
    %2590 = vmatpush1.bf16.msra.mxu0 %v2064
    %2591 = vmatprep.subr.bf16.mxu0 0
    %2592 = vmatpush1.bf16.msra.mxu0 %v2065
    %2593 = vmatprep.subr.bf16.mxu0 0
    %2594 = vmatpush1.bf16.msra.mxu0 %v2066
    %2595 = vmatprep.subr.bf16.mxu0 0
    %2596 = vmatpush1.bf16.msra.mxu0 %v2067
    %2597 = vmatprep.subr.bf16.mxu0 0
    %2598 = vmatpush1.bf16.msra.mxu0 %v2068
    %2599 = vmatprep.subr.bf16.mxu0 0
    %2600 = vmatpush1.bf16.msra.mxu0 %v2069
    %2601 = vmatprep.subr.bf16.mxu0 0
    %2602 = vmatpush1.bf16.msra.mxu0 %v2070
    %2603 = vmatprep.subr.bf16.mxu0 0
    %2604 = vmatpush1.bf16.msra.mxu0 %v2071
    %2605 = vmatprep.subr.bf16.mxu0 0
    %2606 = vmatpush1.bf16.msra.mxu0 %v2072
    %2607 = vmatprep.subr.bf16.mxu0 0
    %2608 = vmatpush1.bf16.msra.mxu0 %v2073
    %2609 = vmatprep.subr.bf16.mxu0 0
    %2610 = vmatpush1.bf16.msra.mxu0 %v2074
    %2611 = vmatprep.subr.bf16.mxu0 0
    %2612 = vmatpush1.bf16.msra.mxu0 %v2075
    %2613 = vmatprep.subr.bf16.mxu0 0
    %2614 = vmatpush1.bf16.msra.mxu0 %v2076
    %2615 = vmatprep.mubr.bf16.mxu0 %v2386
    %2616 = vmatmul.mubr.bf16.gmra.mrb[0].mxu0 %v2315
    %v2617 = vpop.f32.mrb[0].mxu0
    %v2618 = vadd.f32 %v2569, %v2617
    %v2619 = vpop.f32.mrb[0].mxu0
    %v2620 = vpop.f32.mrb[0].mxu0
    %v2621 = vadd.f32 %v2572, %v2620
    %v2622 = vpop.f32.mrb[0].mxu0
    %2623 = vmatprep.mubr.bf16.mxu0 %v2387
    %2624 = vmatmul.mubr.bf16.gmra.mrb[0].mxu0 %v2316
    %v2625 = vpop.f32.mrb[0].mxu0
    %v2626 = vadd.f32 %v2577, %v2625
    %v2627 = vpop.f32.mrb[0].mxu0
    %v2628 = vpop.f32.mrb[0].mxu0
    %v2629 = vadd.f32 %v2580, %v2628
    %v2630 = vpop.f32.mrb[0].mxu0
    %2631 = vdwg.mxu0
    %2632 = vmatprep.subr.bf16.mxu0 0
    %2633 = vmatpush1.bf16.msra.mxu0 %v2077
    %2634 = vmatprep.subr.bf16.mxu0 0
    %2635 = vmatpush1.bf16.msra.mxu0 %v2078
    %2636 = vmatprep.subr.bf16.mxu0 0
    %2637 = vmatpush1.bf16.msra.mxu0 %v2079
    %2638 = vmatprep.subr.bf16.mxu0 0
    %2639 = vmatpush1.bf16.msra.mxu0 %v2080
    %2640 = vmatprep.subr.bf16.mxu0 0
    %2641 = vmatpush1.bf16.msra.mxu0 %v2081
    %2642 = vmatprep.subr.bf16.mxu0 0
    %2643 = vmatpush1.bf16.msra.mxu0 %v2082
    %2644 = vmatprep.subr.bf16.mxu0 0
    %2645 = vmatpush1.bf16.msra.mxu0 %v2083
    %2646 = vmatprep.subr.bf16.mxu0 0
    %2647 = vmatpush1.bf16.msra.mxu0 %v2084
    %2648 = vmatprep.subr.bf16.mxu0 0
    %2649 = vmatpush1.bf16.msra.mxu0 %v2085
    %2650 = vmatprep.subr.bf16.mxu0 0
    %2651 = vmatpush1.bf16.msra.mxu0 %v2086
    %2652 = vmatprep.subr.bf16.mxu0 0
    %2653 = vmatpush1.bf16.msra.mxu0 %v2087
    %2654 = vmatprep.subr.bf16.mxu0 0
    %2655 = vmatpush1.bf16.msra.mxu0 %v2088
    %2656 = vmatprep.subr.bf16.mxu0 0
    %2657 = vmatpush1.bf16.msra.mxu0 %v2089
    %2658 = vmatprep.subr.bf16.mxu0 0
    %2659 = vmatpush1.bf16.msra.mxu0 %v2090
    %2660 = vmatprep.subr.bf16.mxu0 0
    %2661 = vmatpush1.bf16.msra.mxu0 %v2091
    %2662 = vmatprep.subr.bf16.mxu0 0
    %2663 = vmatpush1.bf16.msra.mxu0 %v2092
    %2664 = vmatprep.mubr.bf16.mxu0 %v2528
    %2665 = vmatmul.mubr.bf16.gmra.mrb[0].mxu0 %v2457
    %v2666 = vpop.f32.mrb[0].mxu0
    %v2667 = vadd.f32 %v2618, %v2666
    %v2668 = vpop.f32.mrb[0].mxu0
    %v2669 = vpop.f32.mrb[0].mxu0
    %v2670 = vadd.f32 %v2621, %v2669
    %v2671 = vpop.f32.mrb[0].mxu0
    %2672 = vmatprep.mubr.bf16.mxu0 %v2529
    %2673 = vmatmul.mubr.bf16.gmra.mrb[0].mxu0 %v2458
    %v2674 = vpop.f32.mrb[0].mxu0
    %v2675 = vadd.f32 %v2626, %v2674
    %v2676 = vpop.f32.mrb[0].mxu0
    %v2677 = vpop.f32.mrb[0].mxu0
    %v2678 = vadd.f32 %v2629, %v2677
    %v2679 = vpop.f32.mrb[0].mxu0
    %2680 = vdwg.mxu0
    %2681 = vmatprep.subr.bf16.mxu0 0
    %2682 = vmatpush1.bf16.msra.mxu0 %v2093
    %2683 = vmatprep.subr.bf16.mxu0 0
    %2684 = vmatpush1.bf16.msra.mxu0 %v2094
    %2685 = vmatprep.subr.bf16.mxu0 0
    %2686 = vmatpush1.bf16.msra.mxu0 %v2095
    %2687 = vmatprep.subr.bf16.mxu0 0
    %2688 = vmatpush1.bf16.msra.mxu0 %v2096
    %2689 = vmatprep.subr.bf16.mxu0 0
    %2690 = vmatpush1.bf16.msra.mxu0 %v2097
    %2691 = vmatprep.subr.bf16.mxu0 0
    %2692 = vmatpush1.bf16.msra.mxu0 %v2098
    %2693 = vmatprep.subr.bf16.mxu0 0
    %2694 = vmatpush1.bf16.msra.mxu0 %v2099
    %2695 = vmatprep.subr.bf16.mxu0 0
    %2696 = vmatpush1.bf16.msra.mxu0 %v2100
    %2697 = vmatprep.subr.bf16.mxu0 0
    %2698 = vmatpush1.bf16.msra.mxu0 0
    %2699 = vmatprep.subr.bf16.mxu0 0
    %2700 = vmatpush1.bf16.msra.mxu0 0
    %2701 = vmatprep.subr.bf16.mxu0 0
    %2702 = vmatpush1.bf16.msra.mxu0 0
    %2703 = vmatprep.subr.bf16.mxu0 0
    %2704 = vmatpush1.bf16.msra.mxu0 0
    %2705 = vmatprep.subr.bf16.mxu0 0
    %2706 = vmatpush1.bf16.msra.mxu0 0
    %2707 = vmatprep.subr.bf16.mxu0 0
    %2708 = vmatpush1.bf16.msra.mxu0 0
    %2709 = vmatprep.subr.bf16.mxu0 0
    %2710 = vmatpush1.bf16.msra.mxu0 0
    %2711 = vmatprep.subr.bf16.mxu0 0
    %2712 = vmatpush1.bf16.msra.mxu0 0
    %2713 = vmatprep.mubr.bf16.mxu0 0
    %2714 = vmatmul.mubr.bf16.gmra.mrb[0].mxu0 %v2041
    %v2715 = vpop.f32.mrb[0].mxu0
    %v2716 = vadd.f32 %v2667, %v2715
    %v2717 = vpop.f32.mrb[0].mxu0
    %v2718 = vpop.f32.mrb[0].mxu0
    %v2719 = vadd.f32 %v2670, %v2718
    %v2720 = vpop.f32.mrb[0].mxu0
    %2721 = vmatprep.mubr.bf16.mxu0 0
    %2722 = vmatmul.mubr.bf16.gmra.mrb[0].mxu0 %v2042
    %v2723 = vpop.f32.mrb[0].mxu0
    %v2724 = vadd.f32 %v2675, %v2723
    %v2725 = vpop.f32.mrb[0].mxu0
    %v2726 = vpop.f32.mrb[0].mxu0
    %v2727 = vadd.f32 %v2678, %v2726
    %v2728 = vpop.f32.mrb[0].mxu0
    %2729 = vdwg.mxu0
    %v2730 = vmax.f32 %v2716, 0.0
    %v2731 = vmax.f32 %v2719, 0.0
    %v2732 = vmax.f32 %v2724, 0.0
    %v2733 = vmax.f32 %v2727, 0.0
    %v2734 = vpack.c.bf16 %v2731, %v2730
    %v2735 = vpack.c.bf16 %v2733, %v2732
    %v2736 = vld [vmem:[#allocation2 + $0x540] sm:$0xff]
    %v2737 = vld [vmem:[#allocation2 + $0x548] sm:$0xff]
    %v2738 = vld [vmem:[#allocation2 + $0x550] sm:$0xff]
    %v2739 = vld [vmem:[#allocation2 + $0x558] sm:$0xff]
    %v2740 = vld [vmem:[#allocation2 + $0x560] sm:$0xff]
    %v2741 = vld [vmem:[#allocation2 + $0x568] sm:$0xff]
    %v2742 = vld [vmem:[#allocation2 + $0x570] sm:$0xff]
    %v2743 = vld [vmem:[#allocation2 + $0x578] sm:$0xff]
    %v2744 = vld [vmem:[#allocation2 + $0x580] sm:$0xff]
    %v2745 = vld [vmem:[#allocation2 + $0x588] sm:$0xff]
    %v2746 = vld [vmem:[#allocation2 + $0x590] sm:$0xff]
    %v2747 = vld [vmem:[#allocation2 + $0x598] sm:$0xff]
    %v2748 = vld [vmem:[#allocation2 + $0x5a0] sm:$0xff]
    %v2749 = vld [vmem:[#allocation2 + $0x5a8] sm:$0xff]
    %v2750 = vld [vmem:[#allocation2 + $0x5b0] sm:$0xff]
    %v2751 = vld [vmem:[#allocation2 + $0x5b8] sm:$0xff]
    %v2752 = vld [vmem:[#allocation2 + $0x5c0] sm:$0xff]
    %v2753 = vld [vmem:[#allocation2 + $0x5c8] sm:$0xff]
    %v2754 = vld [vmem:[#allocation2 + $0x5d0] sm:$0xff]
    %v2755 = vld [vmem:[#allocation2 + $0x5d8] sm:$0xff]
    %v2756 = vld [vmem:[#allocation2 + $0x5e0] sm:$0xff]
    %v2757 = vld [vmem:[#allocation2 + $0x5e8] sm:$0xff]
    %v2758 = vld [vmem:[#allocation2 + $0x5f0] sm:$0xff]
    %v2759 = vld [vmem:[#allocation2 + $0x5f8] sm:$0xff]
    %v2760 = vld [vmem:[#allocation2 + $0x600] sm:$0xff]
    %v2761 = vld [vmem:[#allocation2 + $0x608] sm:$0xff]
    %v2762 = vld [vmem:[#allocation2 + $0x610] sm:$0xff]
    %v2763 = vld [vmem:[#allocation2 + $0x618] sm:$0xff]
    %v2764 = vld [vmem:[#allocation2 + $0x620] sm:$0xff]
    %v2765 = vld [vmem:[#allocation2 + $0x628] sm:$0xff]
    %v2766 = vld [vmem:[#allocation2 + $0x630] sm:$0xff]
    %v2767 = vld [vmem:[#allocation2 + $0x638] sm:$0xff]
    %v2768 = vld [vmem:[#allocation2 + $0x640] sm:$0xff]
    %v2769 = vld [vmem:[#allocation2 + $0x648] sm:$0xff]
    %v2770 = vld [vmem:[#allocation2 + $0x650] sm:$0xff]
    %v2771 = vld [vmem:[#allocation2 + $0x658] sm:$0xff]
    %v2772 = vld [vmem:[#allocation2 + $0x660] sm:$0xff]
    %v2773 = vld [vmem:[#allocation2 + $0x668] sm:$0xff]
    %v2774 = vld [vmem:[#allocation2 + $0x670] sm:$0xff]
    %v2775 = vld [vmem:[#allocation2 + $0x678] sm:$0xff]
    %v2776 = vld [vmem:[#allocation2 + $0x680] sm:$0xff]
    %v2777 = vld [vmem:[#allocation2 + $0x688] sm:$0xff]
    %v2778 = vld [vmem:[#allocation2 + $0x690] sm:$0xff]
    %v2779 = vld [vmem:[#allocation2 + $0x698] sm:$0xff]
    %v2780 = vld [vmem:[#allocation2 + $0x6a0] sm:$0xff]
    %v2781 = vld [vmem:[#allocation2 + $0x6a8] sm:$0xff]
    %v2782 = vld [vmem:[#allocation2 + $0x6b0] sm:$0xff]
    %v2783 = vld [vmem:[#allocation2 + $0x6b8] sm:$0xff]
    %v2784 = vld [vmem:[#allocation2 + $0x6c0] sm:$0xff]
    %v2785 = vld [vmem:[#allocation2 + $0x6c8] sm:$0xff]
    %v2786 = vld [vmem:[#allocation2 + $0x6d0] sm:$0xff]
    %v2787 = vld [vmem:[#allocation2 + $0x6d8] sm:$0xff]
    %v2788 = vld [vmem:[#allocation2 + $0x6e0] sm:$0xff]
    %v2789 = vld [vmem:[#allocation2 + $0x6e8] sm:$0xff]
    %v2790 = vld [vmem:[#allocation2 + $0x6f0] sm:$0xff]
    %v2791 = vld [vmem:[#allocation2 + $0x6f8] sm:$0xff]
    %2792 = vmatprep.subr.bf16.mxu0 0
    %2793 = vmatpush1.bf16.msra.mxu0 %v2734
    %2794 = vmatprep.subr.bf16.mxu0 0
    %2795 = vmatpush1.bf16.msra.mxu0 %v2735
    %2796 = vmatprep.subr.bf16.mxu0 0
    %2797 = vmatpush1.bf16.msra.mxu0 0
    %2798 = vmatprep.subr.bf16.mxu0 0
    %2799 = vmatpush1.bf16.msra.mxu0 0
    %2800 = vmatprep.subr.bf16.mxu0 0
    %2801 = vmatpush1.bf16.msra.mxu0 0
    %2802 = vmatprep.subr.bf16.mxu0 0
    %2803 = vmatpush1.bf16.msra.mxu0 0
    %2804 = vmatprep.subr.bf16.mxu0 0
    %2805 = vmatpush1.bf16.msra.mxu0 0
    %2806 = vmatprep.subr.bf16.mxu0 0
    %2807 = vmatpush1.bf16.msra.mxu0 0
    %2808 = vmatprep.subr.bf16.mxu0 0
    %2809 = vmatpush1.bf16.msra.mxu0 0
    %2810 = vmatprep.subr.bf16.mxu0 0
    %2811 = vmatpush1.bf16.msra.mxu0 0
    %2812 = vmatprep.subr.bf16.mxu0 0
    %2813 = vmatpush1.bf16.msra.mxu0 0
    %2814 = vmatprep.subr.bf16.mxu0 0
    %2815 = vmatpush1.bf16.msra.mxu0 0
    %2816 = vmatprep.subr.bf16.mxu0 0
    %2817 = vmatpush1.bf16.msra.mxu0 0
    %2818 = vmatprep.subr.bf16.mxu0 0
    %2819 = vmatpush1.bf16.msra.mxu0 0
    %2820 = vmatprep.subr.bf16.mxu0 0
    %2821 = vmatpush1.bf16.msra.mxu0 0
    %2822 = vmatprep.subr.bf16.mxu0 0
    %2823 = vmatpush1.bf16.msra.mxu0 0
    %2824 = vmatprep.mubr.bf16.mxu0 0
    %2825 = vmatmul.mubr.bf16.gmra.mrb[0].mxu0 %v2117
    %v2826 = vpop.f32.mrb[0].mxu0
    %v2827 = vadd.f32 0.0, %v2826
    %v2828 = vpop.f32.mrb[0].mxu0
    %v2829 = vpop.f32.mrb[0].mxu0
    %v2830 = vadd.f32 0.0, %v2829
    %v2831 = vpop.f32.mrb[0].mxu0
    %2832 = vmatprep.mubr.bf16.mxu0 0
    %2833 = vmatmul.mubr.bf16.gmra.mrb[0].mxu0 %v2120
    %v2834 = vpop.f32.mrb[0].mxu0
    %v2835 = vadd.f32 0.0, %v2834
    %v2836 = vpop.f32.mrb[0].mxu0
    %v2837 = vpop.f32.mrb[0].mxu0
    %v2838 = vadd.f32 0.0, %v2837
    %v2839 = vpop.f32.mrb[0].mxu0
    %2840 = vdwg.mxu0
    %v2841 = vpack.c.bf16 %v2830, %v2827
    %v2842 = vpack.c.bf16 %v2838, %v2835
    %2843 = vmatprep.subr.bf16.mxu0 0
    %2844 = vmatpush1.bf16.msra.mxu0 %v2734
    %2845 = vmatprep.subr.bf16.mxu0 0
    %2846 = vmatpush1.bf16.msra.mxu0 %v2735
    %2847 = vmatprep.subr.bf16.mxu0 0
    %2848 = vmatpush1.bf16.msra.mxu0 0
    %2849 = vmatprep.subr.bf16.mxu0 0
    %2850 = vmatpush1.bf16.msra.mxu0 0
    %2851 = vmatprep.subr.bf16.mxu0 0
    %2852 = vmatpush1.bf16.msra.mxu0 0
    %2853 = vmatprep.subr.bf16.mxu0 0
    %2854 = vmatpush1.bf16.msra.mxu0 0
    %2855 = vmatprep.subr.bf16.mxu0 0
    %2856 = vmatpush1.bf16.msra.mxu0 0
    %2857 = vmatprep.subr.bf16.mxu0 0
    %2858 = vmatpush1.bf16.msra.mxu0 0
    %2859 = vmatprep.subr.bf16.mxu0 0
    %2860 = vmatpush1.bf16.msra.mxu0 0
    %2861 = vmatprep.subr.bf16.mxu0 0
    %2862 = vmatpush1.bf16.msra.mxu0 0
    %2863 = vmatprep.subr.bf16.mxu0 0
    %2864 = vmatpush1.bf16.msra.mxu0 0
    %2865 = vmatprep.subr.bf16.mxu0 0
    %2866 = vmatpush1.bf16.msra.mxu0 0
    %2867 = vmatprep.subr.bf16.mxu0 0
    %2868 = vmatpush1.bf16.msra.mxu0 0
    %2869 = vmatprep.subr.bf16.mxu0 0
    %2870 = vmatpush1.bf16.msra.mxu0 0
    %2871 = vmatprep.subr.bf16.mxu0 0
    %2872 = vmatpush1.bf16.msra.mxu0 0
    %2873 = vmatprep.subr.bf16.mxu0 0
    %2874 = vmatpush1.bf16.msra.mxu0 0
    %2875 = vmatprep.mubr.bf16.mxu0 0
    %2876 = vmatmul.mubr.bf16.gmra.mrb[0].mxu0 %v2189
    %v2877 = vpop.f32.mrb[0].mxu0
    %v2878 = vadd.f32 0.0, %v2877
    %v2879 = vpop.f32.mrb[0].mxu0
    %v2880 = vpop.f32.mrb[0].mxu0
    %v2881 = vadd.f32 0.0, %v2880
    %v2882 = vpop.f32.mrb[0].mxu0
    %2883 = vmatprep.mubr.bf16.mxu0 0
    %2884 = vmatmul.mubr.bf16.gmra.mrb[0].mxu0 %v2192
    %v2885 = vpop.f32.mrb[0].mxu0
    %v2886 = vadd.f32 0.0, %v2885
    %v2887 = vpop.f32.mrb[0].mxu0
    %v2888 = vpop.f32.mrb[0].mxu0
    %v2889 = vadd.f32 0.0, %v2888
    %v2890 = vpop.f32.mrb[0].mxu0
    %2891 = vdwg.mxu0
    %v2892 = vpack.c.bf16 %v2881, %v2878
    %v2893 = vpack.c.bf16 %v2889, %v2886
    %2894 = vmatprep.subr.bf16.mxu0 0
    %2895 = vmatpush1.bf16.msra.mxu0 %v2734
    %2896 = vmatprep.subr.bf16.mxu0 0
    %2897 = vmatpush1.bf16.msra.mxu0 %v2735
    %2898 = vmatprep.subr.bf16.mxu0 0
    %2899 = vmatpush1.bf16.msra.mxu0 0
    %2900 = vmatprep.subr.bf16.mxu0 0
    %2901 = vmatpush1.bf16.msra.mxu0 0
    %2902 = vmatprep.subr.bf16.mxu0 0
    %2903 = vmatpush1.bf16.msra.mxu0 0
    %2904 = vmatprep.subr.bf16.mxu0 0
    %2905 = vmatpush1.bf16.msra.mxu0 0
    %2906 = vmatprep.subr.bf16.mxu0 0
    %2907 = vmatpush1.bf16.msra.mxu0 0
    %2908 = vmatprep.subr.bf16.mxu0 0
    %2909 = vmatpush1.bf16.msra.mxu0 0
    %2910 = vmatprep.subr.bf16.mxu0 0
    %2911 = vmatpush1.bf16.msra.mxu0 0
    %2912 = vmatprep.subr.bf16.mxu0 0
    %2913 = vmatpush1.bf16.msra.mxu0 0
    %2914 = vmatprep.subr.bf16.mxu0 0
    %2915 = vmatpush1.bf16.msra.mxu0 0
    %2916 = vmatprep.subr.bf16.mxu0 0
    %2917 = vmatpush1.bf16.msra.mxu0 0
    %2918 = vmatprep.subr.bf16.mxu0 0
    %2919 = vmatpush1.bf16.msra.mxu0 0
    %2920 = vmatprep.subr.bf16.mxu0 0
    %2921 = vmatpush1.bf16.msra.mxu0 0
    %2922 = vmatprep.subr.bf16.mxu0 0
    %2923 = vmatpush1.bf16.msra.mxu0 0
    %2924 = vmatprep.subr.bf16.mxu0 0
    %2925 = vmatpush1.bf16.msra.mxu0 0
    %2926 = vmatprep.mubr.bf16.mxu0 0
    %2927 = vmatmul.mubr.bf16.gmra.mrb[0].mxu0 %v2261
    %v2928 = vpop.f32.mrb[0].mxu0
    %v2929 = vadd.f32 0.0, %v2928
    %v2930 = vpop.f32.mrb[0].mxu0
    %v2931 = vpop.f32.mrb[0].mxu0
    %v2932 = vadd.f32 0.0, %v2931
    %v2933 = vpop.f32.mrb[0].mxu0
    %2934 = vmatprep.mubr.bf16.mxu0 0
    %2935 = vmatmul.mubr.bf16.gmra.mrb[0].mxu0 %v2264
    %v2936 = vpop.f32.mrb[0].mxu0
    %v2937 = vadd.f32 0.0, %v2936
    %v2938 = vpop.f32.mrb[0].mxu0
    %v2939 = vpop.f32.mrb[0].mxu0
    %v2940 = vadd.f32 0.0, %v2939
    %v2941 = vpop.f32.mrb[0].mxu0
    %2942 = vdwg.mxu0
    %v2943 = vpack.c.bf16 %v2932, %v2929
    %v2944 = vpack.c.bf16 %v2940, %v2937
    %2945 = vmatprep.subr.bf16.mxu0 0
    %2946 = vmatpush1.bf16.msra.mxu0 %v2734
    %2947 = vmatprep.subr.bf16.mxu0 0
    %2948 = vmatpush1.bf16.msra.mxu0 %v2735
    %2949 = vmatprep.subr.bf16.mxu0 0
    %2950 = vmatpush1.bf16.msra.mxu0 0
    %2951 = vmatprep.subr.bf16.mxu0 0
    %2952 = vmatpush1.bf16.msra.mxu0 0
    %2953 = vmatprep.subr.bf16.mxu0 0
    %2954 = vmatpush1.bf16.msra.mxu0 0
    %2955 = vmatprep.subr.bf16.mxu0 0
    %2956 = vmatpush1.bf16.msra.mxu0 0
    %2957 = vmatprep.subr.bf16.mxu0 0
    %2958 = vmatpush1.bf16.msra.mxu0 0
    %2959 = vmatprep.subr.bf16.mxu0 0
    %2960 = vmatpush1.bf16.msra.mxu0 0
    %2961 = vmatprep.subr.bf16.mxu0 0
    %2962 = vmatpush1.bf16.msra.mxu0 0
    %2963 = vmatprep.subr.bf16.mxu0 0
    %2964 = vmatpush1.bf16.msra.mxu0 0
    %2965 = vmatprep.subr.bf16.mxu0 0
    %2966 = vmatpush1.bf16.msra.mxu0 0
    %2967 = vmatprep.subr.bf16.mxu0 0
    %2968 = vmatpush1.bf16.msra.mxu0 0
    %2969 = vmatprep.subr.bf16.mxu0 0
    %2970 = vmatpush1.bf16.msra.mxu0 0
    %2971 = vmatprep.subr.bf16.mxu0 0
    %2972 = vmatpush1.bf16.msra.mxu0 0
    %2973 = vmatprep.subr.bf16.mxu0 0
    %2974 = vmatpush1.bf16.msra.mxu0 0
    %2975 = vmatprep.subr.bf16.mxu0 0
    %2976 = vmatpush1.bf16.msra.mxu0 0
    %2977 = vmatprep.mubr.bf16.mxu0 0
    %2978 = vmatmul.mubr.bf16.gmra.mrb[0].mxu0 %v2332
    %v2979 = vpop.f32.mrb[0].mxu0
    %v2980 = vadd.f32 0.0, %v2979
    %v2981 = vpop.f32.mrb[0].mxu0
    %v2982 = vpop.f32.mrb[0].mxu0
    %v2983 = vadd.f32 0.0, %v2982
    %v2984 = vpop.f32.mrb[0].mxu0
    %2985 = vmatprep.mubr.bf16.mxu0 0
    %2986 = vmatmul.mubr.bf16.gmra.mrb[0].mxu0 %v2335
    %v2987 = vpop.f32.mrb[0].mxu0
    %v2988 = vadd.f32 0.0, %v2987
    %v2989 = vpop.f32.mrb[0].mxu0
    %v2990 = vpop.f32.mrb[0].mxu0
    %v2991 = vadd.f32 0.0, %v2990
    %v2992 = vpop.f32.mrb[0].mxu0
    %2993 = vdwg.mxu0
    %v2994 = vpack.c.bf16 %v2983, %v2980
    %v2995 = vpack.c.bf16 %v2991, %v2988
    %2996 = vmatprep.subr.bf16.mxu0 0
    %2997 = vmatpush1.bf16.msra.mxu0 %v2734
    %2998 = vmatprep.subr.bf16.mxu0 0
    %2999 = vmatpush1.bf16.msra.mxu0 %v2735
    %3000 = vmatprep.subr.bf16.mxu0 0
    %3001 = vmatpush1.bf16.msra.mxu0 0
    %3002 = vmatprep.subr.bf16.mxu0 0
    %3003 = vmatpush1.bf16.msra.mxu0 0
    %3004 = vmatprep.subr.bf16.mxu0 0
    %3005 = vmatpush1.bf16.msra.mxu0 0
    %3006 = vmatprep.subr.bf16.mxu0 0
    %3007 = vmatpush1.bf16.msra.mxu0 0
    %3008 = vmatprep.subr.bf16.mxu0 0
    %3009 = vmatpush1.bf16.msra.mxu0 0
    %3010 = vmatprep.subr.bf16.mxu0 0
    %3011 = vmatpush1.bf16.msra.mxu0 0
    %3012 = vmatprep.subr.bf16.mxu0 0
    %3013 = vmatpush1.bf16.msra.mxu0 0
    %3014 = vmatprep.subr.bf16.mxu0 0
    %3015 = vmatpush1.bf16.msra.mxu0 0
    %3016 = vmatprep.subr.bf16.mxu0 0
    %3017 = vmatpush1.bf16.msra.mxu0 0
    %3018 = vmatprep.subr.bf16.mxu0 0
    %3019 = vmatpush1.bf16.msra.mxu0 0
    %3020 = vmatprep.subr.bf16.mxu0 0
    %3021 = vmatpush1.bf16.msra.mxu0 0
    %3022 = vmatprep.subr.bf16.mxu0 0
    %3023 = vmatpush1.bf16.msra.mxu0 0
    %3024 = vmatprep.subr.bf16.mxu0 0
    %3025 = vmatpush1.bf16.msra.mxu0 0
    %3026 = vmatprep.subr.bf16.mxu0 0
    %3027 = vmatpush1.bf16.msra.mxu0 0
    %3028 = vmatprep.mubr.bf16.mxu0 0
    %3029 = vmatmul.mubr.bf16.gmra.mrb[0].mxu0 %v2403
    %v3030 = vpop.f32.mrb[0].mxu0
    %v3031 = vadd.f32 0.0, %v3030
    %v3032 = vpop.f32.mrb[0].mxu0
    %v3033 = vpop.f32.mrb[0].mxu0
    %v3034 = vadd.f32 0.0, %v3033
    %v3035 = vpop.f32.mrb[0].mxu0
    %3036 = vmatprep.mubr.bf16.mxu0 0
    %3037 = vmatmul.mubr.bf16.gmra.mrb[0].mxu0 %v2406
    %v3038 = vpop.f32.mrb[0].mxu0
    %v3039 = vadd.f32 0.0, %v3038
    %v3040 = vpop.f32.mrb[0].mxu0
    %v3041 = vpop.f32.mrb[0].mxu0
    %v3042 = vadd.f32 0.0, %v3041
    %v3043 = vpop.f32.mrb[0].mxu0
    %3044 = vdwg.mxu0
    %v3045 = vpack.c.bf16 %v3034, %v3031
    %v3046 = vpack.c.bf16 %v3042, %v3039
    %3047 = vmatprep.subr.bf16.mxu0 0
    %3048 = vmatpush1.bf16.msra.mxu0 %v2734
    %3049 = vmatprep.subr.bf16.mxu0 0
    %3050 = vmatpush1.bf16.msra.mxu0 %v2735
    %3051 = vmatprep.subr.bf16.mxu0 0
    %3052 = vmatpush1.bf16.msra.mxu0 0
    %3053 = vmatprep.subr.bf16.mxu0 0
    %3054 = vmatpush1.bf16.msra.mxu0 0
    %3055 = vmatprep.subr.bf16.mxu0 0
    %3056 = vmatpush1.bf16.msra.mxu0 0
    %3057 = vmatprep.subr.bf16.mxu0 0
    %3058 = vmatpush1.bf16.msra.mxu0 0
    %3059 = vmatprep.subr.bf16.mxu0 0
    %3060 = vmatpush1.bf16.msra.mxu0 0
    %3061 = vmatprep.subr.bf16.mxu0 0
    %3062 = vmatpush1.bf16.msra.mxu0 0
    %3063 = vmatprep.subr.bf16.mxu0 0
    %3064 = vmatpush1.bf16.msra.mxu0 0
    %3065 = vmatprep.subr.bf16.mxu0 0
    %3066 = vmatpush1.bf16.msra.mxu0 0
    %3067 = vmatprep.subr.bf16.mxu0 0
    %3068 = vmatpush1.bf16.msra.mxu0 0
    %3069 = vmatprep.subr.bf16.mxu0 0
    %3070 = vmatpush1.bf16.msra.mxu0 0
    %3071 = vmatprep.subr.bf16.mxu0 0
    %3072 = vmatpush1.bf16.msra.mxu0 0
    %3073 = vmatprep.subr.bf16.mxu0 0
    %3074 = vmatpush1.bf16.msra.mxu0 0
    %3075 = vmatprep.subr.bf16.mxu0 0
    %3076 = vmatpush1.bf16.msra.mxu0 0
    %3077 = vmatprep.subr.bf16.mxu0 0
    %3078 = vmatpush1.bf16.msra.mxu0 0
    %3079 = vmatprep.mubr.bf16.mxu0 0
    %3080 = vmatmul.mubr.bf16.gmra.mrb[0].mxu0 %v2474
    %v3081 = vpop.f32.mrb[0].mxu0
    %v3082 = vadd.f32 0.0, %v3081
    %v3083 = vpop.f32.mrb[0].mxu0
    %v3084 = vpop.f32.mrb[0].mxu0
    %v3085 = vadd.f32 0.0, %v3084
    %v3086 = vpop.f32.mrb[0].mxu0
    %3087 = vmatprep.mubr.bf16.mxu0 0
    %3088 = vmatmul.mubr.bf16.gmra.mrb[0].mxu0 %v2477
    %v3089 = vpop.f32.mrb[0].mxu0
    %v3090 = vadd.f32 0.0, %v3089
    %v3091 = vpop.f32.mrb[0].mxu0
    %v3092 = vpop.f32.mrb[0].mxu0
    %v3093 = vadd.f32 0.0, %v3092
    %v3094 = vpop.f32.mrb[0].mxu0
    %3095 = vdwg.mxu0
    %v3096 = vpack.c.bf16 %v3085, %v3082
    %v3097 = vpack.c.bf16 %v3093, %v3090
    %v3098 = vlaneseq
    %v3099 = vshrl.u32 %v3098, 7
    %v3100 = vsub.s32 0, %v3099
    %v3101 = vrot.slane %v2044, %v3100
    %3102 = vmatprep.subr.bf16.mxu0 0
    %3103 = vmatpush1.bf16.msra.mxu0 %v2736
    %3104 = vmatprep.subr.bf16.mxu0 0
    %3105 = vmatpush1.bf16.msra.mxu0 %v2737
    %3106 = vmatprep.subr.bf16.mxu0 0
    %3107 = vmatpush1.bf16.msra.mxu0 %v2738
    %3108 = vmatprep.subr.bf16.mxu0 0
    %3109 = vmatpush1.bf16.msra.mxu0 %v2739
    %3110 = vmatprep.subr.bf16.mxu0 0
    %3111 = vmatpush1.bf16.msra.mxu0 %v2740
    %3112 = vmatprep.subr.bf16.mxu0 0
    %3113 = vmatpush1.bf16.msra.mxu0 %v2741
    %3114 = vmatprep.subr.bf16.mxu0 0
    %3115 = vmatpush1.bf16.msra.mxu0 %v2742
    %3116 = vmatprep.subr.bf16.mxu0 0
    %3117 = vmatpush1.bf16.msra.mxu0 %v2743
    %3118 = vmatprep.subr.bf16.mxu0 0
    %3119 = vmatpush1.bf16.msra.mxu0 %v2744
    %3120 = vmatprep.subr.bf16.mxu0 0
    %3121 = vmatpush1.bf16.msra.mxu0 %v2745
    %3122 = vmatprep.subr.bf16.mxu0 0
    %3123 = vmatpush1.bf16.msra.mxu0 %v2746
    %3124 = vmatprep.subr.bf16.mxu0 0
    %3125 = vmatpush1.bf16.msra.mxu0 %v2747
    %3126 = vmatprep.subr.bf16.mxu0 0
    %3127 = vmatpush1.bf16.msra.mxu0 %v2748
    %3128 = vmatprep.subr.bf16.mxu0 0
    %3129 = vmatpush1.bf16.msra.mxu0 %v2749
    %3130 = vmatprep.subr.bf16.mxu0 0
    %3131 = vmatpush1.bf16.msra.mxu0 %v2750
    %3132 = vmatprep.subr.bf16.mxu0 0
    %3133 = vmatpush1.bf16.msra.mxu0 %v2751
    %3134 = vmatprep.mubr.bf16.mxu0 %v2892
    %3135 = vmatmul.mubr.bf16.gmra.mrb[0].mxu0 %v2841
    %v3136 = vpop.f32.mrb[0].mxu0
    %v3137 = vadd.f32 %v3101, %v3136
    %v3138 = vpop.f32.mrb[0].mxu0
    %v3139 = vpop.f32.mrb[0].mxu0
    %v3140 = vadd.f32 %v3101, %v3139
    %v3141 = vpop.f32.mrb[0].mxu0
    %3142 = vmatprep.mubr.bf16.mxu0 %v2893
    %3143 = vmatmul.mubr.bf16.gmra.mrb[0].mxu0 %v2842
    %v3144 = vpop.f32.mrb[0].mxu0
    %v3145 = vadd.f32 %v3101, %v3144
    %v3146 = vpop.f32.mrb[0].mxu0
    %v3147 = vpop.f32.mrb[0].mxu0
    %v3148 = vadd.f32 %v3101, %v3147
    %v3149 = vpop.f32.mrb[0].mxu0
    %3150 = vdwg.mxu0
    %3151 = vmatprep.subr.bf16.mxu0 0
    %3152 = vmatpush1.bf16.msra.mxu0 %v2752
    %3153 = vmatprep.subr.bf16.mxu0 0
    %3154 = vmatpush1.bf16.msra.mxu0 %v2753
    %3155 = vmatprep.subr.bf16.mxu0 0
    %3156 = vmatpush1.bf16.msra.mxu0 %v2754
    %3157 = vmatprep.subr.bf16.mxu0 0
    %3158 = vmatpush1.bf16.msra.mxu0 %v2755
    %3159 = vmatprep.subr.bf16.mxu0 0
    %3160 = vmatpush1.bf16.msra.mxu0 %v2756
    %3161 = vmatprep.subr.bf16.mxu0 0
    %3162 = vmatpush1.bf16.msra.mxu0 %v2757
    %3163 = vmatprep.subr.bf16.mxu0 0
    %3164 = vmatpush1.bf16.msra.mxu0 %v2758
    %3165 = vmatprep.subr.bf16.mxu0 0
    %3166 = vmatpush1.bf16.msra.mxu0 %v2759
    %3167 = vmatprep.subr.bf16.mxu0 0
    %3168 = vmatpush1.bf16.msra.mxu0 %v2760
    %3169 = vmatprep.subr.bf16.mxu0 0
    %3170 = vmatpush1.bf16.msra.mxu0 %v2761
    %3171 = vmatprep.subr.bf16.mxu0 0
    %3172 = vmatpush1.bf16.msra.mxu0 %v2762
    %3173 = vmatprep.subr.bf16.mxu0 0
    %3174 = vmatpush1.bf16.msra.mxu0 %v2763
    %3175 = vmatprep.subr.bf16.mxu0 0
    %3176 = vmatpush1.bf16.msra.mxu0 %v2764
    %3177 = vmatprep.subr.bf16.mxu0 0
    %3178 = vmatpush1.bf16.msra.mxu0 %v2765
    %3179 = vmatprep.subr.bf16.mxu0 0
    %3180 = vmatpush1.bf16.msra.mxu0 %v2766
    %3181 = vmatprep.subr.bf16.mxu0 0
    %3182 = vmatpush1.bf16.msra.mxu0 %v2767
    %3183 = vmatprep.mubr.bf16.mxu0 %v2994
    %3184 = vmatmul.mubr.bf16.gmra.mrb[0].mxu0 %v2943
    %v3185 = vpop.f32.mrb[0].mxu0
    %v3186 = vadd.f32 %v3137, %v3185
    %v3187 = vpop.f32.mrb[0].mxu0
    %v3188 = vpop.f32.mrb[0].mxu0
    %v3189 = vadd.f32 %v3140, %v3188
    %v3190 = vpop.f32.mrb[0].mxu0
    %3191 = vmatprep.mubr.bf16.mxu0 %v2995
    %3192 = vmatmul.mubr.bf16.gmra.mrb[0].mxu0 %v2944
    %v3193 = vpop.f32.mrb[0].mxu0
    %v3194 = vadd.f32 %v3145, %v3193
    %v3195 = vpop.f32.mrb[0].mxu0
    %v3196 = vpop.f32.mrb[0].mxu0
    %v3197 = vadd.f32 %v3148, %v3196
    %v3198 = vpop.f32.mrb[0].mxu0
    %3199 = vdwg.mxu0
    %3200 = vmatprep.subr.bf16.mxu0 0
    %3201 = vmatpush1.bf16.msra.mxu0 %v2768
    %3202 = vmatprep.subr.bf16.mxu0 0
    %3203 = vmatpush1.bf16.msra.mxu0 %v2769
    %3204 = vmatprep.subr.bf16.mxu0 0
    %3205 = vmatpush1.bf16.msra.mxu0 %v2770
    %3206 = vmatprep.subr.bf16.mxu0 0
    %3207 = vmatpush1.bf16.msra.mxu0 %v2771
    %3208 = vmatprep.subr.bf16.mxu0 0
    %3209 = vmatpush1.bf16.msra.mxu0 %v2772
    %3210 = vmatprep.subr.bf16.mxu0 0
    %3211 = vmatpush1.bf16.msra.mxu0 %v2773
    %3212 = vmatprep.subr.bf16.mxu0 0
    %3213 = vmatpush1.bf16.msra.mxu0 %v2774
    %3214 = vmatprep.subr.bf16.mxu0 0
    %3215 = vmatpush1.bf16.msra.mxu0 %v2775
    %3216 = vmatprep.subr.bf16.mxu0 0
    %3217 = vmatpush1.bf16.msra.mxu0 %v2776
    %3218 = vmatprep.subr.bf16.mxu0 0
    %3219 = vmatpush1.bf16.msra.mxu0 %v2777
    %3220 = vmatprep.subr.bf16.mxu0 0
    %3221 = vmatpush1.bf16.msra.mxu0 %v2778
    %3222 = vmatprep.subr.bf16.mxu0 0
    %3223 = vmatpush1.bf16.msra.mxu0 %v2779
    %3224 = vmatprep.subr.bf16.mxu0 0
    %3225 = vmatpush1.bf16.msra.mxu0 %v2780
    %3226 = vmatprep.subr.bf16.mxu0 0
    %3227 = vmatpush1.bf16.msra.mxu0 %v2781
    %3228 = vmatprep.subr.bf16.mxu0 0
    %3229 = vmatpush1.bf16.msra.mxu0 %v2782
    %3230 = vmatprep.subr.bf16.mxu0 0
    %3231 = vmatpush1.bf16.msra.mxu0 %v2783
    %3232 = vmatprep.mubr.bf16.mxu0 %v3096
    %3233 = vmatmul.mubr.bf16.gmra.mrb[0].mxu0 %v3045
    %v3234 = vpop.f32.mrb[0].mxu0
    %v3235 = vadd.f32 %v3186, %v3234
    %v3236 = vpop.f32.mrb[0].mxu0
    %v3237 = vpop.f32.mrb[0].mxu0
    %v3238 = vadd.f32 %v3189, %v3237
    %v3239 = vpop.f32.mrb[0].mxu0
    %3240 = vmatprep.mubr.bf16.mxu0 %v3097
    %3241 = vmatmul.mubr.bf16.gmra.mrb[0].mxu0 %v3046
    %v3242 = vpop.f32.mrb[0].mxu0
    %v3243 = vadd.f32 %v3194, %v3242
    %v3244 = vpop.f32.mrb[0].mxu0
    %v3245 = vpop.f32.mrb[0].mxu0
    %v3246 = vadd.f32 %v3197, %v3245
    %v3247 = vpop.f32.mrb[0].mxu0
    %3248 = vdwg.mxu0
    %3249 = vmatprep.subr.bf16.mxu0 0
    %3250 = vmatpush1.bf16.msra.mxu0 %v2784
    %3251 = vmatprep.subr.bf16.mxu0 0
    %3252 = vmatpush1.bf16.msra.mxu0 %v2785
    %3253 = vmatprep.subr.bf16.mxu0 0
    %3254 = vmatpush1.bf16.msra.mxu0 %v2786
    %3255 = vmatprep.subr.bf16.mxu0 0
    %3256 = vmatpush1.bf16.msra.mxu0 %v2787
    %3257 = vmatprep.subr.bf16.mxu0 0
    %3258 = vmatpush1.bf16.msra.mxu0 %v2788
    %3259 = vmatprep.subr.bf16.mxu0 0
    %3260 = vmatpush1.bf16.msra.mxu0 %v2789
    %3261 = vmatprep.subr.bf16.mxu0 0
    %3262 = vmatpush1.bf16.msra.mxu0 %v2790
    %3263 = vmatprep.subr.bf16.mxu0 0
    %3264 = vmatpush1.bf16.msra.mxu0 %v2791
    %3265 = vmatprep.subr.bf16.mxu0 0
    %3266 = vmatpush1.bf16.msra.mxu0 0
    %3267 = vmatprep.subr.bf16.mxu0 0
    %3268 = vmatpush1.bf16.msra.mxu0 0
    %3269 = vmatprep.subr.bf16.mxu0 0
    %3270 = vmatpush1.bf16.msra.mxu0 0
    %3271 = vmatprep.subr.bf16.mxu0 0
    %3272 = vmatpush1.bf16.msra.mxu0 0
    %3273 = vmatprep.subr.bf16.mxu0 0
    %3274 = vmatpush1.bf16.msra.mxu0 0
    %3275 = vmatprep.subr.bf16.mxu0 0
    %3276 = vmatpush1.bf16.msra.mxu0 0
    %3277 = vmatprep.subr.bf16.mxu0 0
    %3278 = vmatpush1.bf16.msra.mxu0 0
    %3279 = vmatprep.subr.bf16.mxu0 0
    %3280 = vmatpush1.bf16.msra.mxu0 0
    %3281 = vmatprep.mubr.bf16.mxu0 0
    %3282 = vmatmul.mubr.bf16.gmra.mrb[0].mxu0 %v2734
    %v3283 = vpop.f32.mrb[0].mxu0
    %v3284 = vadd.f32 %v3235, %v3283
    %v3285 = vpop.f32.mrb[0].mxu0
    %v3286 = vpop.f32.mrb[0].mxu0
    %v3287 = vadd.f32 %v3238, %v3286
    %v3288 = vpop.f32.mrb[0].mxu0
    %3289 = vmatprep.mubr.bf16.mxu0 0
    %3290 = vmatmul.mubr.bf16.gmra.mrb[0].mxu0 %v2735
    %v3291 = vpop.f32.mrb[0].mxu0
    %v3292 = vadd.f32 %v3243, %v3291
    %v3293 = vpop.f32.mrb[0].mxu0
    %v3294 = vpop.f32.mrb[0].mxu0
    %v3295 = vadd.f32 %v3246, %v3294
    %v3296 = vpop.f32.mrb[0].mxu0
    %3297 = vdwg.mxu0
    %v3298 = vmax.f32 %v3284, 0.0
    %v3299 = vmax.f32 %v3287, 0.0
    %v3300 = vmax.f32 %v3292, 0.0
    %v3301 = vmax.f32 %v3295, 0.0
    %v3302 = vadd.f32 %v3298, %v2035
    %v3303 = vadd.f32 %v3299, %v2036
    %v3304 = vadd.f32 %v3300, %v2037
    %v3305 = vadd.f32 %v3301, %v2038
    %v3306 = vmax.f32 %v3302, 0.0
    %v3307 = vmax.f32 %v3303, 0.0
    %v3308 = vmax.f32 %v3304, 0.0
    %v3309 = vmax.f32 %v3305, 0.0
    %s3310 = smul.u32 4, 128
    %s3311 = smul.u32 %s3310, 1
    %s3312 = sshll.u32 %s3311, 4
    %3313 = dma.done %s152, %s3312
    %v3314 = vpack.c.bf16 %v3307, %v3306
    %v3315 = vpack.c.bf16 %v3309, %v3308
    %v3316 = vld [vmem:[#allocation12 + $0x4] sm:$0x1]
    %v3317 = vld [vmem:[#allocation12 + $0x5] sm:$0x1]
    %v3318 = vld [vmem:[#allocation2 + $0x700] sm:$0xff]
    %v3319 = vld [vmem:[#allocation2 + $0x708] sm:$0xff]
    %v3320 = vld [vmem:[#allocation2 + $0x710] sm:$0xff]
    %v3321 = vld [vmem:[#allocation2 + $0x718] sm:$0xff]
    %v3322 = vld [vmem:[#allocation2 + $0x720] sm:$0xff]
    %v3323 = vld [vmem:[#allocation2 + $0x728] sm:$0xff]
    %v3324 = vld [vmem:[#allocation2 + $0x730] sm:$0xff]
    %v3325 = vld [vmem:[#allocation2 + $0x738] sm:$0xff]
    %v3326 = vld [vmem:[#allocation2 + $0x740] sm:$0xff]
    %v3327 = vld [vmem:[#allocation2 + $0x748] sm:$0xff]
    %v3328 = vld [vmem:[#allocation2 + $0x750] sm:$0xff]
    %v3329 = vld [vmem:[#allocation2 + $0x758] sm:$0xff]
    %v3330 = vld [vmem:[#allocation2 + $0x760] sm:$0xff]
    %v3331 = vld [vmem:[#allocation2 + $0x768] sm:$0xff]
    %v3332 = vld [vmem:[#allocation2 + $0x770] sm:$0xff]
    %v3333 = vld [vmem:[#allocation2 + $0x778] sm:$0xff]
    %v3334 = vld [vmem:[#allocation2 + $0x780] sm:$0xff]
    %v3335 = vld [vmem:[#allocation2 + $0x788] sm:$0xff]
    %v3336 = vld [vmem:[#allocation2 + $0x790] sm:$0xff]
    %v3337 = vld [vmem:[#allocation2 + $0x798] sm:$0xff]
    %v3338 = vld [vmem:[#allocation2 + $0x7a0] sm:$0xff]
    %v3339 = vld [vmem:[#allocation2 + $0x7a8] sm:$0xff]
    %v3340 = vld [vmem:[#allocation2 + $0x7b0] sm:$0xff]
    %v3341 = vld [vmem:[#allocation2 + $0x7b8] sm:$0xff]
    %v3342 = vld [vmem:[#allocation2 + $0x7c0] sm:$0xff]
    %v3343 = vld [vmem:[#allocation2 + $0x7c8] sm:$0xff]
    %v3344 = vld [vmem:[#allocation2 + $0x7d0] sm:$0xff]
    %v3345 = vld [vmem:[#allocation2 + $0x7d8] sm:$0xff]
    %v3346 = vld [vmem:[#allocation2 + $0x7e0] sm:$0xff]
    %v3347 = vld [vmem:[#allocation2 + $0x7e8] sm:$0xff]
    %v3348 = vld [vmem:[#allocation2 + $0x7f0] sm:$0xff]
    %v3349 = vld [vmem:[#allocation2 + $0x7f8] sm:$0xff]
    %v3350 = vld [vmem:[%s2101] sm:$0xf]
    %v3351 = vld [vmem:[%s2101 + $0x4] sm:$0xf]
    %v3352 = vld [vmem:[%s2101 + $0x8] sm:$0xf]
    %v3353 = vld [vmem:[%s2101 + $0xc] sm:$0xf]
    %v3358 = vunpack.c.l.b16 %v3350
    %v3359 = vunpack.c.l.b16 %v3351
    %v3360 = vunpack.c.l.b16 %v3352
    %v3361 = vunpack.c.l.b16 %v3353
    %v3362 = vpack.c.b16 %v3359, %v3358
    %v3363 = vpack.c.b16 %v3361, %v3360
    %v3365 = vsel %vm842, %v3362, 0
    %v3368 = vsel %vm842, %v3363, 0
    %3370 = vmatprep.subr.bf16.mxu0 0
    %3371 = vmatpush1.bf16.msra.mxu0 %v3314
    %3372 = vmatprep.subr.bf16.mxu0 0
    %3373 = vmatpush1.bf16.msra.mxu0 %v3315
    %3374 = vmatprep.subr.bf16.mxu0 0
    %3375 = vmatpush1.bf16.msra.mxu0 0
    %3376 = vmatprep.subr.bf16.mxu0 0
    %3377 = vmatpush1.bf16.msra.mxu0 0
    %3378 = vmatprep.subr.bf16.mxu0 0
    %3379 = vmatpush1.bf16.msra.mxu0 0
    %3380 = vmatprep.subr.bf16.mxu0 0
    %3381 = vmatpush1.bf16.msra.mxu0 0
    %3382 = vmatprep.subr.bf16.mxu0 0
    %3383 = vmatpush1.bf16.msra.mxu0 0
    %3384 = vmatprep.subr.bf16.mxu0 0
    %3385 = vmatpush1.bf16.msra.mxu0 0
    %3386 = vmatprep.subr.bf16.mxu0 0
    %3387 = vmatpush1.bf16.msra.mxu0 0
    %3388 = vmatprep.subr.bf16.mxu0 0
    %3389 = vmatpush1.bf16.msra.mxu0 0
    %3390 = vmatprep.subr.bf16.mxu0 0
    %3391 = vmatpush1.bf16.msra.mxu0 0
    %3392 = vmatprep.subr.bf16.mxu0 0
    %3393 = vmatpush1.bf16.msra.mxu0 0
    %3394 = vmatprep.subr.bf16.mxu0 0
    %3395 = vmatpush1.bf16.msra.mxu0 0
    %3396 = vmatprep.subr.bf16.mxu0 0
    %3397 = vmatpush1.bf16.msra.mxu0 0
    %3398 = vmatprep.subr.bf16.mxu0 0
    %3399 = vmatpush1.bf16.msra.mxu0 0
    %3400 = vmatprep.subr.bf16.mxu0 0
    %3401 = vmatpush1.bf16.msra.mxu0 0
    %3402 = vmatprep.mubr.bf16.mxu0 0
    %3403 = vmatmul.mubr.bf16.gmra.mrb[0].mxu0 %v3365
    %v3404 = vpop.f32.mrb[0].mxu0
    %v3405 = vadd.f32 0.0, %v3404
    %v3406 = vpop.f32.mrb[0].mxu0
    %v3407 = vpop.f32.mrb[0].mxu0
    %v3408 = vadd.f32 0.0, %v3407
    %v3409 = vpop.f32.mrb[0].mxu0
    %3410 = vmatprep.mubr.bf16.mxu0 0
    %3411 = vmatmul.mubr.bf16.gmra.mrb[0].mxu0 %v3368
    %v3412 = vpop.f32.mrb[0].mxu0
    %v3413 = vadd.f32 0.0, %v3412
    %v3414 = vpop.f32.mrb[0].mxu0
    %v3415 = vpop.f32.mrb[0].mxu0
    %v3416 = vadd.f32 0.0, %v3415
    %v3417 = vpop.f32.mrb[0].mxu0
    %3418 = vdwg.mxu0
    %v3419 = vpack.c.bf16 %v3408, %v3405
    %v3420 = vpack.c.bf16 %v3416, %v3413
    %v3421 = vld [vmem:[%s2245] sm:$0xf]
    %v3422 = vld [vmem:[%s2245 + $0x4] sm:$0xf]
    %v3423 = vld [vmem:[%s2245 + $0x8] sm:$0xf]
    %v3424 = vld [vmem:[%s2245 + $0xc] sm:$0xf]
    %v3429 = vunpack.c.l.b16 %v3421
    %v3430 = vunpack.c.l.b16 %v3422
    %v3431 = vunpack.c.l.b16 %v3423
    %v3432 = vunpack.c.l.b16 %v3424
    %v3433 = vpack.c.b16 %v3430, %v3429
    %v3434 = vpack.c.b16 %v3432, %v3431
    %v3436 = vsel %vm842, %v3433, 0
    %v3439 = vsel %vm842, %v3434, 0
    %3441 = vmatprep.subr.bf16.mxu0 0
    %3442 = vmatpush1.bf16.msra.mxu0 %v3314
    %3443 = vmatprep.subr.bf16.mxu0 0
    %3444 = vmatpush1.bf16.msra.mxu0 %v3315
    %3445 = vmatprep.subr.bf16.mxu0 0
    %3446 = vmatpush1.bf16.msra.mxu0 0
    %3447 = vmatprep.subr.bf16.mxu0 0
    %3448 = vmatpush1.bf16.msra.mxu0 0
    %3449 = vmatprep.subr.bf16.mxu0 0
    %3450 = vmatpush1.bf16.msra.mxu0 0
    %3451 = vmatprep.subr.bf16.mxu0 0
    %3452 = vmatpush1.bf16.msra.mxu0 0
    %3453 = vmatprep.subr.bf16.mxu0 0
    %3454 = vmatpush1.bf16.msra.mxu0 0
    %3455 = vmatprep.subr.bf16.mxu0 0
    %3456 = vmatpush1.bf16.msra.mxu0 0
    %3457 = vmatprep.subr.bf16.mxu0 0
    %3458 = vmatpush1.bf16.msra.mxu0 0
    %3459 = vmatprep.subr.bf16.mxu0 0
    %3460 = vmatpush1.bf16.msra.mxu0 0
    %3461 = vmatprep.subr.bf16.mxu0 0
    %3462 = vmatpush1.bf16.msra.mxu0 0
    %3463 = vmatprep.subr.bf16.mxu0 0
    %3464 = vmatpush1.bf16.msra.mxu0 0
    %3465 = vmatprep.subr.bf16.mxu0 0
    %3466 = vmatpush1.bf16.msra.mxu0 0
    %3467 = vmatprep.subr.bf16.mxu0 0
    %3468 = vmatpush1.bf16.msra.mxu0 0
    %3469 = vmatprep.subr.bf16.mxu0 0
    %3470 = vmatpush1.bf16.msra.mxu0 0
    %3471 = vmatprep.subr.bf16.mxu0 0
    %3472 = vmatpush1.bf16.msra.mxu0 0
    %3473 = vmatprep.mubr.bf16.mxu0 0
    %3474 = vmatmul.mubr.bf16.gmra.mrb[0].mxu0 %v3436
    %v3475 = vpop.f32.mrb[0].mxu0
    %v3476 = vadd.f32 0.0, %v3475
    %v3477 = vpop.f32.mrb[0].mxu0
    %v3478 = vpop.f32.mrb[0].mxu0
    %v3479 = vadd.f32 0.0, %v3478
    %v3480 = vpop.f32.mrb[0].mxu0
    %3481 = vmatprep.mubr.bf16.mxu0 0
    %3482 = vmatmul.mubr.bf16.gmra.mrb[0].mxu0 %v3439
    %v3483 = vpop.f32.mrb[0].mxu0
    %v3484 = vadd.f32 0.0, %v3483
    %v3485 = vpop.f32.mrb[0].mxu0
    %v3486 = vpop.f32.mrb[0].mxu0
    %v3487 = vadd.f32 0.0, %v3486
    %v3488 = vpop.f32.mrb[0].mxu0
    %3489 = vdwg.mxu0
    %v3490 = vpack.c.bf16 %v3479, %v3476
    %v3491 = vpack.c.bf16 %v3487, %v3484
    %v3492 = vld [vmem:[%s972] sm:$0xf]
    %v3493 = vld [vmem:[%s972 + $0x4] sm:$0xf]
    %v3494 = vld [vmem:[%s972 + $0x8] sm:$0xf]
    %v3495 = vld [vmem:[%s972 + $0xc] sm:$0xf]
    %v3500 = vunpack.c.l.b16 %v3492
    %v3501 = vunpack.c.l.b16 %v3493
    %v3502 = vunpack.c.l.b16 %v3494
    %v3503 = vunpack.c.l.b16 %v3495
    %v3504 = vpack.c.b16 %v3501, %v3500
    %v3505 = vpack.c.b16 %v3503, %v3502
    %v3507 = vsel %vm842, %v3504, 0
    %v3510 = vsel %vm842, %v3505, 0
    %3512 = vmatprep.subr.bf16.mxu0 0
    %3513 = vmatpush1.bf16.msra.mxu0 %v3314
    %3514 = vmatprep.subr.bf16.mxu0 0
    %3515 = vmatpush1.bf16.msra.mxu0 %v3315
    %3516 = vmatprep.subr.bf16.mxu0 0
    %3517 = vmatpush1.bf16.msra.mxu0 0
    %3518 = vmatprep.subr.bf16.mxu0 0
    %3519 = vmatpush1.bf16.msra.mxu0 0
    %3520 = vmatprep.subr.bf16.mxu0 0
    %3521 = vmatpush1.bf16.msra.mxu0 0
    %3522 = vmatprep.subr.bf16.mxu0 0
    %3523 = vmatpush1.bf16.msra.mxu0 0
    %3524 = vmatprep.subr.bf16.mxu0 0
    %3525 = vmatpush1.bf16.msra.mxu0 0
    %3526 = vmatprep.subr.bf16.mxu0 0
    %3527 = vmatpush1.bf16.msra.mxu0 0
    %3528 = vmatprep.subr.bf16.mxu0 0
    %3529 = vmatpush1.bf16.msra.mxu0 0
    %3530 = vmatprep.subr.bf16.mxu0 0
    %3531 = vmatpush1.bf16.msra.mxu0 0
    %3532 = vmatprep.subr.bf16.mxu0 0
    %3533 = vmatpush1.bf16.msra.mxu0 0
    %3534 = vmatprep.subr.bf16.mxu0 0
    %3535 = vmatpush1.bf16.msra.mxu0 0
    %3536 = vmatprep.subr.bf16.mxu0 0
    %3537 = vmatpush1.bf16.msra.mxu0 0
    %3538 = vmatprep.subr.bf16.mxu0 0
    %3539 = vmatpush1.bf16.msra.mxu0 0
    %3540 = vmatprep.subr.bf16.mxu0 0
    %3541 = vmatpush1.bf16.msra.mxu0 0
    %3542 = vmatprep.subr.bf16.mxu0 0
    %3543 = vmatpush1.bf16.msra.mxu0 0
    %3544 = vmatprep.mubr.bf16.mxu0 0
    %3545 = vmatmul.mubr.bf16.gmra.mrb[0].mxu0 %v3507
    %v3546 = vpop.f32.mrb[0].mxu0
    %v3547 = vadd.f32 0.0, %v3546
    %v3548 = vpop.f32.mrb[0].mxu0
    %v3549 = vpop.f32.mrb[0].mxu0
    %v3550 = vadd.f32 0.0, %v3549
    %v3551 = vpop.f32.mrb[0].mxu0
    %3552 = vmatprep.mubr.bf16.mxu0 0
    %3553 = vmatmul.mubr.bf16.gmra.mrb[0].mxu0 %v3510
    %v3554 = vpop.f32.mrb[0].mxu0
    %v3555 = vadd.f32 0.0, %v3554
    %v3556 = vpop.f32.mrb[0].mxu0
    %v3557 = vpop.f32.mrb[0].mxu0
    %v3558 = vadd.f32 0.0, %v3557
    %v3559 = vpop.f32.mrb[0].mxu0
    %3560 = vdwg.mxu0
    %v3561 = vpack.c.bf16 %v3550, %v3547
    %v3562 = vpack.c.bf16 %v3558, %v3555
    %v3563 = vlaneseq
    %v3564 = vshrl.u32 %v3563, 7
    %v3565 = vsub.s32 0, %v3564
    %v3566 = vrot.slane %v3316, %v3565
    %3567 = vmatprep.subr.bf16.mxu0 0
    %3568 = vmatpush1.bf16.msra.mxu0 %v3318
    %3569 = vmatprep.subr.bf16.mxu0 0
    %3570 = vmatpush1.bf16.msra.mxu0 %v3319
    %3571 = vmatprep.subr.bf16.mxu0 0
    %3572 = vmatpush1.bf16.msra.mxu0 %v3320
    %3573 = vmatprep.subr.bf16.mxu0 0
    %3574 = vmatpush1.bf16.msra.mxu0 %v3321
    %3575 = vmatprep.subr.bf16.mxu0 0
    %3576 = vmatpush1.bf16.msra.mxu0 %v3322
    %3577 = vmatprep.subr.bf16.mxu0 0
    %3578 = vmatpush1.bf16.msra.mxu0 %v3323
    %3579 = vmatprep.subr.bf16.mxu0 0
    %3580 = vmatpush1.bf16.msra.mxu0 %v3324
    %3581 = vmatprep.subr.bf16.mxu0 0
    %3582 = vmatpush1.bf16.msra.mxu0 %v3325
    %3583 = vmatprep.subr.bf16.mxu0 0
    %3584 = vmatpush1.bf16.msra.mxu0 %v3326
    %3585 = vmatprep.subr.bf16.mxu0 0
    %3586 = vmatpush1.bf16.msra.mxu0 %v3327
    %3587 = vmatprep.subr.bf16.mxu0 0
    %3588 = vmatpush1.bf16.msra.mxu0 %v3328
    %3589 = vmatprep.subr.bf16.mxu0 0
    %3590 = vmatpush1.bf16.msra.mxu0 %v3329
    %3591 = vmatprep.subr.bf16.mxu0 0
    %3592 = vmatpush1.bf16.msra.mxu0 %v3330
    %3593 = vmatprep.subr.bf16.mxu0 0
    %3594 = vmatpush1.bf16.msra.mxu0 %v3331
    %3595 = vmatprep.subr.bf16.mxu0 0
    %3596 = vmatpush1.bf16.msra.mxu0 %v3332
    %3597 = vmatprep.subr.bf16.mxu0 0
    %3598 = vmatpush1.bf16.msra.mxu0 %v3333
    %3599 = vmatprep.mubr.bf16.mxu0 %v3490
    %3600 = vmatmul.mubr.bf16.gmra.mrb[0].mxu0 %v3419
    %v3601 = vpop.f32.mrb[0].mxu0
    %v3602 = vadd.f32 %v3566, %v3601
    %v3603 = vpop.f32.mrb[0].mxu0
    %v3604 = vpop.f32.mrb[0].mxu0
    %v3605 = vadd.f32 %v3566, %v3604
    %v3606 = vpop.f32.mrb[0].mxu0
    %3607 = vmatprep.mubr.bf16.mxu0 %v3491
    %3608 = vmatmul.mubr.bf16.gmra.mrb[0].mxu0 %v3420
    %v3609 = vpop.f32.mrb[0].mxu0
    %v3610 = vadd.f32 %v3566, %v3609
    %v3611 = vpop.f32.mrb[0].mxu0
    %v3612 = vpop.f32.mrb[0].mxu0
    %v3613 = vadd.f32 %v3566, %v3612
    %v3614 = vpop.f32.mrb[0].mxu0
    %3615 = vdwg.mxu0
    %3616 = vmatprep.subr.bf16.mxu0 0
    %3617 = vmatpush1.bf16.msra.mxu0 %v3334
    %3618 = vmatprep.subr.bf16.mxu0 0
    %3619 = vmatpush1.bf16.msra.mxu0 %v3335
    %3620 = vmatprep.subr.bf16.mxu0 0
    %3621 = vmatpush1.bf16.msra.mxu0 %v3336
    %3622 = vmatprep.subr.bf16.mxu0 0
    %3623 = vmatpush1.bf16.msra.mxu0 %v3337
    %3624 = vmatprep.subr.bf16.mxu0 0
    %3625 = vmatpush1.bf16.msra.mxu0 %v3338
    %3626 = vmatprep.subr.bf16.mxu0 0
    %3627 = vmatpush1.bf16.msra.mxu0 %v3339
    %3628 = vmatprep.subr.bf16.mxu0 0
    %3629 = vmatpush1.bf16.msra.mxu0 %v3340
    %3630 = vmatprep.subr.bf16.mxu0 0
    %3631 = vmatpush1.bf16.msra.mxu0 %v3341
    %3632 = vmatprep.subr.bf16.mxu0 0
    %3633 = vmatpush1.bf16.msra.mxu0 %v3342
    %3634 = vmatprep.subr.bf16.mxu0 0
    %3635 = vmatpush1.bf16.msra.mxu0 %v3343
    %3636 = vmatprep.subr.bf16.mxu0 0
    %3637 = vmatpush1.bf16.msra.mxu0 %v3344
    %3638 = vmatprep.subr.bf16.mxu0 0
    %3639 = vmatpush1.bf16.msra.mxu0 %v3345
    %3640 = vmatprep.subr.bf16.mxu0 0
    %3641 = vmatpush1.bf16.msra.mxu0 %v3346
    %3642 = vmatprep.subr.bf16.mxu0 0
    %3643 = vmatpush1.bf16.msra.mxu0 %v3347
    %3644 = vmatprep.subr.bf16.mxu0 0
    %3645 = vmatpush1.bf16.msra.mxu0 %v3348
    %3646 = vmatprep.subr.bf16.mxu0 0
    %3647 = vmatpush1.bf16.msra.mxu0 %v3349
    %3648 = vmatprep.mubr.bf16.mxu0 %v3314
    %3649 = vmatmul.mubr.bf16.gmra.mrb[0].mxu0 %v3561
    %v3650 = vpop.f32.mrb[0].mxu0
    %v3651 = vadd.f32 %v3602, %v3650
    %v3652 = vpop.f32.mrb[0].mxu0
    %v3653 = vpop.f32.mrb[0].mxu0
    %v3654 = vadd.f32 %v3605, %v3653
    %v3655 = vpop.f32.mrb[0].mxu0
    %3656 = vmatprep.mubr.bf16.mxu0 %v3315
    %3657 = vmatmul.mubr.bf16.gmra.mrb[0].mxu0 %v3562
    %v3658 = vpop.f32.mrb[0].mxu0
    %v3659 = vadd.f32 %v3610, %v3658
    %v3660 = vpop.f32.mrb[0].mxu0
    %v3661 = vpop.f32.mrb[0].mxu0
    %v3662 = vadd.f32 %v3613, %v3661
    %v3663 = vpop.f32.mrb[0].mxu0
    %3664 = vdwg.mxu0
    %v3665 = vmax.f32 %v3651, 0.0
    %v3666 = vmax.f32 %v3654, 0.0
    %v3667 = vmax.f32 %v3659, 0.0
    %v3668 = vmax.f32 %v3662, 0.0
    %v3669 = vpack.c.bf16 %v3666, %v3665
    %v3670 = vpack.c.bf16 %v3668, %v3667
    %v3671 = vld [vmem:[#allocation2 + $0x800] sm:$0xff]
    %v3672 = vld [vmem:[#allocation2 + $0x808] sm:$0xff]
    %v3673 = vld [vmem:[#allocation2 + $0x810] sm:$0xff]
    %v3674 = vld [vmem:[#allocation2 + $0x818] sm:$0xff]
    %v3675 = vld [vmem:[#allocation2 + $0x820] sm:$0xff]
    %v3676 = vld [vmem:[#allocation2 + $0x828] sm:$0xff]
    %v3677 = vld [vmem:[#allocation2 + $0x830] sm:$0xff]
    %v3678 = vld [vmem:[#allocation2 + $0x838] sm:$0xff]
    %v3679 = vld [vmem:[#allocation2 + $0x840] sm:$0xff]
    %v3680 = vld [vmem:[#allocation2 + $0x848] sm:$0xff]
    %v3681 = vld [vmem:[#allocation2 + $0x850] sm:$0xff]
    %v3682 = vld [vmem:[#allocation2 + $0x858] sm:$0xff]
    %v3683 = vld [vmem:[#allocation2 + $0x860] sm:$0xff]
    %v3684 = vld [vmem:[#allocation2 + $0x868] sm:$0xff]
    %v3685 = vld [vmem:[#allocation2 + $0x870] sm:$0xff]
    %v3686 = vld [vmem:[#allocation2 + $0x878] sm:$0xff]
    %v3687 = vld [vmem:[#allocation2 + $0x880] sm:$0xff]
    %v3688 = vld [vmem:[#allocation2 + $0x888] sm:$0xff]
    %v3689 = vld [vmem:[#allocation2 + $0x890] sm:$0xff]
    %v3690 = vld [vmem:[#allocation2 + $0x898] sm:$0xff]
    %v3691 = vld [vmem:[#allocation2 + $0x8a0] sm:$0xff]
    %v3692 = vld [vmem:[#allocation2 + $0x8a8] sm:$0xff]
    %v3693 = vld [vmem:[#allocation2 + $0x8b0] sm:$0xff]
    %v3694 = vld [vmem:[#allocation2 + $0x8b8] sm:$0xff]
    %v3695 = vld [vmem:[#allocation2 + $0x8c0] sm:$0xff]
    %v3696 = vld [vmem:[#allocation2 + $0x8c8] sm:$0xff]
    %v3697 = vld [vmem:[#allocation2 + $0x8d0] sm:$0xff]
    %v3698 = vld [vmem:[#allocation2 + $0x8d8] sm:$0xff]
    %v3699 = vld [vmem:[#allocation2 + $0x8e0] sm:$0xff]
    %v3700 = vld [vmem:[#allocation2 + $0x8e8] sm:$0xff]
    %v3701 = vld [vmem:[#allocation2 + $0x8f0] sm:$0xff]
    %v3702 = vld [vmem:[#allocation2 + $0x8f8] sm:$0xff]
    %3703 = vmatprep.subr.bf16.mxu0 0
    %3704 = vmatpush1.bf16.msra.mxu0 %v3669
    %3705 = vmatprep.subr.bf16.mxu0 0
    %3706 = vmatpush1.bf16.msra.mxu0 %v3670
    %3707 = vmatprep.subr.bf16.mxu0 0
    %3708 = vmatpush1.bf16.msra.mxu0 0
    %3709 = vmatprep.subr.bf16.mxu0 0
    %3710 = vmatpush1.bf16.msra.mxu0 0
    %3711 = vmatprep.subr.bf16.mxu0 0
    %3712 = vmatpush1.bf16.msra.mxu0 0
    %3713 = vmatprep.subr.bf16.mxu0 0
    %3714 = vmatpush1.bf16.msra.mxu0 0
    %3715 = vmatprep.subr.bf16.mxu0 0
    %3716 = vmatpush1.bf16.msra.mxu0 0
    %3717 = vmatprep.subr.bf16.mxu0 0
    %3718 = vmatpush1.bf16.msra.mxu0 0
    %3719 = vmatprep.subr.bf16.mxu0 0
    %3720 = vmatpush1.bf16.msra.mxu0 0
    %3721 = vmatprep.subr.bf16.mxu0 0
    %3722 = vmatpush1.bf16.msra.mxu0 0
    %3723 = vmatprep.subr.bf16.mxu0 0
    %3724 = vmatpush1.bf16.msra.mxu0 0
    %3725 = vmatprep.subr.bf16.mxu0 0
    %3726 = vmatpush1.bf16.msra.mxu0 0
    %3727 = vmatprep.subr.bf16.mxu0 0
    %3728 = vmatpush1.bf16.msra.mxu0 0
    %3729 = vmatprep.subr.bf16.mxu0 0
    %3730 = vmatpush1.bf16.msra.mxu0 0
    %3731 = vmatprep.subr.bf16.mxu0 0
    %3732 = vmatpush1.bf16.msra.mxu0 0
    %3733 = vmatprep.subr.bf16.mxu0 0
    %3734 = vmatpush1.bf16.msra.mxu0 0
    %3735 = vmatprep.mubr.bf16.mxu0 0
    %3736 = vmatmul.mubr.bf16.gmra.mrb[0].mxu0 %v3365
    %v3737 = vpop.f32.mrb[0].mxu0
    %v3738 = vadd.f32 0.0, %v3737
    %v3739 = vpop.f32.mrb[0].mxu0
    %v3740 = vpop.f32.mrb[0].mxu0
    %v3741 = vadd.f32 0.0, %v3740
    %v3742 = vpop.f32.mrb[0].mxu0
    %3743 = vmatprep.mubr.bf16.mxu0 0
    %3744 = vmatmul.mubr.bf16.gmra.mrb[0].mxu0 %v3368
    %v3745 = vpop.f32.mrb[0].mxu0
    %v3746 = vadd.f32 0.0, %v3745
    %v3747 = vpop.f32.mrb[0].mxu0
    %v3748 = vpop.f32.mrb[0].mxu0
    %v3749 = vadd.f32 0.0, %v3748
    %v3750 = vpop.f32.mrb[0].mxu0
    %3751 = vdwg.mxu0
    %v3752 = vpack.c.bf16 %v3741, %v3738
    %v3753 = vpack.c.bf16 %v3749, %v3746
    %3754 = vmatprep.subr.bf16.mxu0 0
    %3755 = vmatpush1.bf16.msra.mxu0 %v3669
    %3756 = vmatprep.subr.bf16.mxu0 0
    %3757 = vmatpush1.bf16.msra.mxu0 %v3670
    %3758 = vmatprep.subr.bf16.mxu0 0
    %3759 = vmatpush1.bf16.msra.mxu0 0
    %3760 = vmatprep.subr.bf16.mxu0 0
    %3761 = vmatpush1.bf16.msra.mxu0 0
    %3762 = vmatprep.subr.bf16.mxu0 0
    %3763 = vmatpush1.bf16.msra.mxu0 0
    %3764 = vmatprep.subr.bf16.mxu0 0
    %3765 = vmatpush1.bf16.msra.mxu0 0
    %3766 = vmatprep.subr.bf16.mxu0 0
    %3767 = vmatpush1.bf16.msra.mxu0 0
    %3768 = vmatprep.subr.bf16.mxu0 0
    %3769 = vmatpush1.bf16.msra.mxu0 0
    %3770 = vmatprep.subr.bf16.mxu0 0
    %3771 = vmatpush1.bf16.msra.mxu0 0
    %3772 = vmatprep.subr.bf16.mxu0 0
    %3773 = vmatpush1.bf16.msra.mxu0 0
    %3774 = vmatprep.subr.bf16.mxu0 0
    %3775 = vmatpush1.bf16.msra.mxu0 0
    %3776 = vmatprep.subr.bf16.mxu0 0
    %3777 = vmatpush1.bf16.msra.mxu0 0
    %3778 = vmatprep.subr.bf16.mxu0 0
    %3779 = vmatpush1.bf16.msra.mxu0 0
    %3780 = vmatprep.subr.bf16.mxu0 0
    %3781 = vmatpush1.bf16.msra.mxu0 0
    %3782 = vmatprep.subr.bf16.mxu0 0
    %3783 = vmatpush1.bf16.msra.mxu0 0
    %3784 = vmatprep.subr.bf16.mxu0 0
    %3785 = vmatpush1.bf16.msra.mxu0 0
    %3786 = vmatprep.mubr.bf16.mxu0 0
    %3787 = vmatmul.mubr.bf16.gmra.mrb[0].mxu0 %v3436
    %v3788 = vpop.f32.mrb[0].mxu0
    %v3789 = vadd.f32 0.0, %v3788
    %v3790 = vpop.f32.mrb[0].mxu0
    %v3791 = vpop.f32.mrb[0].mxu0
    %v3792 = vadd.f32 0.0, %v3791
    %v3793 = vpop.f32.mrb[0].mxu0
    %3794 = vmatprep.mubr.bf16.mxu0 0
    %3795 = vmatmul.mubr.bf16.gmra.mrb[0].mxu0 %v3439
    %v3796 = vpop.f32.mrb[0].mxu0
    %v3797 = vadd.f32 0.0, %v3796
    %v3798 = vpop.f32.mrb[0].mxu0
    %v3799 = vpop.f32.mrb[0].mxu0
    %v3800 = vadd.f32 0.0, %v3799
    %v3801 = vpop.f32.mrb[0].mxu0
    %3802 = vdwg.mxu0
    %v3803 = vpack.c.bf16 %v3792, %v3789
    %v3804 = vpack.c.bf16 %v3800, %v3797
    %3805 = vmatprep.subr.bf16.mxu0 0
    %3806 = vmatpush1.bf16.msra.mxu0 %v3669
    %3807 = vmatprep.subr.bf16.mxu0 0
    %3808 = vmatpush1.bf16.msra.mxu0 %v3670
    %3809 = vmatprep.subr.bf16.mxu0 0
    %3810 = vmatpush1.bf16.msra.mxu0 0
    %3811 = vmatprep.subr.bf16.mxu0 0
    %3812 = vmatpush1.bf16.msra.mxu0 0
    %3813 = vmatprep.subr.bf16.mxu0 0
    %3814 = vmatpush1.bf16.msra.mxu0 0
    %3815 = vmatprep.subr.bf16.mxu0 0
    %3816 = vmatpush1.bf16.msra.mxu0 0
    %3817 = vmatprep.subr.bf16.mxu0 0
    %3818 = vmatpush1.bf16.msra.mxu0 0
    %3819 = vmatprep.subr.bf16.mxu0 0
    %3820 = vmatpush1.bf16.msra.mxu0 0
    %3821 = vmatprep.subr.bf16.mxu0 0
    %3822 = vmatpush1.bf16.msra.mxu0 0
    %3823 = vmatprep.subr.bf16.mxu0 0
    %3824 = vmatpush1.bf16.msra.mxu0 0
    %3825 = vmatprep.subr.bf16.mxu0 0
    %3826 = vmatpush1.bf16.msra.mxu0 0
    %3827 = vmatprep.subr.bf16.mxu0 0
    %3828 = vmatpush1.bf16.msra.mxu0 0
    %3829 = vmatprep.subr.bf16.mxu0 0
    %3830 = vmatpush1.bf16.msra.mxu0 0
    %3831 = vmatprep.subr.bf16.mxu0 0
    %3832 = vmatpush1.bf16.msra.mxu0 0
    %3833 = vmatprep.subr.bf16.mxu0 0
    %3834 = vmatpush1.bf16.msra.mxu0 0
    %3835 = vmatprep.subr.bf16.mxu0 0
    %3836 = vmatpush1.bf16.msra.mxu0 0
    %3837 = vmatprep.mubr.bf16.mxu0 0
    %3838 = vmatmul.mubr.bf16.gmra.mrb[0].mxu0 %v3507
    %v3839 = vpop.f32.mrb[0].mxu0
    %v3840 = vadd.f32 0.0, %v3839
    %v3841 = vpop.f32.mrb[0].mxu0
    %v3842 = vpop.f32.mrb[0].mxu0
    %v3843 = vadd.f32 0.0, %v3842
    %v3844 = vpop.f32.mrb[0].mxu0
    %3845 = vmatprep.mubr.bf16.mxu0 0
    %3846 = vmatmul.mubr.bf16.gmra.mrb[0].mxu0 %v3510
    %v3847 = vpop.f32.mrb[0].mxu0
    %v3848 = vadd.f32 0.0, %v3847
    %v3849 = vpop.f32.mrb[0].mxu0
    %v3850 = vpop.f32.mrb[0].mxu0
    %v3851 = vadd.f32 0.0, %v3850
    %v3852 = vpop.f32.mrb[0].mxu0
    %3853 = vdwg.mxu0
    %v3854 = vpack.c.bf16 %v3843, %v3840
    %v3855 = vpack.c.bf16 %v3851, %v3848
    %v3856 = vlaneseq
    %v3857 = vshrl.u32 %v3856, 7
    %v3858 = vsub.s32 0, %v3857
    %v3859 = vrot.slane %v3317, %v3858
    %3860 = vmatprep.subr.bf16.mxu0 0
    %3861 = vmatpush1.bf16.msra.mxu0 %v3671
    %3862 = vmatprep.subr.bf16.mxu0 0
    %3863 = vmatpush1.bf16.msra.mxu0 %v3672
    %3864 = vmatprep.subr.bf16.mxu0 0
    %3865 = vmatpush1.bf16.msra.mxu0 %v3673
    %3866 = vmatprep.subr.bf16.mxu0 0
    %3867 = vmatpush1.bf16.msra.mxu0 %v3674
    %3868 = vmatprep.subr.bf16.mxu0 0
    %3869 = vmatpush1.bf16.msra.mxu0 %v3675
    %3870 = vmatprep.subr.bf16.mxu0 0
    %3871 = vmatpush1.bf16.msra.mxu0 %v3676
    %3872 = vmatprep.subr.bf16.mxu0 0
    %3873 = vmatpush1.bf16.msra.mxu0 %v3677
    %3874 = vmatprep.subr.bf16.mxu0 0
    %3875 = vmatpush1.bf16.msra.mxu0 %v3678
    %3876 = vmatprep.subr.bf16.mxu0 0
    %3877 = vmatpush1.bf16.msra.mxu0 %v3679
    %3878 = vmatprep.subr.bf16.mxu0 0
    %3879 = vmatpush1.bf16.msra.mxu0 %v3680
    %3880 = vmatprep.subr.bf16.mxu0 0
    %3881 = vmatpush1.bf16.msra.mxu0 %v3681
    %3882 = vmatprep.subr.bf16.mxu0 0
    %3883 = vmatpush1.bf16.msra.mxu0 %v3682
    %3884 = vmatprep.subr.bf16.mxu0 0
    %3885 = vmatpush1.bf16.msra.mxu0 %v3683
    %3886 = vmatprep.subr.bf16.mxu0 0
    %3887 = vmatpush1.bf16.msra.mxu0 %v3684
    %3888 = vmatprep.subr.bf16.mxu0 0
    %3889 = vmatpush1.bf16.msra.mxu0 %v3685
    %3890 = vmatprep.subr.bf16.mxu0 0
    %3891 = vmatpush1.bf16.msra.mxu0 %v3686
    %3892 = vmatprep.mubr.bf16.mxu0 %v3803
    %3893 = vmatmul.mubr.bf16.gmra.mrb[0].mxu0 %v3752
    %v3894 = vpop.f32.mrb[0].mxu0
    %v3895 = vadd.f32 %v3859, %v3894
    %v3896 = vpop.f32.mrb[0].mxu0
    %v3897 = vpop.f32.mrb[0].mxu0
    %v3898 = vadd.f32 %v3859, %v3897
    %v3899 = vpop.f32.mrb[0].mxu0
    %3900 = vmatprep.mubr.bf16.mxu0 %v3804
    %3901 = vmatmul.mubr.bf16.gmra.mrb[0].mxu0 %v3753
    %v3902 = vpop.f32.mrb[0].mxu0
    %v3903 = vadd.f32 %v3859, %v3902
    %v3904 = vpop.f32.mrb[0].mxu0
    %v3905 = vpop.f32.mrb[0].mxu0
    %v3906 = vadd.f32 %v3859, %v3905
    %v3907 = vpop.f32.mrb[0].mxu0
    %3908 = vdwg.mxu0
    %3909 = vmatprep.subr.bf16.mxu0 0
    %3910 = vmatpush1.bf16.msra.mxu0 %v3687
    %3911 = vmatprep.subr.bf16.mxu0 0
    %3912 = vmatpush1.bf16.msra.mxu0 %v3688
    %3913 = vmatprep.subr.bf16.mxu0 0
    %3914 = vmatpush1.bf16.msra.mxu0 %v3689
    %3915 = vmatprep.subr.bf16.mxu0 0
    %3916 = vmatpush1.bf16.msra.mxu0 %v3690
    %3917 = vmatprep.subr.bf16.mxu0 0
    %3918 = vmatpush1.bf16.msra.mxu0 %v3691
    %3919 = vmatprep.subr.bf16.mxu0 0
    %3920 = vmatpush1.bf16.msra.mxu0 %v3692
    %3921 = vmatprep.subr.bf16.mxu0 0
    %3922 = vmatpush1.bf16.msra.mxu0 %v3693
    %3923 = vmatprep.subr.bf16.mxu0 0
    %3924 = vmatpush1.bf16.msra.mxu0 %v3694
    %3925 = vmatprep.subr.bf16.mxu0 0
    %3926 = vmatpush1.bf16.msra.mxu0 %v3695
    %3927 = vmatprep.subr.bf16.mxu0 0
    %3928 = vmatpush1.bf16.msra.mxu0 %v3696
    %3929 = vmatprep.subr.bf16.mxu0 0
    %3930 = vmatpush1.bf16.msra.mxu0 %v3697
    %3931 = vmatprep.subr.bf16.mxu0 0
    %3932 = vmatpush1.bf16.msra.mxu0 %v3698
    %3933 = vmatprep.subr.bf16.mxu0 0
    %3934 = vmatpush1.bf16.msra.mxu0 %v3699
    %3935 = vmatprep.subr.bf16.mxu0 0
    %3936 = vmatpush1.bf16.msra.mxu0 %v3700
    %3937 = vmatprep.subr.bf16.mxu0 0
    %3938 = vmatpush1.bf16.msra.mxu0 %v3701
    %3939 = vmatprep.subr.bf16.mxu0 0
    %3940 = vmatpush1.bf16.msra.mxu0 %v3702
    %3941 = vmatprep.mubr.bf16.mxu0 %v3669
    %3942 = vmatmul.mubr.bf16.gmra.mrb[0].mxu0 %v3854
    %v3943 = vpop.f32.mrb[0].mxu0
    %v3944 = vadd.f32 %v3895, %v3943
    %v3945 = vpop.f32.mrb[0].mxu0
    %v3946 = vpop.f32.mrb[0].mxu0
    %v3947 = vadd.f32 %v3898, %v3946
    %v3948 = vpop.f32.mrb[0].mxu0
    %3949 = vmatprep.mubr.bf16.mxu0 %v3670
    %3950 = vmatmul.mubr.bf16.gmra.mrb[0].mxu0 %v3855
    %v3951 = vpop.f32.mrb[0].mxu0
    %v3952 = vadd.f32 %v3903, %v3951
    %v3953 = vpop.f32.mrb[0].mxu0
    %v3954 = vpop.f32.mrb[0].mxu0
    %v3955 = vadd.f32 %v3906, %v3954
    %v3956 = vpop.f32.mrb[0].mxu0
    %3957 = vdwg.mxu0
    %v3958 = vmax.f32 %v3944, 0.0
    %v3959 = vmax.f32 %v3947, 0.0
    %v3960 = vmax.f32 %v3952, 0.0
    %v3961 = vmax.f32 %v3955, 0.0
    %v3962 = vadd.f32 %v3958, %v3306
    %v3963 = vadd.f32 %v3959, %v3307
    %v3964 = vadd.f32 %v3960, %v3308
    %v3965 = vadd.f32 %v3961, %v3309
    %v3966 = vmax.f32 %v3962, 0.0
    %v3967 = vmax.f32 %v3963, 0.0
    %v3968 = vmax.f32 %v3964, 0.0
    %v3969 = vmax.f32 %v3965, 0.0
    %s3970 = smul.u32 4, 64
    %s3971 = smul.u32 %s3970, 1
    %s3972 = sshll.u32 %s3971, 4
    %3973 = dma.done %s166, %s3972
    %v3974 = vpack.c.bf16 %v3967, %v3966
    %v3975 = vpack.c.bf16 %v3969, %v3968
    %v3976 = vld [vmem:[#allocation12 + $0x6] sm:$0x1]
    %v3977 = vld [vmem:[#allocation12 + $0x7] sm:$0x1]
    %v3978 = vld [vmem:[#allocation2 + $0x900] sm:$0xff]
    %v3979 = vld [vmem:[#allocation2 + $0x908] sm:$0xff]
    %v3980 = vld [vmem:[#allocation2 + $0x910] sm:$0xff]
    %v3981 = vld [vmem:[#allocation2 + $0x918] sm:$0xff]
    %v3982 = vld [vmem:[#allocation2 + $0x920] sm:$0xff]
    %v3983 = vld [vmem:[#allocation2 + $0x928] sm:$0xff]
    %v3984 = vld [vmem:[#allocation2 + $0x930] sm:$0xff]
    %v3985 = vld [vmem:[#allocation2 + $0x938] sm:$0xff]
    %v3986 = vld [vmem:[#allocation2 + $0x940] sm:$0xff]
    %v3987 = vld [vmem:[#allocation2 + $0x948] sm:$0xff]
    %v3988 = vld [vmem:[#allocation2 + $0x950] sm:$0xff]
    %v3989 = vld [vmem:[#allocation2 + $0x958] sm:$0xff]
    %v3990 = vld [vmem:[#allocation2 + $0x960] sm:$0xff]
    %v3991 = vld [vmem:[#allocation2 + $0x968] sm:$0xff]
    %v3992 = vld [vmem:[#allocation2 + $0x970] sm:$0xff]
    %v3993 = vld [vmem:[#allocation2 + $0x978] sm:$0xff]
    %v3994 = vld [vmem:[%s2245] sm:$0xf]
    %v3995 = vld [vmem:[%s2245 + $0x4] sm:$0xf]
    %v3996 = vld [vmem:[%s2245 + $0x8] sm:$0xf]
    %v3997 = vld [vmem:[%s2245 + $0xc] sm:$0xf]
    %v4002 = vunpack.c.l.b16 %v3994
    %v4003 = vunpack.c.l.b16 %v3995
    %v4004 = vunpack.c.l.b16 %v3996
    %v4005 = vunpack.c.l.b16 %v3997
    %v4006 = vpack.c.b16 %v4003, %v4002
    %v4007 = vpack.c.b16 %v4005, %v4004
    %v4009 = vsel %vm842, %v4006, 0
    %v4012 = vsel %vm842, %v4007, 0
    %4014 = vmatprep.subr.bf16.mxu0 0
    %4015 = vmatpush1.bf16.msra.mxu0 %v3974
    %4016 = vmatprep.subr.bf16.mxu0 0
    %4017 = vmatpush1.bf16.msra.mxu0 %v3975
    %4018 = vmatprep.subr.bf16.mxu0 0
    %4019 = vmatpush1.bf16.msra.mxu0 0
    %4020 = vmatprep.subr.bf16.mxu0 0
    %4021 = vmatpush1.bf16.msra.mxu0 0
    %4022 = vmatprep.subr.bf16.mxu0 0
    %4023 = vmatpush1.bf16.msra.mxu0 0
    %4024 = vmatprep.subr.bf16.mxu0 0
    %4025 = vmatpush1.bf16.msra.mxu0 0
    %4026 = vmatprep.subr.bf16.mxu0 0
    %4027 = vmatpush1.bf16.msra.mxu0 0
    %4028 = vmatprep.subr.bf16.mxu0 0
    %4029 = vmatpush1.bf16.msra.mxu0 0
    %4030 = vmatprep.subr.bf16.mxu0 0
    %4031 = vmatpush1.bf16.msra.mxu0 0
    %4032 = vmatprep.subr.bf16.mxu0 0
    %4033 = vmatpush1.bf16.msra.mxu0 0
    %4034 = vmatprep.subr.bf16.mxu0 0
    %4035 = vmatpush1.bf16.msra.mxu0 0
    %4036 = vmatprep.subr.bf16.mxu0 0
    %4037 = vmatpush1.bf16.msra.mxu0 0
    %4038 = vmatprep.subr.bf16.mxu0 0
    %4039 = vmatpush1.bf16.msra.mxu0 0
    %4040 = vmatprep.subr.bf16.mxu0 0
    %4041 = vmatpush1.bf16.msra.mxu0 0
    %4042 = vmatprep.subr.bf16.mxu0 0
    %4043 = vmatpush1.bf16.msra.mxu0 0
    %4044 = vmatprep.subr.bf16.mxu0 0
    %4045 = vmatpush1.bf16.msra.mxu0 0
    %4046 = vmatprep.mubr.bf16.mxu0 0
    %4047 = vmatmul.mubr.bf16.gmra.mrb[0].mxu0 %v4009
    %v4048 = vpop.f32.mrb[0].mxu0
    %v4049 = vadd.f32 0.0, %v4048
    %v4050 = vpop.f32.mrb[0].mxu0
    %v4051 = vpop.f32.mrb[0].mxu0
    %v4052 = vadd.f32 0.0, %v4051
    %v4053 = vpop.f32.mrb[0].mxu0
    %4054 = vmatprep.mubr.bf16.mxu0 0
    %4055 = vmatmul.mubr.bf16.gmra.mrb[0].mxu0 %v4012
    %v4056 = vpop.f32.mrb[0].mxu0
    %v4057 = vadd.f32 0.0, %v4056
    %v4058 = vpop.f32.mrb[0].mxu0
    %v4059 = vpop.f32.mrb[0].mxu0
    %v4060 = vadd.f32 0.0, %v4059
    %v4061 = vpop.f32.mrb[0].mxu0
    %4062 = vdwg.mxu0
    %v4063 = vpack.c.bf16 %v4052, %v4049
    %v4064 = vpack.c.bf16 %v4060, %v4057
    %v4065 = vlaneseq
    %v4066 = vshrl.u32 %v4065, 7
    %v4067 = vsub.s32 0, %v4066
    %v4068 = vrot.slane %v3976, %v4067
    %4069 = vmatprep.subr.bf16.mxu0 0
    %4070 = vmatpush1.bf16.msra.mxu0 %v3978
    %4071 = vmatprep.subr.bf16.mxu0 0
    %4072 = vmatpush1.bf16.msra.mxu0 %v3979
    %4073 = vmatprep.subr.bf16.mxu0 0
    %4074 = vmatpush1.bf16.msra.mxu0 %v3980
    %4075 = vmatprep.subr.bf16.mxu0 0
    %4076 = vmatpush1.bf16.msra.mxu0 %v3981
    %4077 = vmatprep.subr.bf16.mxu0 0
    %4078 = vmatpush1.bf16.msra.mxu0 %v3982
    %4079 = vmatprep.subr.bf16.mxu0 0
    %4080 = vmatpush1.bf16.msra.mxu0 %v3983
    %4081 = vmatprep.subr.bf16.mxu0 0
    %4082 = vmatpush1.bf16.msra.mxu0 %v3984
    %4083 = vmatprep.subr.bf16.mxu0 0
    %4084 = vmatpush1.bf16.msra.mxu0 %v3985
    %4085 = vmatprep.subr.bf16.mxu0 0
    %4086 = vmatpush1.bf16.msra.mxu0 %v3986
    %4087 = vmatprep.subr.bf16.mxu0 0
    %4088 = vmatpush1.bf16.msra.mxu0 %v3987
    %4089 = vmatprep.subr.bf16.mxu0 0
    %4090 = vmatpush1.bf16.msra.mxu0 %v3988
    %4091 = vmatprep.subr.bf16.mxu0 0
    %4092 = vmatpush1.bf16.msra.mxu0 %v3989
    %4093 = vmatprep.subr.bf16.mxu0 0
    %4094 = vmatpush1.bf16.msra.mxu0 %v3990
    %4095 = vmatprep.subr.bf16.mxu0 0
    %4096 = vmatpush1.bf16.msra.mxu0 %v3991
    %4097 = vmatprep.subr.bf16.mxu0 0
    %4098 = vmatpush1.bf16.msra.mxu0 %v3992
    %4099 = vmatprep.subr.bf16.mxu0 0
    %4100 = vmatpush1.bf16.msra.mxu0 %v3993
    %4101 = vmatprep.mubr.bf16.mxu0 %v3974
    %4102 = vmatmul.mubr.bf16.gmra.mrb[0].mxu0 %v4063
    %v4103 = vpop.f32.mrb[0].mxu0
    %v4104 = vadd.f32 %v4068, %v4103
    %v4105 = vpop.f32.mrb[0].mxu0
    %v4106 = vpop.f32.mrb[0].mxu0
    %v4107 = vadd.f32 %v4068, %v4106
    %v4108 = vpop.f32.mrb[0].mxu0
    %4109 = vmatprep.mubr.bf16.mxu0 %v3975
    %4110 = vmatmul.mubr.bf16.gmra.mrb[0].mxu0 %v4064
    %v4111 = vpop.f32.mrb[0].mxu0
    %v4112 = vadd.f32 %v4068, %v4111
    %v4113 = vpop.f32.mrb[0].mxu0
    %v4114 = vpop.f32.mrb[0].mxu0
    %v4115 = vadd.f32 %v4068, %v4114
    %v4116 = vpop.f32.mrb[0].mxu0
    %4117 = vdwg.mxu0
    %v4118 = vmax.f32 %v4104, 0.0
    %v4119 = vmax.f32 %v4107, 0.0
    %v4120 = vmax.f32 %v4112, 0.0
    %v4121 = vmax.f32 %v4115, 0.0
    %v4122 = vpack.c.bf16 %v4119, %v4118
    %v4123 = vpack.c.bf16 %v4121, %v4120
    %v4124 = vld [vmem:[#allocation2 + $0x980] sm:$0xff]
    %v4125 = vld [vmem:[#allocation2 + $0x988] sm:$0xff]
    %v4126 = vld [vmem:[#allocation2 + $0x990] sm:$0xff]
    %v4127 = vld [vmem:[#allocation2 + $0x998] sm:$0xff]
    %v4128 = vld [vmem:[#allocation2 + $0x9a0] sm:$0xff]
    %v4129 = vld [vmem:[#allocation2 + $0x9a8] sm:$0xff]
    %v4130 = vld [vmem:[#allocation2 + $0x9b0] sm:$0xff]
    %v4131 = vld [vmem:[#allocation2 + $0x9b8] sm:$0xff]
    %v4132 = vld [vmem:[#allocation2 + $0x9c0] sm:$0xff]
    %v4133 = vld [vmem:[#allocation2 + $0x9c8] sm:$0xff]
    %v4134 = vld [vmem:[#allocation2 + $0x9d0] sm:$0xff]
    %v4135 = vld [vmem:[#allocation2 + $0x9d8] sm:$0xff]
    %v4136 = vld [vmem:[#allocation2 + $0x9e0] sm:$0xff]
    %v4137 = vld [vmem:[#allocation2 + $0x9e8] sm:$0xff]
    %v4138 = vld [vmem:[#allocation2 + $0x9f0] sm:$0xff]
    %v4139 = vld [vmem:[#allocation2 + $0x9f8] sm:$0xff]
    %4140 = vmatprep.subr.bf16.mxu0 0
    %4141 = vmatpush1.bf16.msra.mxu0 %v4122
    %4142 = vmatprep.subr.bf16.mxu0 0
    %4143 = vmatpush1.bf16.msra.mxu0 %v4123
    %4144 = vmatprep.subr.bf16.mxu0 0
    %4145 = vmatpush1.bf16.msra.mxu0 0
    %4146 = vmatprep.subr.bf16.mxu0 0
    %4147 = vmatpush1.bf16.msra.mxu0 0
    %4148 = vmatprep.subr.bf16.mxu0 0
    %4149 = vmatpush1.bf16.msra.mxu0 0
    %4150 = vmatprep.subr.bf16.mxu0 0
    %4151 = vmatpush1.bf16.msra.mxu0 0
    %4152 = vmatprep.subr.bf16.mxu0 0
    %4153 = vmatpush1.bf16.msra.mxu0 0
    %4154 = vmatprep.subr.bf16.mxu0 0
    %4155 = vmatpush1.bf16.msra.mxu0 0
    %4156 = vmatprep.subr.bf16.mxu0 0
    %4157 = vmatpush1.bf16.msra.mxu0 0
    %4158 = vmatprep.subr.bf16.mxu0 0
    %4159 = vmatpush1.bf16.msra.mxu0 0
    %4160 = vmatprep.subr.bf16.mxu0 0
    %4161 = vmatpush1.bf16.msra.mxu0 0
    %4162 = vmatprep.subr.bf16.mxu0 0
    %4163 = vmatpush1.bf16.msra.mxu0 0
    %4164 = vmatprep.subr.bf16.mxu0 0
    %4165 = vmatpush1.bf16.msra.mxu0 0
    %4166 = vmatprep.subr.bf16.mxu0 0
    %4167 = vmatpush1.bf16.msra.mxu0 0
    %4168 = vmatprep.subr.bf16.mxu0 0
    %4169 = vmatpush1.bf16.msra.mxu0 0
    %4170 = vmatprep.subr.bf16.mxu0 0
    %4171 = vmatpush1.bf16.msra.mxu0 0
    %4172 = vmatprep.mubr.bf16.mxu0 0
    %4173 = vmatmul.mubr.bf16.gmra.mrb[0].mxu0 %v4009
    %v4174 = vpop.f32.mrb[0].mxu0
    %v4175 = vadd.f32 0.0, %v4174
    %v4176 = vpop.f32.mrb[0].mxu0
    %v4177 = vpop.f32.mrb[0].mxu0
    %v4178 = vadd.f32 0.0, %v4177
    %v4179 = vpop.f32.mrb[0].mxu0
    %4180 = vmatprep.mubr.bf16.mxu0 0
    %4181 = vmatmul.mubr.bf16.gmra.mrb[0].mxu0 %v4012
    %v4182 = vpop.f32.mrb[0].mxu0
    %v4183 = vadd.f32 0.0, %v4182
    %v4184 = vpop.f32.mrb[0].mxu0
    %v4185 = vpop.f32.mrb[0].mxu0
    %v4186 = vadd.f32 0.0, %v4185
    %v4187 = vpop.f32.mrb[0].mxu0
    %4188 = vdwg.mxu0
    %v4189 = vpack.c.bf16 %v4178, %v4175
    %v4190 = vpack.c.bf16 %v4186, %v4183
    %v4191 = vlaneseq
    %v4192 = vshrl.u32 %v4191, 7
    %v4193 = vsub.s32 0, %v4192
    %v4194 = vrot.slane %v3977, %v4193
    %4195 = vmatprep.subr.bf16.mxu0 0
    %4196 = vmatpush1.bf16.msra.mxu0 %v4124
    %4197 = vmatprep.subr.bf16.mxu0 0
    %4198 = vmatpush1.bf16.msra.mxu0 %v4125
    %4199 = vmatprep.subr.bf16.mxu0 0
    %4200 = vmatpush1.bf16.msra.mxu0 %v4126
    %4201 = vmatprep.subr.bf16.mxu0 0
    %4202 = vmatpush1.bf16.msra.mxu0 %v4127
    %4203 = vmatprep.subr.bf16.mxu0 0
    %4204 = vmatpush1.bf16.msra.mxu0 %v4128
    %4205 = vmatprep.subr.bf16.mxu0 0
    %4206 = vmatpush1.bf16.msra.mxu0 %v4129
    %4207 = vmatprep.subr.bf16.mxu0 0
    %4208 = vmatpush1.bf16.msra.mxu0 %v4130
    %4209 = vmatprep.subr.bf16.mxu0 0
    %4210 = vmatpush1.bf16.msra.mxu0 %v4131
    %4211 = vmatprep.subr.bf16.mxu0 0
    %4212 = vmatpush1.bf16.msra.mxu0 %v4132
    %4213 = vmatprep.subr.bf16.mxu0 0
    %4214 = vmatpush1.bf16.msra.mxu0 %v4133
    %4215 = vmatprep.subr.bf16.mxu0 0
    %4216 = vmatpush1.bf16.msra.mxu0 %v4134
    %4217 = vmatprep.subr.bf16.mxu0 0
    %4218 = vmatpush1.bf16.msra.mxu0 %v4135
    %4219 = vmatprep.subr.bf16.mxu0 0
    %4220 = vmatpush1.bf16.msra.mxu0 %v4136
    %4221 = vmatprep.subr.bf16.mxu0 0
    %4222 = vmatpush1.bf16.msra.mxu0 %v4137
    %4223 = vmatprep.subr.bf16.mxu0 0
    %4224 = vmatpush1.bf16.msra.mxu0 %v4138
    %4225 = vmatprep.subr.bf16.mxu0 0
    %4226 = vmatpush1.bf16.msra.mxu0 %v4139
    %4227 = vmatprep.mubr.bf16.mxu0 %v4122
    %4228 = vmatmul.mubr.bf16.gmra.mrb[0].mxu0 %v4189
    %v4229 = vpop.f32.mrb[0].mxu0
    %v4230 = vadd.f32 %v4194, %v4229
    %v4231 = vpop.f32.mrb[0].mxu0
    %v4232 = vpop.f32.mrb[0].mxu0
    %v4233 = vadd.f32 %v4194, %v4232
    %v4234 = vpop.f32.mrb[0].mxu0
    %4235 = vmatprep.mubr.bf16.mxu0 %v4123
    %4236 = vmatmul.mubr.bf16.gmra.mrb[0].mxu0 %v4190
    %v4237 = vpop.f32.mrb[0].mxu0
    %v4238 = vadd.f32 %v4194, %v4237
    %v4239 = vpop.f32.mrb[0].mxu0
    %v4240 = vpop.f32.mrb[0].mxu0
    %v4241 = vadd.f32 %v4194, %v4240
    %v4242 = vpop.f32.mrb[0].mxu0
    %4243 = vdwg.mxu0
    %v4244 = vmax.f32 %v4230, 0.0
    %v4245 = vmax.f32 %v4233, 0.0
    %v4246 = vmax.f32 %v4238, 0.0
    %v4247 = vmax.f32 %v4241, 0.0
    %v4248 = vadd.f32 %v4244, %v3966
    %v4249 = vadd.f32 %v4245, %v3967
    %v4250 = vadd.f32 %v4246, %v3968
    %v4251 = vadd.f32 %v4247, %v3969
    %v4252 = vmax.f32 %v4248, 0.0
    %v4253 = vmax.f32 %v4249, 0.0
    %v4254 = vmax.f32 %v4250, 0.0
    %v4255 = vmax.f32 %v4251, 0.0
    %s4256 = smul.u32 4, 32
    %s4257 = smul.u32 %s4256, 1
    %s4258 = sshll.u32 %s4257, 4
    %4259 = dma.done %s180, %s4258
    %v4260 = vpack.c.bf16 %v4253, %v4252
    %v4261 = vpack.c.bf16 %v4255, %v4254
    %v4262 = vld [vmem:[#allocation12 + $0x8] sm:$0x1]
    %v4263 = vld [vmem:[#allocation12 + $0x9] sm:$0x1]
    %v4264 = vld [vmem:[#allocation2 + $0xa00] sm:$0xff]
    %v4265 = vld [vmem:[#allocation2 + $0xa08] sm:$0xff]
    %v4266 = vld [vmem:[#allocation2 + $0xa10] sm:$0xff]
    %v4267 = vld [vmem:[#allocation2 + $0xa18] sm:$0xff]
    %v4268 = vld [vmem:[#allocation2 + $0xa20] sm:$0xff]
    %v4269 = vld [vmem:[#allocation2 + $0xa28] sm:$0xff]
    %v4270 = vld [vmem:[#allocation2 + $0xa30] sm:$0xff]
    %v4271 = vld [vmem:[#allocation2 + $0xa38] sm:$0xff]
    %v4272 = vlaneseq
    %v4273 = vshrl.u32 %v4272, 7
    %v4274 = vsub.s32 0, %v4273
    %v4275 = vrot.slane %v4262, %v4274
    %4276 = vmatprep.subr.bf16.mxu0 0
    %4277 = vmatpush1.bf16.msra.mxu0 %v4264
    %4278 = vmatprep.subr.bf16.mxu0 0
    %4279 = vmatpush1.bf16.msra.mxu0 %v4265
    %4280 = vmatprep.subr.bf16.mxu0 0
    %4281 = vmatpush1.bf16.msra.mxu0 %v4266
    %4282 = vmatprep.subr.bf16.mxu0 0
    %4283 = vmatpush1.bf16.msra.mxu0 %v4267
    %4284 = vmatprep.subr.bf16.mxu0 0
    %4285 = vmatpush1.bf16.msra.mxu0 %v4268
    %4286 = vmatprep.subr.bf16.mxu0 0
    %4287 = vmatpush1.bf16.msra.mxu0 %v4269
    %4288 = vmatprep.subr.bf16.mxu0 0
    %4289 = vmatpush1.bf16.msra.mxu0 %v4270
    %4290 = vmatprep.subr.bf16.mxu0 0
    %4291 = vmatpush1.bf16.msra.mxu0 %v4271
    %4292 = vmatprep.subr.bf16.mxu0 0
    %4293 = vmatpush1.bf16.msra.mxu0 0
    %4294 = vmatprep.subr.bf16.mxu0 0
    %4295 = vmatpush1.bf16.msra.mxu0 0
    %4296 = vmatprep.subr.bf16.mxu0 0
    %4297 = vmatpush1.bf16.msra.mxu0 0
    %4298 = vmatprep.subr.bf16.mxu0 0
    %4299 = vmatpush1.bf16.msra.mxu0 0
    %4300 = vmatprep.subr.bf16.mxu0 0
    %4301 = vmatpush1.bf16.msra.mxu0 0
    %4302 = vmatprep.subr.bf16.mxu0 0
    %4303 = vmatpush1.bf16.msra.mxu0 0
    %4304 = vmatprep.subr.bf16.mxu0 0
    %4305 = vmatpush1.bf16.msra.mxu0 0
    %4306 = vmatprep.subr.bf16.mxu0 0
    %4307 = vmatpush1.bf16.msra.mxu0 0
    %4308 = vmatprep.mubr.bf16.mxu0 0
    %4309 = vmatmul.mubr.bf16.gmra.mrb[0].mxu0 %v4260
    %v4310 = vpop.f32.mrb[0].mxu0
    %v4311 = vadd.f32 %v4275, %v4310
    %v4312 = vpop.f32.mrb[0].mxu0
    %v4313 = vpop.f32.mrb[0].mxu0
    %v4314 = vadd.f32 %v4275, %v4313
    %v4315 = vpop.f32.mrb[0].mxu0
    %4316 = vmatprep.mubr.bf16.mxu0 0
    %4317 = vmatmul.mubr.bf16.gmra.mrb[0].mxu0 %v4261
    %v4318 = vpop.f32.mrb[0].mxu0
    %v4319 = vadd.f32 %v4275, %v4318
    %v4320 = vpop.f32.mrb[0].mxu0
    %v4321 = vpop.f32.mrb[0].mxu0
    %v4322 = vadd.f32 %v4275, %v4321
    %v4323 = vpop.f32.mrb[0].mxu0
    %4324 = vdwg.mxu0
    %v4325 = vmax.f32 %v4311, 0.0
    %v4326 = vmax.f32 %v4314, 0.0
    %v4327 = vmax.f32 %v4319, 0.0
    %v4328 = vmax.f32 %v4322, 0.0
    %v4329 = vpack.c.bf16 %v4326, %v4325
    %v4330 = vpack.c.bf16 %v4328, %v4327
    %v4331 = vld [vmem:[#allocation2 + $0xa40] sm:$0xff]
    %v4332 = vld [vmem:[#allocation2 + $0xa48] sm:$0xff]
    %v4333 = vld [vmem:[#allocation2 + $0xa50] sm:$0xff]
    %v4334 = vld [vmem:[#allocation2 + $0xa58] sm:$0xff]
    %v4335 = vld [vmem:[#allocation2 + $0xa60] sm:$0xff]
    %v4336 = vld [vmem:[#allocation2 + $0xa68] sm:$0xff]
    %v4337 = vld [vmem:[#allocation2 + $0xa70] sm:$0xff]
    %v4338 = vld [vmem:[#allocation2 + $0xa78] sm:$0xff]
    %v4339 = vlaneseq
    %v4340 = vshrl.u32 %v4339, 7
    %v4341 = vsub.s32 0, %v4340
    %v4342 = vrot.slane %v4263, %v4341
    %4343 = vmatprep.subr.bf16.mxu0 0
    %4344 = vmatpush1.bf16.msra.mxu0 %v4331
    %4345 = vmatprep.subr.bf16.mxu0 0
    %4346 = vmatpush1.bf16.msra.mxu0 %v4332
    %4347 = vmatprep.subr.bf16.mxu0 0
    %4348 = vmatpush1.bf16.msra.mxu0 %v4333
    %4349 = vmatprep.subr.bf16.mxu0 0
    %4350 = vmatpush1.bf16.msra.mxu0 %v4334
    %4351 = vmatprep.subr.bf16.mxu0 0
    %4352 = vmatpush1.bf16.msra.mxu0 %v4335
    %4353 = vmatprep.subr.bf16.mxu0 0
    %4354 = vmatpush1.bf16.msra.mxu0 %v4336
    %4355 = vmatprep.subr.bf16.mxu0 0
    %4356 = vmatpush1.bf16.msra.mxu0 %v4337
    %4357 = vmatprep.subr.bf16.mxu0 0
    %4358 = vmatpush1.bf16.msra.mxu0 %v4338
    %4359 = vmatprep.subr.bf16.mxu0 0
    %4360 = vmatpush1.bf16.msra.mxu0 0
    %4361 = vmatprep.subr.bf16.mxu0 0
    %4362 = vmatpush1.bf16.msra.mxu0 0
    %4363 = vmatprep.subr.bf16.mxu0 0
    %4364 = vmatpush1.bf16.msra.mxu0 0
    %4365 = vmatprep.subr.bf16.mxu0 0
    %4366 = vmatpush1.bf16.msra.mxu0 0
    %4367 = vmatprep.subr.bf16.mxu0 0
    %4368 = vmatpush1.bf16.msra.mxu0 0
    %4369 = vmatprep.subr.bf16.mxu0 0
    %4370 = vmatpush1.bf16.msra.mxu0 0
    %4371 = vmatprep.subr.bf16.mxu0 0
    %4372 = vmatpush1.bf16.msra.mxu0 0
    %4373 = vmatprep.subr.bf16.mxu0 0
    %4374 = vmatpush1.bf16.msra.mxu0 0
    %4375 = vmatprep.mubr.bf16.mxu0 0
    %4376 = vmatmul.mubr.bf16.gmra.mrb[0].mxu0 %v4329
    %v4377 = vpop.f32.mrb[0].mxu0
    %v4378 = vadd.f32 %v4342, %v4377
    %v4379 = vpop.f32.mrb[0].mxu0
    %v4380 = vpop.f32.mrb[0].mxu0
    %v4381 = vadd.f32 %v4342, %v4380
    %v4382 = vpop.f32.mrb[0].mxu0
    %4383 = vmatprep.mubr.bf16.mxu0 0
    %4384 = vmatmul.mubr.bf16.gmra.mrb[0].mxu0 %v4330
    %v4385 = vpop.f32.mrb[0].mxu0
    %v4386 = vadd.f32 %v4342, %v4385
    %v4387 = vpop.f32.mrb[0].mxu0
    %v4388 = vpop.f32.mrb[0].mxu0
    %v4389 = vadd.f32 %v4342, %v4388
    %v4390 = vpop.f32.mrb[0].mxu0
    %4391 = vdwg.mxu0
    %v4392 = vmax.f32 %v4378, 0.0
    %v4393 = vmax.f32 %v4381, 0.0
    %v4394 = vmax.f32 %v4386, 0.0
    %v4395 = vmax.f32 %v4389, 0.0
    %v4396 = vadd.f32 %v4392, %v4252
    %v4397 = vadd.f32 %v4393, %v4253
    %v4398 = vadd.f32 %v4394, %v4254
    %v4399 = vadd.f32 %v4395, %v4255
    %v4400 = vmax.f32 %v4396, 0.0
    %v4401 = vmax.f32 %v4397, 0.0
    %v4402 = vmax.f32 %v4398, 0.0
    %v4403 = vmax.f32 %v4399, 0.0
    %s4404 = sshll.u32 %s4257, 4
    %4405 = dma.done %s194, %s4404
    %v4406 = vpack.c.bf16 %v4401, %v4400
    %v4407 = vpack.c.bf16 %v4403, %v4402
    %v4408 = vld [vmem:[#allocation12 + $0xa] sm:$0x1]
    %v4409 = vld [vmem:[#allocation12 + $0xb] sm:$0x1]
    %v4410 = vld [vmem:[#allocation2 + $0xa80] sm:$0xff]
    %v4411 = vld [vmem:[#allocation2 + $0xa88] sm:$0xff]
    %v4412 = vld [vmem:[#allocation2 + $0xa90] sm:$0xff]
    %v4413 = vld [vmem:[#allocation2 + $0xa98] sm:$0xff]
    %v4414 = vld [vmem:[#allocation2 + $0xaa0] sm:$0xff]
    %v4415 = vld [vmem:[#allocation2 + $0xaa8] sm:$0xff]
    %v4416 = vld [vmem:[#allocation2 + $0xab0] sm:$0xff]
    %v4417 = vld [vmem:[#allocation2 + $0xab8] sm:$0xff]
    %v4418 = vlaneseq
    %v4419 = vshrl.u32 %v4418, 7
    %v4420 = vsub.s32 0, %v4419
    %v4421 = vrot.slane %v4408, %v4420
    %4422 = vmatprep.subr.bf16.mxu0 0
    %4423 = vmatpush1.bf16.msra.mxu0 %v4410
    %4424 = vmatprep.subr.bf16.mxu0 0
    %4425 = vmatpush1.bf16.msra.mxu0 %v4411
    %4426 = vmatprep.subr.bf16.mxu0 0
    %4427 = vmatpush1.bf16.msra.mxu0 %v4412
    %4428 = vmatprep.subr.bf16.mxu0 0
    %4429 = vmatpush1.bf16.msra.mxu0 %v4413
    %4430 = vmatprep.subr.bf16.mxu0 0
    %4431 = vmatpush1.bf16.msra.mxu0 %v4414
    %4432 = vmatprep.subr.bf16.mxu0 0
    %4433 = vmatpush1.bf16.msra.mxu0 %v4415
    %4434 = vmatprep.subr.bf16.mxu0 0
    %4435 = vmatpush1.bf16.msra.mxu0 %v4416
    %4436 = vmatprep.subr.bf16.mxu0 0
    %4437 = vmatpush1.bf16.msra.mxu0 %v4417
    %4438 = vmatprep.subr.bf16.mxu0 0
    %4439 = vmatpush1.bf16.msra.mxu0 0
    %4440 = vmatprep.subr.bf16.mxu0 0
    %4441 = vmatpush1.bf16.msra.mxu0 0
    %4442 = vmatprep.subr.bf16.mxu0 0
    %4443 = vmatpush1.bf16.msra.mxu0 0
    %4444 = vmatprep.subr.bf16.mxu0 0
    %4445 = vmatpush1.bf16.msra.mxu0 0
    %4446 = vmatprep.subr.bf16.mxu0 0
    %4447 = vmatpush1.bf16.msra.mxu0 0
    %4448 = vmatprep.subr.bf16.mxu0 0
    %4449 = vmatpush1.bf16.msra.mxu0 0
    %4450 = vmatprep.subr.bf16.mxu0 0
    %4451 = vmatpush1.bf16.msra.mxu0 0
    %4452 = vmatprep.subr.bf16.mxu0 0
    %4453 = vmatpush1.bf16.msra.mxu0 0
    %4454 = vmatprep.mubr.bf16.mxu0 0
    %4455 = vmatmul.mubr.bf16.gmra.mrb[0].mxu0 %v4406
    %v4456 = vpop.f32.mrb[0].mxu0
    %v4457 = vadd.f32 %v4421, %v4456
    %v4458 = vpop.f32.mrb[0].mxu0
    %v4459 = vpop.f32.mrb[0].mxu0
    %v4460 = vadd.f32 %v4421, %v4459
    %v4461 = vpop.f32.mrb[0].mxu0
    %4462 = vmatprep.mubr.bf16.mxu0 0
    %4463 = vmatmul.mubr.bf16.gmra.mrb[0].mxu0 %v4407
    %v4464 = vpop.f32.mrb[0].mxu0
    %v4465 = vadd.f32 %v4421, %v4464
    %v4466 = vpop.f32.mrb[0].mxu0
    %v4467 = vpop.f32.mrb[0].mxu0
    %v4468 = vadd.f32 %v4421, %v4467
    %v4469 = vpop.f32.mrb[0].mxu0
    %4470 = vdwg.mxu0
    %v4471 = vmax.f32 %v4457, 0.0
    %v4472 = vmax.f32 %v4460, 0.0
    %v4473 = vmax.f32 %v4465, 0.0
    %v4474 = vmax.f32 %v4468, 0.0
    %v4475 = vpack.c.bf16 %v4472, %v4471
    %v4476 = vpack.c.bf16 %v4474, %v4473
    %v4477 = vld [vmem:[#allocation2 + $0xac0] sm:$0xff]
    %v4478 = vld [vmem:[#allocation2 + $0xac8] sm:$0xff]
    %v4479 = vld [vmem:[#allocation2 + $0xad0] sm:$0xff]
    %v4480 = vld [vmem:[#allocation2 + $0xad8] sm:$0xff]
    %v4481 = vld [vmem:[#allocation2 + $0xae0] sm:$0xff]
    %v4482 = vld [vmem:[#allocation2 + $0xae8] sm:$0xff]
    %v4483 = vld [vmem:[#allocation2 + $0xaf0] sm:$0xff]
    %v4484 = vld [vmem:[#allocation2 + $0xaf8] sm:$0xff]
    %v4485 = vlaneseq
    %v4486 = vshrl.u32 %v4485, 7
    %v4487 = vsub.s32 0, %v4486
    %v4488 = vrot.slane %v4409, %v4487
    %4489 = vmatprep.subr.bf16.mxu0 0
    %4490 = vmatpush1.bf16.msra.mxu0 %v4477
    %4491 = vmatprep.subr.bf16.mxu0 0
    %4492 = vmatpush1.bf16.msra.mxu0 %v4478
    %4493 = vmatprep.subr.bf16.mxu0 0
    %4494 = vmatpush1.bf16.msra.mxu0 %v4479
    %4495 = vmatprep.subr.bf16.mxu0 0
    %4496 = vmatpush1.bf16.msra.mxu0 %v4480
    %4497 = vmatprep.subr.bf16.mxu0 0
    %4498 = vmatpush1.bf16.msra.mxu0 %v4481
    %4499 = vmatprep.subr.bf16.mxu0 0
    %4500 = vmatpush1.bf16.msra.mxu0 %v4482
    %4501 = vmatprep.subr.bf16.mxu0 0
    %4502 = vmatpush1.bf16.msra.mxu0 %v4483
    %4503 = vmatprep.subr.bf16.mxu0 0
    %4504 = vmatpush1.bf16.msra.mxu0 %v4484
    %4505 = vmatprep.subr.bf16.mxu0 0
    %4506 = vmatpush1.bf16.msra.mxu0 0
    %4507 = vmatprep.subr.bf16.mxu0 0
    %4508 = vmatpush1.bf16.msra.mxu0 0
    %4509 = vmatprep.subr.bf16.mxu0 0
    %4510 = vmatpush1.bf16.msra.mxu0 0
    %4511 = vmatprep.subr.bf16.mxu0 0
    %4512 = vmatpush1.bf16.msra.mxu0 0
    %4513 = vmatprep.subr.bf16.mxu0 0
    %4514 = vmatpush1.bf16.msra.mxu0 0
    %4515 = vmatprep.subr.bf16.mxu0 0
    %4516 = vmatpush1.bf16.msra.mxu0 0
    %4517 = vmatprep.subr.bf16.mxu0 0
    %4518 = vmatpush1.bf16.msra.mxu0 0
    %4519 = vmatprep.subr.bf16.mxu0 0
    %4520 = vmatpush1.bf16.msra.mxu0 0
    %4521 = vmatprep.mubr.bf16.mxu0 0
    %4522 = vmatmul.mubr.bf16.gmra.mrb[0].mxu0 %v4475
    %v4523 = vpop.f32.mrb[0].mxu0
    %v4524 = vadd.f32 %v4488, %v4523
    %v4525 = vpop.f32.mrb[0].mxu0
    %v4526 = vpop.f32.mrb[0].mxu0
    %v4527 = vadd.f32 %v4488, %v4526
    %v4528 = vpop.f32.mrb[0].mxu0
    %4529 = vmatprep.mubr.bf16.mxu0 0
    %4530 = vmatmul.mubr.bf16.gmra.mrb[0].mxu0 %v4476
    %v4531 = vpop.f32.mrb[0].mxu0
    %v4532 = vadd.f32 %v4488, %v4531
    %v4533 = vpop.f32.mrb[0].mxu0
    %v4534 = vpop.f32.mrb[0].mxu0
    %v4535 = vadd.f32 %v4488, %v4534
    %v4536 = vpop.f32.mrb[0].mxu0
    %4537 = vdwg.mxu0
    %v4538 = vmax.f32 %v4524, 0.0
    %v4539 = vmax.f32 %v4527, 0.0
    %v4540 = vmax.f32 %v4532, 0.0
    %v4541 = vmax.f32 %v4535, 0.0
    %v4542 = vadd.f32 %v4538, %v4400
    %v4543 = vadd.f32 %v4539, %v4401
    %v4544 = vadd.f32 %v4540, %v4402
    %v4545 = vadd.f32 %v4541, %v4403
    %v4546 = vmax.f32 %v4542, 0.0
    %v4547 = vmax.f32 %v4543, 0.0
    %v4548 = vmax.f32 %v4544, 0.0
    %v4549 = vmax.f32 %v4545, 0.0
    %s4550 = sshll.u32 %s4257, 4
    %4551 = dma.done %s208, %s4550
    %v4552 = vpack.c.bf16 %v4547, %v4546
    %v4553 = vpack.c.bf16 %v4549, %v4548
    %v4554 = vld [vmem:[#allocation12 + $0xc] sm:$0x1]
    %v4555 = vld [vmem:[#allocation12 + $0xd] sm:$0x1]
    %v4556 = vld [vmem:[#allocation2 + $0xb00] sm:$0xff]
    %v4557 = vld [vmem:[#allocation2 + $0xb08] sm:$0xff]
    %v4558 = vld [vmem:[#allocation2 + $0xb10] sm:$0xff]
    %v4559 = vld [vmem:[#allocation2 + $0xb18] sm:$0xff]
    %v4560 = vld [vmem:[#allocation2 + $0xb20] sm:$0xff]
    %v4561 = vld [vmem:[#allocation2 + $0xb28] sm:$0xff]
    %v4562 = vld [vmem:[#allocation2 + $0xb30] sm:$0xff]
    %v4563 = vld [vmem:[#allocation2 + $0xb38] sm:$0xff]
    %v4564 = vlaneseq
    %v4565 = vshrl.u32 %v4564, 7
    %v4566 = vsub.s32 0, %v4565
    %v4567 = vrot.slane %v4554, %v4566
    %4568 = vmatprep.subr.bf16.mxu0 0
    %4569 = vmatpush1.bf16.msra.mxu0 %v4556
    %4570 = vmatprep.subr.bf16.mxu0 0
    %4571 = vmatpush1.bf16.msra.mxu0 %v4557
    %4572 = vmatprep.subr.bf16.mxu0 0
    %4573 = vmatpush1.bf16.msra.mxu0 %v4558
    %4574 = vmatprep.subr.bf16.mxu0 0
    %4575 = vmatpush1.bf16.msra.mxu0 %v4559
    %4576 = vmatprep.subr.bf16.mxu0 0
    %4577 = vmatpush1.bf16.msra.mxu0 %v4560
    %4578 = vmatprep.subr.bf16.mxu0 0
    %4579 = vmatpush1.bf16.msra.mxu0 %v4561
    %4580 = vmatprep.subr.bf16.mxu0 0
    %4581 = vmatpush1.bf16.msra.mxu0 %v4562
    %4582 = vmatprep.subr.bf16.mxu0 0
    %4583 = vmatpush1.bf16.msra.mxu0 %v4563
    %4584 = vmatprep.subr.bf16.mxu0 0
    %4585 = vmatpush1.bf16.msra.mxu0 0
    %4586 = vmatprep.subr.bf16.mxu0 0
    %4587 = vmatpush1.bf16.msra.mxu0 0
    %4588 = vmatprep.subr.bf16.mxu0 0
    %4589 = vmatpush1.bf16.msra.mxu0 0
    %4590 = vmatprep.subr.bf16.mxu0 0
    %4591 = vmatpush1.bf16.msra.mxu0 0
    %4592 = vmatprep.subr.bf16.mxu0 0
    %4593 = vmatpush1.bf16.msra.mxu0 0
    %4594 = vmatprep.subr.bf16.mxu0 0
    %4595 = vmatpush1.bf16.msra.mxu0 0
    %4596 = vmatprep.subr.bf16.mxu0 0
    %4597 = vmatpush1.bf16.msra.mxu0 0
    %4598 = vmatprep.subr.bf16.mxu0 0
    %4599 = vmatpush1.bf16.msra.mxu0 0
    %4600 = vmatprep.mubr.bf16.mxu0 0
    %4601 = vmatmul.mubr.bf16.gmra.mrb[0].mxu0 %v4552
    %v4602 = vpop.f32.mrb[0].mxu0
    %v4603 = vadd.f32 %v4567, %v4602
    %v4604 = vpop.f32.mrb[0].mxu0
    %v4605 = vpop.f32.mrb[0].mxu0
    %v4606 = vadd.f32 %v4567, %v4605
    %v4607 = vpop.f32.mrb[0].mxu0
    %4608 = vmatprep.mubr.bf16.mxu0 0
    %4609 = vmatmul.mubr.bf16.gmra.mrb[0].mxu0 %v4553
    %v4610 = vpop.f32.mrb[0].mxu0
    %v4611 = vadd.f32 %v4567, %v4610
    %v4612 = vpop.f32.mrb[0].mxu0
    %v4613 = vpop.f32.mrb[0].mxu0
    %v4614 = vadd.f32 %v4567, %v4613
    %v4615 = vpop.f32.mrb[0].mxu0
    %4616 = vdwg.mxu0
    %v4617 = vmax.f32 %v4603, 0.0
    %v4618 = vmax.f32 %v4606, 0.0
    %v4619 = vmax.f32 %v4611, 0.0
    %v4620 = vmax.f32 %v4614, 0.0
    %v4621 = vpack.c.bf16 %v4618, %v4617
    %v4622 = vpack.c.bf16 %v4620, %v4619
    %v4623 = vld [vmem:[#allocation2 + $0xb40] sm:$0xff]
    %v4624 = vld [vmem:[#allocation2 + $0xb48] sm:$0xff]
    %v4625 = vld [vmem:[#allocation2 + $0xb50] sm:$0xff]
    %v4626 = vld [vmem:[#allocation2 + $0xb58] sm:$0xff]
    %v4627 = vld [vmem:[#allocation2 + $0xb60] sm:$0xff]
    %v4628 = vld [vmem:[#allocation2 + $0xb68] sm:$0xff]
    %v4629 = vld [vmem:[#allocation2 + $0xb70] sm:$0xff]
    %v4630 = vld [vmem:[#allocation2 + $0xb78] sm:$0xff]
    %v4631 = vlaneseq
    %v4632 = vshrl.u32 %v4631, 7
    %v4633 = vsub.s32 0, %v4632
    %v4634 = vrot.slane %v4555, %v4633
    %4635 = vmatprep.subr.bf16.mxu0 0
    %4636 = vmatpush1.bf16.msra.mxu0 %v4623
    %4637 = vmatprep.subr.bf16.mxu0 0
    %4638 = vmatpush1.bf16.msra.mxu0 %v4624
    %4639 = vmatprep.subr.bf16.mxu0 0
    %4640 = vmatpush1.bf16.msra.mxu0 %v4625
    %4641 = vmatprep.subr.bf16.mxu0 0
    %4642 = vmatpush1.bf16.msra.mxu0 %v4626
    %4643 = vmatprep.subr.bf16.mxu0 0
    %4644 = vmatpush1.bf16.msra.mxu0 %v4627
    %4645 = vmatprep.subr.bf16.mxu0 0
    %4646 = vmatpush1.bf16.msra.mxu0 %v4628
    %4647 = vmatprep.subr.bf16.mxu0 0
    %4648 = vmatpush1.bf16.msra.mxu0 %v4629
    %4649 = vmatprep.subr.bf16.mxu0 0
    %4650 = vmatpush1.bf16.msra.mxu0 %v4630
    %4651 = vmatprep.subr.bf16.mxu0 0
    %4652 = vmatpush1.bf16.msra.mxu0 0
    %4653 = vmatprep.subr.bf16.mxu0 0
    %4654 = vmatpush1.bf16.msra.mxu0 0
    %4655 = vmatprep.subr.bf16.mxu0 0
    %4656 = vmatpush1.bf16.msra.mxu0 0
    %4657 = vmatprep.subr.bf16.mxu0 0
    %4658 = vmatpush1.bf16.msra.mxu0 0
    %4659 = vmatprep.subr.bf16.mxu0 0
    %4660 = vmatpush1.bf16.msra.mxu0 0
    %4661 = vmatprep.subr.bf16.mxu0 0
    %4662 = vmatpush1.bf16.msra.mxu0 0
    %4663 = vmatprep.subr.bf16.mxu0 0
    %4664 = vmatpush1.bf16.msra.mxu0 0
    %4665 = vmatprep.subr.bf16.mxu0 0
    %4666 = vmatpush1.bf16.msra.mxu0 0
    %4667 = vmatprep.mubr.bf16.mxu0 0
    %4668 = vmatmul.mubr.bf16.gmra.mrb[0].mxu0 %v4621
    %v4669 = vpop.f32.mrb[0].mxu0
    %v4670 = vadd.f32 %v4634, %v4669
    %v4671 = vpop.f32.mrb[0].mxu0
    %v4672 = vpop.f32.mrb[0].mxu0
    %v4673 = vadd.f32 %v4634, %v4672
    %v4674 = vpop.f32.mrb[0].mxu0
    %4675 = vmatprep.mubr.bf16.mxu0 0
    %4676 = vmatmul.mubr.bf16.gmra.mrb[0].mxu0 %v4622
    %v4677 = vpop.f32.mrb[0].mxu0
    %v4678 = vadd.f32 %v4634, %v4677
    %v4679 = vpop.f32.mrb[0].mxu0
    %v4680 = vpop.f32.mrb[0].mxu0
    %v4681 = vadd.f32 %v4634, %v4680
    %v4682 = vpop.f32.mrb[0].mxu0
    %4683 = vdwg.mxu0
    %v4684 = vmax.f32 %v4670, 0.0
    %v4685 = vmax.f32 %v4673, 0.0
    %v4686 = vmax.f32 %v4678, 0.0
    %v4687 = vmax.f32 %v4681, 0.0
    %v4688 = vadd.f32 %v4684, %v4546
    %v4689 = vadd.f32 %v4685, %v4547
    %v4690 = vadd.f32 %v4686, %v4548
    %v4691 = vadd.f32 %v4687, %v4549
    %v4692 = vmax.f32 %v4688, 0.0
    %v4693 = vmax.f32 %v4689, 0.0
    %v4694 = vmax.f32 %v4690, 0.0
    %v4695 = vmax.f32 %v4691, 0.0
    %s4696 = sshll.u32 %s4257, 4
    %4697 = dma.done %s222, %s4696
    %v4698 = vpack.c.bf16 %v4693, %v4692
    %v4699 = vpack.c.bf16 %v4695, %v4694
    %v4700 = vld [vmem:[#allocation12 + $0xe] sm:$0x1]
    %v4701 = vld [vmem:[#allocation12 + $0xf] sm:$0x1]
    %v4702 = vld [vmem:[#allocation2 + $0xb80] sm:$0xff]
    %v4703 = vld [vmem:[#allocation2 + $0xb88] sm:$0xff]
    %v4704 = vld [vmem:[#allocation2 + $0xb90] sm:$0xff]
    %v4705 = vld [vmem:[#allocation2 + $0xb98] sm:$0xff]
    %v4706 = vld [vmem:[#allocation2 + $0xba0] sm:$0xff]
    %v4707 = vld [vmem:[#allocation2 + $0xba8] sm:$0xff]
    %v4708 = vld [vmem:[#allocation2 + $0xbb0] sm:$0xff]
    %v4709 = vld [vmem:[#allocation2 + $0xbb8] sm:$0xff]
    %v4710 = vlaneseq
    %v4711 = vshrl.u32 %v4710, 7
    %v4712 = vsub.s32 0, %v4711
    %v4713 = vrot.slane %v4700, %v4712
    %4714 = vmatprep.subr.bf16.mxu0 0
    %4715 = vmatpush1.bf16.msra.mxu0 %v4702
    %4716 = vmatprep.subr.bf16.mxu0 0
    %4717 = vmatpush1.bf16.msra.mxu0 %v4703
    %4718 = vmatprep.subr.bf16.mxu0 0
    %4719 = vmatpush1.bf16.msra.mxu0 %v4704
    %4720 = vmatprep.subr.bf16.mxu0 0
    %4721 = vmatpush1.bf16.msra.mxu0 %v4705
    %4722 = vmatprep.subr.bf16.mxu0 0
    %4723 = vmatpush1.bf16.msra.mxu0 %v4706
    %4724 = vmatprep.subr.bf16.mxu0 0
    %4725 = vmatpush1.bf16.msra.mxu0 %v4707
    %4726 = vmatprep.subr.bf16.mxu0 0
    %4727 = vmatpush1.bf16.msra.mxu0 %v4708
    %4728 = vmatprep.subr.bf16.mxu0 0
    %4729 = vmatpush1.bf16.msra.mxu0 %v4709
    %4730 = vmatprep.subr.bf16.mxu0 0
    %4731 = vmatpush1.bf16.msra.mxu0 0
    %4732 = vmatprep.subr.bf16.mxu0 0
    %4733 = vmatpush1.bf16.msra.mxu0 0
    %4734 = vmatprep.subr.bf16.mxu0 0
    %4735 = vmatpush1.bf16.msra.mxu0 0
    %4736 = vmatprep.subr.bf16.mxu0 0
    %4737 = vmatpush1.bf16.msra.mxu0 0
    %4738 = vmatprep.subr.bf16.mxu0 0
    %4739 = vmatpush1.bf16.msra.mxu0 0
    %4740 = vmatprep.subr.bf16.mxu0 0
    %4741 = vmatpush1.bf16.msra.mxu0 0
    %4742 = vmatprep.subr.bf16.mxu0 0
    %4743 = vmatpush1.bf16.msra.mxu0 0
    %4744 = vmatprep.subr.bf16.mxu0 0
    %4745 = vmatpush1.bf16.msra.mxu0 0
    %4746 = vmatprep.mubr.bf16.mxu0 0
    %4747 = vmatmul.mubr.bf16.gmra.mrb[0].mxu0 %v4698
    %v4748 = vpop.f32.mrb[0].mxu0
    %v4749 = vadd.f32 %v4713, %v4748
    %v4750 = vpop.f32.mrb[0].mxu0
    %v4751 = vpop.f32.mrb[0].mxu0
    %v4752 = vadd.f32 %v4713, %v4751
    %v4753 = vpop.f32.mrb[0].mxu0
    %4754 = vmatprep.mubr.bf16.mxu0 0
    %4755 = vmatmul.mubr.bf16.gmra.mrb[0].mxu0 %v4699
    %v4756 = vpop.f32.mrb[0].mxu0
    %v4757 = vadd.f32 %v4713, %v4756
    %v4758 = vpop.f32.mrb[0].mxu0
    %v4759 = vpop.f32.mrb[0].mxu0
    %v4760 = vadd.f32 %v4713, %v4759
    %v4761 = vpop.f32.mrb[0].mxu0
    %4762 = vdwg.mxu0
    %v4763 = vmax.f32 %v4749, 0.0
    %v4764 = vmax.f32 %v4752, 0.0
    %v4765 = vmax.f32 %v4757, 0.0
    %v4766 = vmax.f32 %v4760, 0.0
    %v4767 = vpack.c.bf16 %v4764, %v4763
    %v4768 = vpack.c.bf16 %v4766, %v4765
    %v4769 = vld [vmem:[#allocation2 + $0xbc0] sm:$0xff]
    %v4770 = vld [vmem:[#allocation2 + $0xbc8] sm:$0xff]
    %v4771 = vld [vmem:[#allocation2 + $0xbd0] sm:$0xff]
    %v4772 = vld [vmem:[#allocation2 + $0xbd8] sm:$0xff]
    %v4773 = vld [vmem:[#allocation2 + $0xbe0] sm:$0xff]
    %v4774 = vld [vmem:[#allocation2 + $0xbe8] sm:$0xff]
    %v4775 = vld [vmem:[#allocation2 + $0xbf0] sm:$0xff]
    %v4776 = vld [vmem:[#allocation2 + $0xbf8] sm:$0xff]
    %v4777 = vlaneseq
    %v4778 = vshrl.u32 %v4777, 7
    %v4779 = vsub.s32 0, %v4778
    %v4780 = vrot.slane %v4701, %v4779
    %4781 = vmatprep.subr.bf16.mxu0 0
    %4782 = vmatpush1.bf16.msra.mxu0 %v4769
    %4783 = vmatprep.subr.bf16.mxu0 0
    %4784 = vmatpush1.bf16.msra.mxu0 %v4770
    %4785 = vmatprep.subr.bf16.mxu0 0
    %4786 = vmatpush1.bf16.msra.mxu0 %v4771
    %4787 = vmatprep.subr.bf16.mxu0 0
    %4788 = vmatpush1.bf16.msra.mxu0 %v4772
    %4789 = vmatprep.subr.bf16.mxu0 0
    %4790 = vmatpush1.bf16.msra.mxu0 %v4773
    %4791 = vmatprep.subr.bf16.mxu0 0
    %4792 = vmatpush1.bf16.msra.mxu0 %v4774
    %4793 = vmatprep.subr.bf16.mxu0 0
    %4794 = vmatpush1.bf16.msra.mxu0 %v4775
    %4795 = vmatprep.subr.bf16.mxu0 0
    %4796 = vmatpush1.bf16.msra.mxu0 %v4776
    %4797 = vmatprep.subr.bf16.mxu0 0
    %4798 = vmatpush1.bf16.msra.mxu0 0
    %4799 = vmatprep.subr.bf16.mxu0 0
    %4800 = vmatpush1.bf16.msra.mxu0 0
    %4801 = vmatprep.subr.bf16.mxu0 0
    %4802 = vmatpush1.bf16.msra.mxu0 0
    %4803 = vmatprep.subr.bf16.mxu0 0
    %4804 = vmatpush1.bf16.msra.mxu0 0
    %4805 = vmatprep.subr.bf16.mxu0 0
    %4806 = vmatpush1.bf16.msra.mxu0 0
    %4807 = vmatprep.subr.bf16.mxu0 0
    %4808 = vmatpush1.bf16.msra.mxu0 0
    %4809 = vmatprep.subr.bf16.mxu0 0
    %4810 = vmatpush1.bf16.msra.mxu0 0
    %4811 = vmatprep.subr.bf16.mxu0 0
    %4812 = vmatpush1.bf16.msra.mxu0 0
    %4813 = vmatprep.mubr.bf16.mxu0 0
    %4814 = vmatmul.mubr.bf16.gmra.mrb[0].mxu0 %v4767
    %v4815 = vpop.f32.mrb[0].mxu0
    %v4816 = vadd.f32 %v4780, %v4815
    %v4817 = vpop.f32.mrb[0].mxu0
    %v4818 = vpop.f32.mrb[0].mxu0
    %v4819 = vadd.f32 %v4780, %v4818
    %v4820 = vpop.f32.mrb[0].mxu0
    %4821 = vmatprep.mubr.bf16.mxu0 0
    %4822 = vmatmul.mubr.bf16.gmra.mrb[0].mxu0 %v4768
    %v4823 = vpop.f32.mrb[0].mxu0
    %v4824 = vadd.f32 %v4780, %v4823
    %v4825 = vpop.f32.mrb[0].mxu0
    %v4826 = vpop.f32.mrb[0].mxu0
    %v4827 = vadd.f32 %v4780, %v4826
    %v4828 = vpop.f32.mrb[0].mxu0
    %4829 = vdwg.mxu0
    %v4830 = vmax.f32 %v4816, 0.0
    %v4831 = vmax.f32 %v4819, 0.0
    %v4832 = vmax.f32 %v4824, 0.0
    %v4833 = vmax.f32 %v4827, 0.0
    %v4834 = vadd.f32 %v4830, %v4692
    %v4835 = vadd.f32 %v4831, %v4693
    %v4836 = vadd.f32 %v4832, %v4694
    %v4837 = vadd.f32 %v4833, %v4695
    %v4838 = vmax.f32 %v4834, 0.0
    %v4839 = vmax.f32 %v4835, 0.0
    %v4840 = vmax.f32 %v4836, 0.0
    %v4841 = vmax.f32 %v4837, 0.0
    %v4842 = vadd.f32 %v4838, %v4839
    %v4843 = vrot.slane %v4842, 4
    %v4844 = vadd.f32 %v4842, %v4843
    %v4845 = vrot.slane %v4844, 2
    %v4846 = vadd.f32 %v4844, %v4845
    %v4847 = vrot.slane %v4846, 1
    %v4848 = vadd.f32 %v4846, %v4847
    %v4849 = vadd.f32 %v4840, %v4841
    %v4850 = vrot.slane %v4849, 4
    %v4851 = vadd.f32 %v4849, %v4850
    %v4852 = vrot.slane %v4851, 2
    %v4853 = vadd.f32 %v4851, %v4852
    %v4854 = vrot.slane %v4853, 1
    %v4855 = vadd.f32 %v4853, %v4854
    %v4856 = vld [vmem:[#allocation15] sm:$0x1]
    %v4858 = vlaneseq
    %v4859 = vshrl.u32 %v4858, 7
    %v4860 = vsub.s32 0, %v4859
    %v4861 = vrot.slane %v4856, %v4860
    %v4863 = vmul.f32 %v4848, %v4861
    %v4864 = vmul.f32 %v4855, %v4861
    %v4867 = vrot.slane %v4864, 7
    %vm4868 = vcmask 1041409
    %v4869 = vsel %vm4868, %v4867, %v4863
    %vm4871 = vcmask 1041408
    %v4872 = vsel %vm4871, %v4869, 0.0
    %4873 = vadd.xlane.f32.xlu0 %v4872
    %v4874 = vpop.xlane.xlu0 %4873
    %v4875 = vld [vmem:[#allocation4] sm:$0x1]
    %v4877 = vlaneseq
    %v4878 = vshrl.u32 %v4877, 7
    %v4879 = vsub.s32 0, %v4878
    %v4880 = vrot.slane %v4875, %v4879
    %v4882 = vadd.f32 %v4874, %v4880
    %vm4883 = vcmask 1024
    %4884 = vst.msk [vmem:[%s10] sm:$0x3] %vm4883, %v4882
    // Predicated region
    $region98: #{forward.1} parent=1 // pred_check
      _
    $region99: #{forward.1} parent=1 // pred_check_branch
      %4886 = sbr.rel (0) target = $region101
    $region100: #{forward.1} parent=1 // pred_region
      _
    $region101: #{forward.1} parent=1 // pred_fallthru
      _
    // Predicated region
    $region102: #{forward.1} parent=1 // pred_check
      _
    $region103: #{forward.1} parent=1 // pred_check_branch
      %4888 = sbr.rel (0) target = $region105
    $region104: #{forward.1} parent=1 // pred_region
      _
    $region105: #{forward.1} parent=1 // pred_fallthru
      _
    %4889 = vsyncpa [#allocation6], 1
    %4890 = vsyncpa [#allocation8], 1
    %4891 = vsyncpa [#allocation11], 1
    %4892 = vsyncpa [#allocation14], 1
  %4893 = vsyncmov [#allocation3]
  %s4894 = vpop.sfrf %4893
  %p4895 = scmp.eq.s32.totalorder %s4894, 0
  %p4896 = pneg %p4895
  %4898 = shalt.err (%p4896)
  %s4899 = scalar_lea.sflag [#allocation3], 1
  %4900 = vsyncmov %s4899
  %s4901 = vpop.sfrf %4900
  %p4902 = scmp.eq.s32.totalorder %s4901, 0
  %p4903 = pneg %p4902
  %4905 = shalt.err (%p4903)
  %s4906 = scalar_lea.sflag [#allocation3], 2
  %4907 = vsyncmov %s4906
  %s4908 = vpop.sfrf %4907
  %p4909 = scmp.eq.s32.totalorder %s4908, 0
  %p4910 = pneg %p4909
  %4912 = shalt.err (%p4910)
  %s4913 = scalar_lea.sflag [#allocation3], 3
  %4914 = vsyncmov %s4913
  %s4915 = vpop.sfrf %4914
  %p4916 = scmp.eq.s32.totalorder %s4915, 0
  %p4917 = pneg %p4916
  %4919 = shalt.err (%p4917)
  %s4920 = scalar_lea.sflag [#allocation3], 4
  %4921 = vsyncmov %s4920
  %s4922 = vpop.sfrf %4921
  %p4923 = scmp.eq.s32.totalorder %s4922, 0
  %p4924 = pneg %p4923
  %4926 = shalt.err (%p4924)
  %s4927 = scalar_lea.sflag [#allocation3], 5
  %4928 = vsyncmov %s4927
  %s4929 = vpop.sfrf %4928
  %p4930 = scmp.eq.s32.totalorder %s4929, 0
  %p4931 = pneg %p4930
  %4933 = shalt.err (%p4931)
  %s4934 = scalar_lea.sflag [#allocation3], 6
  %4935 = vsyncmov %s4934
  %s4936 = vpop.sfrf %4935
  %p4937 = scmp.eq.s32.totalorder %s4936, 0
  %p4938 = pneg %p4937
  %4940 = shalt.err (%p4938)
  %s4941 = scalar_lea.sflag [#allocation3], 7
  %4942 = vsyncmov %s4941
  %s4943 = vpop.sfrf %4942
  %p4944 = scmp.eq.s32.totalorder %s4943, 0
  %p4945 = pneg %p4944
  %4947 = shalt.err (%p4945)

</llo_original>
